<compile_context>
chip_gen: v7x
topology: tpu7x:2x2x1
jax: 0.10.0
libtpu: 0.0.40
codegen_flags: <defaults>
</compile_context>

<pallas_src>
import functools

import jax
import jax.numpy as jnp
from jax.experimental import pallas as pl
from jax.experimental.pallas import tpu as pltpu


def _swish(v):
    return v * jax.nn.sigmoid(v)


def _round_up(n, m):
    return (n + m - 1) // m * m


def upresblock_kernel(x_ref, te_ref, g1_ref, b1_ref, g2_ref, b2_ref,
                      wt_ref, ws_ref, bias_ref, gsame_ref,
                      o_ref, hbuf_ref, enh_ref,
                      *, H, W, TH, P, eps, inv_cnt, compute_dtype):
    HW = H * W
    BP = TH * W                               # pixels in one low-res band
    Cp = x_ref.shape[-1]
    Cop = ws_ref.shape[-1]
    nb = pl.program_id(1)

    # ---- whole-image prepass (band 0 only): GN1/Swish + time emb + GN2/Swish.
    # Nearest-2x upsample replicates pixels, so the upsampled GroupNorm stats
    # equal the low-res ones; everything here runs at LOW resolution.
    @pl.when(nb == 0)
    def _prepass():
        xs = x_ref[0].astype(jnp.float32)                      # (HW, Cp)
        gsame = gsame_ref[...]

        def groupnorm(v, gamma, beta):
            # Column sums on the VPU/XLU; group broadcast via a tiny
            # (1,Cp)x(Cp,Cp) matmul.  Two-pass (mean, then centered moment).
            s1 = jnp.sum(v, axis=0, keepdims=True)
            mean = jnp.dot(s1, gsame,
                           preferred_element_type=jnp.float32) * inv_cnt
            centered = v - mean
            s2 = jnp.sum(centered * centered, axis=0, keepdims=True)
            var = jnp.dot(s2, gsame,
                          preferred_element_type=jnp.float32) * inv_cnt
            return centered * (jax.lax.rsqrt(var + eps) * gamma) + beta

        h1 = _swish(groupnorm(xs, g1_ref[...], b1_ref[...]))
        enhanced = h1 + te_ref[0].astype(jnp.float32)          # (HW, Cp)
        h2 = _swish(groupnorm(enhanced, g2_ref[...], b2_ref[...]))
        # TODO(synk): nn.Dropout is eval-mode identity here; train-mode RNG
        # dropout (pltpu.prng_seed / prng_random_bits) is not reproduced.

        enh_ref[...] = enhanced.astype(compute_dtype)
        zpad = jnp.zeros((P, Cp), compute_dtype)
        hbuf_ref[pl.ds(0, P), :] = zpad                        # top halo (zeros)
        hbuf_ref[pl.ds(P, HW), :] = h2.astype(compute_dtype)   # image rows
        hbuf_ref[pl.ds(P + HW, P), :] = zpad                   # bottom halo

    # ---- per-band work: shortcut + phase-decomposed conv matmuls + stores ----
    s0 = nb * BP
    band_aligned = (BP % 8 == 0)

    def maybe8(off, ok):
        return pl.multiple_of(off, 8) if ok else off

    enh_band = enh_ref[pl.ds(maybe8(s0, band_aligned), BP), :]
    # 1x1 shortcut conv on this band; b3 + bs were pre-fused into bias_ref.
    scb = jnp.dot(enh_band, ws_ref[...],
                  preferred_element_type=jnp.float32) + bias_ref[...]

    # Wrap masks for the dx = +-1 taps (zero padding at image-row edges).
    col = jax.lax.broadcasted_iota(jnp.int32, (BP, Cp), 0) % W
    mask_l = col != 0
    mask_r = col != (W - 1)

    rshift = ((-1, 0), (0, 1))                # low-res row taps used by phase pi
    cshift = ((-1, 0), (0, 1))                # low-res col taps used by phase pj
    accs = [None] * 4

    # Taps-outer / phases-inner: each distinct (dr, dc) slab is loaded (and
    # masked) exactly once; every use is one accumulating matmul.
    for dr in (-1, 0, 1):
        for dc in (-1, 0, 1):
            ok = band_aligned and ((P + dr * W + dc) % 8 == 0)
            start = maybe8(s0 + (P + dr * W + dc), ok)
            slab = hbuf_ref[pl.ds(start, BP), :]
            if dc == -1:
                slab = jnp.where(mask_l, slab, jnp.zeros_like(slab))
            elif dc == 1:
                slab = jnp.where(mask_r, slab, jnp.zeros_like(slab))
            for pi in range(2):
                if dr not in rshift[pi]:
                    continue
                a = rshift[pi].index(dr)
                for pj in range(2):
                    if dc not in cshift[pj]:
                        continue
                    b = cshift[pj].index(dc)
                    ph = 2 * pi + pj
                    contrib = jnp.dot(slab, wt_ref[ph, 2 * a + b],
                                      preferred_element_type=jnp.float32)
                    accs[ph] = contrib if accs[ph] is None else accs[ph] + contrib

    # Fused sub-pixel de-interleave: (TH, 2, W, 2*Cop) is row-major identical
    # to (2*TH, 2*W, Cop); each phase store is a lane-aligned plain slice.
    for pi in range(2):
        for pj in range(2):
            ph = 2 * pi + pj
            o_ref[0, :, pi, :, pl.ds(pj * Cop, Cop)] = (
                (accs[ph] + scb).reshape(TH, W, Cop).astype(o_ref.dtype))


def up_res_block(x_nchw, t, params, *, groups, compute_dtype=jnp.bfloat16,
                 band_rows=None):
    N, Cin, H, W = x_nchw.shape
    assert Cin % groups == 0
    HW = H * W
    Cout = params["w3"].shape[-1]
    Cp = _round_up(Cin, 128)
    Cop = _round_up(Cout, 128)
    G = groups
    f32 = jnp.float32

    # Spatial banding: conv/shortcut matmuls and output stores are banded; the
    # GroupNorm pass stays whole-image.  Default: band only large images.
    if band_rows is None:
        band_rows = H
        if HW > 4096:
            band_rows = 1
            for th in range(H, 0, -1):
                if H % th == 0 and th * W <= 4096:
                    band_rows = th
                    break
    assert H % band_rows == 0
    TH, NB = band_rows, H // band_rows
    P = _round_up(W + 1, 8)                   # sublane-aligned halo pad rows

    # glue: NCHW -> (N, H*W, Cp) channels-last, channel-padded, native dtype.
    x = jnp.transpose(x_nchw, (0, 2, 3, 1)).reshape(N, HW, Cin)
    x = jnp.pad(x, ((0, 0), (0, 0), (0, Cp - Cin)))

    # time embedding hoisted out of the kernel (one tiny batched matmul).
    te = _swish(t.astype(f32)) @ params["wt"].astype(f32) + params["bt"].astype(f32)
    te = jnp.pad(te, ((0, 0), (0, Cp - Cin))).reshape(N, 1, Cp)

    def pad_row(p, width):
        p = p.astype(f32).reshape(1, -1)
        return jnp.pad(p, ((0, 0), (0, width - p.shape[1])))

    g1 = pad_row(params["g1"], Cp)
    b1 = pad_row(params["b1"], Cp)
    g2 = pad_row(params["g2"], Cp)
    b2 = pad_row(params["b2"], Cp)
    bias = pad_row(params["b3"], Cop) + pad_row(params["bs"], Cop)   # b3 + bs
    ws = jnp.pad(params["ws"].astype(f32),
                 ((0, Cp - Cin), (0, Cop - Cout))).astype(compute_dtype)

    # Fold the nearest-2x upsample into the 3x3 conv: per output sub-pixel
    # phase it collapses to a 2x2 conv over the LOW-res image.  Stored as
    # (phase, tap, Cp, Cop) so the kernel runs per-tap accumulating matmuls.
    w3 = params["w3"].astype(f32).reshape(3, 3, Cin, Cout)           # [ky,kx,i,o]
    M = [jnp.array([[1., 0.], [0., 1.], [0., 1.]], f32),             # pi/pj = 0
         jnp.array([[1., 0.], [1., 0.], [0., 1.]], f32)]             # pi/pj = 1
    wt = []
    for pi in range(2):
        for pj in range(2):
            k = jnp.einsum("ya,xb,yxio->abio", M[pi], M[pj], w3)     # (2,2,Ci,Co)
            k = jnp.pad(k, ((0, 0), (0, 0), (0, Cp - Cin), (0, Cop - Cout)))
            wt.append(k.reshape(4, Cp, Cop))
    wt = jnp.stack(wt, axis=0).astype(compute_dtype)                 # (4,4,Cp,Cop)

    # same-group channel map (zero rows/cols for padded channels).
    ch = jnp.arange(Cp)
    gid = ch // max(Cin // G, 1)
    valid = ch < Cin
    gsame = ((gid[:, None] == gid[None, :]) &
             valid[:, None] & valid[None, :]).astype(f32)            # (Cp, Cp)

    kernel = functools.partial(
        upresblock_kernel, H=H, W=W, TH=TH, P=P, eps=1e-5,
        inv_cnt=1.0 / float(HW * (Cin // G)), compute_dtype=compute_dtype)

    def const(shape):
        return pl.BlockSpec(shape, lambda b, nb, _n=len(shape): (0,) * _n)

    # scoped-VMEM budget from the real footprint, capped by physical VMEM.
    cd = jnp.dtype(compute_dtype).itemsize
    xd = jnp.dtype(x_nchw.dtype).itemsize
    BP = TH * W
    need = (2 * HW * Cp * xd                        # x block (double buffered)
            + 2 * TH * 2 * W * 2 * Cop * xd         # out block (double buffered)
            + 2 * 16 * Cp * Cop * cd                # per-tap conv weights
            + 2 * Cp * Cop * cd + 2 * Cp * Cp * 4   # shortcut W, gsame
            + (2 * P + HW) * Cp * cd                # halo scratch
            + HW * Cp * cd                          # enhanced scratch
            + 8 * HW * Cp * 4                       # whole-image f32 GN temps
            + BP * Cp * cd + 6 * BP * Cop * 4)      # per-band temporaries
    try:
        cap = pltpu.get_tpu_info().vmem_capacity_bytes
    except Exception:
        cap = 64 * 2**20
    vmem_limit = int(max(16 * 2**20,
                         min(max(int(need * 1.25), 32 * 2**20),
                             cap - 4 * 2**20)))

    out_k = pl.pallas_call(
        kernel,
        out_shape=jax.ShapeDtypeStruct((N, H, 2, W, 2 * Cop), x_nchw.dtype),
        grid_spec=pltpu.PrefetchScalarGridSpec(
            num_scalar_prefetch=0,
            grid=(N, NB),
            in_specs=[
                pl.BlockSpec((1, HW, Cp), lambda b, nb: (b, 0, 0)),   # x (low res)
                pl.BlockSpec((1, 1, Cp), lambda b, nb: (b, 0, 0)),    # time emb
                const((1, Cp)), const((1, Cp)),                       # gamma1, beta1
                const((1, Cp)), const((1, Cp)),                       # gamma2, beta2
                const((4, 4, Cp, Cop)),                               # per-tap conv W
                const((Cp, Cop)), const((1, Cop)),                    # shortcut W, bias
                const((Cp, Cp)),                                      # same-group map
            ],
            out_specs=pl.BlockSpec((1, TH, 2, W, 2 * Cop),
                                   lambda b, nb: (b, nb, 0, 0, 0)),
            scratch_shapes=[
                pltpu.VMEM((2 * P + HW, Cp), compute_dtype),          # h2 halo
                pltpu.VMEM((HW, Cp), compute_dtype),                  # enhanced
            ],
        ),
        compiler_params=pltpu.CompilerParams(
            dimension_semantics=("parallel", "arbitrary"),
            vmem_limit_bytes=vmem_limit),
    )(x, te, g1, b1, g2, b2, wt, ws, bias, gsame)

    # (N, H, 2, W, 2*Cop) is row-major identical to (N, 2H, 2W, Cop): the
    # sub-pixel de-interleave is a free reshape; only the NHWC->NCHW transpose
    # required by the module interface remains.
    out = out_k.reshape(N, 2 * H, 2 * W, Cop)[:, :, :, :Cout]
    return jnp.transpose(out, (0, 3, 1, 2))


def reference(x_nchw, t, params, groups):
    """Plain-JAX reference with identical semantics (eval-mode dropout)."""
    N, Cin, H, W = x_nchw.shape
    x = jnp.transpose(x_nchw, (0, 2, 3, 1)).astype(jnp.float32)
    up = jnp.repeat(jnp.repeat(x, 2, axis=1), 2, axis=2)

    def gn(v, gamma, beta):
        n, h, w, c = v.shape
        vg = v.reshape(n, h, w, groups, c // groups)
        mean = vg.mean(axis=(1, 2, 4), keepdims=True)
        var = vg.var(axis=(1, 2, 4), keepdims=True)
        vn = ((vg - mean) / jnp.sqrt(var + 1e-5)).reshape(n, h, w, c)
        return vn * gamma.reshape(1, 1, 1, -1) + beta.reshape(1, 1, 1, -1)

    swish = lambda v: v * jax.nn.sigmoid(v)
    h1 = swish(gn(up, params["g1"], params["b1"]))
    te = swish(t.astype(jnp.float32)) @ params["wt"] + params["bt"]
    enhanced = h1 + te[:, None, None, :]
    h2 = swish(gn(enhanced, params["g2"], params["b2"]))

    w3 = params["w3"].reshape(3, 3, Cin, -1)  # HWIO
    out = jax.lax.conv_general_dilated(
        h2, w3, window_strides=(1, 1), padding=((1, 1), (1, 1)),
        dimension_numbers=("NHWC", "HWIO", "NHWC"))
    out = out + params["b3"].reshape(1, 1, 1, -1)
    sc = enhanced @ params["ws"] + params["bs"].reshape(1, 1, 1, -1)
    return jnp.transpose(out + sc, (0, 3, 1, 2))


if __name__ == "__main__":
    # small shapes consistent with the module: N=2, Cin=4, Cout=8, Ct=8, H=W=16
    N, Cin, Cout, Ct, H, W = 2, 4, 8, 8, 16, 16
    groups = 2  # must divide Cin (module default 32 doesn't fit tiny channels)

    key = jax.random.PRNGKey(0)
    ks = jax.random.split(key, 12)
    x = jax.random.normal(ks[0], (N, Cin, H, W), jnp.float32)
    t = jax.random.normal(ks[1], (N, Ct), jnp.float32)

    params = {
        "g1": 1.0 + 0.1 * jax.random.normal(ks[2], (1, Cin), jnp.float32),
        "b1": 0.1 * jax.random.normal(ks[3], (1, Cin), jnp.float32),
        "g2": 1.0 + 0.1 * jax.random.normal(ks[4], (1, Cin), jnp.float32),
        "b2": 0.1 * jax.random.normal(ks[5], (1, Cin), jnp.float32),
        "wt": 0.2 * jax.random.normal(ks[6], (Ct, Cin), jnp.float32),
        "bt": 0.1 * jax.random.normal(ks[7], (1, Cin), jnp.float32),
        # conv3x3 weights stored as (9, Cin, Cout)  ==  HWIO reshaped
        "w3": 0.2 * jax.random.normal(ks[8], (9, Cin, Cout), jnp.float32),
        "b3": 0.1 * jax.random.normal(ks[9], (1, Cout), jnp.float32),
        "ws": 0.2 * jax.random.normal(ks[10], (Cin, Cout), jnp.float32),
        "bs": 0.1 * jax.random.normal(ks[11], (1, Cout), jnp.float32),
    }

    ref = reference(x, t, params, groups)

    # correctness: f32 compute dtype, single band (NB=1)
    out_f32 = jax.block_until_ready(
        up_res_block(x, t, params, groups=groups, compute_dtype=jnp.float32))
    assert out_f32.shape == (N, Cout, 2 * H, 2 * W), out_f32.shape
    err32 = float(jnp.max(jnp.abs(out_f32 - ref)))
    assert jnp.allclose(out_f32, ref, atol=1e-3, rtol=1e-3), err32

    # correctness: f32 compute dtype, banded spatial axis (NB=2)
    out_band = jax.block_until_ready(
        up_res_block(x, t, params, groups=groups, compute_dtype=jnp.float32,
                     band_rows=8))
    errb = float(jnp.max(jnp.abs(out_band - ref)))
    assert jnp.allclose(out_band, ref, atol=1e-3, rtol=1e-3), errb

    # fast path: bf16 MXU operands / bf16 halo (f32 stats and accumulation)
    out_bf16 = jax.block_until_ready(
        up_res_block(x, t, params, groups=groups, compute_dtype=jnp.bfloat16))
    err16 = float(jnp.max(jnp.abs(out_bf16 - ref)))
    assert jnp.allclose(out_bf16, ref, atol=0.2, rtol=0.05), err16

    print("KERNEL_OK")
</pallas_src>

<mosaic_0001>
module attributes {stable_mosaic.version = 11 : i64} {
  func.func @upresblock_kernel(%arg0: i32, %arg1: i32, %arg2: memref<1x256x128xf32, #tpu.memory_space<vmem>>, %arg3: memref<1x1x128xf32, #tpu.memory_space<vmem>>, %arg4: memref<1x128xf32, #tpu.memory_space<vmem>>, %arg5: memref<1x128xf32, #tpu.memory_space<vmem>>, %arg6: memref<1x128xf32, #tpu.memory_space<vmem>>, %arg7: memref<1x128xf32, #tpu.memory_space<vmem>>, %arg8: memref<4x4x128x128xf32, #tpu.memory_space<vmem>>, %arg9: memref<128x128xf32, #tpu.memory_space<vmem>>, %arg10: memref<1x128xf32, #tpu.memory_space<vmem>>, %arg11: memref<128x128xf32, #tpu.memory_space<vmem>>, %arg12: memref<1x16x2x16x256xf32, #tpu.memory_space<vmem>>, %arg13: memref<304x128xf32, #tpu.memory_space<vmem>>, %arg14: memref<256x128xf32, #tpu.memory_space<vmem>>) attributes {dimension_semantics = [#tpu.dimension_semantics<parallel>, #tpu.dimension_semantics<arbitrary>], iteration_bounds = array<i64: 2, 1>, scalar_prefetch = 0 : i64, scratch_operands = 2 : i64, tpu.core_type = #tpu.core_type<tc>, window_params = [{transform_indices = @transform_0, window_bounds = array<i64: 1, 256, 128>}, {transform_indices = @transform_1, window_bounds = array<i64: 1, 1, 128>}, {pipeline_mode = #tpu.pipeline_mode<synchronous>, transform_indices = @transform_2, window_bounds = array<i64: 1, 128>}, {pipeline_mode = #tpu.pipeline_mode<synchronous>, transform_indices = @transform_3, window_bounds = array<i64: 1, 128>}, {pipeline_mode = #tpu.pipeline_mode<synchronous>, transform_indices = @transform_4, window_bounds = array<i64: 1, 128>}, {pipeline_mode = #tpu.pipeline_mode<synchronous>, transform_indices = @transform_5, window_bounds = array<i64: 1, 128>}, {pipeline_mode = #tpu.pipeline_mode<synchronous>, transform_indices = @transform_6, window_bounds = array<i64: 4, 4, 128, 128>}, {pipeline_mode = #tpu.pipeline_mode<synchronous>, transform_indices = @transform_7, window_bounds = array<i64: 128, 128>}, {pipeline_mode = #tpu.pipeline_mode<synchronous>, transform_indices = @transform_8, window_bounds = array<i64: 1, 128>}, {pipeline_mode = #tpu.pipeline_mode<synchronous>, transform_indices = @transform_9, window_bounds = array<i64: 128, 128>}, {transform_indices = @transform_10, window_bounds = array<i64: 1, 16, 2, 16, 256>}]} {
    %c0_i32 = arith.constant 0 : i32
    %0 = arith.cmpi eq, %arg1, %c0_i32 : i32
    %1 = arith.extui %0 : i1 to i32
    %c0_i32_0 = arith.constant 0 : i32
    %2 = arith.cmpi ne, %1, %c0_i32_0 : i32
    scf.if %2 {
      %c0_121 = arith.constant 0 : index
      %c0_122 = arith.constant 0 : index
      %c0_123 = arith.constant 0 : index
      %155 = vector.load %arg2[%c0_121, %c0_122, %c0_123] : memref<1x256x128xf32, #tpu.memory_space<vmem>>, vector<1x256x128xf32>
      %156 = vector.shape_cast %155 : vector<1x256x128xf32> to vector<256x128xf32>
      %c0_124 = arith.constant 0 : index
      %c0_125 = arith.constant 0 : index
      %157 = vector.load %arg11[%c0_124, %c0_125] : memref<128x128xf32, #tpu.memory_space<vmem>>, vector<128x128xf32>
      %c0_126 = arith.constant 0 : index
      %c0_127 = arith.constant 0 : index
      %158 = vector.load %arg4[%c0_126, %c0_127] : memref<1x128xf32, #tpu.memory_space<vmem>>, vector<1x128xf32>
      %c0_128 = arith.constant 0 : index
      %c0_129 = arith.constant 0 : index
      %159 = vector.load %arg5[%c0_128, %c0_129] : memref<1x128xf32, #tpu.memory_space<vmem>>, vector<1x128xf32>
      %cst_130 = arith.constant dense<0.000000e+00> : vector<128xf32>
      %160 = vector.multi_reduction <add>, %156, %cst_130 [0] : vector<256x128xf32> to vector<128xf32>
      %161 = vector.shape_cast %160 : vector<128xf32> to vector<1x128xf32>
      %cst_131 = arith.constant dense<0.000000e+00> : vector<1x128xf32>
      %162 = tpu.matmul %161, %157, %cst_131 {dimension_numbers = #tpu.dot_dimension_numbers<[1], [0], [0], [1], [0, 0, 1, 1], [], []>} : vector<1x128xf32>, vector<128x128xf32>, vector<1x128xf32> -> vector<1x128xf32>
      %cst_132 = arith.constant 0.001953125 : f32
      %163 = vector.broadcast %cst_132 : f32 to vector<1x128xf32>
      %164 = arith.mulf %162, %163 : vector<1x128xf32>
      %165 = vector.broadcast %164 : vector<1x128xf32> to vector<256x128xf32>
      %166 = arith.subf %156, %165 : vector<256x128xf32>
      %167 = arith.mulf %166, %166 : vector<256x128xf32>
      %cst_133 = arith.constant dense<0.000000e+00> : vector<128xf32>
      %168 = vector.multi_reduction <add>, %167, %cst_133 [0] : vector<256x128xf32> to vector<128xf32>
      %169 = vector.shape_cast %168 : vector<128xf32> to vector<1x128xf32>
      %cst_134 = arith.constant dense<0.000000e+00> : vector<1x128xf32>
      %170 = tpu.matmul %169, %157, %cst_134 {dimension_numbers = #tpu.dot_dimension_numbers<[1], [0], [0], [1], [0, 0, 1, 1], [], []>} : vector<1x128xf32>, vector<128x128xf32>, vector<1x128xf32> -> vector<1x128xf32>
      %cst_135 = arith.constant 0.001953125 : f32
      %171 = vector.broadcast %cst_135 : f32 to vector<1x128xf32>
      %172 = arith.mulf %170, %171 : vector<1x128xf32>
      %cst_136 = arith.constant 9.99999974E-6 : f32
      %173 = vector.broadcast %cst_136 : f32 to vector<1x128xf32>
      %174 = arith.addf %172, %173 : vector<1x128xf32>
      %175 = math.rsqrt %174 : vector<1x128xf32>
      %176 = arith.mulf %175, %158 : vector<1x128xf32>
      %177 = vector.broadcast %176 : vector<1x128xf32> to vector<256x128xf32>
      %178 = arith.mulf %166, %177 : vector<256x128xf32>
      %179 = vector.broadcast %159 : vector<1x128xf32> to vector<256x128xf32>
      %180 = arith.addf %178, %179 : vector<256x128xf32>
      %181 = arith.negf %180 : vector<256x128xf32>
      %182 = math.exp %181 : vector<256x128xf32>
      %cst_137 = arith.constant 1.000000e+00 : f32
      %183 = vector.broadcast %cst_137 : f32 to vector<256x128xf32>
      %184 = arith.addf %183, %182 : vector<256x128xf32>
      %185 = arith.divf %183, %184 : vector<256x128xf32>
      %186 = arith.mulf %180, %185 : vector<256x128xf32>
      %c0_138 = arith.constant 0 : index
      %c0_139 = arith.constant 0 : index
      %c0_140 = arith.constant 0 : index
      %187 = vector.load %arg3[%c0_138, %c0_139, %c0_140] : memref<1x1x128xf32, #tpu.memory_space<vmem>>, vector<1x1x128xf32>
      %188 = vector.shape_cast %187 : vector<1x1x128xf32> to vector<1x128xf32>
      %189 = vector.broadcast %188 : vector<1x128xf32> to vector<256x128xf32>
      %190 = arith.addf %186, %189 : vector<256x128xf32>
      %c0_141 = arith.constant 0 : index
      %c0_142 = arith.constant 0 : index
      %191 = vector.load %arg6[%c0_141, %c0_142] : memref<1x128xf32, #tpu.memory_space<vmem>>, vector<1x128xf32>
      %c0_143 = arith.constant 0 : index
      %c0_144 = arith.constant 0 : index
      %192 = vector.load %arg7[%c0_143, %c0_144] : memref<1x128xf32, #tpu.memory_space<vmem>>, vector<1x128xf32>
      %cst_145 = arith.constant dense<0.000000e+00> : vector<128xf32>
      %193 = vector.multi_reduction <add>, %190, %cst_145 [0] : vector<256x128xf32> to vector<128xf32>
      %194 = vector.shape_cast %193 : vector<128xf32> to vector<1x128xf32>
      %cst_146 = arith.constant dense<0.000000e+00> : vector<1x128xf32>
      %195 = tpu.matmul %194, %157, %cst_146 {dimension_numbers = #tpu.dot_dimension_numbers<[1], [0], [0], [1], [0, 0, 1, 1], [], []>} : vector<1x128xf32>, vector<128x128xf32>, vector<1x128xf32> -> vector<1x128xf32>
      %cst_147 = arith.constant 0.001953125 : f32
      %196 = vector.broadcast %cst_147 : f32 to vector<1x128xf32>
      %197 = arith.mulf %195, %196 : vector<1x128xf32>
      %198 = vector.broadcast %197 : vector<1x128xf32> to vector<256x128xf32>
      %199 = arith.subf %190, %198 : vector<256x128xf32>
      %200 = arith.mulf %199, %199 : vector<256x128xf32>
      %cst_148 = arith.constant dense<0.000000e+00> : vector<128xf32>
      %201 = vector.multi_reduction <add>, %200, %cst_148 [0] : vector<256x128xf32> to vector<128xf32>
      %202 = vector.shape_cast %201 : vector<128xf32> to vector<1x128xf32>
      %cst_149 = arith.constant dense<0.000000e+00> : vector<1x128xf32>
      %203 = tpu.matmul %202, %157, %cst_149 {dimension_numbers = #tpu.dot_dimension_numbers<[1], [0], [0], [1], [0, 0, 1, 1], [], []>} : vector<1x128xf32>, vector<128x128xf32>, vector<1x128xf32> -> vector<1x128xf32>
      %cst_150 = arith.constant 0.001953125 : f32
      %204 = vector.broadcast %cst_150 : f32 to vector<1x128xf32>
      %205 = arith.mulf %203, %204 : vector<1x128xf32>
      %cst_151 = arith.constant 9.99999974E-6 : f32
      %206 = vector.broadcast %cst_151 : f32 to vector<1x128xf32>
      %207 = arith.addf %205, %206 : vector<1x128xf32>
      %208 = math.rsqrt %207 : vector<1x128xf32>
      %209 = arith.mulf %208, %191 : vector<1x128xf32>
      %210 = vector.broadcast %209 : vector<1x128xf32> to vector<256x128xf32>
      %211 = arith.mulf %199, %210 : vector<256x128xf32>
      %212 = vector.broadcast %192 : vector<1x128xf32> to vector<256x128xf32>
      %213 = arith.addf %211, %212 : vector<256x128xf32>
      %214 = arith.negf %213 : vector<256x128xf32>
      %215 = math.exp %214 : vector<256x128xf32>
      %cst_152 = arith.constant 1.000000e+00 : f32
      %216 = vector.broadcast %cst_152 : f32 to vector<256x128xf32>
      %217 = arith.addf %216, %215 : vector<256x128xf32>
      %218 = arith.divf %216, %217 : vector<256x128xf32>
      %219 = arith.mulf %213, %218 : vector<256x128xf32>
      %c0_153 = arith.constant 0 : index
      %c0_154 = arith.constant 0 : index
      %220 = vector.load %arg14[%c0_153, %c0_154] : memref<256x128xf32, #tpu.memory_space<vmem>>, vector<256x128xf32>
      tpu.vector_store %arg14[%c0_153, %c0_154], %190 {strides = array<i32>} : memref<256x128xf32, #tpu.memory_space<vmem>>, vector<256x128xf32>,
      %cst_155 = arith.constant 0.000000e+00 : f32
      %221 = vector.broadcast %cst_155 : f32 to vector<24x128xf32>
      %c0_156 = arith.constant 0 : index
      %c0_157 = arith.constant 0 : index
      %222 = vector.load %arg13[%c0_156, %c0_157] : memref<304x128xf32, #tpu.memory_space<vmem>>, vector<24x128xf32>
      tpu.vector_store %arg13[%c0_156, %c0_157], %221 {strides = array<i32>} : memref<304x128xf32, #tpu.memory_space<vmem>>, vector<24x128xf32>,
      %c24 = arith.constant 24 : index
      %c0_158 = arith.constant 0 : index
      %223 = vector.load %arg13[%c24, %c0_158] : memref<304x128xf32, #tpu.memory_space<vmem>>, vector<256x128xf32>
      tpu.vector_store %arg13[%c24, %c0_158], %219 {strides = array<i32>} : memref<304x128xf32, #tpu.memory_space<vmem>>, vector<256x128xf32>,
      %c280 = arith.constant 280 : index
      %c0_159 = arith.constant 0 : index
      %224 = vector.load %arg13[%c280, %c0_159] : memref<304x128xf32, #tpu.memory_space<vmem>>, vector<24x128xf32>
      tpu.vector_store %arg13[%c280, %c0_159], %221 {strides = array<i32>} : memref<304x128xf32, #tpu.memory_space<vmem>>, vector<24x128xf32>,
    } else {
    }
    %c256_i32 = arith.constant 256 : i32
    %3 = arith.muli %arg1, %c256_i32 : i32
    %4 = tpu.assume_multiple %3, 8 : i32
    %5 = arith.index_cast %4 : i32 to index
    %c0 = arith.constant 0 : index
    %6 = vector.load %arg14[%5, %c0] : memref<256x128xf32, #tpu.memory_space<vmem>>, vector<256x128xf32>
    %c0_1 = arith.constant 0 : index
    %c0_2 = arith.constant 0 : index
    %7 = vector.load %arg9[%c0_1, %c0_2] : memref<128x128xf32, #tpu.memory_space<vmem>>, vector<128x128xf32>
    %cst = arith.constant dense<0.000000e+00> : vector<256x128xf32>
    %8 = tpu.matmul %6, %7, %cst {dimension_numbers = #tpu.dot_dimension_numbers<[1], [0], [0], [1], [0, 0, 1, 1], [], []>} : vector<256x128xf32>, vector<128x128xf32>, vector<256x128xf32> -> vector<256x128xf32>
    %c0_3 = arith.constant 0 : index
    %c0_4 = arith.constant 0 : index
    %9 = vector.load %arg10[%c0_3, %c0_4] : memref<1x128xf32, #tpu.memory_space<vmem>>, vector<1x128xf32>
    %10 = vector.broadcast %9 : vector<1x128xf32> to vector<256x128xf32>
    %11 = arith.addf %8, %10 : vector<256x128xf32>
    %12 = tpu.iota {dimensions = array<i32: 0>} : vector<256x128xi32>
    %c16_i32 = arith.constant 16 : i32
    %c0_i32_5 = arith.constant 0 : i32
    %13 = arith.cmpi eq, %c16_i32, %c0_i32_5 : i32
    %c1_i32 = arith.constant 1 : i32
    %14 = arith.select %13, %c1_i32, %c16_i32 : i32
    %15 = vector.broadcast %14 : i32 to vector<256x128xi32>
    %16 = arith.remsi %12, %15 : vector<256x128xi32>
    %c0_i32_6 = arith.constant 0 : i32
    %17 = vector.broadcast %c0_i32_6 : i32 to vector<256x128xi32>
    %18 = arith.cmpi ne, %16, %17 : vector<256x128xi32>
    %c0_i32_7 = arith.constant 0 : i32
    %19 = vector.broadcast %c0_i32_7 : i32 to vector<256x128xi32>
    %20 = arith.cmpi slt, %16, %19 : vector<256x128xi32>
    %c0_i32_8 = arith.constant 0 : i32
    %21 = arith.cmpi slt, %14, %c0_i32_8 : i32
    %22 = vector.broadcast %21 : i1 to vector<256x128xi1>
    %23 = vector.broadcast %22 : vector<256x128xi1> to vector<256x128xi1>
    %24 = arith.xori %20, %23 : vector<256x128xi1>
    %25 = arith.andi %24, %18 : vector<256x128xi1>
    %26 = vector.broadcast %14 : i32 to vector<256x128xi32>
    %27 = arith.addi %16, %26 : vector<256x128xi32>
    %28 = arith.select %25, %27, %16 : vector<256x128xi1>, vector<256x128xi32>
    %c0_i32_9 = arith.constant 0 : i32
    %29 = vector.broadcast %c0_i32_9 : i32 to vector<256x128xi32>
    %30 = arith.cmpi ne, %28, %29 : vector<256x128xi32>
    %c15_i32 = arith.constant 15 : i32
    %31 = vector.broadcast %c15_i32 : i32 to vector<256x128xi32>
    %32 = arith.cmpi ne, %28, %31 : vector<256x128xi32>
    %c7_i32 = arith.constant 7 : i32
    %33 = arith.addi %3, %c7_i32 : i32
    %34 = arith.index_cast %33 : i32 to index
    %c0_10 = arith.constant 0 : index
    %35 = vector.load %arg13[%34, %c0_10] : memref<304x128xf32, #tpu.memory_space<vmem>>, vector<256x128xf32>
    %cst_11 = arith.constant 0.000000e+00 : f32
    %36 = vector.broadcast %cst_11 : f32 to vector<256x128xf32>
    %37 = arith.select %30, %35, %36 : vector<256x128xi1>, vector<256x128xf32>
    %c0_12 = arith.constant 0 : index
    %c0_13 = arith.constant 0 : index
    %c0_14 = arith.constant 0 : index
    %c0_15 = arith.constant 0 : index
    %38 = vector.load %arg8[%c0_12, %c0_13, %c0_14, %c0_15] : memref<4x4x128x128xf32, #tpu.memory_space<vmem>>, vector<1x1x128x128xf32>
    %39 = vector.shape_cast %38 : vector<1x1x128x128xf32> to vector<128x128xf32>
    %cst_16 = arith.constant dense<0.000000e+00> : vector<256x128xf32>
    %40 = tpu.matmul %37, %39, %cst_16 {dimension_numbers = #tpu.dot_dimension_numbers<[1], [0], [0], [1], [0, 0, 1, 1], [], []>} : vector<256x128xf32>, vector<128x128xf32>, vector<256x128xf32> -> vector<256x128xf32>
    %c8_i32 = arith.constant 8 : i32
    %41 = arith.addi %3, %c8_i32 : i32
    %42 = tpu.assume_multiple %41, 8 : i32
    %43 = arith.index_cast %42 : i32 to index
    %c0_17 = arith.constant 0 : index
    %44 = vector.load %arg13[%43, %c0_17] : memref<304x128xf32, #tpu.memory_space<vmem>>, vector<256x128xf32>
    %c0_18 = arith.constant 0 : index
    %c1 = arith.constant 1 : index
    %c0_19 = arith.constant 0 : index
    %c0_20 = arith.constant 0 : index
    %45 = vector.load %arg8[%c0_18, %c1, %c0_19, %c0_20] : memref<4x4x128x128xf32, #tpu.memory_space<vmem>>, vector<1x1x128x128xf32>
    %46 = vector.shape_cast %45 : vector<1x1x128x128xf32> to vector<128x128xf32>
    %cst_21 = arith.constant dense<0.000000e+00> : vector<256x128xf32>
    %47 = tpu.matmul %44, %46, %cst_21 {dimension_numbers = #tpu.dot_dimension_numbers<[1], [0], [0], [1], [0, 0, 1, 1], [], []>} : vector<256x128xf32>, vector<128x128xf32>, vector<256x128xf32> -> vector<256x128xf32>
    %48 = arith.addf %40, %47 : vector<256x128xf32>
    %c1_22 = arith.constant 1 : index
    %c0_23 = arith.constant 0 : index
    %c0_24 = arith.constant 0 : index
    %c0_25 = arith.constant 0 : index
    %49 = vector.load %arg8[%c1_22, %c0_23, %c0_24, %c0_25] : memref<4x4x128x128xf32, #tpu.memory_space<vmem>>, vector<1x1x128x128xf32>
    %50 = vector.shape_cast %49 : vector<1x1x128x128xf32> to vector<128x128xf32>
    %cst_26 = arith.constant dense<0.000000e+00> : vector<256x128xf32>
    %51 = tpu.matmul %44, %50, %cst_26 {dimension_numbers = #tpu.dot_dimension_numbers<[1], [0], [0], [1], [0, 0, 1, 1], [], []>} : vector<256x128xf32>, vector<128x128xf32>, vector<256x128xf32> -> vector<256x128xf32>
    %c9_i32 = arith.constant 9 : i32
    %52 = arith.addi %3, %c9_i32 : i32
    %53 = arith.index_cast %52 : i32 to index
    %c0_27 = arith.constant 0 : index
    %54 = vector.load %arg13[%53, %c0_27] : memref<304x128xf32, #tpu.memory_space<vmem>>, vector<256x128xf32>
    %cst_28 = arith.constant 0.000000e+00 : f32
    %55 = vector.broadcast %cst_28 : f32 to vector<256x128xf32>
    %56 = arith.select %32, %54, %55 : vector<256x128xi1>, vector<256x128xf32>
    %c1_29 = arith.constant 1 : index
    %c1_30 = arith.constant 1 : index
    %c0_31 = arith.constant 0 : index
    %c0_32 = arith.constant 0 : index
    %57 = vector.load %arg8[%c1_29, %c1_30, %c0_31, %c0_32] : memref<4x4x128x128xf32, #tpu.memory_space<vmem>>, vector<1x1x128x128xf32>
    %58 = vector.shape_cast %57 : vector<1x1x128x128xf32> to vector<128x128xf32>
    %cst_33 = arith.constant dense<0.000000e+00> : vector<256x128xf32>
    %59 = tpu.matmul %56, %58, %cst_33 {dimension_numbers = #tpu.dot_dimension_numbers<[1], [0], [0], [1], [0, 0, 1, 1], [], []>} : vector<256x128xf32>, vector<128x128xf32>, vector<256x128xf32> -> vector<256x128xf32>
    %60 = arith.addf %51, %59 : vector<256x128xf32>
    %c23_i32 = arith.constant 23 : i32
    %61 = arith.addi %3, %c23_i32 : i32
    %62 = arith.index_cast %61 : i32 to index
    %c0_34 = arith.constant 0 : index
    %63 = vector.load %arg13[%62, %c0_34] : memref<304x128xf32, #tpu.memory_space<vmem>>, vector<256x128xf32>
    %cst_35 = arith.constant 0.000000e+00 : f32
    %64 = vector.broadcast %cst_35 : f32 to vector<256x128xf32>
    %65 = arith.select %30, %63, %64 : vector<256x128xi1>, vector<256x128xf32>
    %c0_36 = arith.constant 0 : index
    %c2 = arith.constant 2 : index
    %c0_37 = arith.constant 0 : index
    %c0_38 = arith.constant 0 : index
    %66 = vector.load %arg8[%c0_36, %c2, %c0_37, %c0_38] : memref<4x4x128x128xf32, #tpu.memory_space<vmem>>, vector<1x1x128x128xf32>
    %67 = vector.shape_cast %66 : vector<1x1x128x128xf32> to vector<128x128xf32>
    %cst_39 = arith.constant dense<0.000000e+00> : vector<256x128xf32>
    %68 = tpu.matmul %65, %67, %cst_39 {dimension_numbers = #tpu.dot_dimension_numbers<[1], [0], [0], [1], [0, 0, 1, 1], [], []>} : vector<256x128xf32>, vector<128x128xf32>, vector<256x128xf32> -> vector<256x128xf32>
    %69 = arith.addf %48, %68 : vector<256x128xf32>
    %c2_40 = arith.constant 2 : index
    %c0_41 = arith.constant 0 : index
    %c0_42 = arith.constant 0 : index
    %c0_43 = arith.constant 0 : index
    %70 = vector.load %arg8[%c2_40, %c0_41, %c0_42, %c0_43] : memref<4x4x128x128xf32, #tpu.memory_space<vmem>>, vector<1x1x128x128xf32>
    %71 = vector.shape_cast %70 : vector<1x1x128x128xf32> to vector<128x128xf32>
    %cst_44 = arith.constant dense<0.000000e+00> : vector<256x128xf32>
    %72 = tpu.matmul %65, %71, %cst_44 {dimension_numbers = #tpu.dot_dimension_numbers<[1], [0], [0], [1], [0, 0, 1, 1], [], []>} : vector<256x128xf32>, vector<128x128xf32>, vector<256x128xf32> -> vector<256x128xf32>
    %c24_i32 = arith.constant 24 : i32
    %73 = arith.addi %3, %c24_i32 : i32
    %74 = tpu.assume_multiple %73, 8 : i32
    %75 = arith.index_cast %74 : i32 to index
    %c0_45 = arith.constant 0 : index
    %76 = vector.load %arg13[%75, %c0_45] : memref<304x128xf32, #tpu.memory_space<vmem>>, vector<256x128xf32>
    %c0_46 = arith.constant 0 : index
    %c3 = arith.constant 3 : index
    %c0_47 = arith.constant 0 : index
    %c0_48 = arith.constant 0 : index
    %77 = vector.load %arg8[%c0_46, %c3, %c0_47, %c0_48] : memref<4x4x128x128xf32, #tpu.memory_space<vmem>>, vector<1x1x128x128xf32>
    %78 = vector.shape_cast %77 : vector<1x1x128x128xf32> to vector<128x128xf32>
    %cst_49 = arith.constant dense<0.000000e+00> : vector<256x128xf32>
    %79 = tpu.matmul %76, %78, %cst_49 {dimension_numbers = #tpu.dot_dimension_numbers<[1], [0], [0], [1], [0, 0, 1, 1], [], []>} : vector<256x128xf32>, vector<128x128xf32>, vector<256x128xf32> -> vector<256x128xf32>
    %80 = arith.addf %69, %79 : vector<256x128xf32>
    %c1_50 = arith.constant 1 : index
    %c2_51 = arith.constant 2 : index
    %c0_52 = arith.constant 0 : index
    %c0_53 = arith.constant 0 : index
    %81 = vector.load %arg8[%c1_50, %c2_51, %c0_52, %c0_53] : memref<4x4x128x128xf32, #tpu.memory_space<vmem>>, vector<1x1x128x128xf32>
    %82 = vector.shape_cast %81 : vector<1x1x128x128xf32> to vector<128x128xf32>
    %cst_54 = arith.constant dense<0.000000e+00> : vector<256x128xf32>
    %83 = tpu.matmul %76, %82, %cst_54 {dimension_numbers = #tpu.dot_dimension_numbers<[1], [0], [0], [1], [0, 0, 1, 1], [], []>} : vector<256x128xf32>, vector<128x128xf32>, vector<256x128xf32> -> vector<256x128xf32>
    %84 = arith.addf %60, %83 : vector<256x128xf32>
    %c2_55 = arith.constant 2 : index
    %c1_56 = arith.constant 1 : index
    %c0_57 = arith.constant 0 : index
    %c0_58 = arith.constant 0 : index
    %85 = vector.load %arg8[%c2_55, %c1_56, %c0_57, %c0_58] : memref<4x4x128x128xf32, #tpu.memory_space<vmem>>, vector<1x1x128x128xf32>
    %86 = vector.shape_cast %85 : vector<1x1x128x128xf32> to vector<128x128xf32>
    %cst_59 = arith.constant dense<0.000000e+00> : vector<256x128xf32>
    %87 = tpu.matmul %76, %86, %cst_59 {dimension_numbers = #tpu.dot_dimension_numbers<[1], [0], [0], [1], [0, 0, 1, 1], [], []>} : vector<256x128xf32>, vector<128x128xf32>, vector<256x128xf32> -> vector<256x128xf32>
    %88 = arith.addf %72, %87 : vector<256x128xf32>
    %c3_60 = arith.constant 3 : index
    %c0_61 = arith.constant 0 : index
    %c0_62 = arith.constant 0 : index
    %c0_63 = arith.constant 0 : index
    %89 = vector.load %arg8[%c3_60, %c0_61, %c0_62, %c0_63] : memref<4x4x128x128xf32, #tpu.memory_space<vmem>>, vector<1x1x128x128xf32>
    %90 = vector.shape_cast %89 : vector<1x1x128x128xf32> to vector<128x128xf32>
    %cst_64 = arith.constant dense<0.000000e+00> : vector<256x128xf32>
    %91 = tpu.matmul %76, %90, %cst_64 {dimension_numbers = #tpu.dot_dimension_numbers<[1], [0], [0], [1], [0, 0, 1, 1], [], []>} : vector<256x128xf32>, vector<128x128xf32>, vector<256x128xf32> -> vector<256x128xf32>
    %c25_i32 = arith.constant 25 : i32
    %92 = arith.addi %3, %c25_i32 : i32
    %93 = arith.index_cast %92 : i32 to index
    %c0_65 = arith.constant 0 : index
    %94 = vector.load %arg13[%93, %c0_65] : memref<304x128xf32, #tpu.memory_space<vmem>>, vector<256x128xf32>
    %cst_66 = arith.constant 0.000000e+00 : f32
    %95 = vector.broadcast %cst_66 : f32 to vector<256x128xf32>
    %96 = arith.select %32, %94, %95 : vector<256x128xi1>, vector<256x128xf32>
    %c1_67 = arith.constant 1 : index
    %c3_68 = arith.constant 3 : index
    %c0_69 = arith.constant 0 : index
    %c0_70 = arith.constant 0 : index
    %97 = vector.load %arg8[%c1_67, %c3_68, %c0_69, %c0_70] : memref<4x4x128x128xf32, #tpu.memory_space<vmem>>, vector<1x1x128x128xf32>
    %98 = vector.shape_cast %97 : vector<1x1x128x128xf32> to vector<128x128xf32>
    %cst_71 = arith.constant dense<0.000000e+00> : vector<256x128xf32>
    %99 = tpu.matmul %96, %98, %cst_71 {dimension_numbers = #tpu.dot_dimension_numbers<[1], [0], [0], [1], [0, 0, 1, 1], [], []>} : vector<256x128xf32>, vector<128x128xf32>, vector<256x128xf32> -> vector<256x128xf32>
    %100 = arith.addf %84, %99 : vector<256x128xf32>
    %c3_72 = arith.constant 3 : index
    %c1_73 = arith.constant 1 : index
    %c0_74 = arith.constant 0 : index
    %c0_75 = arith.constant 0 : index
    %101 = vector.load %arg8[%c3_72, %c1_73, %c0_74, %c0_75] : memref<4x4x128x128xf32, #tpu.memory_space<vmem>>, vector<1x1x128x128xf32>
    %102 = vector.shape_cast %101 : vector<1x1x128x128xf32> to vector<128x128xf32>
    %cst_76 = arith.constant dense<0.000000e+00> : vector<256x128xf32>
    %103 = tpu.matmul %96, %102, %cst_76 {dimension_numbers = #tpu.dot_dimension_numbers<[1], [0], [0], [1], [0, 0, 1, 1], [], []>} : vector<256x128xf32>, vector<128x128xf32>, vector<256x128xf32> -> vector<256x128xf32>
    %104 = arith.addf %91, %103 : vector<256x128xf32>
    %c39_i32 = arith.constant 39 : i32
    %105 = arith.addi %3, %c39_i32 : i32
    %106 = arith.index_cast %105 : i32 to index
    %c0_77 = arith.constant 0 : index
    %107 = vector.load %arg13[%106, %c0_77] : memref<304x128xf32, #tpu.memory_space<vmem>>, vector<256x128xf32>
    %cst_78 = arith.constant 0.000000e+00 : f32
    %108 = vector.broadcast %cst_78 : f32 to vector<256x128xf32>
    %109 = arith.select %30, %107, %108 : vector<256x128xi1>, vector<256x128xf32>
    %c2_79 = arith.constant 2 : index
    %c2_80 = arith.constant 2 : index
    %c0_81 = arith.constant 0 : index
    %c0_82 = arith.constant 0 : index
    %110 = vector.load %arg8[%c2_79, %c2_80, %c0_81, %c0_82] : memref<4x4x128x128xf32, #tpu.memory_space<vmem>>, vector<1x1x128x128xf32>
    %111 = vector.shape_cast %110 : vector<1x1x128x128xf32> to vector<128x128xf32>
    %cst_83 = arith.constant dense<0.000000e+00> : vector<256x128xf32>
    %112 = tpu.matmul %109, %111, %cst_83 {dimension_numbers = #tpu.dot_dimension_numbers<[1], [0], [0], [1], [0, 0, 1, 1], [], []>} : vector<256x128xf32>, vector<128x128xf32>, vector<256x128xf32> -> vector<256x128xf32>
    %113 = arith.addf %88, %112 : vector<256x128xf32>
    %c40_i32 = arith.constant 40 : i32
    %114 = arith.addi %3, %c40_i32 : i32
    %115 = tpu.assume_multiple %114, 8 : i32
    %116 = arith.index_cast %115 : i32 to index
    %c0_84 = arith.constant 0 : index
    %117 = vector.load %arg13[%116, %c0_84] : memref<304x128xf32, #tpu.memory_space<vmem>>, vector<256x128xf32>
    %c2_85 = arith.constant 2 : index
    %c3_86 = arith.constant 3 : index
    %c0_87 = arith.constant 0 : index
    %c0_88 = arith.constant 0 : index
    %118 = vector.load %arg8[%c2_85, %c3_86, %c0_87, %c0_88] : memref<4x4x128x128xf32, #tpu.memory_space<vmem>>, vector<1x1x128x128xf32>
    %119 = vector.shape_cast %118 : vector<1x1x128x128xf32> to vector<128x128xf32>
    %cst_89 = arith.constant dense<0.000000e+00> : vector<256x128xf32>
    %120 = tpu.matmul %117, %119, %cst_89 {dimension_numbers = #tpu.dot_dimension_numbers<[1], [0], [0], [1], [0, 0, 1, 1], [], []>} : vector<256x128xf32>, vector<128x128xf32>, vector<256x128xf32> -> vector<256x128xf32>
    %121 = arith.addf %113, %120 : vector<256x128xf32>
    %c3_90 = arith.constant 3 : index
    %c2_91 = arith.constant 2 : index
    %c0_92 = arith.constant 0 : index
    %c0_93 = arith.constant 0 : index
    %122 = vector.load %arg8[%c3_90, %c2_91, %c0_92, %c0_93] : memref<4x4x128x128xf32, #tpu.memory_space<vmem>>, vector<1x1x128x128xf32>
    %123 = vector.shape_cast %122 : vector<1x1x128x128xf32> to vector<128x128xf32>
    %cst_94 = arith.constant dense<0.000000e+00> : vector<256x128xf32>
    %124 = tpu.matmul %117, %123, %cst_94 {dimension_numbers = #tpu.dot_dimension_numbers<[1], [0], [0], [1], [0, 0, 1, 1], [], []>} : vector<256x128xf32>, vector<128x128xf32>, vector<256x128xf32> -> vector<256x128xf32>
    %125 = arith.addf %104, %124 : vector<256x128xf32>
    %c41_i32 = arith.constant 41 : i32
    %126 = arith.addi %3, %c41_i32 : i32
    %127 = arith.index_cast %126 : i32 to index
    %c0_95 = arith.constant 0 : index
    %128 = vector.load %arg13[%127, %c0_95] : memref<304x128xf32, #tpu.memory_space<vmem>>, vector<256x128xf32>
    %cst_96 = arith.constant 0.000000e+00 : f32
    %129 = vector.broadcast %cst_96 : f32 to vector<256x128xf32>
    %130 = arith.select %32, %128, %129 : vector<256x128xi1>, vector<256x128xf32>
    %c3_97 = arith.constant 3 : index
    %c3_98 = arith.constant 3 : index
    %c0_99 = arith.constant 0 : index
    %c0_100 = arith.constant 0 : index
    %131 = vector.load %arg8[%c3_97, %c3_98, %c0_99, %c0_100] : memref<4x4x128x128xf32, #tpu.memory_space<vmem>>, vector<1x1x128x128xf32>
    %132 = vector.shape_cast %131 : vector<1x1x128x128xf32> to vector<128x128xf32>
    %cst_101 = arith.constant dense<0.000000e+00> : vector<256x128xf32>
    %133 = tpu.matmul %130, %132, %cst_101 {dimension_numbers = #tpu.dot_dimension_numbers<[1], [0], [0], [1], [0, 0, 1, 1], [], []>} : vector<256x128xf32>, vector<128x128xf32>, vector<256x128xf32> -> vector<256x128xf32>
    %134 = arith.addf %125, %133 : vector<256x128xf32>
    %135 = arith.addf %80, %11 : vector<256x128xf32>
    %136 = vector.shape_cast %135 : vector<256x128xf32> to vector<16x16x128xf32>
    %c0_102 = arith.constant 0 : index
    %c0_103 = arith.constant 0 : index
    %c0_104 = arith.constant 0 : index
    %c0_105 = arith.constant 0 : index
    %c0_106 = arith.constant 0 : index
    %137 = vector.load %arg12[%c0_102, %c0_103, %c0_104, %c0_105, %c0_106] : memref<1x16x2x16x256xf32, #tpu.memory_space<vmem>>, vector<1x16x1x16x128xf32>
    %138 = vector.shape_cast %137 : vector<1x16x1x16x128xf32> to vector<16x16x128xf32>
    %139 = vector.shape_cast %136 : vector<16x16x128xf32> to vector<1x16x1x16x128xf32>
    tpu.vector_store %arg12[%c0_102, %c0_103, %c0_104, %c0_105, %c0_106], %139 {strides = array<i32>} : memref<1x16x2x16x256xf32, #tpu.memory_space<vmem>>, vector<1x16x1x16x128xf32>,
    %140 = arith.addf %100, %11 : vector<256x128xf32>
    %141 = vector.shape_cast %140 : vector<256x128xf32> to vector<16x16x128xf32>
    %c0_107 = arith.constant 0 : index
    %c0_108 = arith.constant 0 : index
    %c0_109 = arith.constant 0 : index
    %c0_110 = arith.constant 0 : index
    %c128 = arith.constant 128 : index
    %142 = vector.load %arg12[%c0_107, %c0_108, %c0_109, %c0_110, %c128] : memref<1x16x2x16x256xf32, #tpu.memory_space<vmem>>, vector<1x16x1x16x128xf32>
    %143 = vector.shape_cast %142 : vector<1x16x1x16x128xf32> to vector<16x16x128xf32>
    %144 = vector.shape_cast %141 : vector<16x16x128xf32> to vector<1x16x1x16x128xf32>
    tpu.vector_store %arg12[%c0_107, %c0_108, %c0_109, %c0_110, %c128], %144 {strides = array<i32>} : memref<1x16x2x16x256xf32, #tpu.memory_space<vmem>>, vector<1x16x1x16x128xf32>,
    %145 = arith.addf %121, %11 : vector<256x128xf32>
    %146 = vector.shape_cast %145 : vector<256x128xf32> to vector<16x16x128xf32>
    %c0_111 = arith.constant 0 : index
    %c0_112 = arith.constant 0 : index
    %c1_113 = arith.constant 1 : index
    %c0_114 = arith.constant 0 : index
    %c0_115 = arith.constant 0 : index
    %147 = vector.load %arg12[%c0_111, %c0_112, %c1_113, %c0_114, %c0_115] : memref<1x16x2x16x256xf32, #tpu.memory_space<vmem>>, vector<1x16x1x16x128xf32>
    %148 = vector.shape_cast %147 : vector<1x16x1x16x128xf32> to vector<16x16x128xf32>
    %149 = vector.shape_cast %146 : vector<16x16x128xf32> to vector<1x16x1x16x128xf32>
    tpu.vector_store %arg12[%c0_111, %c0_112, %c1_113, %c0_114, %c0_115], %149 {strides = array<i32>} : memref<1x16x2x16x256xf32, #tpu.memory_space<vmem>>, vector<1x16x1x16x128xf32>,
    %150 = arith.addf %134, %11 : vector<256x128xf32>
    %151 = vector.shape_cast %150 : vector<256x128xf32> to vector<16x16x128xf32>
    %c0_116 = arith.constant 0 : index
    %c0_117 = arith.constant 0 : index
    %c1_118 = arith.constant 1 : index
    %c0_119 = arith.constant 0 : index
    %c128_120 = arith.constant 128 : index
    %152 = vector.load %arg12[%c0_116, %c0_117, %c1_118, %c0_119, %c128_120] : memref<1x16x2x16x256xf32, #tpu.memory_space<vmem>>, vector<1x16x1x16x128xf32>
    %153 = vector.shape_cast %152 : vector<1x16x1x16x128xf32> to vector<16x16x128xf32>
    %154 = vector.shape_cast %151 : vector<16x16x128xf32> to vector<1x16x1x16x128xf32>
    tpu.vector_store %arg12[%c0_116, %c0_117, %c1_118, %c0_119, %c128_120], %154 {strides = array<i32>} : memref<1x16x2x16x256xf32, #tpu.memory_space<vmem>>, vector<1x16x1x16x128xf32>,
    return
  }
  func.func @transform_0(%arg0: i32, %arg1: i32) -> (i32, i32, i32) {
    %c0_i32 = arith.constant 0 : i32
    %c0_i32_0 = arith.constant 0 : i32
    %c0_i32_1 = arith.constant 0 : i32
    return %arg0, %c0_i32, %c0_i32_0 : i32, i32, i32
  }
  func.func @transform_1(%arg0: i32, %arg1: i32) -> (i32, i32, i32) {
    %c0_i32 = arith.constant 0 : i32
    %c0_i32_0 = arith.constant 0 : i32
    %c0_i32_1 = arith.constant 0 : i32
    return %arg0, %c0_i32, %c0_i32_0 : i32, i32, i32
  }
  func.func @transform_2(%arg0: i32, %arg1: i32) -> (i32, i32) {
    %c0_i32 = arith.constant 0 : i32
    %c0_i32_0 = arith.constant 0 : i32
    %c0_i32_1 = arith.constant 0 : i32
    return %c0_i32, %c0_i32_0 : i32, i32
  }
  func.func @transform_3(%arg0: i32, %arg1: i32) -> (i32, i32) {
    %c0_i32 = arith.constant 0 : i32
    %c0_i32_0 = arith.constant 0 : i32
    %c0_i32_1 = arith.constant 0 : i32
    return %c0_i32, %c0_i32_0 : i32, i32
  }
  func.func @transform_4(%arg0: i32, %arg1: i32) -> (i32, i32) {
    %c0_i32 = arith.constant 0 : i32
    %c0_i32_0 = arith.constant 0 : i32
    %c0_i32_1 = arith.constant 0 : i32
    return %c0_i32, %c0_i32_0 : i32, i32
  }
  func.func @transform_5(%arg0: i32, %arg1: i32) -> (i32, i32) {
    %c0_i32 = arith.constant 0 : i32
    %c0_i32_0 = arith.constant 0 : i32
    %c0_i32_1 = arith.constant 0 : i32
    return %c0_i32, %c0_i32_0 : i32, i32
  }
  func.func @transform_6(%arg0: i32, %arg1: i32) -> (i32, i32, i32, i32) {
    %c0_i32 = arith.constant 0 : i32
    %c0_i32_0 = arith.constant 0 : i32
    %c0_i32_1 = arith.constant 0 : i32
    %c0_i32_2 = arith.constant 0 : i32
    %c0_i32_3 = arith.constant 0 : i32
    return %c0_i32, %c0_i32_0, %c0_i32_1, %c0_i32_2 : i32, i32, i32, i32
  }
  func.func @transform_7(%arg0: i32, %arg1: i32) -> (i32, i32) {
    %c0_i32 = arith.constant 0 : i32
    %c0_i32_0 = arith.constant 0 : i32
    %c0_i32_1 = arith.constant 0 : i32
    return %c0_i32, %c0_i32_0 : i32, i32
  }
  func.func @transform_8(%arg0: i32, %arg1: i32) -> (i32, i32) {
    %c0_i32 = arith.constant 0 : i32
    %c0_i32_0 = arith.constant 0 : i32
    %c0_i32_1 = arith.constant 0 : i32
    return %c0_i32, %c0_i32_0 : i32, i32
  }
  func.func @transform_9(%arg0: i32, %arg1: i32) -> (i32, i32) {
    %c0_i32 = arith.constant 0 : i32
    %c0_i32_0 = arith.constant 0 : i32
    %c0_i32_1 = arith.constant 0 : i32
    return %c0_i32, %c0_i32_0 : i32, i32
  }
  func.func @transform_10(%arg0: i32, %arg1: i32) -> (i32, i32, i32, i32, i32) {
    %c0_i32 = arith.constant 0 : i32
    %c0_i32_0 = arith.constant 0 : i32
    %c0_i32_1 = arith.constant 0 : i32
    %c0_i32_2 = arith.constant 0 : i32
    return %arg0, %arg1, %c0_i32, %c0_i32_0, %c0_i32_1 : i32, i32, i32, i32, i32
  }
}

</mosaic_0001>

<llo_original>
// kernel: tpu_custom_call.1
$region0: #{tpu_custom_call.1}
  #allocation0 [shape = 'u32[]', space=smem, size = 0x4, offset = 0x4, fixed_abs, tag = 'smem constant byte address 0x4 - core index']
  #allocation1 [shape = 'u32[144,128]{1,0:T(1,128)}', space=vmem, size = 0x12000, scoped, tag = 'internal scratch']
  #allocation2 [shape = 'f32[304,128]{1,0:T(8,128)}', space=vmem, size = 0x26000, scoped, tag = 'scratch operand']
  #allocation3 [shape = 'f32[256,128]{1,0:T(8,128)}', space=vmem, size = 0x20000, scoped, tag = 'scratch operand']
  %s0 = inlined_call_operand.hbm [shape: f32[2,256,128], index: 0, kind: input, shape index: {}]
  %s1 = inlined_call_operand.vmem [shape: f32[2,1,128], index: 1, kind: input, shape index: {}]
  %s2 = inlined_call_operand.vmem [shape: f32[1,128], index: 2, kind: input, shape index: {}]
  %s3 = inlined_call_operand.vmem [shape: f32[1,128], index: 3, kind: input, shape index: {}]
  %s4 = inlined_call_operand.vmem [shape: f32[1,128], index: 4, kind: input, shape index: {}]
  %s5 = inlined_call_operand.vmem [shape: f32[1,128], index: 5, kind: input, shape index: {}]
  %s6 = inlined_call_operand.hbm [shape: f32[4,4,128,128], index: 6, kind: input, shape index: {}]
  %s7 = inlined_call_operand.hbm [shape: f32[128,128], index: 7, kind: input, shape index: {}]
  %s8 = inlined_call_operand.vmem [shape: f32[1,128], index: 8, kind: input, shape index: {}]
  %s9 = inlined_call_operand.hbm [shape: f32[128,128], index: 9, kind: input, shape index: {}]
  %s10 = inlined_call_operand.hbm [shape: f32[2,16,2,16,256], index: 10, kind: output, shape index: {}]
  %s11 = sld [smem:[#allocation0]]
  $region93: #{tpu_custom_call.1} parent=0
    _
  %s13 = ssub.s32 1, %s11
  %s14 = scalar_select 0, %s13, %s11
  $region1: #{tpu_custom_call.1} parent=0
    #allocation4 [shape = 'u8[262144]{0}', space=vmem, size = 0x40000, scoped, tag = 'input window, operand 0']
    #allocation5 [shape = 's32[2]{0}', space=sflag, size = 0x8, scoped, tag = 'scoped memory for tpu_custom_call.1']
    #allocation6 [shape = 's32[2]{0}', space=sflag, size = 0x8, scoped, tag = 'scoped memory for tpu_custom_call.1']
    #allocation7 [shape = 'u8[1048576]{0}', space=vmem, size = 0x100000, scoped, tag = 'input window, operand 6, single buffered']
    #allocation8 [shape = 's32[1]{0}', space=sflag, size = 0x4, scoped, tag = 'scoped memory for tpu_custom_call.1']
    #allocation9 [shape = 'u8[65536]{0}', space=vmem, size = 0x10000, scoped, tag = 'input window, operand 7, single buffered']
    #allocation10 [shape = 'u8[65536]{0}', space=vmem, size = 0x10000, scoped, tag = 'input window, operand 9, single buffered']
    #allocation11 [shape = 's32[1]{0}', space=sflag, size = 0x4, scoped, tag = 'scoped memory for tpu_custom_call.1']
    #allocation12 [shape = 'u8[1048576]{0}', space=vmem, size = 0x100000, scoped, tag = 'output window, operand 0']
    %15 = vsyncpa [#allocation5], 0
    %s16 = scalar_lea.sflag [#allocation5], 1
    %17 = vsyncpa %s16, 0
    %18 = vsyncpa [#allocation8], 0
    %19 = vsyncpa [#allocation11], 0
    %20 = vsyncpa [#allocation6], 0
    %s21 = scalar_lea.sflag [#allocation6], 1
    %22 = vsyncpa %s21, 0
    loop: start=0, step=1, limit=4
    $region2: #{tpu_custom_call.1} parent=1 // loop_pre_header
      _
    $region3: #{tpu_custom_call.1} parent=1 // loop_header
      %s24 = sphi 0, %s28
      %p25 = scmp.ge.s32.totalorder %s24, 4
      %s31 = sphi 0, %s43
      %s32 = sphi 0, %s39
      %s33 = sphi 0, %s31
      %s34 = sphi 0, %s32
      %s35 = sphi 0, %s33
      %s36 = sphi 0, %s34
      %s46 = sphi 0, %s48
      %s49 = sphi 0, %s46
      %s50 = sphi 0, %s49
      %s66 = sphi 0, %s50
      %s72 = sphi 0, %s74
      %s75 = sphi 0, %s72
      %s76 = sphi 0, %s75
      %s92 = sphi 0, %s76
      %s96 = sphi 0, %s96
      %s98 = sphi 0, %s96
      %s99 = sphi 0, %s98
      %s113 = sphi 0, %s99
      %s117 = sphi 0, %s117
      %s119 = sphi 0, %s117
      %s120 = sphi 0, %s119
      %s134 = sphi 0, %s120
      %s138 = sphi 0, %s138
      %s140 = sphi 0, %s138
      %s141 = sphi 0, %s140
      %s155 = sphi 0, %s141
      %s159 = sphi 0, %s159
      %s161 = sphi 0, %s159
      %s162 = sphi 0, %s161
      %s176 = sphi 0, %s162
      %s180 = sphi 0, %s180
      %s182 = sphi 0, %s180
      %s183 = sphi 0, %s182
      %s197 = sphi 0, %s183
      %s201 = sphi 0, %s201
      %s203 = sphi 0, %s201
      %s204 = sphi 0, %s203
      %s218 = sphi 0, %s204
      %s222 = sphi 0, %s222
      %s224 = sphi 0, %s222
      %s225 = sphi 0, %s224
      %s239 = sphi 0, %s225
      %s243 = sphi 0, %s243
      %s245 = sphi 0, %s243
      %s246 = sphi 0, %s245
      %s260 = sphi 0, %s246
      %s268 = sphi 0, %s270
      %s271 = sphi 0, %s268
      %s272 = sphi 0, %s271
      %s288 = sphi 0, %s272
    $region4: #{tpu_custom_call.1} parent=1 // loop_header_branch
      %27 = sbr.rel (%p25) target = $region8
    $region5: #{tpu_custom_call.1} parent=1 // loop_body
      %s29 = ssub.s32 %s24, 1
      %s30 = ssub.s32 %s24, 2
      %s37 = sadd.s32 1, %s32
      %p38 = scmp.ge.s32.totalorder %s37, 1
      %s39 = scalar_select %p38, 0, %s37
      %s40 = sadd.s32 1, %s31
      %s41 = scalar_select %p38, %s40, %s31
      %p42 = scmp.ge.s32.totalorder %s41, 2
      %s43 = scalar_select %p42, 0, %s41
      %s44 = ssub.s32 %s31, %s43
      %p45 = scmp.eq.s32.totalorder %s44, 0
      %s47 = sadd.s32 %s46, 1
      %s48 = scalar_select %p45, %s46, %s47
      %p51 = pneg %p45
      %p52 = scmp.eq.s32.totalorder %s24, 1
      %p53 = por %p51, %p52
      %p54 = scmp.ne.s32.totalorder %s46, %s49
      %p55 = scmp.eq.s32.totalorder %s24, 0
      %p56 = por %p54, %p55
      %p57 = scmp.ne.s32.totalorder %s46, %s49
      %p58 = scmp.eq.s32.totalorder %s29, 1
      %p59 = por %p57, %p58
      %p60 = scmp.ne.s32.totalorder %s49, %s50
      %p61 = scmp.eq.s32.totalorder %s29, 0
      %p62 = por %p60, %p61
      %p63 = scmp.ne.s32.totalorder %s49, %s50
      %p64 = scmp.eq.s32.totalorder %s30, 1
      %p65 = por %p63, %p64
      %p67 = scmp.ne.s32.totalorder %s50, %s66
      %p68 = scmp.eq.s32.totalorder %s30, 0
      %p69 = por %p67, %p68
      %s70 = ssub.s32 %s31, %s43
      %p71 = scmp.eq.s32.totalorder %s70, 0
      %s73 = sadd.s32 %s72, 1
      %s74 = scalar_select %p71, %s72, %s73
      %p77 = pneg %p71
      %p78 = scmp.eq.s32.totalorder %s24, 1
      %p79 = por %p77, %p78
      %p80 = scmp.ne.s32.totalorder %s72, %s75
      %p81 = scmp.eq.s32.totalorder %s24, 0
      %p82 = por %p80, %p81
      %p83 = scmp.ne.s32.totalorder %s72, %s75
      %p84 = scmp.eq.s32.totalorder %s29, 1
      %p85 = por %p83, %p84
      %p86 = scmp.ne.s32.totalorder %s75, %s76
      %p87 = scmp.eq.s32.totalorder %s29, 0
      %p88 = por %p86, %p87
      %p89 = scmp.ne.s32.totalorder %s75, %s76
      %p90 = scmp.eq.s32.totalorder %s30, 1
      %p91 = por %p89, %p90
      %p93 = scmp.ne.s32.totalorder %s76, %s92
      %p94 = scmp.eq.s32.totalorder %s30, 0
      %p95 = por %p93, %p94
      %s97 = sadd.s32 %s96, 1
      %p100 = scmp.eq.s32.totalorder %s24, 1
      %p101 = scmp.ne.s32.totalorder %s96, %s98
      %p102 = scmp.eq.s32.totalorder %s24, 0
      %p103 = por %p101, %p102
      %p104 = scmp.ne.s32.totalorder %s96, %s98
      %p105 = scmp.eq.s32.totalorder %s29, 1
      %p106 = por %p104, %p105
      %p107 = scmp.ne.s32.totalorder %s98, %s99
      %p108 = scmp.eq.s32.totalorder %s29, 0
      %p109 = por %p107, %p108
      %p110 = scmp.ne.s32.totalorder %s98, %s99
      %p111 = scmp.eq.s32.totalorder %s30, 1
      %p112 = por %p110, %p111
      %p114 = scmp.ne.s32.totalorder %s99, %s113
      %p115 = scmp.eq.s32.totalorder %s30, 0
      %p116 = por %p114, %p115
      %s118 = sadd.s32 %s117, 1
      %p121 = scmp.eq.s32.totalorder %s24, 1
      %p122 = scmp.ne.s32.totalorder %s117, %s119
      %p123 = scmp.eq.s32.totalorder %s24, 0
      %p124 = por %p122, %p123
      %p125 = scmp.ne.s32.totalorder %s117, %s119
      %p126 = scmp.eq.s32.totalorder %s29, 1
      %p127 = por %p125, %p126
      %p128 = scmp.ne.s32.totalorder %s119, %s120
      %p129 = scmp.eq.s32.totalorder %s29, 0
      %p130 = por %p128, %p129
      %p131 = scmp.ne.s32.totalorder %s119, %s120
      %p132 = scmp.eq.s32.totalorder %s30, 1
      %p133 = por %p131, %p132
      %p135 = scmp.ne.s32.totalorder %s120, %s134
      %p136 = scmp.eq.s32.totalorder %s30, 0
      %p137 = por %p135, %p136
      %s139 = sadd.s32 %s138, 1
      %p142 = scmp.eq.s32.totalorder %s24, 1
      %p143 = scmp.ne.s32.totalorder %s138, %s140
      %p144 = scmp.eq.s32.totalorder %s24, 0
      %p145 = por %p143, %p144
      %p146 = scmp.ne.s32.totalorder %s138, %s140
      %p147 = scmp.eq.s32.totalorder %s29, 1
      %p148 = por %p146, %p147
      %p149 = scmp.ne.s32.totalorder %s140, %s141
      %p150 = scmp.eq.s32.totalorder %s29, 0
      %p151 = por %p149, %p150
      %p152 = scmp.ne.s32.totalorder %s140, %s141
      %p153 = scmp.eq.s32.totalorder %s30, 1
      %p154 = por %p152, %p153
      %p156 = scmp.ne.s32.totalorder %s141, %s155
      %p157 = scmp.eq.s32.totalorder %s30, 0
      %p158 = por %p156, %p157
      %s160 = sadd.s32 %s159, 1
      %p163 = scmp.eq.s32.totalorder %s24, 1
      %p164 = scmp.ne.s32.totalorder %s159, %s161
      %p165 = scmp.eq.s32.totalorder %s24, 0
      %p166 = por %p164, %p165
      %p167 = scmp.ne.s32.totalorder %s159, %s161
      %p168 = scmp.eq.s32.totalorder %s29, 1
      %p169 = por %p167, %p168
      %p170 = scmp.ne.s32.totalorder %s161, %s162
      %p171 = scmp.eq.s32.totalorder %s29, 0
      %p172 = por %p170, %p171
      %p173 = scmp.ne.s32.totalorder %s161, %s162
      %p174 = scmp.eq.s32.totalorder %s30, 1
      %p175 = por %p173, %p174
      %p177 = scmp.ne.s32.totalorder %s162, %s176
      %p178 = scmp.eq.s32.totalorder %s30, 0
      %p179 = por %p177, %p178
      %s181 = sadd.s32 %s180, 1
      %p184 = scmp.eq.s32.totalorder %s24, 1
      %p185 = scmp.ne.s32.totalorder %s180, %s182
      %p186 = scmp.eq.s32.totalorder %s24, 0
      %p187 = por %p185, %p186
      %p188 = scmp.ne.s32.totalorder %s180, %s182
      %p189 = scmp.eq.s32.totalorder %s29, 1
      %p190 = por %p188, %p189
      %p191 = scmp.ne.s32.totalorder %s182, %s183
      %p192 = scmp.eq.s32.totalorder %s29, 0
      %p193 = por %p191, %p192
      %p194 = scmp.ne.s32.totalorder %s182, %s183
      %p195 = scmp.eq.s32.totalorder %s30, 1
      %p196 = por %p194, %p195
      %p198 = scmp.ne.s32.totalorder %s183, %s197
      %p199 = scmp.eq.s32.totalorder %s30, 0
      %p200 = por %p198, %p199
      %s202 = sadd.s32 %s201, 1
      %p205 = scmp.eq.s32.totalorder %s24, 1
      %p206 = scmp.ne.s32.totalorder %s201, %s203
      %p207 = scmp.eq.s32.totalorder %s24, 0
      %p208 = por %p206, %p207
      %p209 = scmp.ne.s32.totalorder %s201, %s203
      %p210 = scmp.eq.s32.totalorder %s29, 1
      %p211 = por %p209, %p210
      %p212 = scmp.ne.s32.totalorder %s203, %s204
      %p213 = scmp.eq.s32.totalorder %s29, 0
      %p214 = por %p212, %p213
      %p215 = scmp.ne.s32.totalorder %s203, %s204
      %p216 = scmp.eq.s32.totalorder %s30, 1
      %p217 = por %p215, %p216
      %p219 = scmp.ne.s32.totalorder %s204, %s218
      %p220 = scmp.eq.s32.totalorder %s30, 0
      %p221 = por %p219, %p220
      %s223 = sadd.s32 %s222, 1
      %p226 = scmp.eq.s32.totalorder %s24, 1
      %p227 = scmp.ne.s32.totalorder %s222, %s224
      %p228 = scmp.eq.s32.totalorder %s24, 0
      %p229 = por %p227, %p228
      %p230 = scmp.ne.s32.totalorder %s222, %s224
      %p231 = scmp.eq.s32.totalorder %s29, 1
      %p232 = por %p230, %p231
      %p233 = scmp.ne.s32.totalorder %s224, %s225
      %p234 = scmp.eq.s32.totalorder %s29, 0
      %p235 = por %p233, %p234
      %p236 = scmp.ne.s32.totalorder %s224, %s225
      %p237 = scmp.eq.s32.totalorder %s30, 1
      %p238 = por %p236, %p237
      %p240 = scmp.ne.s32.totalorder %s225, %s239
      %p241 = scmp.eq.s32.totalorder %s30, 0
      %p242 = por %p240, %p241
      %s244 = sadd.s32 %s243, 1
      %p247 = scmp.eq.s32.totalorder %s24, 1
      %p248 = scmp.ne.s32.totalorder %s243, %s245
      %p249 = scmp.eq.s32.totalorder %s24, 0
      %p250 = por %p248, %p249
      %p251 = scmp.ne.s32.totalorder %s243, %s245
      %p252 = scmp.eq.s32.totalorder %s29, 1
      %p253 = por %p251, %p252
      %p254 = scmp.ne.s32.totalorder %s245, %s246
      %p255 = scmp.eq.s32.totalorder %s29, 0
      %p256 = por %p254, %p255
      %p257 = scmp.ne.s32.totalorder %s245, %s246
      %p258 = scmp.eq.s32.totalorder %s30, 1
      %p259 = por %p257, %p258
      %p261 = scmp.ne.s32.totalorder %s246, %s260
      %p262 = scmp.eq.s32.totalorder %s30, 0
      %p263 = por %p261, %p262
      %s264 = ssub.s32 %s31, %s43
      %s265 = ssub.s32 %s32, %s39
      %s266 = sor.u32 %s264, %s265
      %p267 = scmp.eq.s32.totalorder %s266, 0
      %s269 = sadd.s32 %s268, 1
      %s270 = scalar_select %p267, %s268, %s269
      %p273 = pneg %p267
      %p274 = scmp.eq.s32.totalorder %s24, 1
      %p275 = por %p273, %p274
      %p276 = scmp.ne.s32.totalorder %s268, %s271
      %p277 = scmp.eq.s32.totalorder %s24, 0
      %p278 = por %p276, %p277
      %p279 = scmp.ne.s32.totalorder %s268, %s271
      %p280 = scmp.eq.s32.totalorder %s29, 1
      %p281 = por %p279, %p280
      %p282 = scmp.ne.s32.totalorder %s271, %s272
      %p283 = scmp.eq.s32.totalorder %s29, 0
      %p284 = por %p282, %p283
      %p285 = scmp.ne.s32.totalorder %s271, %s272
      %p286 = scmp.eq.s32.totalorder %s30, 1
      %p287 = por %p285, %p286
      %p289 = scmp.ne.s32.totalorder %s272, %s288
      %p290 = scmp.eq.s32.totalorder %s30, 0
      %p291 = por %p289, %p290
      %p292 = scmp.le.s32.totalorder 1, %s24
      %p293 = scmp.lt.s32.totalorder %s24, 3
      %p294 = pnand %p292, %p293
      %p295 = pneg %p294
      // Predicated region
      $region9: #{tpu_custom_call.1} parent=5 // pred_check
        _
      $region10: #{tpu_custom_call.1} parent=5 // pred_check_branch
        %297 = sbr.rel (%p294) target = $region12
      $region11: #{tpu_custom_call.1} parent=5 // pred_region
        %s298 = ssub.s32 %s24, 1
        // Predicated region
        $region13: #{tpu_custom_call.1} parent=11 // pred_check
          %p299 = pneg %p109
        $region14: #{tpu_custom_call.1} parent=11 // pred_check_branch
          %301 = sbr.rel (%p299) target = $region16
        $region15: #{tpu_custom_call.1} parent=11 // pred_region
          _
        $region16: #{tpu_custom_call.1} parent=11 // pred_fallthru
          _
        // Predicated region
        $region17: #{tpu_custom_call.1} parent=11 // pred_check
          %p302 = pneg %p130
        $region18: #{tpu_custom_call.1} parent=11 // pred_check_branch
          %304 = sbr.rel (%p302) target = $region20
        $region19: #{tpu_custom_call.1} parent=11 // pred_region
          _
        $region20: #{tpu_custom_call.1} parent=11 // pred_fallthru
          _
        // Predicated region
        $region21: #{tpu_custom_call.1} parent=11 // pred_check
          %p305 = pneg %p151
        $region22: #{tpu_custom_call.1} parent=11 // pred_check_branch
          %307 = sbr.rel (%p305) target = $region24
        $region23: #{tpu_custom_call.1} parent=11 // pred_region
          _
        $region24: #{tpu_custom_call.1} parent=11 // pred_fallthru
          _
        // Predicated region
        $region25: #{tpu_custom_call.1} parent=11 // pred_check
          %p308 = pneg %p172
        $region26: #{tpu_custom_call.1} parent=11 // pred_check_branch
          %310 = sbr.rel (%p308) target = $region28
        $region27: #{tpu_custom_call.1} parent=11 // pred_region
          _
        $region28: #{tpu_custom_call.1} parent=11 // pred_fallthru
          _
        // Predicated region
        $region29: #{tpu_custom_call.1} parent=11 // pred_check
          %p311 = pneg %p193
        $region30: #{tpu_custom_call.1} parent=11 // pred_check_branch
          %313 = sbr.rel (%p311) target = $region32
        $region31: #{tpu_custom_call.1} parent=11 // pred_region
          %s315 = ssub.s32 32768, 32768
          %316 = vsyncadd [#allocation8], %s315
          %s317 = sshll.u32 [#allocation7], 4
          %s318 = int_to_ptr.vmem [resolvable:$true] %s317
          %323 = dma.hbm_to_vmem [thread:$0]  %s6, 32768, %s318, [#allocation8], 128, 128, 8
        $region32: #{tpu_custom_call.1} parent=11 // pred_fallthru
          _
        // Predicated region
        $region33: #{tpu_custom_call.1} parent=11 // pred_check
          %p324 = pneg %p214
        $region34: #{tpu_custom_call.1} parent=11 // pred_check_branch
          %326 = sbr.rel (%p324) target = $region36
        $region35: #{tpu_custom_call.1} parent=11 // pred_region
          %s328 = ssub.s32 2048, 2048
          %329 = vsyncadd [#allocation8], %s328
          %s330 = sshll.u32 [#allocation9], 4
          %s331 = int_to_ptr.vmem [resolvable:$true] %s330
          %336 = dma.hbm_to_vmem [thread:$0]  %s7, 2048, %s331, [#allocation8], 128, 128, 8
        $region36: #{tpu_custom_call.1} parent=11 // pred_fallthru
          _
        // Predicated region
        $region37: #{tpu_custom_call.1} parent=11 // pred_check
          %p337 = pneg %p235
        $region38: #{tpu_custom_call.1} parent=11 // pred_check_branch
          %339 = sbr.rel (%p337) target = $region40
        $region39: #{tpu_custom_call.1} parent=11 // pred_region
          _
        $region40: #{tpu_custom_call.1} parent=11 // pred_fallthru
          _
        // Predicated region
        $region41: #{tpu_custom_call.1} parent=11 // pred_check
          %p340 = pneg %p256
        $region42: #{tpu_custom_call.1} parent=11 // pred_check_branch
          %342 = sbr.rel (%p340) target = $region44
        $region43: #{tpu_custom_call.1} parent=11 // pred_region
          %s344 = ssub.s32 2048, 2048
          %345 = vsyncadd [#allocation11], %s344
          %s346 = sshll.u32 [#allocation10], 4
          %s347 = int_to_ptr.vmem [resolvable:$true] %s346
          %352 = dma.hbm_to_vmem [thread:$0]  %s9, 2048, %s347, [#allocation11], 128, 128, 8
        $region44: #{tpu_custom_call.1} parent=11 // pred_fallthru
          _
      $region12: #{tpu_custom_call.1} parent=5 // pred_fallthru
        _
      %p353 = scmp.lt.s32.totalorder %s24, 2
      // Predicated region
      $region45: #{tpu_custom_call.1} parent=5 // pred_check
        %p354 = pneg %p353
      $region46: #{tpu_custom_call.1} parent=5 // pred_check_branch
        %356 = sbr.rel (%p354) target = $region48
      $region47: #{tpu_custom_call.1} parent=5 // pred_region
        // Predicated region
        $region49: #{tpu_custom_call.1} parent=47 // pred_check
          %p357 = pneg %p56
        $region50: #{tpu_custom_call.1} parent=47 // pred_check_branch
          %359 = sbr.rel (%p357) target = $region52
        $region51: #{tpu_custom_call.1} parent=47 // pred_region
          %s360 = sand.u32 %s46, 1
          %s361 = scalar_lea.sflag [#allocation5], %s360
          %s362 = sand.u32 %s46, 1
          %s363 = smul.addr %s362, 256
          %s364 = scalar_lea.vmem [#allocation4], %s363
          %s366 = ssub.s32 4096, 4096
          %367 = vsyncadd %s361, %s366
          %s368 = smul.addr %s31, 32
          %s369 = smul.addr %s368, 128
          %s370 = scalar_lea.hbm %s0, %s369
          %s371 = sshll.u32 %s364, 4
          %s372 = int_to_ptr.vmem [resolvable:$true] %s371
          %377 = dma.hbm_to_vmem [thread:$0]  %s370, 4096, %s372, %s361, 128, 128, 8
        $region52: #{tpu_custom_call.1} parent=47 // pred_fallthru
          _
        // Predicated region
        $region53: #{tpu_custom_call.1} parent=47 // pred_check
          %p378 = pneg %p82
        $region54: #{tpu_custom_call.1} parent=47 // pred_check_branch
          %380 = sbr.rel (%p378) target = $region56
        $region55: #{tpu_custom_call.1} parent=47 // pred_region
          %p381 = scmp.lt.s32.totalorder %s31, 1
          %s382 = scalar_select %p381, %s31, 1
          %s383 = scalar_lea.vmem %s1, %s382
        $region56: #{tpu_custom_call.1} parent=47 // pred_fallthru
          _
      $region48: #{tpu_custom_call.1} parent=5 // pred_fallthru
        _
      %p384 = scmp.le.s32.totalorder 1, %s24
      %p385 = scmp.lt.s32.totalorder %s24, 3
      %p386 = pnand %p384, %p385
      %p387 = pneg %p386
      // Predicated region
      $region57: #{tpu_custom_call.1} parent=5 // pred_check
        _
      $region58: #{tpu_custom_call.1} parent=5 // pred_check_branch
        %389 = sbr.rel (%p386) target = $region60
      $region59: #{tpu_custom_call.1} parent=5 // pred_region
        %s390 = ssub.s32 %s24, 1
        %s391 = sand.u32 %s49, 1
        %s392 = scalar_lea.sflag [#allocation5], %s391
        %s393 = sand.u32 %s49, 1
        %s394 = smul.addr %s393, 256
        %s395 = scalar_lea.vmem [#allocation4], %s394
        // Predicated region
        $region61: #{tpu_custom_call.1} parent=59 // pred_check
          %p396 = pneg %p62
        $region62: #{tpu_custom_call.1} parent=59 // pred_check_branch
          %398 = sbr.rel (%p396) target = $region64
        $region63: #{tpu_custom_call.1} parent=59 // pred_region
          %399 = dma.done %s392, 4096
        $region64: #{tpu_custom_call.1} parent=59 // pred_fallthru
          _
        // Predicated region
        $region65: #{tpu_custom_call.1} parent=59 // pred_check
          %p400 = pneg %p193
        $region66: #{tpu_custom_call.1} parent=59 // pred_check_branch
          %402 = sbr.rel (%p400) target = $region68
        $region67: #{tpu_custom_call.1} parent=59 // pred_region
          %403 = dma.done [#allocation8], 32768
        $region68: #{tpu_custom_call.1} parent=59 // pred_fallthru
          _
        // Predicated region
        $region69: #{tpu_custom_call.1} parent=59 // pred_check
          %p404 = pneg %p214
        $region70: #{tpu_custom_call.1} parent=59 // pred_check_branch
          %406 = sbr.rel (%p404) target = $region72
        $region71: #{tpu_custom_call.1} parent=59 // pred_region
          %407 = dma.done [#allocation8], 2048
        $region72: #{tpu_custom_call.1} parent=59 // pred_fallthru
          _
        // Predicated region
        $region73: #{tpu_custom_call.1} parent=59 // pred_check
          %p408 = pneg %p256
        $region74: #{tpu_custom_call.1} parent=59 // pred_check_branch
          %410 = sbr.rel (%p408) target = $region76
        $region75: #{tpu_custom_call.1} parent=59 // pred_region
          %411 = dma.done [#allocation11], 2048
        $region76: #{tpu_custom_call.1} parent=59 // pred_fallthru
          _
        %s412 = sand.u32 %s49, 1
        %s413 = scalar_lea.sflag [#allocation5], %s412
        %s414 = sand.u32 %s49, 1
        %s415 = smul.addr %s414, 256
        %s416 = scalar_lea.vmem [#allocation4], %s415
        %p417 = pneg %p62
        %p418 = pneg %p59
        %p419 = scmp.lt.s32.totalorder %s33, 1
        %s420 = scalar_select %p419, %s33, 1
        %s421 = scalar_lea.vmem %s1, %s420
        %p422 = pneg %p88
        %p423 = pneg %p85
        %p424 = pneg %p109
        %p425 = pneg %p106
        %p426 = pneg %p130
        %p427 = pneg %p127
        %p428 = pneg %p151
        %p429 = pneg %p148
        %p430 = pneg %p172
        %p431 = pneg %p169
        %p432 = pneg %p193
        %p433 = pneg %p190
        %p434 = pneg %p214
        %p435 = pneg %p211
        %p436 = pneg %p235
        %p437 = pneg %p232
        %p438 = pneg %p256
        %p439 = pneg %p253
        %p440 = pneg %p284
        %p441 = pneg %p281
        %s442 = sand.u32 %s271, 1
        %s443 = scalar_lea.sflag [#allocation6], %s442
        %s444 = sand.u32 %s271, 1
        %s445 = smul.addr %s444, 1024
        %s446 = scalar_lea.vmem [#allocation12], %s445
        %p447 = scmp.lt.s32.totalorder %s33, 1
        %s448 = scalar_select %p447, %s33, 1
        %s449 = scalar_lea.vmem %s1, %s448
        %s450 = smul.u32 16, %s34
        %p451 = scmp.eq.s32.totalorder %s34, 0
        // Predicated region
        $region77: #{tpu_custom_call.1} parent=59 // pred_check
          %p452 = pneg %p451
        $region78: #{tpu_custom_call.1} parent=59 // pred_check_branch
          %454 = sbr.rel (%p452) target = $region80
        $region79: #{tpu_custom_call.1} parent=59 // pred_region
          %v455 = vld [vmem:[%s395] sm:$0xff]
          %v456 = vld [vmem:[%s395 + $0x8] sm:$0xff]
          %v457 = vld [vmem:[%s395 + $0x10] sm:$0xff]
          %v458 = vld [vmem:[%s395 + $0x18] sm:$0xff]
          %v459 = vld [vmem:[%s395 + $0x20] sm:$0xff]
          %v460 = vld [vmem:[%s395 + $0x28] sm:$0xff]
          %v461 = vld [vmem:[%s395 + $0x30] sm:$0xff]
          %v462 = vld [vmem:[%s395 + $0x38] sm:$0xff]
          %v463 = vld [vmem:[%s395 + $0x40] sm:$0xff]
          %v464 = vld [vmem:[%s395 + $0x48] sm:$0xff]
          %v465 = vld [vmem:[%s395 + $0x50] sm:$0xff]
          %v466 = vld [vmem:[%s395 + $0x58] sm:$0xff]
          %v467 = vld [vmem:[%s395 + $0x60] sm:$0xff]
          %v468 = vld [vmem:[%s395 + $0x68] sm:$0xff]
          %v469 = vld [vmem:[%s395 + $0x70] sm:$0xff]
          %v470 = vld [vmem:[%s395 + $0x78] sm:$0xff]
          %v471 = vld [vmem:[%s395 + $0x80] sm:$0xff]
          %v472 = vld [vmem:[%s395 + $0x88] sm:$0xff]
          %v473 = vld [vmem:[%s395 + $0x90] sm:$0xff]
          %v474 = vld [vmem:[%s395 + $0x98] sm:$0xff]
          %v475 = vld [vmem:[%s395 + $0xa0] sm:$0xff]
          %v476 = vld [vmem:[%s395 + $0xa8] sm:$0xff]
          %v477 = vld [vmem:[%s395 + $0xb0] sm:$0xff]
          %v478 = vld [vmem:[%s395 + $0xb8] sm:$0xff]
          %v479 = vld [vmem:[%s395 + $0xc0] sm:$0xff]
          %v480 = vld [vmem:[%s395 + $0xc8] sm:$0xff]
          %v481 = vld [vmem:[%s395 + $0xd0] sm:$0xff]
          %v482 = vld [vmem:[%s395 + $0xd8] sm:$0xff]
          %v483 = vld [vmem:[%s395 + $0xe0] sm:$0xff]
          %v484 = vld [vmem:[%s395 + $0xe8] sm:$0xff]
          %v485 = vld [vmem:[%s395 + $0xf0] sm:$0xff]
          %v486 = vld [vmem:[%s395 + $0xf8] sm:$0xff]
          %v487 = vld [vmem:[#allocation10] sm:$0xff]
          %v488 = vld [vmem:[#allocation10 + $0x8] sm:$0xff]
          %v489 = vld [vmem:[#allocation10 + $0x10] sm:$0xff]
          %v490 = vld [vmem:[#allocation10 + $0x18] sm:$0xff]
          %v491 = vld [vmem:[#allocation10 + $0x20] sm:$0xff]
          %v492 = vld [vmem:[#allocation10 + $0x28] sm:$0xff]
          %v493 = vld [vmem:[#allocation10 + $0x30] sm:$0xff]
          %v494 = vld [vmem:[#allocation10 + $0x38] sm:$0xff]
          %v495 = vld [vmem:[#allocation10 + $0x40] sm:$0xff]
          %v496 = vld [vmem:[#allocation10 + $0x48] sm:$0xff]
          %v497 = vld [vmem:[#allocation10 + $0x50] sm:$0xff]
          %v498 = vld [vmem:[#allocation10 + $0x58] sm:$0xff]
          %v499 = vld [vmem:[#allocation10 + $0x60] sm:$0xff]
          %v500 = vld [vmem:[#allocation10 + $0x68] sm:$0xff]
          %v501 = vld [vmem:[#allocation10 + $0x70] sm:$0xff]
          %v502 = vld [vmem:[#allocation10 + $0x78] sm:$0xff]
          %v503 = vld [vmem:[%s2] sm:$0x1]
          %v504 = vld [vmem:[%s3] sm:$0x1]
          %v505 = vadd.f32 %v455, %v456
          %v506 = vadd.f32 %v505, %v457
          %v507 = vadd.f32 %v506, %v458
          %v508 = vadd.f32 %v507, %v459
          %v509 = vadd.f32 %v508, %v460
          %v510 = vadd.f32 %v509, %v461
          %v511 = vadd.f32 %v510, %v462
          %v512 = vadd.f32 %v511, %v463
          %v513 = vadd.f32 %v512, %v464
          %v514 = vadd.f32 %v513, %v465
          %v515 = vadd.f32 %v514, %v466
          %v516 = vadd.f32 %v515, %v467
          %v517 = vadd.f32 %v516, %v468
          %v518 = vadd.f32 %v517, %v469
          %v519 = vadd.f32 %v518, %v470
          %v520 = vadd.f32 %v519, %v471
          %v521 = vadd.f32 %v520, %v472
          %v522 = vadd.f32 %v521, %v473
          %v523 = vadd.f32 %v522, %v474
          %v524 = vadd.f32 %v523, %v475
          %v525 = vadd.f32 %v524, %v476
          %v526 = vadd.f32 %v525, %v477
          %v527 = vadd.f32 %v526, %v478
          %v528 = vadd.f32 %v527, %v479
          %v529 = vadd.f32 %v528, %v480
          %v530 = vadd.f32 %v529, %v481
          %v531 = vadd.f32 %v530, %v482
          %v532 = vadd.f32 %v531, %v483
          %v533 = vadd.f32 %v532, %v484
          %v534 = vadd.f32 %v533, %v485
          %v535 = vadd.f32 %v534, %v486
          %v536 = vrot.slane %v535, 4
          %v537 = vadd.f32 %v535, %v536
          %v538 = vrot.slane %v537, 2
          %v539 = vadd.f32 %v537, %v538
          %v540 = vrot.slane %v539, 1
          %v541 = vadd.f32 %v539, %v540
          %542 = vmatprep.subr.mxu0 0.0
          %543 = vmatpush1.msra.mxu0 %v487
          %544 = vmatprep.subr.mxu0 0.0
          %545 = vmatpush1.msra.mxu0 %v488
          %546 = vmatprep.subr.mxu0 0.0
          %547 = vmatpush1.msra.mxu0 %v489
          %548 = vmatprep.subr.mxu0 0.0
          %549 = vmatpush1.msra.mxu0 %v490
          %550 = vmatprep.subr.mxu0 0.0
          %551 = vmatpush1.msra.mxu0 %v491
          %552 = vmatprep.subr.mxu0 0.0
          %553 = vmatpush1.msra.mxu0 %v492
          %554 = vmatprep.subr.mxu0 0.0
          %555 = vmatpush1.msra.mxu0 %v493
          %556 = vmatprep.subr.mxu0 0.0
          %557 = vmatpush1.msra.mxu0 %v494
          %558 = vmatprep.subr.mxu0 0.0
          %559 = vmatpush1.msra.mxu0 %v495
          %560 = vmatprep.subr.mxu0 0.0
          %561 = vmatpush1.msra.mxu0 %v496
          %562 = vmatprep.subr.mxu0 0.0
          %563 = vmatpush1.msra.mxu0 %v497
          %564 = vmatprep.subr.mxu0 0.0
          %565 = vmatpush1.msra.mxu0 %v498
          %566 = vmatprep.subr.mxu0 0.0
          %567 = vmatpush1.msra.mxu0 %v499
          %568 = vmatprep.subr.mxu0 0.0
          %569 = vmatpush1.msra.mxu0 %v500
          %570 = vmatprep.subr.mxu0 0.0
          %571 = vmatpush1.msra.mxu0 %v501
          %572 = vmatprep.subr.mxu0 0.0
          %573 = vmatpush1.msra.mxu0 %v502
          %574 = vmatprep.subr.mxu0 0.0
          %575 = vmatpush1.msra.mxu0 0.0
          %576 = vmatprep.subr.mxu0 0.0
          %577 = vmatpush1.msra.mxu0 0.0
          %578 = vmatprep.subr.mxu0 0.0
          %579 = vmatpush1.msra.mxu0 0.0
          %580 = vmatprep.subr.mxu0 0.0
          %581 = vmatpush1.msra.mxu0 0.0
          %582 = vmatprep.subr.mxu0 0.0
          %583 = vmatpush1.msra.mxu0 0.0
          %584 = vmatprep.subr.mxu0 0.0
          %585 = vmatpush1.msra.mxu0 0.0
          %586 = vmatprep.subr.mxu0 0.0
          %587 = vmatpush1.msra.mxu0 0.0
          %588 = vmatprep.subr.mxu0 0.0
          %589 = vmatpush1.msra.mxu0 0.0
          %590 = vmatprep.subr.mxu0 0.0
          %591 = vmatpush1.msra.mxu0 0.0
          %592 = vmatprep.subr.mxu0 0.0
          %593 = vmatpush1.msra.mxu0 0.0
          %594 = vmatprep.subr.mxu0 0.0
          %595 = vmatpush1.msra.mxu0 0.0
          %596 = vmatprep.subr.mxu0 0.0
          %597 = vmatpush1.msra.mxu0 0.0
          %598 = vmatprep.subr.mxu0 0.0
          %599 = vmatpush1.msra.mxu0 0.0
          %600 = vmatprep.subr.mxu0 0.0
          %601 = vmatpush1.msra.mxu0 0.0
          %602 = vmatprep.subr.mxu0 0.0
          %603 = vmatpush1.msra.mxu0 0.0
          %604 = vmatprep.subr.mxu0 0.0
          %605 = vmatpush1.msra.mxu0 0.0
          %606 = vmatprep.mubr.f32.mxu0 0.0
          %607 = vmatmul.mubr.f32.gmra.mrb[0].mxu0 %v541
          %v608 = vpop.f32.mrb[0].mxu0
          %v609 = vadd.f32 0.0, %v608
          %v610 = vpop.f32.mrb[0].mxu0
          %611 = vdwg.mxu0
          %v612 = vmul.f32 %v609, 0.001953125
          %v613 = vlaneseq
          %v614 = vshrl.u32 %v613, 7
          %v615 = vsub.s32 0, %v614
          %v616 = vrot.slane %v612, %v615
          %v617 = vsub.f32 %v455, %v616
          %v618 = vsub.f32 %v456, %v616
          %v619 = vsub.f32 %v457, %v616
          %v620 = vsub.f32 %v458, %v616
          %v621 = vsub.f32 %v459, %v616
          %v622 = vsub.f32 %v460, %v616
          %v623 = vsub.f32 %v461, %v616
          %v624 = vsub.f32 %v462, %v616
          %v625 = vsub.f32 %v463, %v616
          %v626 = vsub.f32 %v464, %v616
          %v627 = vsub.f32 %v465, %v616
          %v628 = vsub.f32 %v466, %v616
          %v629 = vsub.f32 %v467, %v616
          %v630 = vsub.f32 %v468, %v616
          %v631 = vsub.f32 %v469, %v616
          %v632 = vsub.f32 %v470, %v616
          %v633 = vsub.f32 %v471, %v616
          %v634 = vsub.f32 %v472, %v616
          %v635 = vsub.f32 %v473, %v616
          %v636 = vsub.f32 %v474, %v616
          %v637 = vsub.f32 %v475, %v616
          %v638 = vsub.f32 %v476, %v616
          %v639 = vsub.f32 %v477, %v616
          %v640 = vsub.f32 %v478, %v616
          %v641 = vsub.f32 %v479, %v616
          %v642 = vsub.f32 %v480, %v616
          %v643 = vsub.f32 %v481, %v616
          %v644 = vsub.f32 %v482, %v616
          %v645 = vsub.f32 %v483, %v616
          %v646 = vsub.f32 %v484, %v616
          %v647 = vsub.f32 %v485, %v616
          %v648 = vsub.f32 %v486, %v616
          %v649 = vmul.f32 %v617, %v617
          %v650 = vmul.f32 %v618, %v618
          %v651 = vmul.f32 %v619, %v619
          %v652 = vmul.f32 %v620, %v620
          %v653 = vmul.f32 %v621, %v621
          %v654 = vmul.f32 %v622, %v622
          %v655 = vmul.f32 %v623, %v623
          %v656 = vmul.f32 %v624, %v624
          %v657 = vmul.f32 %v625, %v625
          %v658 = vmul.f32 %v626, %v626
          %v659 = vmul.f32 %v627, %v627
          %v660 = vmul.f32 %v628, %v628
          %v661 = vmul.f32 %v629, %v629
          %v662 = vmul.f32 %v630, %v630
          %v663 = vmul.f32 %v631, %v631
          %v664 = vmul.f32 %v632, %v632
          %v665 = vmul.f32 %v633, %v633
          %v666 = vmul.f32 %v634, %v634
          %v667 = vmul.f32 %v635, %v635
          %v668 = vmul.f32 %v636, %v636
          %v669 = vmul.f32 %v637, %v637
          %v670 = vmul.f32 %v638, %v638
          %v671 = vmul.f32 %v639, %v639
          %v672 = vmul.f32 %v640, %v640
          %v673 = vmul.f32 %v641, %v641
          %v674 = vmul.f32 %v642, %v642
          %v675 = vmul.f32 %v643, %v643
          %v676 = vmul.f32 %v644, %v644
          %v677 = vmul.f32 %v645, %v645
          %v678 = vmul.f32 %v646, %v646
          %v679 = vmul.f32 %v647, %v647
          %v680 = vmul.f32 %v648, %v648
          %v681 = vadd.f32 %v649, %v650
          %v682 = vadd.f32 %v681, %v651
          %v683 = vadd.f32 %v682, %v652
          %v684 = vadd.f32 %v683, %v653
          %v685 = vadd.f32 %v684, %v654
          %v686 = vadd.f32 %v685, %v655
          %v687 = vadd.f32 %v686, %v656
          %v688 = vadd.f32 %v687, %v657
          %v689 = vadd.f32 %v688, %v658
          %v690 = vadd.f32 %v689, %v659
          %v691 = vadd.f32 %v690, %v660
          %v692 = vadd.f32 %v691, %v661
          %v693 = vadd.f32 %v692, %v662
          %v694 = vadd.f32 %v693, %v663
          %v695 = vadd.f32 %v694, %v664
          %v696 = vadd.f32 %v695, %v665
          %v697 = vadd.f32 %v696, %v666
          %v698 = vadd.f32 %v697, %v667
          %v699 = vadd.f32 %v698, %v668
          %v700 = vadd.f32 %v699, %v669
          %v701 = vadd.f32 %v700, %v670
          %v702 = vadd.f32 %v701, %v671
          %v703 = vadd.f32 %v702, %v672
          %v704 = vadd.f32 %v703, %v673
          %v705 = vadd.f32 %v704, %v674
          %v706 = vadd.f32 %v705, %v675
          %v707 = vadd.f32 %v706, %v676
          %v708 = vadd.f32 %v707, %v677
          %v709 = vadd.f32 %v708, %v678
          %v710 = vadd.f32 %v709, %v679
          %v711 = vadd.f32 %v710, %v680
          %v712 = vrot.slane %v711, 4
          %v713 = vadd.f32 %v711, %v712
          %v714 = vrot.slane %v713, 2
          %v715 = vadd.f32 %v713, %v714
          %v716 = vrot.slane %v715, 1
          %v717 = vadd.f32 %v715, %v716
          %718 = vmatprep.subr.mxu0 0.0
          %719 = vmatpush1.msra.mxu0 %v487
          %720 = vmatprep.subr.mxu0 0.0
          %721 = vmatpush1.msra.mxu0 %v488
          %722 = vmatprep.subr.mxu0 0.0
          %723 = vmatpush1.msra.mxu0 %v489
          %724 = vmatprep.subr.mxu0 0.0
          %725 = vmatpush1.msra.mxu0 %v490
          %726 = vmatprep.subr.mxu0 0.0
          %727 = vmatpush1.msra.mxu0 %v491
          %728 = vmatprep.subr.mxu0 0.0
          %729 = vmatpush1.msra.mxu0 %v492
          %730 = vmatprep.subr.mxu0 0.0
          %731 = vmatpush1.msra.mxu0 %v493
          %732 = vmatprep.subr.mxu0 0.0
          %733 = vmatpush1.msra.mxu0 %v494
          %734 = vmatprep.subr.mxu0 0.0
          %735 = vmatpush1.msra.mxu0 %v495
          %736 = vmatprep.subr.mxu0 0.0
          %737 = vmatpush1.msra.mxu0 %v496
          %738 = vmatprep.subr.mxu0 0.0
          %739 = vmatpush1.msra.mxu0 %v497
          %740 = vmatprep.subr.mxu0 0.0
          %741 = vmatpush1.msra.mxu0 %v498
          %742 = vmatprep.subr.mxu0 0.0
          %743 = vmatpush1.msra.mxu0 %v499
          %744 = vmatprep.subr.mxu0 0.0
          %745 = vmatpush1.msra.mxu0 %v500
          %746 = vmatprep.subr.mxu0 0.0
          %747 = vmatpush1.msra.mxu0 %v501
          %748 = vmatprep.subr.mxu0 0.0
          %749 = vmatpush1.msra.mxu0 %v502
          %750 = vmatprep.subr.mxu0 0.0
          %751 = vmatpush1.msra.mxu0 0.0
          %752 = vmatprep.subr.mxu0 0.0
          %753 = vmatpush1.msra.mxu0 0.0
          %754 = vmatprep.subr.mxu0 0.0
          %755 = vmatpush1.msra.mxu0 0.0
          %756 = vmatprep.subr.mxu0 0.0
          %757 = vmatpush1.msra.mxu0 0.0
          %758 = vmatprep.subr.mxu0 0.0
          %759 = vmatpush1.msra.mxu0 0.0
          %760 = vmatprep.subr.mxu0 0.0
          %761 = vmatpush1.msra.mxu0 0.0
          %762 = vmatprep.subr.mxu0 0.0
          %763 = vmatpush1.msra.mxu0 0.0
          %764 = vmatprep.subr.mxu0 0.0
          %765 = vmatpush1.msra.mxu0 0.0
          %766 = vmatprep.subr.mxu0 0.0
          %767 = vmatpush1.msra.mxu0 0.0
          %768 = vmatprep.subr.mxu0 0.0
          %769 = vmatpush1.msra.mxu0 0.0
          %770 = vmatprep.subr.mxu0 0.0
          %771 = vmatpush1.msra.mxu0 0.0
          %772 = vmatprep.subr.mxu0 0.0
          %773 = vmatpush1.msra.mxu0 0.0
          %774 = vmatprep.subr.mxu0 0.0
          %775 = vmatpush1.msra.mxu0 0.0
          %776 = vmatprep.subr.mxu0 0.0
          %777 = vmatpush1.msra.mxu0 0.0
          %778 = vmatprep.subr.mxu0 0.0
          %779 = vmatpush1.msra.mxu0 0.0
          %780 = vmatprep.subr.mxu0 0.0
          %781 = vmatpush1.msra.mxu0 0.0
          %782 = vmatprep.mubr.f32.mxu0 0.0
          %783 = vmatmul.mubr.f32.gmra.mrb[0].mxu0 %v717
          %v784 = vpop.f32.mrb[0].mxu0
          %v785 = vadd.f32 0.0, %v784
          %v786 = vpop.f32.mrb[0].mxu0
          %787 = vdwg.mxu0
          %v788 = vmul.f32 %v785, 0.001953125
          %v789 = vadd.f32 %v788, 1e-05
          %v790 = vrsqrt.pop %v789
          %v791 = vmul.f32 %v790, %v503
          %v792 = vlaneseq
          %v793 = vshrl.u32 %v792, 7
          %v794 = vsub.s32 0, %v793
          %v795 = vrot.slane %v791, %v794
          %v796 = vmul.f32 %v617, %v795
          %v797 = vmul.f32 %v618, %v795
          %v798 = vmul.f32 %v619, %v795
          %v799 = vmul.f32 %v620, %v795
          %v800 = vmul.f32 %v621, %v795
          %v801 = vmul.f32 %v622, %v795
          %v802 = vmul.f32 %v623, %v795
          %v803 = vmul.f32 %v624, %v795
          %v804 = vmul.f32 %v625, %v795
          %v805 = vmul.f32 %v626, %v795
          %v806 = vmul.f32 %v627, %v795
          %v807 = vmul.f32 %v628, %v795
          %v808 = vmul.f32 %v629, %v795
          %v809 = vmul.f32 %v630, %v795
          %v810 = vmul.f32 %v631, %v795
          %v811 = vmul.f32 %v632, %v795
          %v812 = vmul.f32 %v633, %v795
          %v813 = vmul.f32 %v634, %v795
          %v814 = vmul.f32 %v635, %v795
          %v815 = vmul.f32 %v636, %v795
          %v816 = vmul.f32 %v637, %v795
          %v817 = vmul.f32 %v638, %v795
          %v818 = vmul.f32 %v639, %v795
          %v819 = vmul.f32 %v640, %v795
          %v820 = vmul.f32 %v641, %v795
          %v821 = vmul.f32 %v642, %v795
          %v822 = vmul.f32 %v643, %v795
          %v823 = vmul.f32 %v644, %v795
          %v824 = vmul.f32 %v645, %v795
          %v825 = vmul.f32 %v646, %v795
          %v826 = vmul.f32 %v647, %v795
          %v827 = vmul.f32 %v648, %v795
          %v829 = vlaneseq
          %v830 = vshrl.u32 %v829, 7
          %v831 = vsub.s32 0, %v830
          %v832 = vrot.slane %v504, %v831
          %v834 = vadd.f32 %v796, %v832
          %v835 = vadd.f32 %v797, %v832
          %v836 = vadd.f32 %v798, %v832
          %v837 = vadd.f32 %v799, %v832
          %v838 = vadd.f32 %v800, %v832
          %v839 = vadd.f32 %v801, %v832
          %v840 = vadd.f32 %v802, %v832
          %v841 = vadd.f32 %v803, %v832
          %v842 = vadd.f32 %v804, %v832
          %v843 = vadd.f32 %v805, %v832
          %v844 = vadd.f32 %v806, %v832
          %v845 = vadd.f32 %v807, %v832
          %v846 = vadd.f32 %v808, %v832
          %v847 = vadd.f32 %v809, %v832
          %v848 = vadd.f32 %v810, %v832
          %v849 = vadd.f32 %v811, %v832
          %v850 = vadd.f32 %v812, %v832
          %v851 = vadd.f32 %v813, %v832
          %v852 = vadd.f32 %v814, %v832
          %v853 = vadd.f32 %v815, %v832
          %v854 = vadd.f32 %v816, %v832
          %v855 = vadd.f32 %v817, %v832
          %v856 = vadd.f32 %v818, %v832
          %v857 = vadd.f32 %v819, %v832
          %v858 = vadd.f32 %v820, %v832
          %v859 = vadd.f32 %v821, %v832
          %v860 = vadd.f32 %v822, %v832
          %v861 = vadd.f32 %v823, %v832
          %v862 = vadd.f32 %v824, %v832
          %v863 = vadd.f32 %v825, %v832
          %v864 = vadd.f32 %v826, %v832
          %v865 = vadd.f32 %v827, %v832
          %v866 = vxor.u32 %v834, 2147483648
          %v867 = vxor.u32 %v835, 2147483648
          %v868 = vxor.u32 %v836, 2147483648
          %v869 = vxor.u32 %v837, 2147483648
          %v870 = vxor.u32 %v838, 2147483648
          %v871 = vxor.u32 %v839, 2147483648
          %v872 = vxor.u32 %v840, 2147483648
          %v873 = vxor.u32 %v841, 2147483648
          %v874 = vxor.u32 %v842, 2147483648
          %v875 = vxor.u32 %v843, 2147483648
          %v876 = vxor.u32 %v844, 2147483648
          %v877 = vxor.u32 %v845, 2147483648
          %v878 = vxor.u32 %v846, 2147483648
          %v879 = vxor.u32 %v847, 2147483648
          %v880 = vxor.u32 %v848, 2147483648
          %v881 = vxor.u32 %v849, 2147483648
          %v882 = vxor.u32 %v850, 2147483648
          %v883 = vxor.u32 %v851, 2147483648
          %v884 = vxor.u32 %v852, 2147483648
          %v885 = vxor.u32 %v853, 2147483648
          %v886 = vxor.u32 %v854, 2147483648
          %v887 = vxor.u32 %v855, 2147483648
          %v888 = vxor.u32 %v856, 2147483648
          %v889 = vxor.u32 %v857, 2147483648
          %v890 = vxor.u32 %v858, 2147483648
          %v891 = vxor.u32 %v859, 2147483648
          %v892 = vxor.u32 %v860, 2147483648
          %v893 = vxor.u32 %v861, 2147483648
          %v894 = vxor.u32 %v862, 2147483648
          %v895 = vxor.u32 %v863, 2147483648
          %v896 = vxor.u32 %v864, 2147483648
          %v897 = vxor.u32 %v865, 2147483648
          %v898 = vmul.f32 %v866, 1.442695
          %v899 = vpow.pop %v898
          %v900 = vmul.f32 %v867, 1.442695
          %v901 = vpow.pop %v900
          %v902 = vmul.f32 %v868, 1.442695
          %v903 = vpow.pop %v902
          %v904 = vmul.f32 %v869, 1.442695
          %v905 = vpow.pop %v904
          %v906 = vmul.f32 %v870, 1.442695
          %v907 = vpow.pop %v906
          %v908 = vmul.f32 %v871, 1.442695
          %v909 = vpow.pop %v908
          %v910 = vmul.f32 %v872, 1.442695
          %v911 = vpow.pop %v910
          %v912 = vmul.f32 %v873, 1.442695
          %v913 = vpow.pop %v912
          %v914 = vmul.f32 %v874, 1.442695
          %v915 = vpow.pop %v914
          %v916 = vmul.f32 %v875, 1.442695
          %v917 = vpow.pop %v916
          %v918 = vmul.f32 %v876, 1.442695
          %v919 = vpow.pop %v918
          %v920 = vmul.f32 %v877, 1.442695
          %v921 = vpow.pop %v920
          %v922 = vmul.f32 %v878, 1.442695
          %v923 = vpow.pop %v922
          %v924 = vmul.f32 %v879, 1.442695
          %v925 = vpow.pop %v924
          %v926 = vmul.f32 %v880, 1.442695
          %v927 = vpow.pop %v926
          %v928 = vmul.f32 %v881, 1.442695
          %v929 = vpow.pop %v928
          %v930 = vmul.f32 %v882, 1.442695
          %v931 = vpow.pop %v930
          %v932 = vmul.f32 %v883, 1.442695
          %v933 = vpow.pop %v932
          %v934 = vmul.f32 %v884, 1.442695
          %v935 = vpow.pop %v934
          %v936 = vmul.f32 %v885, 1.442695
          %v937 = vpow.pop %v936
          %v938 = vmul.f32 %v886, 1.442695
          %v939 = vpow.pop %v938
          %v940 = vmul.f32 %v887, 1.442695
          %v941 = vpow.pop %v940
          %v942 = vmul.f32 %v888, 1.442695
          %v943 = vpow.pop %v942
          %v944 = vmul.f32 %v889, 1.442695
          %v945 = vpow.pop %v944
          %v946 = vmul.f32 %v890, 1.442695
          %v947 = vpow.pop %v946
          %v948 = vmul.f32 %v891, 1.442695
          %v949 = vpow.pop %v948
          %v950 = vmul.f32 %v892, 1.442695
          %v951 = vpow.pop %v950
          %v952 = vmul.f32 %v893, 1.442695
          %v953 = vpow.pop %v952
          %v954 = vmul.f32 %v894, 1.442695
          %v955 = vpow.pop %v954
          %v956 = vmul.f32 %v895, 1.442695
          %v957 = vpow.pop %v956
          %v958 = vmul.f32 %v896, 1.442695
          %v959 = vpow.pop %v958
          %v960 = vmul.f32 %v897, 1.442695
          %v961 = vpow.pop %v960
          %v962 = vadd.f32 %v899, 1.0
          %v963 = vadd.f32 %v901, 1.0
          %v964 = vadd.f32 %v903, 1.0
          %v965 = vadd.f32 %v905, 1.0
          %v966 = vadd.f32 %v907, 1.0
          %v967 = vadd.f32 %v909, 1.0
          %v968 = vadd.f32 %v911, 1.0
          %v969 = vadd.f32 %v913, 1.0
          %v970 = vadd.f32 %v915, 1.0
          %v971 = vadd.f32 %v917, 1.0
          %v972 = vadd.f32 %v919, 1.0
          %v973 = vadd.f32 %v921, 1.0
          %v974 = vadd.f32 %v923, 1.0
          %v975 = vadd.f32 %v925, 1.0
          %v976 = vadd.f32 %v927, 1.0
          %v977 = vadd.f32 %v929, 1.0
          %v978 = vadd.f32 %v931, 1.0
          %v979 = vadd.f32 %v933, 1.0
          %v980 = vadd.f32 %v935, 1.0
          %v981 = vadd.f32 %v937, 1.0
          %v982 = vadd.f32 %v939, 1.0
          %v983 = vadd.f32 %v941, 1.0
          %v984 = vadd.f32 %v943, 1.0
          %v985 = vadd.f32 %v945, 1.0
          %v986 = vadd.f32 %v947, 1.0
          %v987 = vadd.f32 %v949, 1.0
          %v988 = vadd.f32 %v951, 1.0
          %v989 = vadd.f32 %v953, 1.0
          %v990 = vadd.f32 %v955, 1.0
          %v991 = vadd.f32 %v957, 1.0
          %v992 = vadd.f32 %v959, 1.0
          %v993 = vadd.f32 %v961, 1.0
          %v994 = vrcp.pop %v962
          %v995 = vmul.f32 1.0, %v994
          %v996 = vrcp.pop %v963
          %v997 = vmul.f32 1.0, %v996
          %v998 = vrcp.pop %v964
          %v999 = vmul.f32 1.0, %v998
          %v1000 = vrcp.pop %v965
          %v1001 = vmul.f32 1.0, %v1000
          %v1002 = vrcp.pop %v966
          %v1003 = vmul.f32 1.0, %v1002
          %v1004 = vrcp.pop %v967
          %v1005 = vmul.f32 1.0, %v1004
          %v1006 = vrcp.pop %v968
          %v1007 = vmul.f32 1.0, %v1006
          %v1008 = vrcp.pop %v969
          %v1009 = vmul.f32 1.0, %v1008
          %v1010 = vrcp.pop %v970
          %v1011 = vmul.f32 1.0, %v1010
          %v1012 = vrcp.pop %v971
          %v1013 = vmul.f32 1.0, %v1012
          %v1014 = vrcp.pop %v972
          %v1015 = vmul.f32 1.0, %v1014
          %v1016 = vrcp.pop %v973
          %v1017 = vmul.f32 1.0, %v1016
          %v1018 = vrcp.pop %v974
          %v1019 = vmul.f32 1.0, %v1018
          %v1020 = vrcp.pop %v975
          %v1021 = vmul.f32 1.0, %v1020
          %v1022 = vrcp.pop %v976
          %v1023 = vmul.f32 1.0, %v1022
          %v1024 = vrcp.pop %v977
          %v1025 = vmul.f32 1.0, %v1024
          %v1026 = vrcp.pop %v978
          %v1027 = vmul.f32 1.0, %v1026
          %v1028 = vrcp.pop %v979
          %v1029 = vmul.f32 1.0, %v1028
          %v1030 = vrcp.pop %v980
          %v1031 = vmul.f32 1.0, %v1030
          %v1032 = vrcp.pop %v981
          %v1033 = vmul.f32 1.0, %v1032
          %v1034 = vrcp.pop %v982
          %v1035 = vmul.f32 1.0, %v1034
          %v1036 = vrcp.pop %v983
          %v1037 = vmul.f32 1.0, %v1036
          %v1038 = vrcp.pop %v984
          %v1039 = vmul.f32 1.0, %v1038
          %v1040 = vrcp.pop %v985
          %v1041 = vmul.f32 1.0, %v1040
          %v1042 = vrcp.pop %v986
          %v1043 = vmul.f32 1.0, %v1042
          %v1044 = vrcp.pop %v987
          %v1045 = vmul.f32 1.0, %v1044
          %v1046 = vrcp.pop %v988
          %v1047 = vmul.f32 1.0, %v1046
          %v1048 = vrcp.pop %v989
          %v1049 = vmul.f32 1.0, %v1048
          %v1050 = vrcp.pop %v990
          %v1051 = vmul.f32 1.0, %v1050
          %v1052 = vrcp.pop %v991
          %v1053 = vmul.f32 1.0, %v1052
          %v1054 = vrcp.pop %v992
          %v1055 = vmul.f32 1.0, %v1054
          %v1056 = vrcp.pop %v993
          %v1057 = vmul.f32 1.0, %v1056
          %v1058 = vmul.f32 %v834, %v995
          %v1059 = vmul.f32 %v835, %v997
          %v1060 = vmul.f32 %v836, %v999
          %v1061 = vmul.f32 %v837, %v1001
          %v1062 = vmul.f32 %v838, %v1003
          %v1063 = vmul.f32 %v839, %v1005
          %v1064 = vmul.f32 %v840, %v1007
          %v1065 = vmul.f32 %v841, %v1009
          %v1066 = vmul.f32 %v842, %v1011
          %v1067 = vmul.f32 %v843, %v1013
          %v1068 = vmul.f32 %v844, %v1015
          %v1069 = vmul.f32 %v845, %v1017
          %v1070 = vmul.f32 %v846, %v1019
          %v1071 = vmul.f32 %v847, %v1021
          %v1072 = vmul.f32 %v848, %v1023
          %v1073 = vmul.f32 %v849, %v1025
          %v1074 = vmul.f32 %v850, %v1027
          %v1075 = vmul.f32 %v851, %v1029
          %v1076 = vmul.f32 %v852, %v1031
          %v1077 = vmul.f32 %v853, %v1033
          %v1078 = vmul.f32 %v854, %v1035
          %v1079 = vmul.f32 %v855, %v1037
          %v1080 = vmul.f32 %v856, %v1039
          %v1081 = vmul.f32 %v857, %v1041
          %v1082 = vmul.f32 %v858, %v1043
          %v1083 = vmul.f32 %v859, %v1045
          %v1084 = vmul.f32 %v860, %v1047
          %v1085 = vmul.f32 %v861, %v1049
          %v1086 = vmul.f32 %v862, %v1051
          %v1087 = vmul.f32 %v863, %v1053
          %v1088 = vmul.f32 %v864, %v1055
          %v1089 = vmul.f32 %v865, %v1057
          %v1090 = vld [vmem:[%s449] sm:$0x1]
          %v1092 = vlaneseq
          %v1093 = vshrl.u32 %v1092, 7
          %v1094 = vsub.s32 0, %v1093
          %v1095 = vrot.slane %v1090, %v1094
          %v1097 = vadd.f32 %v1058, %v1095
          %v1098 = vadd.f32 %v1059, %v1095
          %v1099 = vadd.f32 %v1060, %v1095
          %v1100 = vadd.f32 %v1061, %v1095
          %v1101 = vadd.f32 %v1062, %v1095
          %v1102 = vadd.f32 %v1063, %v1095
          %v1103 = vadd.f32 %v1064, %v1095
          %v1104 = vadd.f32 %v1065, %v1095
          %v1105 = vadd.f32 %v1066, %v1095
          %v1106 = vadd.f32 %v1067, %v1095
          %v1107 = vadd.f32 %v1068, %v1095
          %v1108 = vadd.f32 %v1069, %v1095
          %v1109 = vadd.f32 %v1070, %v1095
          %v1110 = vadd.f32 %v1071, %v1095
          %v1111 = vadd.f32 %v1072, %v1095
          %v1112 = vadd.f32 %v1073, %v1095
          %v1113 = vadd.f32 %v1074, %v1095
          %v1114 = vadd.f32 %v1075, %v1095
          %v1115 = vadd.f32 %v1076, %v1095
          %v1116 = vadd.f32 %v1077, %v1095
          %v1117 = vadd.f32 %v1078, %v1095
          %v1118 = vadd.f32 %v1079, %v1095
          %v1119 = vadd.f32 %v1080, %v1095
          %v1120 = vadd.f32 %v1081, %v1095
          %v1121 = vadd.f32 %v1082, %v1095
          %v1122 = vadd.f32 %v1083, %v1095
          %v1123 = vadd.f32 %v1084, %v1095
          %v1124 = vadd.f32 %v1085, %v1095
          %v1125 = vadd.f32 %v1086, %v1095
          %v1126 = vadd.f32 %v1087, %v1095
          %v1127 = vadd.f32 %v1088, %v1095
          %v1128 = vadd.f32 %v1089, %v1095
          %v1129 = vld [vmem:[%s4] sm:$0x1]
          %v1130 = vld [vmem:[%s5] sm:$0x1]
          %v1131 = vadd.f32 %v1097, %v1098
          %v1132 = vadd.f32 %v1131, %v1099
          %v1133 = vadd.f32 %v1132, %v1100
          %v1134 = vadd.f32 %v1133, %v1101
          %v1135 = vadd.f32 %v1134, %v1102
          %v1136 = vadd.f32 %v1135, %v1103
          %v1137 = vadd.f32 %v1136, %v1104
          %v1138 = vadd.f32 %v1137, %v1105
          %v1139 = vadd.f32 %v1138, %v1106
          %v1140 = vadd.f32 %v1139, %v1107
          %v1141 = vadd.f32 %v1140, %v1108
          %v1142 = vadd.f32 %v1141, %v1109
          %v1143 = vadd.f32 %v1142, %v1110
          %v1144 = vadd.f32 %v1143, %v1111
          %v1145 = vadd.f32 %v1144, %v1112
          %v1146 = vadd.f32 %v1145, %v1113
          %v1147 = vadd.f32 %v1146, %v1114
          %v1148 = vadd.f32 %v1147, %v1115
          %v1149 = vadd.f32 %v1148, %v1116
          %v1150 = vadd.f32 %v1149, %v1117
          %v1151 = vadd.f32 %v1150, %v1118
          %v1152 = vadd.f32 %v1151, %v1119
          %v1153 = vadd.f32 %v1152, %v1120
          %v1154 = vadd.f32 %v1153, %v1121
          %v1155 = vadd.f32 %v1154, %v1122
          %v1156 = vadd.f32 %v1155, %v1123
          %v1157 = vadd.f32 %v1156, %v1124
          %v1158 = vadd.f32 %v1157, %v1125
          %v1159 = vadd.f32 %v1158, %v1126
          %v1160 = vadd.f32 %v1159, %v1127
          %v1161 = vadd.f32 %v1160, %v1128
          %v1162 = vrot.slane %v1161, 4
          %v1163 = vadd.f32 %v1161, %v1162
          %v1164 = vrot.slane %v1163, 2
          %v1165 = vadd.f32 %v1163, %v1164
          %v1166 = vrot.slane %v1165, 1
          %v1167 = vadd.f32 %v1165, %v1166
          %1168 = vmatprep.subr.mxu0 0.0
          %1169 = vmatpush1.msra.mxu0 %v487
          %1170 = vmatprep.subr.mxu0 0.0
          %1171 = vmatpush1.msra.mxu0 %v488
          %1172 = vmatprep.subr.mxu0 0.0
          %1173 = vmatpush1.msra.mxu0 %v489
          %1174 = vmatprep.subr.mxu0 0.0
          %1175 = vmatpush1.msra.mxu0 %v490
          %1176 = vmatprep.subr.mxu0 0.0
          %1177 = vmatpush1.msra.mxu0 %v491
          %1178 = vmatprep.subr.mxu0 0.0
          %1179 = vmatpush1.msra.mxu0 %v492
          %1180 = vmatprep.subr.mxu0 0.0
          %1181 = vmatpush1.msra.mxu0 %v493
          %1182 = vmatprep.subr.mxu0 0.0
          %1183 = vmatpush1.msra.mxu0 %v494
          %1184 = vmatprep.subr.mxu0 0.0
          %1185 = vmatpush1.msra.mxu0 %v495
          %1186 = vmatprep.subr.mxu0 0.0
          %1187 = vmatpush1.msra.mxu0 %v496
          %1188 = vmatprep.subr.mxu0 0.0
          %1189 = vmatpush1.msra.mxu0 %v497
          %1190 = vmatprep.subr.mxu0 0.0
          %1191 = vmatpush1.msra.mxu0 %v498
          %1192 = vmatprep.subr.mxu0 0.0
          %1193 = vmatpush1.msra.mxu0 %v499
          %1194 = vmatprep.subr.mxu0 0.0
          %1195 = vmatpush1.msra.mxu0 %v500
          %1196 = vmatprep.subr.mxu0 0.0
          %1197 = vmatpush1.msra.mxu0 %v501
          %1198 = vmatprep.subr.mxu0 0.0
          %1199 = vmatpush1.msra.mxu0 %v502
          %1200 = vmatprep.subr.mxu0 0.0
          %1201 = vmatpush1.msra.mxu0 0.0
          %1202 = vmatprep.subr.mxu0 0.0
          %1203 = vmatpush1.msra.mxu0 0.0
          %1204 = vmatprep.subr.mxu0 0.0
          %1205 = vmatpush1.msra.mxu0 0.0
          %1206 = vmatprep.subr.mxu0 0.0
          %1207 = vmatpush1.msra.mxu0 0.0
          %1208 = vmatprep.subr.mxu0 0.0
          %1209 = vmatpush1.msra.mxu0 0.0
          %1210 = vmatprep.subr.mxu0 0.0
          %1211 = vmatpush1.msra.mxu0 0.0
          %1212 = vmatprep.subr.mxu0 0.0
          %1213 = vmatpush1.msra.mxu0 0.0
          %1214 = vmatprep.subr.mxu0 0.0
          %1215 = vmatpush1.msra.mxu0 0.0
          %1216 = vmatprep.subr.mxu0 0.0
          %1217 = vmatpush1.msra.mxu0 0.0
          %1218 = vmatprep.subr.mxu0 0.0
          %1219 = vmatpush1.msra.mxu0 0.0
          %1220 = vmatprep.subr.mxu0 0.0
          %1221 = vmatpush1.msra.mxu0 0.0
          %1222 = vmatprep.subr.mxu0 0.0
          %1223 = vmatpush1.msra.mxu0 0.0
          %1224 = vmatprep.subr.mxu0 0.0
          %1225 = vmatpush1.msra.mxu0 0.0
          %1226 = vmatprep.subr.mxu0 0.0
          %1227 = vmatpush1.msra.mxu0 0.0
          %1228 = vmatprep.subr.mxu0 0.0
          %1229 = vmatpush1.msra.mxu0 0.0
          %1230 = vmatprep.subr.mxu0 0.0
          %1231 = vmatpush1.msra.mxu0 0.0
          %1232 = vmatprep.mubr.f32.mxu0 0.0
          %1233 = vmatmul.mubr.f32.gmra.mrb[0].mxu0 %v1167
          %v1234 = vpop.f32.mrb[0].mxu0
          %v1235 = vadd.f32 0.0, %v1234
          %v1236 = vpop.f32.mrb[0].mxu0
          %1237 = vdwg.mxu0
          %v1238 = vmul.f32 %v1235, 0.001953125
          %v1239 = vlaneseq
          %v1240 = vshrl.u32 %v1239, 7
          %v1241 = vsub.s32 0, %v1240
          %v1242 = vrot.slane %v1238, %v1241
          %v1243 = vsub.f32 %v1097, %v1242
          %v1244 = vsub.f32 %v1098, %v1242
          %v1245 = vsub.f32 %v1099, %v1242
          %v1246 = vsub.f32 %v1100, %v1242
          %v1247 = vsub.f32 %v1101, %v1242
          %v1248 = vsub.f32 %v1102, %v1242
          %v1249 = vsub.f32 %v1103, %v1242
          %v1250 = vsub.f32 %v1104, %v1242
          %v1251 = vsub.f32 %v1105, %v1242
          %v1252 = vsub.f32 %v1106, %v1242
          %v1253 = vsub.f32 %v1107, %v1242
          %v1254 = vsub.f32 %v1108, %v1242
          %v1255 = vsub.f32 %v1109, %v1242
          %v1256 = vsub.f32 %v1110, %v1242
          %v1257 = vsub.f32 %v1111, %v1242
          %v1258 = vsub.f32 %v1112, %v1242
          %v1259 = vsub.f32 %v1113, %v1242
          %v1260 = vsub.f32 %v1114, %v1242
          %v1261 = vsub.f32 %v1115, %v1242
          %v1262 = vsub.f32 %v1116, %v1242
          %v1263 = vsub.f32 %v1117, %v1242
          %v1264 = vsub.f32 %v1118, %v1242
          %v1265 = vsub.f32 %v1119, %v1242
          %v1266 = vsub.f32 %v1120, %v1242
          %v1267 = vsub.f32 %v1121, %v1242
          %v1268 = vsub.f32 %v1122, %v1242
          %v1269 = vsub.f32 %v1123, %v1242
          %v1270 = vsub.f32 %v1124, %v1242
          %v1271 = vsub.f32 %v1125, %v1242
          %v1272 = vsub.f32 %v1126, %v1242
          %v1273 = vsub.f32 %v1127, %v1242
          %v1274 = vsub.f32 %v1128, %v1242
          %v1275 = vmul.f32 %v1243, %v1243
          %v1276 = vmul.f32 %v1244, %v1244
          %v1277 = vmul.f32 %v1245, %v1245
          %v1278 = vmul.f32 %v1246, %v1246
          %v1279 = vmul.f32 %v1247, %v1247
          %v1280 = vmul.f32 %v1248, %v1248
          %v1281 = vmul.f32 %v1249, %v1249
          %v1282 = vmul.f32 %v1250, %v1250
          %v1283 = vmul.f32 %v1251, %v1251
          %v1284 = vmul.f32 %v1252, %v1252
          %v1285 = vmul.f32 %v1253, %v1253
          %v1286 = vmul.f32 %v1254, %v1254
          %v1287 = vmul.f32 %v1255, %v1255
          %v1288 = vmul.f32 %v1256, %v1256
          %v1289 = vmul.f32 %v1257, %v1257
          %v1290 = vmul.f32 %v1258, %v1258
          %v1291 = vmul.f32 %v1259, %v1259
          %v1292 = vmul.f32 %v1260, %v1260
          %v1293 = vmul.f32 %v1261, %v1261
          %v1294 = vmul.f32 %v1262, %v1262
          %v1295 = vmul.f32 %v1263, %v1263
          %v1296 = vmul.f32 %v1264, %v1264
          %v1297 = vmul.f32 %v1265, %v1265
          %v1298 = vmul.f32 %v1266, %v1266
          %v1299 = vmul.f32 %v1267, %v1267
          %v1300 = vmul.f32 %v1268, %v1268
          %v1301 = vmul.f32 %v1269, %v1269
          %v1302 = vmul.f32 %v1270, %v1270
          %v1303 = vmul.f32 %v1271, %v1271
          %v1304 = vmul.f32 %v1272, %v1272
          %v1305 = vmul.f32 %v1273, %v1273
          %v1306 = vmul.f32 %v1274, %v1274
          %v1307 = vadd.f32 %v1275, %v1276
          %v1308 = vadd.f32 %v1307, %v1277
          %v1309 = vadd.f32 %v1308, %v1278
          %v1310 = vadd.f32 %v1309, %v1279
          %v1311 = vadd.f32 %v1310, %v1280
          %v1312 = vadd.f32 %v1311, %v1281
          %v1313 = vadd.f32 %v1312, %v1282
          %v1314 = vadd.f32 %v1313, %v1283
          %v1315 = vadd.f32 %v1314, %v1284
          %v1316 = vadd.f32 %v1315, %v1285
          %v1317 = vadd.f32 %v1316, %v1286
          %v1318 = vadd.f32 %v1317, %v1287
          %v1319 = vadd.f32 %v1318, %v1288
          %v1320 = vadd.f32 %v1319, %v1289
          %v1321 = vadd.f32 %v1320, %v1290
          %v1322 = vadd.f32 %v1321, %v1291
          %v1323 = vadd.f32 %v1322, %v1292
          %v1324 = vadd.f32 %v1323, %v1293
          %v1325 = vadd.f32 %v1324, %v1294
          %v1326 = vadd.f32 %v1325, %v1295
          %v1327 = vadd.f32 %v1326, %v1296
          %v1328 = vadd.f32 %v1327, %v1297
          %v1329 = vadd.f32 %v1328, %v1298
          %v1330 = vadd.f32 %v1329, %v1299
          %v1331 = vadd.f32 %v1330, %v1300
          %v1332 = vadd.f32 %v1331, %v1301
          %v1333 = vadd.f32 %v1332, %v1302
          %v1334 = vadd.f32 %v1333, %v1303
          %v1335 = vadd.f32 %v1334, %v1304
          %v1336 = vadd.f32 %v1335, %v1305
          %v1337 = vadd.f32 %v1336, %v1306
          %v1338 = vrot.slane %v1337, 4
          %v1339 = vadd.f32 %v1337, %v1338
          %v1340 = vrot.slane %v1339, 2
          %v1341 = vadd.f32 %v1339, %v1340
          %v1342 = vrot.slane %v1341, 1
          %v1343 = vadd.f32 %v1341, %v1342
          %1344 = vmatprep.subr.mxu0 0.0
          %1345 = vmatpush1.msra.mxu0 %v487
          %1346 = vmatprep.subr.mxu0 0.0
          %1347 = vmatpush1.msra.mxu0 %v488
          %1348 = vmatprep.subr.mxu0 0.0
          %1349 = vmatpush1.msra.mxu0 %v489
          %1350 = vmatprep.subr.mxu0 0.0
          %1351 = vmatpush1.msra.mxu0 %v490
          %1352 = vmatprep.subr.mxu0 0.0
          %1353 = vmatpush1.msra.mxu0 %v491
          %1354 = vmatprep.subr.mxu0 0.0
          %1355 = vmatpush1.msra.mxu0 %v492
          %1356 = vmatprep.subr.mxu0 0.0
          %1357 = vmatpush1.msra.mxu0 %v493
          %1358 = vmatprep.subr.mxu0 0.0
          %1359 = vmatpush1.msra.mxu0 %v494
          %1360 = vmatprep.subr.mxu0 0.0
          %1361 = vmatpush1.msra.mxu0 %v495
          %1362 = vmatprep.subr.mxu0 0.0
          %1363 = vmatpush1.msra.mxu0 %v496
          %1364 = vmatprep.subr.mxu0 0.0
          %1365 = vmatpush1.msra.mxu0 %v497
          %1366 = vmatprep.subr.mxu0 0.0
          %1367 = vmatpush1.msra.mxu0 %v498
          %1368 = vmatprep.subr.mxu0 0.0
          %1369 = vmatpush1.msra.mxu0 %v499
          %1370 = vmatprep.subr.mxu0 0.0
          %1371 = vmatpush1.msra.mxu0 %v500
          %1372 = vmatprep.subr.mxu0 0.0
          %1373 = vmatpush1.msra.mxu0 %v501
          %1374 = vmatprep.subr.mxu0 0.0
          %1375 = vmatpush1.msra.mxu0 %v502
          %1376 = vmatprep.subr.mxu0 0.0
          %1377 = vmatpush1.msra.mxu0 0.0
          %1378 = vmatprep.subr.mxu0 0.0
          %1379 = vmatpush1.msra.mxu0 0.0
          %1380 = vmatprep.subr.mxu0 0.0
          %1381 = vmatpush1.msra.mxu0 0.0
          %1382 = vmatprep.subr.mxu0 0.0
          %1383 = vmatpush1.msra.mxu0 0.0
          %1384 = vmatprep.subr.mxu0 0.0
          %1385 = vmatpush1.msra.mxu0 0.0
          %1386 = vmatprep.subr.mxu0 0.0
          %1387 = vmatpush1.msra.mxu0 0.0
          %1388 = vmatprep.subr.mxu0 0.0
          %1389 = vmatpush1.msra.mxu0 0.0
          %1390 = vmatprep.subr.mxu0 0.0
          %1391 = vmatpush1.msra.mxu0 0.0
          %1392 = vmatprep.subr.mxu0 0.0
          %1393 = vmatpush1.msra.mxu0 0.0
          %1394 = vmatprep.subr.mxu0 0.0
          %1395 = vmatpush1.msra.mxu0 0.0
          %1396 = vmatprep.subr.mxu0 0.0
          %1397 = vmatpush1.msra.mxu0 0.0
          %1398 = vmatprep.subr.mxu0 0.0
          %1399 = vmatpush1.msra.mxu0 0.0
          %1400 = vmatprep.subr.mxu0 0.0
          %1401 = vmatpush1.msra.mxu0 0.0
          %1402 = vmatprep.subr.mxu0 0.0
          %1403 = vmatpush1.msra.mxu0 0.0
          %1404 = vmatprep.subr.mxu0 0.0
          %1405 = vmatpush1.msra.mxu0 0.0
          %1406 = vmatprep.subr.mxu0 0.0
          %1407 = vmatpush1.msra.mxu0 0.0
          %1408 = vmatprep.mubr.f32.mxu0 0.0
          %1409 = vmatmul.mubr.f32.gmra.mrb[0].mxu0 %v1343
          %v1410 = vpop.f32.mrb[0].mxu0
          %v1411 = vadd.f32 0.0, %v1410
          %v1412 = vpop.f32.mrb[0].mxu0
          %1413 = vdwg.mxu0
          %v1414 = vmul.f32 %v1411, 0.001953125
          %v1415 = vadd.f32 %v1414, 1e-05
          %v1416 = vrsqrt.pop %v1415
          %v1417 = vmul.f32 %v1416, %v1129
          %v1418 = vlaneseq
          %v1419 = vshrl.u32 %v1418, 7
          %v1420 = vsub.s32 0, %v1419
          %v1421 = vrot.slane %v1417, %v1420
          %v1422 = vmul.f32 %v1243, %v1421
          %v1423 = vmul.f32 %v1244, %v1421
          %v1424 = vmul.f32 %v1245, %v1421
          %v1425 = vmul.f32 %v1246, %v1421
          %v1426 = vmul.f32 %v1247, %v1421
          %v1427 = vmul.f32 %v1248, %v1421
          %v1428 = vmul.f32 %v1249, %v1421
          %v1429 = vmul.f32 %v1250, %v1421
          %v1430 = vmul.f32 %v1251, %v1421
          %v1431 = vmul.f32 %v1252, %v1421
          %v1432 = vmul.f32 %v1253, %v1421
          %v1433 = vmul.f32 %v1254, %v1421
          %v1434 = vmul.f32 %v1255, %v1421
          %v1435 = vmul.f32 %v1256, %v1421
          %v1436 = vmul.f32 %v1257, %v1421
          %v1437 = vmul.f32 %v1258, %v1421
          %v1438 = vmul.f32 %v1259, %v1421
          %v1439 = vmul.f32 %v1260, %v1421
          %v1440 = vmul.f32 %v1261, %v1421
          %v1441 = vmul.f32 %v1262, %v1421
          %v1442 = vmul.f32 %v1263, %v1421
          %v1443 = vmul.f32 %v1264, %v1421
          %v1444 = vmul.f32 %v1265, %v1421
          %v1445 = vmul.f32 %v1266, %v1421
          %v1446 = vmul.f32 %v1267, %v1421
          %v1447 = vmul.f32 %v1268, %v1421
          %v1448 = vmul.f32 %v1269, %v1421
          %v1449 = vmul.f32 %v1270, %v1421
          %v1450 = vmul.f32 %v1271, %v1421
          %v1451 = vmul.f32 %v1272, %v1421
          %v1452 = vmul.f32 %v1273, %v1421
          %v1453 = vmul.f32 %v1274, %v1421
          %v1455 = vlaneseq
          %v1456 = vshrl.u32 %v1455, 7
          %v1457 = vsub.s32 0, %v1456
          %v1458 = vrot.slane %v1130, %v1457
          %v1460 = vadd.f32 %v1422, %v1458
          %v1461 = vadd.f32 %v1423, %v1458
          %v1462 = vadd.f32 %v1424, %v1458
          %v1463 = vadd.f32 %v1425, %v1458
          %v1464 = vadd.f32 %v1426, %v1458
          %v1465 = vadd.f32 %v1427, %v1458
          %v1466 = vadd.f32 %v1428, %v1458
          %v1467 = vadd.f32 %v1429, %v1458
          %v1468 = vadd.f32 %v1430, %v1458
          %v1469 = vadd.f32 %v1431, %v1458
          %v1470 = vadd.f32 %v1432, %v1458
          %v1471 = vadd.f32 %v1433, %v1458
          %v1472 = vadd.f32 %v1434, %v1458
          %v1473 = vadd.f32 %v1435, %v1458
          %v1474 = vadd.f32 %v1436, %v1458
          %v1475 = vadd.f32 %v1437, %v1458
          %v1476 = vadd.f32 %v1438, %v1458
          %v1477 = vadd.f32 %v1439, %v1458
          %v1478 = vadd.f32 %v1440, %v1458
          %v1479 = vadd.f32 %v1441, %v1458
          %v1480 = vadd.f32 %v1442, %v1458
          %v1481 = vadd.f32 %v1443, %v1458
          %v1482 = vadd.f32 %v1444, %v1458
          %v1483 = vadd.f32 %v1445, %v1458
          %v1484 = vadd.f32 %v1446, %v1458
          %v1485 = vadd.f32 %v1447, %v1458
          %v1486 = vadd.f32 %v1448, %v1458
          %v1487 = vadd.f32 %v1449, %v1458
          %v1488 = vadd.f32 %v1450, %v1458
          %v1489 = vadd.f32 %v1451, %v1458
          %v1490 = vadd.f32 %v1452, %v1458
          %v1491 = vadd.f32 %v1453, %v1458
          %v1492 = vxor.u32 %v1460, 2147483648
          %v1493 = vxor.u32 %v1461, 2147483648
          %v1494 = vxor.u32 %v1462, 2147483648
          %v1495 = vxor.u32 %v1463, 2147483648
          %v1496 = vxor.u32 %v1464, 2147483648
          %v1497 = vxor.u32 %v1465, 2147483648
          %v1498 = vxor.u32 %v1466, 2147483648
          %v1499 = vxor.u32 %v1467, 2147483648
          %v1500 = vxor.u32 %v1468, 2147483648
          %v1501 = vxor.u32 %v1469, 2147483648
          %v1502 = vxor.u32 %v1470, 2147483648
          %v1503 = vxor.u32 %v1471, 2147483648
          %v1504 = vxor.u32 %v1472, 2147483648
          %v1505 = vxor.u32 %v1473, 2147483648
          %v1506 = vxor.u32 %v1474, 2147483648
          %v1507 = vxor.u32 %v1475, 2147483648
          %v1508 = vxor.u32 %v1476, 2147483648
          %v1509 = vxor.u32 %v1477, 2147483648
          %v1510 = vxor.u32 %v1478, 2147483648
          %v1511 = vxor.u32 %v1479, 2147483648
          %v1512 = vxor.u32 %v1480, 2147483648
          %v1513 = vxor.u32 %v1481, 2147483648
          %v1514 = vxor.u32 %v1482, 2147483648
          %v1515 = vxor.u32 %v1483, 2147483648
          %v1516 = vxor.u32 %v1484, 2147483648
          %v1517 = vxor.u32 %v1485, 2147483648
          %v1518 = vxor.u32 %v1486, 2147483648
          %v1519 = vxor.u32 %v1487, 2147483648
          %v1520 = vxor.u32 %v1488, 2147483648
          %v1521 = vxor.u32 %v1489, 2147483648
          %v1522 = vxor.u32 %v1490, 2147483648
          %v1523 = vxor.u32 %v1491, 2147483648
          %v1524 = vmul.f32 %v1492, 1.442695
          %v1525 = vpow.pop %v1524
          %v1526 = vmul.f32 %v1493, 1.442695
          %v1527 = vpow.pop %v1526
          %v1528 = vmul.f32 %v1494, 1.442695
          %v1529 = vpow.pop %v1528
          %v1530 = vmul.f32 %v1495, 1.442695
          %v1531 = vpow.pop %v1530
          %v1532 = vmul.f32 %v1496, 1.442695
          %v1533 = vpow.pop %v1532
          %v1534 = vmul.f32 %v1497, 1.442695
          %v1535 = vpow.pop %v1534
          %v1536 = vmul.f32 %v1498, 1.442695
          %v1537 = vpow.pop %v1536
          %v1538 = vmul.f32 %v1499, 1.442695
          %v1539 = vpow.pop %v1538
          %v1540 = vmul.f32 %v1500, 1.442695
          %v1541 = vpow.pop %v1540
          %v1542 = vmul.f32 %v1501, 1.442695
          %v1543 = vpow.pop %v1542
          %v1544 = vmul.f32 %v1502, 1.442695
          %v1545 = vpow.pop %v1544
          %v1546 = vmul.f32 %v1503, 1.442695
          %v1547 = vpow.pop %v1546
          %v1548 = vmul.f32 %v1504, 1.442695
          %v1549 = vpow.pop %v1548
          %v1550 = vmul.f32 %v1505, 1.442695
          %v1551 = vpow.pop %v1550
          %v1552 = vmul.f32 %v1506, 1.442695
          %v1553 = vpow.pop %v1552
          %v1554 = vmul.f32 %v1507, 1.442695
          %v1555 = vpow.pop %v1554
          %v1556 = vmul.f32 %v1508, 1.442695
          %v1557 = vpow.pop %v1556
          %v1558 = vmul.f32 %v1509, 1.442695
          %v1559 = vpow.pop %v1558
          %v1560 = vmul.f32 %v1510, 1.442695
          %v1561 = vpow.pop %v1560
          %v1562 = vmul.f32 %v1511, 1.442695
          %v1563 = vpow.pop %v1562
          %v1564 = vmul.f32 %v1512, 1.442695
          %v1565 = vpow.pop %v1564
          %v1566 = vmul.f32 %v1513, 1.442695
          %v1567 = vpow.pop %v1566
          %v1568 = vmul.f32 %v1514, 1.442695
          %v1569 = vpow.pop %v1568
          %v1570 = vmul.f32 %v1515, 1.442695
          %v1571 = vpow.pop %v1570
          %v1572 = vmul.f32 %v1516, 1.442695
          %v1573 = vpow.pop %v1572
          %v1574 = vmul.f32 %v1517, 1.442695
          %v1575 = vpow.pop %v1574
          %v1576 = vmul.f32 %v1518, 1.442695
          %v1577 = vpow.pop %v1576
          %v1578 = vmul.f32 %v1519, 1.442695
          %v1579 = vpow.pop %v1578
          %v1580 = vmul.f32 %v1520, 1.442695
          %v1581 = vpow.pop %v1580
          %v1582 = vmul.f32 %v1521, 1.442695
          %v1583 = vpow.pop %v1582
          %v1584 = vmul.f32 %v1522, 1.442695
          %v1585 = vpow.pop %v1584
          %v1586 = vmul.f32 %v1523, 1.442695
          %v1587 = vpow.pop %v1586
          %v1588 = vadd.f32 %v1525, 1.0
          %v1589 = vadd.f32 %v1527, 1.0
          %v1590 = vadd.f32 %v1529, 1.0
          %v1591 = vadd.f32 %v1531, 1.0
          %v1592 = vadd.f32 %v1533, 1.0
          %v1593 = vadd.f32 %v1535, 1.0
          %v1594 = vadd.f32 %v1537, 1.0
          %v1595 = vadd.f32 %v1539, 1.0
          %v1596 = vadd.f32 %v1541, 1.0
          %v1597 = vadd.f32 %v1543, 1.0
          %v1598 = vadd.f32 %v1545, 1.0
          %v1599 = vadd.f32 %v1547, 1.0
          %v1600 = vadd.f32 %v1549, 1.0
          %v1601 = vadd.f32 %v1551, 1.0
          %v1602 = vadd.f32 %v1553, 1.0
          %v1603 = vadd.f32 %v1555, 1.0
          %v1604 = vadd.f32 %v1557, 1.0
          %v1605 = vadd.f32 %v1559, 1.0
          %v1606 = vadd.f32 %v1561, 1.0
          %v1607 = vadd.f32 %v1563, 1.0
          %v1608 = vadd.f32 %v1565, 1.0
          %v1609 = vadd.f32 %v1567, 1.0
          %v1610 = vadd.f32 %v1569, 1.0
          %v1611 = vadd.f32 %v1571, 1.0
          %v1612 = vadd.f32 %v1573, 1.0
          %v1613 = vadd.f32 %v1575, 1.0
          %v1614 = vadd.f32 %v1577, 1.0
          %v1615 = vadd.f32 %v1579, 1.0
          %v1616 = vadd.f32 %v1581, 1.0
          %v1617 = vadd.f32 %v1583, 1.0
          %v1618 = vadd.f32 %v1585, 1.0
          %v1619 = vadd.f32 %v1587, 1.0
          %v1620 = vrcp.pop %v1588
          %v1621 = vmul.f32 1.0, %v1620
          %v1622 = vrcp.pop %v1589
          %v1623 = vmul.f32 1.0, %v1622
          %v1624 = vrcp.pop %v1590
          %v1625 = vmul.f32 1.0, %v1624
          %v1626 = vrcp.pop %v1591
          %v1627 = vmul.f32 1.0, %v1626
          %v1628 = vrcp.pop %v1592
          %v1629 = vmul.f32 1.0, %v1628
          %v1630 = vrcp.pop %v1593
          %v1631 = vmul.f32 1.0, %v1630
          %v1632 = vrcp.pop %v1594
          %v1633 = vmul.f32 1.0, %v1632
          %v1634 = vrcp.pop %v1595
          %v1635 = vmul.f32 1.0, %v1634
          %v1636 = vrcp.pop %v1596
          %v1637 = vmul.f32 1.0, %v1636
          %v1638 = vrcp.pop %v1597
          %v1639 = vmul.f32 1.0, %v1638
          %v1640 = vrcp.pop %v1598
          %v1641 = vmul.f32 1.0, %v1640
          %v1642 = vrcp.pop %v1599
          %v1643 = vmul.f32 1.0, %v1642
          %v1644 = vrcp.pop %v1600
          %v1645 = vmul.f32 1.0, %v1644
          %v1646 = vrcp.pop %v1601
          %v1647 = vmul.f32 1.0, %v1646
          %v1648 = vrcp.pop %v1602
          %v1649 = vmul.f32 1.0, %v1648
          %v1650 = vrcp.pop %v1603
          %v1651 = vmul.f32 1.0, %v1650
          %v1652 = vrcp.pop %v1604
          %v1653 = vmul.f32 1.0, %v1652
          %v1654 = vrcp.pop %v1605
          %v1655 = vmul.f32 1.0, %v1654
          %v1656 = vrcp.pop %v1606
          %v1657 = vmul.f32 1.0, %v1656
          %v1658 = vrcp.pop %v1607
          %v1659 = vmul.f32 1.0, %v1658
          %v1660 = vrcp.pop %v1608
          %v1661 = vmul.f32 1.0, %v1660
          %v1662 = vrcp.pop %v1609
          %v1663 = vmul.f32 1.0, %v1662
          %v1664 = vrcp.pop %v1610
          %v1665 = vmul.f32 1.0, %v1664
          %v1666 = vrcp.pop %v1611
          %v1667 = vmul.f32 1.0, %v1666
          %v1668 = vrcp.pop %v1612
          %v1669 = vmul.f32 1.0, %v1668
          %v1670 = vrcp.pop %v1613
          %v1671 = vmul.f32 1.0, %v1670
          %v1672 = vrcp.pop %v1614
          %v1673 = vmul.f32 1.0, %v1672
          %v1674 = vrcp.pop %v1615
          %v1675 = vmul.f32 1.0, %v1674
          %v1676 = vrcp.pop %v1616
          %v1677 = vmul.f32 1.0, %v1676
          %v1678 = vrcp.pop %v1617
          %v1679 = vmul.f32 1.0, %v1678
          %v1680 = vrcp.pop %v1618
          %v1681 = vmul.f32 1.0, %v1680
          %v1682 = vrcp.pop %v1619
          %v1683 = vmul.f32 1.0, %v1682
          %v1684 = vmul.f32 %v1460, %v1621
          %v1685 = vmul.f32 %v1461, %v1623
          %v1686 = vmul.f32 %v1462, %v1625
          %v1687 = vmul.f32 %v1463, %v1627
          %v1688 = vmul.f32 %v1464, %v1629
          %v1689 = vmul.f32 %v1465, %v1631
          %v1690 = vmul.f32 %v1466, %v1633
          %v1691 = vmul.f32 %v1467, %v1635
          %v1692 = vmul.f32 %v1468, %v1637
          %v1693 = vmul.f32 %v1469, %v1639
          %v1694 = vmul.f32 %v1470, %v1641
          %v1695 = vmul.f32 %v1471, %v1643
          %v1696 = vmul.f32 %v1472, %v1645
          %v1697 = vmul.f32 %v1473, %v1647
          %v1698 = vmul.f32 %v1474, %v1649
          %v1699 = vmul.f32 %v1475, %v1651
          %v1700 = vmul.f32 %v1476, %v1653
          %v1701 = vmul.f32 %v1477, %v1655
          %v1702 = vmul.f32 %v1478, %v1657
          %v1703 = vmul.f32 %v1479, %v1659
          %v1704 = vmul.f32 %v1480, %v1661
          %v1705 = vmul.f32 %v1481, %v1663
          %v1706 = vmul.f32 %v1482, %v1665
          %v1707 = vmul.f32 %v1483, %v1667
          %v1708 = vmul.f32 %v1484, %v1669
          %v1709 = vmul.f32 %v1485, %v1671
          %v1710 = vmul.f32 %v1486, %v1673
          %v1711 = vmul.f32 %v1487, %v1675
          %v1712 = vmul.f32 %v1488, %v1677
          %v1713 = vmul.f32 %v1489, %v1679
          %v1714 = vmul.f32 %v1490, %v1681
          %v1715 = vmul.f32 %v1491, %v1683
          %1716 = vst [vmem:[#allocation3] sm:$0xff] %v1097
          %1717 = vst [vmem:[#allocation3 + $0x8] sm:$0xff] %v1098
          %1718 = vst [vmem:[#allocation3 + $0x10] sm:$0xff] %v1099
          %1719 = vst [vmem:[#allocation3 + $0x18] sm:$0xff] %v1100
          %1720 = vst [vmem:[#allocation3 + $0x20] sm:$0xff] %v1101
          %1721 = vst [vmem:[#allocation3 + $0x28] sm:$0xff] %v1102
          %1722 = vst [vmem:[#allocation3 + $0x30] sm:$0xff] %v1103
          %1723 = vst [vmem:[#allocation3 + $0x38] sm:$0xff] %v1104
          %1724 = vst [vmem:[#allocation3 + $0x40] sm:$0xff] %v1105
          %1725 = vst [vmem:[#allocation3 + $0x48] sm:$0xff] %v1106
          %1726 = vst [vmem:[#allocation3 + $0x50] sm:$0xff] %v1107
          %1727 = vst [vmem:[#allocation3 + $0x58] sm:$0xff] %v1108
          %1728 = vst [vmem:[#allocation3 + $0x60] sm:$0xff] %v1109
          %1729 = vst [vmem:[#allocation3 + $0x68] sm:$0xff] %v1110
          %1730 = vst [vmem:[#allocation3 + $0x70] sm:$0xff] %v1111
          %1731 = vst [vmem:[#allocation3 + $0x78] sm:$0xff] %v1112
          %1732 = vst [vmem:[#allocation3 + $0x80] sm:$0xff] %v1113
          %1733 = vst [vmem:[#allocation3 + $0x88] sm:$0xff] %v1114
          %1734 = vst [vmem:[#allocation3 + $0x90] sm:$0xff] %v1115
          %1735 = vst [vmem:[#allocation3 + $0x98] sm:$0xff] %v1116
          %1736 = vst [vmem:[#allocation3 + $0xa0] sm:$0xff] %v1117
          %1737 = vst [vmem:[#allocation3 + $0xa8] sm:$0xff] %v1118
          %1738 = vst [vmem:[#allocation3 + $0xb0] sm:$0xff] %v1119
          %1739 = vst [vmem:[#allocation3 + $0xb8] sm:$0xff] %v1120
          %1740 = vst [vmem:[#allocation3 + $0xc0] sm:$0xff] %v1121
          %1741 = vst [vmem:[#allocation3 + $0xc8] sm:$0xff] %v1122
          %1742 = vst [vmem:[#allocation3 + $0xd0] sm:$0xff] %v1123
          %1743 = vst [vmem:[#allocation3 + $0xd8] sm:$0xff] %v1124
          %1744 = vst [vmem:[#allocation3 + $0xe0] sm:$0xff] %v1125
          %1745 = vst [vmem:[#allocation3 + $0xe8] sm:$0xff] %v1126
          %1746 = vst [vmem:[#allocation3 + $0xf0] sm:$0xff] %v1127
          %1747 = vst [vmem:[#allocation3 + $0xf8] sm:$0xff] %v1128
          %1748 = vst [vmem:[#allocation2] sm:$0xff] 0.0
          %1749 = vst [vmem:[#allocation2 + $0x8] sm:$0xff] 0.0
          %1750 = vst [vmem:[#allocation2 + $0x10] sm:$0xff] 0.0
          %1751 = vst [vmem:[#allocation2 + $0x18] sm:$0xff] %v1684
          %1752 = vst [vmem:[#allocation2 + $0x20] sm:$0xff] %v1685
          %1753 = vst [vmem:[#allocation2 + $0x28] sm:$0xff] %v1686
          %1754 = vst [vmem:[#allocation2 + $0x30] sm:$0xff] %v1687
          %1755 = vst [vmem:[#allocation2 + $0x38] sm:$0xff] %v1688
          %1756 = vst [vmem:[#allocation2 + $0x40] sm:$0xff] %v1689
          %1757 = vst [vmem:[#allocation2 + $0x48] sm:$0xff] %v1690
          %1758 = vst [vmem:[#allocation2 + $0x50] sm:$0xff] %v1691
          %1759 = vst [vmem:[#allocation2 + $0x58] sm:$0xff] %v1692
          %1760 = vst [vmem:[#allocation2 + $0x60] sm:$0xff] %v1693
          %1761 = vst [vmem:[#allocation2 + $0x68] sm:$0xff] %v1694
          %1762 = vst [vmem:[#allocation2 + $0x70] sm:$0xff] %v1695
          %1763 = vst [vmem:[#allocation2 + $0x78] sm:$0xff] %v1696
          %1764 = vst [vmem:[#allocation2 + $0x80] sm:$0xff] %v1697
          %1765 = vst [vmem:[#allocation2 + $0x88] sm:$0xff] %v1698
          %1766 = vst [vmem:[#allocation2 + $0x90] sm:$0xff] %v1699
          %1767 = vst [vmem:[#allocation2 + $0x98] sm:$0xff] %v1700
          %1768 = vst [vmem:[#allocation2 + $0xa0] sm:$0xff] %v1701
          %1769 = vst [vmem:[#allocation2 + $0xa8] sm:$0xff] %v1702
          %1770 = vst [vmem:[#allocation2 + $0xb0] sm:$0xff] %v1703
          %1771 = vst [vmem:[#allocation2 + $0xb8] sm:$0xff] %v1704
          %1772 = vst [vmem:[#allocation2 + $0xc0] sm:$0xff] %v1705
          %1773 = vst [vmem:[#allocation2 + $0xc8] sm:$0xff] %v1706
          %1774 = vst [vmem:[#allocation2 + $0xd0] sm:$0xff] %v1707
          %1775 = vst [vmem:[#allocation2 + $0xd8] sm:$0xff] %v1708
          %1776 = vst [vmem:[#allocation2 + $0xe0] sm:$0xff] %v1709
          %1777 = vst [vmem:[#allocation2 + $0xe8] sm:$0xff] %v1710
          %1778 = vst [vmem:[#allocation2 + $0xf0] sm:$0xff] %v1711
          %1779 = vst [vmem:[#allocation2 + $0xf8] sm:$0xff] %v1712
          %1780 = vst [vmem:[#allocation2 + $0x100] sm:$0xff] %v1713
          %1781 = vst [vmem:[#allocation2 + $0x108] sm:$0xff] %v1714
          %1782 = vst [vmem:[#allocation2 + $0x110] sm:$0xff] %v1715
          %1783 = vst [vmem:[#allocation2 + $0x118] sm:$0xff] 0.0
          %1784 = vst [vmem:[#allocation2 + $0x120] sm:$0xff] 0.0
          %1785 = vst [vmem:[#allocation2 + $0x128] sm:$0xff] 0.0
        $region80: #{tpu_custom_call.1} parent=59 // pred_fallthru
          _
        %s1786 = smul.u32 %s34, 256
        %s1787 = scalar_lea.vmem [#allocation3], %s1786
        %v1788 = vld [vmem:[%s1787] sm:$0xff]
        %v1789 = vld [vmem:[%s1787 + $0x8] sm:$0xff]
        %v1790 = vld [vmem:[%s1787 + $0x10] sm:$0xff]
        %v1791 = vld [vmem:[%s1787 + $0x18] sm:$0xff]
        %v1792 = vld [vmem:[%s1787 + $0x20] sm:$0xff]
        %v1793 = vld [vmem:[%s1787 + $0x28] sm:$0xff]
        %v1794 = vld [vmem:[%s1787 + $0x30] sm:$0xff]
        %v1795 = vld [vmem:[%s1787 + $0x38] sm:$0xff]
        %v1796 = vld [vmem:[%s1787 + $0x40] sm:$0xff]
        %v1797 = vld [vmem:[%s1787 + $0x48] sm:$0xff]
        %v1798 = vld [vmem:[%s1787 + $0x50] sm:$0xff]
        %v1799 = vld [vmem:[%s1787 + $0x58] sm:$0xff]
        %v1800 = vld [vmem:[%s1787 + $0x60] sm:$0xff]
        %v1801 = vld [vmem:[%s1787 + $0x68] sm:$0xff]
        %v1802 = vld [vmem:[%s1787 + $0x70] sm:$0xff]
        %v1803 = vld [vmem:[%s1787 + $0x78] sm:$0xff]
        %v1804 = vld [vmem:[%s1787 + $0x80] sm:$0xff]
        %v1805 = vld [vmem:[%s1787 + $0x88] sm:$0xff]
        %v1806 = vld [vmem:[%s1787 + $0x90] sm:$0xff]
        %v1807 = vld [vmem:[%s1787 + $0x98] sm:$0xff]
        %v1808 = vld [vmem:[%s1787 + $0xa0] sm:$0xff]
        %v1809 = vld [vmem:[%s1787 + $0xa8] sm:$0xff]
        %v1810 = vld [vmem:[%s1787 + $0xb0] sm:$0xff]
        %v1811 = vld [vmem:[%s1787 + $0xb8] sm:$0xff]
        %v1812 = vld [vmem:[%s1787 + $0xc0] sm:$0xff]
        %v1813 = vld [vmem:[%s1787 + $0xc8] sm:$0xff]
        %v1814 = vld [vmem:[%s1787 + $0xd0] sm:$0xff]
        %v1815 = vld [vmem:[%s1787 + $0xd8] sm:$0xff]
        %v1816 = vld [vmem:[%s1787 + $0xe0] sm:$0xff]
        %v1817 = vld [vmem:[%s1787 + $0xe8] sm:$0xff]
        %v1818 = vld [vmem:[%s1787 + $0xf0] sm:$0xff]
        %v1819 = vld [vmem:[%s1787 + $0xf8] sm:$0xff]
        %v1820 = vld [vmem:[#allocation9] sm:$0xff]
        %v1821 = vld [vmem:[#allocation9 + $0x8] sm:$0xff]
        %v1822 = vld [vmem:[#allocation9 + $0x10] sm:$0xff]
        %v1823 = vld [vmem:[#allocation9 + $0x18] sm:$0xff]
        %v1824 = vld [vmem:[#allocation9 + $0x20] sm:$0xff]
        %v1825 = vld [vmem:[#allocation9 + $0x28] sm:$0xff]
        %v1826 = vld [vmem:[#allocation9 + $0x30] sm:$0xff]
        %v1827 = vld [vmem:[#allocation9 + $0x38] sm:$0xff]
        %v1828 = vld [vmem:[#allocation9 + $0x40] sm:$0xff]
        %v1829 = vld [vmem:[#allocation9 + $0x48] sm:$0xff]
        %v1830 = vld [vmem:[#allocation9 + $0x50] sm:$0xff]
        %v1831 = vld [vmem:[#allocation9 + $0x58] sm:$0xff]
        %v1832 = vld [vmem:[#allocation9 + $0x60] sm:$0xff]
        %v1833 = vld [vmem:[#allocation9 + $0x68] sm:$0xff]
        %v1834 = vld [vmem:[#allocation9 + $0x70] sm:$0xff]
        %v1835 = vld [vmem:[#allocation9 + $0x78] sm:$0xff]
        %v1836 = vld [vmem:[%s8] sm:$0x1]
        %v1838 = vlaneseq
        %v1839 = vshrl.u32 %v1838, 7
        %v1840 = vsub.s32 0, %v1839
        %v1841 = vrot.slane %v1836, %v1840
        %1843 = vmatprep.subr.mxu0 0.0
        %1844 = vmatpush1.msra.mxu0 %v1820
        %1845 = vmatprep.subr.mxu0 0.0
        %1846 = vmatpush1.msra.mxu0 %v1821
        %1847 = vmatprep.subr.mxu0 0.0
        %1848 = vmatpush1.msra.mxu0 %v1822
        %1849 = vmatprep.subr.mxu0 0.0
        %1850 = vmatpush1.msra.mxu0 %v1823
        %1851 = vmatprep.subr.mxu0 0.0
        %1852 = vmatpush1.msra.mxu0 %v1824
        %1853 = vmatprep.subr.mxu0 0.0
        %1854 = vmatpush1.msra.mxu0 %v1825
        %1855 = vmatprep.subr.mxu0 0.0
        %1856 = vmatpush1.msra.mxu0 %v1826
        %1857 = vmatprep.subr.mxu0 0.0
        %1858 = vmatpush1.msra.mxu0 %v1827
        %1859 = vmatprep.subr.mxu0 0.0
        %1860 = vmatpush1.msra.mxu0 %v1828
        %1861 = vmatprep.subr.mxu0 0.0
        %1862 = vmatpush1.msra.mxu0 %v1829
        %1863 = vmatprep.subr.mxu0 0.0
        %1864 = vmatpush1.msra.mxu0 %v1830
        %1865 = vmatprep.subr.mxu0 0.0
        %1866 = vmatpush1.msra.mxu0 %v1831
        %1867 = vmatprep.subr.mxu0 0.0
        %1868 = vmatpush1.msra.mxu0 %v1832
        %1869 = vmatprep.subr.mxu0 0.0
        %1870 = vmatpush1.msra.mxu0 %v1833
        %1871 = vmatprep.subr.mxu0 0.0
        %1872 = vmatpush1.msra.mxu0 %v1834
        %1873 = vmatprep.subr.mxu0 0.0
        %1874 = vmatpush1.msra.mxu0 %v1835
        %1875 = vmatprep.subr.mxu0 0.0
        %1876 = vmatpush1.msra.mxu0 0.0
        %1877 = vmatprep.subr.mxu0 0.0
        %1878 = vmatpush1.msra.mxu0 0.0
        %1879 = vmatprep.subr.mxu0 0.0
        %1880 = vmatpush1.msra.mxu0 0.0
        %1881 = vmatprep.subr.mxu0 0.0
        %1882 = vmatpush1.msra.mxu0 0.0
        %1883 = vmatprep.subr.mxu0 0.0
        %1884 = vmatpush1.msra.mxu0 0.0
        %1885 = vmatprep.subr.mxu0 0.0
        %1886 = vmatpush1.msra.mxu0 0.0
        %1887 = vmatprep.subr.mxu0 0.0
        %1888 = vmatpush1.msra.mxu0 0.0
        %1889 = vmatprep.subr.mxu0 0.0
        %1890 = vmatpush1.msra.mxu0 0.0
        %1891 = vmatprep.subr.mxu0 0.0
        %1892 = vmatpush1.msra.mxu0 0.0
        %1893 = vmatprep.subr.mxu0 0.0
        %1894 = vmatpush1.msra.mxu0 0.0
        %1895 = vmatprep.subr.mxu0 0.0
        %1896 = vmatpush1.msra.mxu0 0.0
        %1897 = vmatprep.subr.mxu0 0.0
        %1898 = vmatpush1.msra.mxu0 0.0
        %1899 = vmatprep.subr.mxu0 0.0
        %1900 = vmatpush1.msra.mxu0 0.0
        %1901 = vmatprep.subr.mxu0 0.0
        %1902 = vmatpush1.msra.mxu0 0.0
        %1903 = vmatprep.subr.mxu0 0.0
        %1904 = vmatpush1.msra.mxu0 0.0
        %1905 = vmatprep.subr.mxu0 0.0
        %1906 = vmatpush1.msra.mxu0 0.0
        %1907 = vmatprep.mubr.f32.mxu0 0.0
        %1908 = vmatmul.mubr.f32.gmra.mrb[0].mxu0 %v1788
        %v1909 = vpop.f32.mrb[0].mxu0
        %v1910 = vadd.f32 %v1841, %v1909
        %v1911 = vpop.f32.mrb[0].mxu0
        %1912 = vmatprep.mubr.f32.mxu0 0.0
        %1913 = vmatmul.mubr.f32.gmra.mrb[0].mxu0 %v1789
        %v1914 = vpop.f32.mrb[0].mxu0
        %v1915 = vadd.f32 %v1841, %v1914
        %v1916 = vpop.f32.mrb[0].mxu0
        %1917 = vmatprep.mubr.f32.mxu0 0.0
        %1918 = vmatmul.mubr.f32.gmra.mrb[0].mxu0 %v1790
        %v1919 = vpop.f32.mrb[0].mxu0
        %v1920 = vadd.f32 %v1841, %v1919
        %v1921 = vpop.f32.mrb[0].mxu0
        %1922 = vmatprep.mubr.f32.mxu0 0.0
        %1923 = vmatmul.mubr.f32.gmra.mrb[0].mxu0 %v1791
        %v1924 = vpop.f32.mrb[0].mxu0
        %v1925 = vadd.f32 %v1841, %v1924
        %v1926 = vpop.f32.mrb[0].mxu0
        %1927 = vmatprep.mubr.f32.mxu0 0.0
        %1928 = vmatmul.mubr.f32.gmra.mrb[0].mxu0 %v1792
        %v1929 = vpop.f32.mrb[0].mxu0
        %v1930 = vadd.f32 %v1841, %v1929
        %v1931 = vpop.f32.mrb[0].mxu0
        %1932 = vmatprep.mubr.f32.mxu0 0.0
        %1933 = vmatmul.mubr.f32.gmra.mrb[0].mxu0 %v1793
        %v1934 = vpop.f32.mrb[0].mxu0
        %v1935 = vadd.f32 %v1841, %v1934
        %v1936 = vpop.f32.mrb[0].mxu0
        %1937 = vmatprep.mubr.f32.mxu0 0.0
        %1938 = vmatmul.mubr.f32.gmra.mrb[0].mxu0 %v1794
        %v1939 = vpop.f32.mrb[0].mxu0
        %v1940 = vadd.f32 %v1841, %v1939
        %v1941 = vpop.f32.mrb[0].mxu0
        %1942 = vmatprep.mubr.f32.mxu0 0.0
        %1943 = vmatmul.mubr.f32.gmra.mrb[0].mxu0 %v1795
        %v1944 = vpop.f32.mrb[0].mxu0
        %v1945 = vadd.f32 %v1841, %v1944
        %v1946 = vpop.f32.mrb[0].mxu0
        %1947 = vmatprep.mubr.f32.mxu0 0.0
        %1948 = vmatmul.mubr.f32.gmra.mrb[0].mxu0 %v1796
        %v1949 = vpop.f32.mrb[0].mxu0
        %v1950 = vadd.f32 %v1841, %v1949
        %v1951 = vpop.f32.mrb[0].mxu0
        %1952 = vmatprep.mubr.f32.mxu0 0.0
        %1953 = vmatmul.mubr.f32.gmra.mrb[0].mxu0 %v1797
        %v1954 = vpop.f32.mrb[0].mxu0
        %v1955 = vadd.f32 %v1841, %v1954
        %v1956 = vpop.f32.mrb[0].mxu0
        %1957 = vmatprep.mubr.f32.mxu0 0.0
        %1958 = vmatmul.mubr.f32.gmra.mrb[0].mxu0 %v1798
        %v1959 = vpop.f32.mrb[0].mxu0
        %v1960 = vadd.f32 %v1841, %v1959
        %v1961 = vpop.f32.mrb[0].mxu0
        %1962 = vmatprep.mubr.f32.mxu0 0.0
        %1963 = vmatmul.mubr.f32.gmra.mrb[0].mxu0 %v1799
        %v1964 = vpop.f32.mrb[0].mxu0
        %v1965 = vadd.f32 %v1841, %v1964
        %v1966 = vpop.f32.mrb[0].mxu0
        %1967 = vmatprep.mubr.f32.mxu0 0.0
        %1968 = vmatmul.mubr.f32.gmra.mrb[0].mxu0 %v1800
        %v1969 = vpop.f32.mrb[0].mxu0
        %v1970 = vadd.f32 %v1841, %v1969
        %v1971 = vpop.f32.mrb[0].mxu0
        %1972 = vmatprep.mubr.f32.mxu0 0.0
        %1973 = vmatmul.mubr.f32.gmra.mrb[0].mxu0 %v1801
        %v1974 = vpop.f32.mrb[0].mxu0
        %v1975 = vadd.f32 %v1841, %v1974
        %v1976 = vpop.f32.mrb[0].mxu0
        %1977 = vmatprep.mubr.f32.mxu0 0.0
        %1978 = vmatmul.mubr.f32.gmra.mrb[0].mxu0 %v1802
        %v1979 = vpop.f32.mrb[0].mxu0
        %v1980 = vadd.f32 %v1841, %v1979
        %v1981 = vpop.f32.mrb[0].mxu0
        %1982 = vmatprep.mubr.f32.mxu0 0.0
        %1983 = vmatmul.mubr.f32.gmra.mrb[0].mxu0 %v1803
        %v1984 = vpop.f32.mrb[0].mxu0
        %v1985 = vadd.f32 %v1841, %v1984
        %v1986 = vpop.f32.mrb[0].mxu0
        %1987 = vmatprep.mubr.f32.mxu0 0.0
        %1988 = vmatmul.mubr.f32.gmra.mrb[0].mxu0 %v1804
        %v1989 = vpop.f32.mrb[0].mxu0
        %v1990 = vadd.f32 %v1841, %v1989
        %v1991 = vpop.f32.mrb[0].mxu0
        %1992 = vmatprep.mubr.f32.mxu0 0.0
        %1993 = vmatmul.mubr.f32.gmra.mrb[0].mxu0 %v1805
        %v1994 = vpop.f32.mrb[0].mxu0
        %v1995 = vadd.f32 %v1841, %v1994
        %v1996 = vpop.f32.mrb[0].mxu0
        %1997 = vmatprep.mubr.f32.mxu0 0.0
        %1998 = vmatmul.mubr.f32.gmra.mrb[0].mxu0 %v1806
        %v1999 = vpop.f32.mrb[0].mxu0
        %v2000 = vadd.f32 %v1841, %v1999
        %v2001 = vpop.f32.mrb[0].mxu0
        %2002 = vmatprep.mubr.f32.mxu0 0.0
        %2003 = vmatmul.mubr.f32.gmra.mrb[0].mxu0 %v1807
        %v2004 = vpop.f32.mrb[0].mxu0
        %v2005 = vadd.f32 %v1841, %v2004
        %v2006 = vpop.f32.mrb[0].mxu0
        %2007 = vmatprep.mubr.f32.mxu0 0.0
        %2008 = vmatmul.mubr.f32.gmra.mrb[0].mxu0 %v1808
        %v2009 = vpop.f32.mrb[0].mxu0
        %v2010 = vadd.f32 %v1841, %v2009
        %v2011 = vpop.f32.mrb[0].mxu0
        %2012 = vmatprep.mubr.f32.mxu0 0.0
        %2013 = vmatmul.mubr.f32.gmra.mrb[0].mxu0 %v1809
        %v2014 = vpop.f32.mrb[0].mxu0
        %v2015 = vadd.f32 %v1841, %v2014
        %v2016 = vpop.f32.mrb[0].mxu0
        %2017 = vmatprep.mubr.f32.mxu0 0.0
        %2018 = vmatmul.mubr.f32.gmra.mrb[0].mxu0 %v1810
        %v2019 = vpop.f32.mrb[0].mxu0
        %v2020 = vadd.f32 %v1841, %v2019
        %v2021 = vpop.f32.mrb[0].mxu0
        %2022 = vmatprep.mubr.f32.mxu0 0.0
        %2023 = vmatmul.mubr.f32.gmra.mrb[0].mxu0 %v1811
        %v2024 = vpop.f32.mrb[0].mxu0
        %v2025 = vadd.f32 %v1841, %v2024
        %v2026 = vpop.f32.mrb[0].mxu0
        %2027 = vmatprep.mubr.f32.mxu0 0.0
        %2028 = vmatmul.mubr.f32.gmra.mrb[0].mxu0 %v1812
        %v2029 = vpop.f32.mrb[0].mxu0
        %v2030 = vadd.f32 %v1841, %v2029
        %v2031 = vpop.f32.mrb[0].mxu0
        %2032 = vmatprep.mubr.f32.mxu0 0.0
        %2033 = vmatmul.mubr.f32.gmra.mrb[0].mxu0 %v1813
        %v2034 = vpop.f32.mrb[0].mxu0
        %v2035 = vadd.f32 %v1841, %v2034
        %v2036 = vpop.f32.mrb[0].mxu0
        %2037 = vmatprep.mubr.f32.mxu0 0.0
        %2038 = vmatmul.mubr.f32.gmra.mrb[0].mxu0 %v1814
        %v2039 = vpop.f32.mrb[0].mxu0
        %v2040 = vadd.f32 %v1841, %v2039
        %v2041 = vpop.f32.mrb[0].mxu0
        %2042 = vmatprep.mubr.f32.mxu0 0.0
        %2043 = vmatmul.mubr.f32.gmra.mrb[0].mxu0 %v1815
        %v2044 = vpop.f32.mrb[0].mxu0
        %v2045 = vadd.f32 %v1841, %v2044
        %v2046 = vpop.f32.mrb[0].mxu0
        %2047 = vmatprep.mubr.f32.mxu0 0.0
        %2048 = vmatmul.mubr.f32.gmra.mrb[0].mxu0 %v1816
        %v2049 = vpop.f32.mrb[0].mxu0
        %v2050 = vadd.f32 %v1841, %v2049
        %v2051 = vpop.f32.mrb[0].mxu0
        %2052 = vmatprep.mubr.f32.mxu0 0.0
        %2053 = vmatmul.mubr.f32.gmra.mrb[0].mxu0 %v1817
        %v2054 = vpop.f32.mrb[0].mxu0
        %v2055 = vadd.f32 %v1841, %v2054
        %v2056 = vpop.f32.mrb[0].mxu0
        %2057 = vmatprep.mubr.f32.mxu0 0.0
        %2058 = vmatmul.mubr.f32.gmra.mrb[0].mxu0 %v1818
        %v2059 = vpop.f32.mrb[0].mxu0
        %v2060 = vadd.f32 %v1841, %v2059
        %v2061 = vpop.f32.mrb[0].mxu0
        %2062 = vmatprep.mubr.f32.mxu0 0.0
        %2063 = vmatmul.mubr.f32.gmra.mrb[0].mxu0 %v1819
        %v2064 = vpop.f32.mrb[0].mxu0
        %v2065 = vadd.f32 %v1841, %v2064
        %v2066 = vpop.f32.mrb[0].mxu0
        %2067 = vdwg.mxu0
        %v2068 = vlaneseq
        %v2069 = vshrl.u32 %v2068, 7
        %v2070 = vadd.s32 %v2069, 8
        %v2071 = vadd.s32 %v2069, 16
        %v2072 = vadd.s32 %v2069, 24
        %v2073 = vadd.s32 %v2069, 32
        %v2074 = vadd.s32 %v2069, 40
        %v2075 = vadd.s32 %v2069, 48
        %v2076 = vadd.s32 %v2069, 56
        %v2077 = vadd.s32 %v2069, 64
        %v2078 = vadd.s32 %v2069, 72
        %v2079 = vadd.s32 %v2069, 80
        %v2080 = vadd.s32 %v2069, 88
        %v2081 = vadd.s32 %v2069, 96
        %v2082 = vadd.s32 %v2069, 104
        %v2083 = vadd.s32 %v2069, 112
        %v2084 = vadd.s32 %v2069, 120
        %v2085 = vadd.s32 %v2069, 128
        %v2086 = vadd.s32 %v2069, 136
        %v2087 = vadd.s32 %v2069, 144
        %v2088 = vadd.s32 %v2069, 152
        %v2089 = vadd.s32 %v2069, 160
        %v2090 = vadd.s32 %v2069, 168
        %v2091 = vadd.s32 %v2069, 176
        %v2092 = vadd.s32 %v2069, 184
        %v2093 = vadd.s32 %v2069, 192
        %v2094 = vadd.s32 %v2069, 200
        %v2095 = vadd.s32 %v2069, 208
        %v2096 = vadd.s32 %v2069, 216
        %v2097 = vadd.s32 %v2069, 224
        %v2098 = vadd.s32 %v2069, 232
        %v2099 = vadd.s32 %v2069, 240
        %v2100 = vadd.s32 %v2069, 248
        %vm2101 = vcmp.lt.s32.totalorder %v2069, 0
        %v2102 = vsub.s32 0, %v2069
        %v2103 = vsel %vm2101, %v2102, %v2069
        %v2104 = vshrl.u32 %v2103, 4
        %v2105 = vand.u32 %v2103, 15
        %v2106 = vsub.s32 0, %v2105
        %v2107 = vsel %vm2101, %v2106, %v2105
        %vm2108 = vcmp.lt.s32.totalorder %v2070, 0
        %v2109 = vsub.s32 0, %v2070
        %v2110 = vsel %vm2108, %v2109, %v2070
        %v2111 = vshrl.u32 %v2110, 4
        %v2112 = vand.u32 %v2110, 15
        %v2113 = vsub.s32 0, %v2112
        %v2114 = vsel %vm2108, %v2113, %v2112
        %vm2115 = vcmp.lt.s32.totalorder %v2071, 0
        %v2116 = vsub.s32 0, %v2071
        %v2117 = vsel %vm2115, %v2116, %v2071
        %v2118 = vshrl.u32 %v2117, 4
        %v2119 = vand.u32 %v2117, 15
        %v2120 = vsub.s32 0, %v2119
        %v2121 = vsel %vm2115, %v2120, %v2119
        %vm2122 = vcmp.lt.s32.totalorder %v2072, 0
        %v2123 = vsub.s32 0, %v2072
        %v2124 = vsel %vm2122, %v2123, %v2072
        %v2125 = vshrl.u32 %v2124, 4
        %v2126 = vand.u32 %v2124, 15
        %v2127 = vsub.s32 0, %v2126
        %v2128 = vsel %vm2122, %v2127, %v2126
        %vm2129 = vcmp.lt.s32.totalorder %v2073, 0
        %v2130 = vsub.s32 0, %v2073
        %v2131 = vsel %vm2129, %v2130, %v2073
        %v2132 = vshrl.u32 %v2131, 4
        %v2133 = vand.u32 %v2131, 15
        %v2134 = vsub.s32 0, %v2133
        %v2135 = vsel %vm2129, %v2134, %v2133
        %vm2136 = vcmp.lt.s32.totalorder %v2074, 0
        %v2137 = vsub.s32 0, %v2074
        %v2138 = vsel %vm2136, %v2137, %v2074
        %v2139 = vshrl.u32 %v2138, 4
        %v2140 = vand.u32 %v2138, 15
        %v2141 = vsub.s32 0, %v2140
        %v2142 = vsel %vm2136, %v2141, %v2140
        %vm2143 = vcmp.lt.s32.totalorder %v2075, 0
        %v2144 = vsub.s32 0, %v2075
        %v2145 = vsel %vm2143, %v2144, %v2075
        %v2146 = vshrl.u32 %v2145, 4
        %v2147 = vand.u32 %v2145, 15
        %v2148 = vsub.s32 0, %v2147
        %v2149 = vsel %vm2143, %v2148, %v2147
        %vm2150 = vcmp.lt.s32.totalorder %v2076, 0
        %v2151 = vsub.s32 0, %v2076
        %v2152 = vsel %vm2150, %v2151, %v2076
        %v2153 = vshrl.u32 %v2152, 4
        %v2154 = vand.u32 %v2152, 15
        %v2155 = vsub.s32 0, %v2154
        %v2156 = vsel %vm2150, %v2155, %v2154
        %vm2157 = vcmp.lt.s32.totalorder %v2077, 0
        %v2158 = vsub.s32 0, %v2077
        %v2159 = vsel %vm2157, %v2158, %v2077
        %v2160 = vshrl.u32 %v2159, 4
        %v2161 = vand.u32 %v2159, 15
        %v2162 = vsub.s32 0, %v2161
        %v2163 = vsel %vm2157, %v2162, %v2161
        %vm2164 = vcmp.lt.s32.totalorder %v2078, 0
        %v2165 = vsub.s32 0, %v2078
        %v2166 = vsel %vm2164, %v2165, %v2078
        %v2167 = vshrl.u32 %v2166, 4
        %v2168 = vand.u32 %v2166, 15
        %v2169 = vsub.s32 0, %v2168
        %v2170 = vsel %vm2164, %v2169, %v2168
        %vm2171 = vcmp.lt.s32.totalorder %v2079, 0
        %v2172 = vsub.s32 0, %v2079
        %v2173 = vsel %vm2171, %v2172, %v2079
        %v2174 = vshrl.u32 %v2173, 4
        %v2175 = vand.u32 %v2173, 15
        %v2176 = vsub.s32 0, %v2175
        %v2177 = vsel %vm2171, %v2176, %v2175
        %vm2178 = vcmp.lt.s32.totalorder %v2080, 0
        %v2179 = vsub.s32 0, %v2080
        %v2180 = vsel %vm2178, %v2179, %v2080
        %v2181 = vshrl.u32 %v2180, 4
        %v2182 = vand.u32 %v2180, 15
        %v2183 = vsub.s32 0, %v2182
        %v2184 = vsel %vm2178, %v2183, %v2182
        %vm2185 = vcmp.lt.s32.totalorder %v2081, 0
        %v2186 = vsub.s32 0, %v2081
        %v2187 = vsel %vm2185, %v2186, %v2081
        %v2188 = vshrl.u32 %v2187, 4
        %v2189 = vand.u32 %v2187, 15
        %v2190 = vsub.s32 0, %v2189
        %v2191 = vsel %vm2185, %v2190, %v2189
        %vm2192 = vcmp.lt.s32.totalorder %v2082, 0
        %v2193 = vsub.s32 0, %v2082
        %v2194 = vsel %vm2192, %v2193, %v2082
        %v2195 = vshrl.u32 %v2194, 4
        %v2196 = vand.u32 %v2194, 15
        %v2197 = vsub.s32 0, %v2196
        %v2198 = vsel %vm2192, %v2197, %v2196
        %vm2199 = vcmp.lt.s32.totalorder %v2083, 0
        %v2200 = vsub.s32 0, %v2083
        %v2201 = vsel %vm2199, %v2200, %v2083
        %v2202 = vshrl.u32 %v2201, 4
        %v2203 = vand.u32 %v2201, 15
        %v2204 = vsub.s32 0, %v2203
        %v2205 = vsel %vm2199, %v2204, %v2203
        %vm2206 = vcmp.lt.s32.totalorder %v2084, 0
        %v2207 = vsub.s32 0, %v2084
        %v2208 = vsel %vm2206, %v2207, %v2084
        %v2209 = vshrl.u32 %v2208, 4
        %v2210 = vand.u32 %v2208, 15
        %v2211 = vsub.s32 0, %v2210
        %v2212 = vsel %vm2206, %v2211, %v2210
        %vm2213 = vcmp.lt.s32.totalorder %v2085, 0
        %v2214 = vsub.s32 0, %v2085
        %v2215 = vsel %vm2213, %v2214, %v2085
        %v2216 = vshrl.u32 %v2215, 4
        %v2217 = vand.u32 %v2215, 15
        %v2218 = vsub.s32 0, %v2217
        %v2219 = vsel %vm2213, %v2218, %v2217
        %vm2220 = vcmp.lt.s32.totalorder %v2086, 0
        %v2221 = vsub.s32 0, %v2086
        %v2222 = vsel %vm2220, %v2221, %v2086
        %v2223 = vshrl.u32 %v2222, 4
        %v2224 = vand.u32 %v2222, 15
        %v2225 = vsub.s32 0, %v2224
        %v2226 = vsel %vm2220, %v2225, %v2224
        %vm2227 = vcmp.lt.s32.totalorder %v2087, 0
        %v2228 = vsub.s32 0, %v2087
        %v2229 = vsel %vm2227, %v2228, %v2087
        %v2230 = vshrl.u32 %v2229, 4
        %v2231 = vand.u32 %v2229, 15
        %v2232 = vsub.s32 0, %v2231
        %v2233 = vsel %vm2227, %v2232, %v2231
        %vm2234 = vcmp.lt.s32.totalorder %v2088, 0
        %v2235 = vsub.s32 0, %v2088
        %v2236 = vsel %vm2234, %v2235, %v2088
        %v2237 = vshrl.u32 %v2236, 4
        %v2238 = vand.u32 %v2236, 15
        %v2239 = vsub.s32 0, %v2238
        %v2240 = vsel %vm2234, %v2239, %v2238
        %vm2241 = vcmp.lt.s32.totalorder %v2089, 0
        %v2242 = vsub.s32 0, %v2089
        %v2243 = vsel %vm2241, %v2242, %v2089
        %v2244 = vshrl.u32 %v2243, 4
        %v2245 = vand.u32 %v2243, 15
        %v2246 = vsub.s32 0, %v2245
        %v2247 = vsel %vm2241, %v2246, %v2245
        %vm2248 = vcmp.lt.s32.totalorder %v2090, 0
        %v2249 = vsub.s32 0, %v2090
        %v2250 = vsel %vm2248, %v2249, %v2090
        %v2251 = vshrl.u32 %v2250, 4
        %v2252 = vand.u32 %v2250, 15
        %v2253 = vsub.s32 0, %v2252
        %v2254 = vsel %vm2248, %v2253, %v2252
        %vm2255 = vcmp.lt.s32.totalorder %v2091, 0
        %v2256 = vsub.s32 0, %v2091
        %v2257 = vsel %vm2255, %v2256, %v2091
        %v2258 = vshrl.u32 %v2257, 4
        %v2259 = vand.u32 %v2257, 15
        %v2260 = vsub.s32 0, %v2259
        %v2261 = vsel %vm2255, %v2260, %v2259
        %vm2262 = vcmp.lt.s32.totalorder %v2092, 0
        %v2263 = vsub.s32 0, %v2092
        %v2264 = vsel %vm2262, %v2263, %v2092
        %v2265 = vshrl.u32 %v2264, 4
        %v2266 = vand.u32 %v2264, 15
        %v2267 = vsub.s32 0, %v2266
        %v2268 = vsel %vm2262, %v2267, %v2266
        %vm2269 = vcmp.lt.s32.totalorder %v2093, 0
        %v2270 = vsub.s32 0, %v2093
        %v2271 = vsel %vm2269, %v2270, %v2093
        %v2272 = vshrl.u32 %v2271, 4
        %v2273 = vand.u32 %v2271, 15
        %v2274 = vsub.s32 0, %v2273
        %v2275 = vsel %vm2269, %v2274, %v2273
        %vm2276 = vcmp.lt.s32.totalorder %v2094, 0
        %v2277 = vsub.s32 0, %v2094
        %v2278 = vsel %vm2276, %v2277, %v2094
        %v2279 = vshrl.u32 %v2278, 4
        %v2280 = vand.u32 %v2278, 15
        %v2281 = vsub.s32 0, %v2280
        %v2282 = vsel %vm2276, %v2281, %v2280
        %vm2283 = vcmp.lt.s32.totalorder %v2095, 0
        %v2284 = vsub.s32 0, %v2095
        %v2285 = vsel %vm2283, %v2284, %v2095
        %v2286 = vshrl.u32 %v2285, 4
        %v2287 = vand.u32 %v2285, 15
        %v2288 = vsub.s32 0, %v2287
        %v2289 = vsel %vm2283, %v2288, %v2287
        %vm2290 = vcmp.lt.s32.totalorder %v2096, 0
        %v2291 = vsub.s32 0, %v2096
        %v2292 = vsel %vm2290, %v2291, %v2096
        %v2293 = vshrl.u32 %v2292, 4
        %v2294 = vand.u32 %v2292, 15
        %v2295 = vsub.s32 0, %v2294
        %v2296 = vsel %vm2290, %v2295, %v2294
        %vm2297 = vcmp.lt.s32.totalorder %v2097, 0
        %v2298 = vsub.s32 0, %v2097
        %v2299 = vsel %vm2297, %v2298, %v2097
        %v2300 = vshrl.u32 %v2299, 4
        %v2301 = vand.u32 %v2299, 15
        %v2302 = vsub.s32 0, %v2301
        %v2303 = vsel %vm2297, %v2302, %v2301
        %vm2304 = vcmp.lt.s32.totalorder %v2098, 0
        %v2305 = vsub.s32 0, %v2098
        %v2306 = vsel %vm2304, %v2305, %v2098
        %v2307 = vshrl.u32 %v2306, 4
        %v2308 = vand.u32 %v2306, 15
        %v2309 = vsub.s32 0, %v2308
        %v2310 = vsel %vm2304, %v2309, %v2308
        %vm2311 = vcmp.lt.s32.totalorder %v2099, 0
        %v2312 = vsub.s32 0, %v2099
        %v2313 = vsel %vm2311, %v2312, %v2099
        %v2314 = vshrl.u32 %v2313, 4
        %v2315 = vand.u32 %v2313, 15
        %v2316 = vsub.s32 0, %v2315
        %v2317 = vsel %vm2311, %v2316, %v2315
        %vm2318 = vcmp.lt.s32.totalorder %v2100, 0
        %v2319 = vsub.s32 0, %v2100
        %v2320 = vsel %vm2318, %v2319, %v2100
        %v2321 = vshrl.u32 %v2320, 4
        %v2322 = vand.u32 %v2320, 15
        %v2323 = vsub.s32 0, %v2322
        %v2324 = vsel %vm2318, %v2323, %v2322
        %vm2325 = vcmp.ne.s32.totalorder %v2107, 0
        %vm2326 = vcmp.ne.s32.totalorder %v2114, 0
        %vm2327 = vcmp.ne.s32.totalorder %v2121, 0
        %vm2328 = vcmp.ne.s32.totalorder %v2128, 0
        %vm2329 = vcmp.ne.s32.totalorder %v2135, 0
        %vm2330 = vcmp.ne.s32.totalorder %v2142, 0
        %vm2331 = vcmp.ne.s32.totalorder %v2149, 0
        %vm2332 = vcmp.ne.s32.totalorder %v2156, 0
        %vm2333 = vcmp.ne.s32.totalorder %v2163, 0
        %vm2334 = vcmp.ne.s32.totalorder %v2170, 0
        %vm2335 = vcmp.ne.s32.totalorder %v2177, 0
        %vm2336 = vcmp.ne.s32.totalorder %v2184, 0
        %vm2337 = vcmp.ne.s32.totalorder %v2191, 0
        %vm2338 = vcmp.ne.s32.totalorder %v2198, 0
        %vm2339 = vcmp.ne.s32.totalorder %v2205, 0
        %vm2340 = vcmp.ne.s32.totalorder %v2212, 0
        %vm2341 = vcmp.ne.s32.totalorder %v2219, 0
        %vm2342 = vcmp.ne.s32.totalorder %v2226, 0
        %vm2343 = vcmp.ne.s32.totalorder %v2233, 0
        %vm2344 = vcmp.ne.s32.totalorder %v2240, 0
        %vm2345 = vcmp.ne.s32.totalorder %v2247, 0
        %vm2346 = vcmp.ne.s32.totalorder %v2254, 0
        %vm2347 = vcmp.ne.s32.totalorder %v2261, 0
        %vm2348 = vcmp.ne.s32.totalorder %v2268, 0
        %vm2349 = vcmp.ne.s32.totalorder %v2275, 0
        %vm2350 = vcmp.ne.s32.totalorder %v2282, 0
        %vm2351 = vcmp.ne.s32.totalorder %v2289, 0
        %vm2352 = vcmp.ne.s32.totalorder %v2296, 0
        %vm2353 = vcmp.ne.s32.totalorder %v2303, 0
        %vm2354 = vcmp.ne.s32.totalorder %v2310, 0
        %vm2355 = vcmp.ne.s32.totalorder %v2317, 0
        %vm2356 = vcmp.ne.s32.totalorder %v2324, 0
        %vm2357 = vcmp.lt.s32.totalorder %v2107, 0
        %vm2358 = vcmp.lt.s32.totalorder %v2114, 0
        %vm2359 = vcmp.lt.s32.totalorder %v2121, 0
        %vm2360 = vcmp.lt.s32.totalorder %v2128, 0
        %vm2361 = vcmp.lt.s32.totalorder %v2135, 0
        %vm2362 = vcmp.lt.s32.totalorder %v2142, 0
        %vm2363 = vcmp.lt.s32.totalorder %v2149, 0
        %vm2364 = vcmp.lt.s32.totalorder %v2156, 0
        %vm2365 = vcmp.lt.s32.totalorder %v2163, 0
        %vm2366 = vcmp.lt.s32.totalorder %v2170, 0
        %vm2367 = vcmp.lt.s32.totalorder %v2177, 0
        %vm2368 = vcmp.lt.s32.totalorder %v2184, 0
        %vm2369 = vcmp.lt.s32.totalorder %v2191, 0
        %vm2370 = vcmp.lt.s32.totalorder %v2198, 0
        %vm2371 = vcmp.lt.s32.totalorder %v2205, 0
        %vm2372 = vcmp.lt.s32.totalorder %v2212, 0
        %vm2373 = vcmp.lt.s32.totalorder %v2219, 0
        %vm2374 = vcmp.lt.s32.totalorder %v2226, 0
        %vm2375 = vcmp.lt.s32.totalorder %v2233, 0
        %vm2376 = vcmp.lt.s32.totalorder %v2240, 0
        %vm2377 = vcmp.lt.s32.totalorder %v2247, 0
        %vm2378 = vcmp.lt.s32.totalorder %v2254, 0
        %vm2379 = vcmp.lt.s32.totalorder %v2261, 0
        %vm2380 = vcmp.lt.s32.totalorder %v2268, 0
        %vm2381 = vcmp.lt.s32.totalorder %v2275, 0
        %vm2382 = vcmp.lt.s32.totalorder %v2282, 0
        %vm2383 = vcmp.lt.s32.totalorder %v2289, 0
        %vm2384 = vcmp.lt.s32.totalorder %v2296, 0
        %vm2385 = vcmp.lt.s32.totalorder %v2303, 0
        %vm2386 = vcmp.lt.s32.totalorder %v2310, 0
        %vm2387 = vcmp.lt.s32.totalorder %v2317, 0
        %vm2388 = vcmp.lt.s32.totalorder %v2324, 0
        %vm2389 = vmand %vm2357, %vm2325
        %vm2390 = vmand %vm2358, %vm2326
        %vm2391 = vmand %vm2359, %vm2327
        %vm2392 = vmand %vm2360, %vm2328
        %vm2393 = vmand %vm2361, %vm2329
        %vm2394 = vmand %vm2362, %vm2330
        %vm2395 = vmand %vm2363, %vm2331
        %vm2396 = vmand %vm2364, %vm2332
        %vm2397 = vmand %vm2365, %vm2333
        %vm2398 = vmand %vm2366, %vm2334
        %vm2399 = vmand %vm2367, %vm2335
        %vm2400 = vmand %vm2368, %vm2336
        %vm2401 = vmand %vm2369, %vm2337
        %vm2402 = vmand %vm2370, %vm2338
        %vm2403 = vmand %vm2371, %vm2339
        %vm2404 = vmand %vm2372, %vm2340
        %vm2405 = vmand %vm2373, %vm2341
        %vm2406 = vmand %vm2374, %vm2342
        %vm2407 = vmand %vm2375, %vm2343
        %vm2408 = vmand %vm2376, %vm2344
        %vm2409 = vmand %vm2377, %vm2345
        %vm2410 = vmand %vm2378, %vm2346
        %vm2411 = vmand %vm2379, %vm2347
        %vm2412 = vmand %vm2380, %vm2348
        %vm2413 = vmand %vm2381, %vm2349
        %vm2414 = vmand %vm2382, %vm2350
        %vm2415 = vmand %vm2383, %vm2351
        %vm2416 = vmand %vm2384, %vm2352
        %vm2417 = vmand %vm2385, %vm2353
        %vm2418 = vmand %vm2386, %vm2354
        %vm2419 = vmand %vm2387, %vm2355
        %vm2420 = vmand %vm2388, %vm2356
        %v2421 = vadd.s32 %v2107, 16
        %v2422 = vadd.s32 %v2114, 16
        %v2423 = vadd.s32 %v2121, 16
        %v2424 = vadd.s32 %v2128, 16
        %v2425 = vadd.s32 %v2135, 16
        %v2426 = vadd.s32 %v2142, 16
        %v2427 = vadd.s32 %v2149, 16
        %v2428 = vadd.s32 %v2156, 16
        %v2429 = vadd.s32 %v2163, 16
        %v2430 = vadd.s32 %v2170, 16
        %v2431 = vadd.s32 %v2177, 16
        %v2432 = vadd.s32 %v2184, 16
        %v2433 = vadd.s32 %v2191, 16
        %v2434 = vadd.s32 %v2198, 16
        %v2435 = vadd.s32 %v2205, 16
        %v2436 = vadd.s32 %v2212, 16
        %v2437 = vadd.s32 %v2219, 16
        %v2438 = vadd.s32 %v2226, 16
        %v2439 = vadd.s32 %v2233, 16
        %v2440 = vadd.s32 %v2240, 16
        %v2441 = vadd.s32 %v2247, 16
        %v2442 = vadd.s32 %v2254, 16
        %v2443 = vadd.s32 %v2261, 16
        %v2444 = vadd.s32 %v2268, 16
        %v2445 = vadd.s32 %v2275, 16
        %v2446 = vadd.s32 %v2282, 16
        %v2447 = vadd.s32 %v2289, 16
        %v2448 = vadd.s32 %v2296, 16
        %v2449 = vadd.s32 %v2303, 16
        %v2450 = vadd.s32 %v2310, 16
        %v2451 = vadd.s32 %v2317, 16
        %v2452 = vadd.s32 %v2324, 16
        %v2453 = vsel %vm2389, %v2421, %v2107
        %v2454 = vsel %vm2390, %v2422, %v2114
        %v2455 = vsel %vm2391, %v2423, %v2121
        %v2456 = vsel %vm2392, %v2424, %v2128
        %v2457 = vsel %vm2393, %v2425, %v2135
        %v2458 = vsel %vm2394, %v2426, %v2142
        %v2459 = vsel %vm2395, %v2427, %v2149
        %v2460 = vsel %vm2396, %v2428, %v2156
        %v2461 = vsel %vm2397, %v2429, %v2163
        %v2462 = vsel %vm2398, %v2430, %v2170
        %v2463 = vsel %vm2399, %v2431, %v2177
        %v2464 = vsel %vm2400, %v2432, %v2184
        %v2465 = vsel %vm2401, %v2433, %v2191
        %v2466 = vsel %vm2402, %v2434, %v2198
        %v2467 = vsel %vm2403, %v2435, %v2205
        %v2468 = vsel %vm2404, %v2436, %v2212
        %v2469 = vsel %vm2405, %v2437, %v2219
        %v2470 = vsel %vm2406, %v2438, %v2226
        %v2471 = vsel %vm2407, %v2439, %v2233
        %v2472 = vsel %vm2408, %v2440, %v2240
        %v2473 = vsel %vm2409, %v2441, %v2247
        %v2474 = vsel %vm2410, %v2442, %v2254
        %v2475 = vsel %vm2411, %v2443, %v2261
        %v2476 = vsel %vm2412, %v2444, %v2268
        %v2477 = vsel %vm2413, %v2445, %v2275
        %v2478 = vsel %vm2414, %v2446, %v2282
        %v2479 = vsel %vm2415, %v2447, %v2289
        %v2480 = vsel %vm2416, %v2448, %v2296
        %v2481 = vsel %vm2417, %v2449, %v2303
        %v2482 = vsel %vm2418, %v2450, %v2310
        %v2483 = vsel %vm2419, %v2451, %v2317
        %v2484 = vsel %vm2420, %v2452, %v2324
        %vm2485 = vcmp.ne.s32.totalorder %v2453, 0
        %vm2486 = vcmp.ne.s32.totalorder %v2454, 0
        %vm2487 = vcmp.ne.s32.totalorder %v2455, 0
        %vm2488 = vcmp.ne.s32.totalorder %v2456, 0
        %vm2489 = vcmp.ne.s32.totalorder %v2457, 0
        %vm2490 = vcmp.ne.s32.totalorder %v2458, 0
        %vm2491 = vcmp.ne.s32.totalorder %v2459, 0
        %vm2492 = vcmp.ne.s32.totalorder %v2460, 0
        %vm2493 = vcmp.ne.s32.totalorder %v2461, 0
        %vm2494 = vcmp.ne.s32.totalorder %v2462, 0
        %vm2495 = vcmp.ne.s32.totalorder %v2463, 0
        %vm2496 = vcmp.ne.s32.totalorder %v2464, 0
        %vm2497 = vcmp.ne.s32.totalorder %v2465, 0
        %vm2498 = vcmp.ne.s32.totalorder %v2466, 0
        %vm2499 = vcmp.ne.s32.totalorder %v2467, 0
        %vm2500 = vcmp.ne.s32.totalorder %v2468, 0
        %vm2501 = vcmp.ne.s32.totalorder %v2469, 0
        %vm2502 = vcmp.ne.s32.totalorder %v2470, 0
        %vm2503 = vcmp.ne.s32.totalorder %v2471, 0
        %vm2504 = vcmp.ne.s32.totalorder %v2472, 0
        %vm2505 = vcmp.ne.s32.totalorder %v2473, 0
        %vm2506 = vcmp.ne.s32.totalorder %v2474, 0
        %vm2507 = vcmp.ne.s32.totalorder %v2475, 0
        %vm2508 = vcmp.ne.s32.totalorder %v2476, 0
        %vm2509 = vcmp.ne.s32.totalorder %v2477, 0
        %vm2510 = vcmp.ne.s32.totalorder %v2478, 0
        %vm2511 = vcmp.ne.s32.totalorder %v2479, 0
        %vm2512 = vcmp.ne.s32.totalorder %v2480, 0
        %vm2513 = vcmp.ne.s32.totalorder %v2481, 0
        %vm2514 = vcmp.ne.s32.totalorder %v2482, 0
        %vm2515 = vcmp.ne.s32.totalorder %v2483, 0
        %vm2516 = vcmp.ne.s32.totalorder %v2484, 0
        %vm2517 = vcmp.ne.s32.totalorder %v2453, 15
        %vm2518 = vcmp.ne.s32.totalorder %v2454, 15
        %vm2519 = vcmp.ne.s32.totalorder %v2455, 15
        %vm2520 = vcmp.ne.s32.totalorder %v2456, 15
        %vm2521 = vcmp.ne.s32.totalorder %v2457, 15
        %vm2522 = vcmp.ne.s32.totalorder %v2458, 15
        %vm2523 = vcmp.ne.s32.totalorder %v2459, 15
        %vm2524 = vcmp.ne.s32.totalorder %v2460, 15
        %vm2525 = vcmp.ne.s32.totalorder %v2461, 15
        %vm2526 = vcmp.ne.s32.totalorder %v2462, 15
        %vm2527 = vcmp.ne.s32.totalorder %v2463, 15
        %vm2528 = vcmp.ne.s32.totalorder %v2464, 15
        %vm2529 = vcmp.ne.s32.totalorder %v2465, 15
        %vm2530 = vcmp.ne.s32.totalorder %v2466, 15
        %vm2531 = vcmp.ne.s32.totalorder %v2467, 15
        %vm2532 = vcmp.ne.s32.totalorder %v2468, 15
        %vm2533 = vcmp.ne.s32.totalorder %v2469, 15
        %vm2534 = vcmp.ne.s32.totalorder %v2470, 15
        %vm2535 = vcmp.ne.s32.totalorder %v2471, 15
        %vm2536 = vcmp.ne.s32.totalorder %v2472, 15
        %vm2537 = vcmp.ne.s32.totalorder %v2473, 15
        %vm2538 = vcmp.ne.s32.totalorder %v2474, 15
        %vm2539 = vcmp.ne.s32.totalorder %v2475, 15
        %vm2540 = vcmp.ne.s32.totalorder %v2476, 15
        %vm2541 = vcmp.ne.s32.totalorder %v2477, 15
        %vm2542 = vcmp.ne.s32.totalorder %v2478, 15
        %vm2543 = vcmp.ne.s32.totalorder %v2479, 15
        %vm2544 = vcmp.ne.s32.totalorder %v2480, 15
        %vm2545 = vcmp.ne.s32.totalorder %v2481, 15
        %vm2546 = vcmp.ne.s32.totalorder %v2482, 15
        %vm2547 = vcmp.ne.s32.totalorder %v2483, 15
        %vm2548 = vcmp.ne.s32.totalorder %v2484, 15
        %s2549 = sadd.s32 %s1786, 7
        %s2550 = scalar_lea.vmem [#allocation2], %s2549
        %v2551 = vld [vmem:[%s2550] sm:$0xff]
        %v2552 = vld [vmem:[%s2550 + $0x8] sm:$0xff]
        %v2553 = vld [vmem:[%s2550 + $0x10] sm:$0xff]
        %v2554 = vld [vmem:[%s2550 + $0x18] sm:$0xff]
        %v2555 = vld [vmem:[%s2550 + $0x20] sm:$0xff]
        %v2556 = vld [vmem:[%s2550 + $0x28] sm:$0xff]
        %v2557 = vld [vmem:[%s2550 + $0x30] sm:$0xff]
        %v2558 = vld [vmem:[%s2550 + $0x38] sm:$0xff]
        %v2559 = vld [vmem:[%s2550 + $0x40] sm:$0xff]
        %v2560 = vld [vmem:[%s2550 + $0x48] sm:$0xff]
        %v2561 = vld [vmem:[%s2550 + $0x50] sm:$0xff]
        %v2562 = vld [vmem:[%s2550 + $0x58] sm:$0xff]
        %v2563 = vld [vmem:[%s2550 + $0x60] sm:$0xff]
        %v2564 = vld [vmem:[%s2550 + $0x68] sm:$0xff]
        %v2565 = vld [vmem:[%s2550 + $0x70] sm:$0xff]
        %v2566 = vld [vmem:[%s2550 + $0x78] sm:$0xff]
        %v2567 = vld [vmem:[%s2550 + $0x80] sm:$0xff]
        %v2568 = vld [vmem:[%s2550 + $0x88] sm:$0xff]
        %v2569 = vld [vmem:[%s2550 + $0x90] sm:$0xff]
        %v2570 = vld [vmem:[%s2550 + $0x98] sm:$0xff]
        %v2571 = vld [vmem:[%s2550 + $0xa0] sm:$0xff]
        %v2572 = vld [vmem:[%s2550 + $0xa8] sm:$0xff]
        %v2573 = vld [vmem:[%s2550 + $0xb0] sm:$0xff]
        %v2574 = vld [vmem:[%s2550 + $0xb8] sm:$0xff]
        %v2575 = vld [vmem:[%s2550 + $0xc0] sm:$0xff]
        %v2576 = vld [vmem:[%s2550 + $0xc8] sm:$0xff]
        %v2577 = vld [vmem:[%s2550 + $0xd0] sm:$0xff]
        %v2578 = vld [vmem:[%s2550 + $0xd8] sm:$0xff]
        %v2579 = vld [vmem:[%s2550 + $0xe0] sm:$0xff]
        %v2580 = vld [vmem:[%s2550 + $0xe8] sm:$0xff]
        %v2581 = vld [vmem:[%s2550 + $0xf0] sm:$0xff]
        %v2582 = vld [vmem:[%s2550 + $0xf8] sm:$0xff]
        %v2583 = vsel %vm2485, %v2551, 0.0
        %v2584 = vsel %vm2486, %v2552, 0.0
        %v2585 = vsel %vm2487, %v2553, 0.0
        %v2586 = vsel %vm2488, %v2554, 0.0
        %v2587 = vsel %vm2489, %v2555, 0.0
        %v2588 = vsel %vm2490, %v2556, 0.0
        %v2589 = vsel %vm2491, %v2557, 0.0
        %v2590 = vsel %vm2492, %v2558, 0.0
        %v2591 = vsel %vm2493, %v2559, 0.0
        %v2592 = vsel %vm2494, %v2560, 0.0
        %v2593 = vsel %vm2495, %v2561, 0.0
        %v2594 = vsel %vm2496, %v2562, 0.0
        %v2595 = vsel %vm2497, %v2563, 0.0
        %v2596 = vsel %vm2498, %v2564, 0.0
        %v2597 = vsel %vm2499, %v2565, 0.0
        %v2598 = vsel %vm2500, %v2566, 0.0
        %v2599 = vsel %vm2501, %v2567, 0.0
        %v2600 = vsel %vm2502, %v2568, 0.0
        %v2601 = vsel %vm2503, %v2569, 0.0
        %v2602 = vsel %vm2504, %v2570, 0.0
        %v2603 = vsel %vm2505, %v2571, 0.0
        %v2604 = vsel %vm2506, %v2572, 0.0
        %v2605 = vsel %vm2507, %v2573, 0.0
        %v2606 = vsel %vm2508, %v2574, 0.0
        %v2607 = vsel %vm2509, %v2575, 0.0
        %v2608 = vsel %vm2510, %v2576, 0.0
        %v2609 = vsel %vm2511, %v2577, 0.0
        %v2610 = vsel %vm2512, %v2578, 0.0
        %v2611 = vsel %vm2513, %v2579, 0.0
        %v2612 = vsel %vm2514, %v2580, 0.0
        %v2613 = vsel %vm2515, %v2581, 0.0
        %v2614 = vsel %vm2516, %v2582, 0.0
        %v2615 = vld [vmem:[#allocation7] sm:$0xff]
        %v2616 = vld [vmem:[#allocation7 + $0x8] sm:$0xff]
        %v2617 = vld [vmem:[#allocation7 + $0x10] sm:$0xff]
        %v2618 = vld [vmem:[#allocation7 + $0x18] sm:$0xff]
        %v2619 = vld [vmem:[#allocation7 + $0x20] sm:$0xff]
        %v2620 = vld [vmem:[#allocation7 + $0x28] sm:$0xff]
        %v2621 = vld [vmem:[#allocation7 + $0x30] sm:$0xff]
        %v2622 = vld [vmem:[#allocation7 + $0x38] sm:$0xff]
        %v2623 = vld [vmem:[#allocation7 + $0x40] sm:$0xff]
        %v2624 = vld [vmem:[#allocation7 + $0x48] sm:$0xff]
        %v2625 = vld [vmem:[#allocation7 + $0x50] sm:$0xff]
        %v2626 = vld [vmem:[#allocation7 + $0x58] sm:$0xff]
        %v2627 = vld [vmem:[#allocation7 + $0x60] sm:$0xff]
        %v2628 = vld [vmem:[#allocation7 + $0x68] sm:$0xff]
        %v2629 = vld [vmem:[#allocation7 + $0x70] sm:$0xff]
        %v2630 = vld [vmem:[#allocation7 + $0x78] sm:$0xff]
        %s2631 = sadd.s32 %s1786, 8
        %s2632 = scalar_lea.vmem [#allocation2], %s2631
        %v2633 = vld [vmem:[%s2632] sm:$0xff]
        %v2634 = vld [vmem:[%s2632 + $0x8] sm:$0xff]
        %v2635 = vld [vmem:[%s2632 + $0x10] sm:$0xff]
        %v2636 = vld [vmem:[%s2632 + $0x18] sm:$0xff]
        %v2637 = vld [vmem:[%s2632 + $0x20] sm:$0xff]
        %v2638 = vld [vmem:[%s2632 + $0x28] sm:$0xff]
        %v2639 = vld [vmem:[%s2632 + $0x30] sm:$0xff]
        %v2640 = vld [vmem:[%s2632 + $0x38] sm:$0xff]
        %v2641 = vld [vmem:[%s2632 + $0x40] sm:$0xff]
        %v2642 = vld [vmem:[%s2632 + $0x48] sm:$0xff]
        %v2643 = vld [vmem:[%s2632 + $0x50] sm:$0xff]
        %v2644 = vld [vmem:[%s2632 + $0x58] sm:$0xff]
        %v2645 = vld [vmem:[%s2632 + $0x60] sm:$0xff]
        %v2646 = vld [vmem:[%s2632 + $0x68] sm:$0xff]
        %v2647 = vld [vmem:[%s2632 + $0x70] sm:$0xff]
        %v2648 = vld [vmem:[%s2632 + $0x78] sm:$0xff]
        %v2649 = vld [vmem:[%s2632 + $0x80] sm:$0xff]
        %v2650 = vld [vmem:[%s2632 + $0x88] sm:$0xff]
        %v2651 = vld [vmem:[%s2632 + $0x90] sm:$0xff]
        %v2652 = vld [vmem:[%s2632 + $0x98] sm:$0xff]
        %v2653 = vld [vmem:[%s2632 + $0xa0] sm:$0xff]
        %v2654 = vld [vmem:[%s2632 + $0xa8] sm:$0xff]
        %v2655 = vld [vmem:[%s2632 + $0xb0] sm:$0xff]
        %v2656 = vld [vmem:[%s2632 + $0xb8] sm:$0xff]
        %v2657 = vld [vmem:[%s2632 + $0xc0] sm:$0xff]
        %v2658 = vld [vmem:[%s2632 + $0xc8] sm:$0xff]
        %v2659 = vld [vmem:[%s2632 + $0xd0] sm:$0xff]
        %v2660 = vld [vmem:[%s2632 + $0xd8] sm:$0xff]
        %v2661 = vld [vmem:[%s2632 + $0xe0] sm:$0xff]
        %v2662 = vld [vmem:[%s2632 + $0xe8] sm:$0xff]
        %v2663 = vld [vmem:[%s2632 + $0xf0] sm:$0xff]
        %v2664 = vld [vmem:[%s2632 + $0xf8] sm:$0xff]
        %s2665 = scalar_lea.vmem [#allocation7], 128
        %v2666 = vld [vmem:[%s2665] sm:$0xff]
        %v2667 = vld [vmem:[%s2665 + $0x8] sm:$0xff]
        %v2668 = vld [vmem:[%s2665 + $0x10] sm:$0xff]
        %v2669 = vld [vmem:[%s2665 + $0x18] sm:$0xff]
        %v2670 = vld [vmem:[%s2665 + $0x20] sm:$0xff]
        %v2671 = vld [vmem:[%s2665 + $0x28] sm:$0xff]
        %v2672 = vld [vmem:[%s2665 + $0x30] sm:$0xff]
        %v2673 = vld [vmem:[%s2665 + $0x38] sm:$0xff]
        %v2674 = vld [vmem:[%s2665 + $0x40] sm:$0xff]
        %v2675 = vld [vmem:[%s2665 + $0x48] sm:$0xff]
        %v2676 = vld [vmem:[%s2665 + $0x50] sm:$0xff]
        %v2677 = vld [vmem:[%s2665 + $0x58] sm:$0xff]
        %v2678 = vld [vmem:[%s2665 + $0x60] sm:$0xff]
        %v2679 = vld [vmem:[%s2665 + $0x68] sm:$0xff]
        %v2680 = vld [vmem:[%s2665 + $0x70] sm:$0xff]
        %v2681 = vld [vmem:[%s2665 + $0x78] sm:$0xff]
        %2682 = vmatprep.subr.mxu0 0.0
        %2683 = vmatpush1.msra.mxu0 %v2666
        %2684 = vmatprep.subr.mxu0 0.0
        %2685 = vmatpush1.msra.mxu0 %v2667
        %2686 = vmatprep.subr.mxu0 0.0
        %2687 = vmatpush1.msra.mxu0 %v2668
        %2688 = vmatprep.subr.mxu0 0.0
        %2689 = vmatpush1.msra.mxu0 %v2669
        %2690 = vmatprep.subr.mxu0 0.0
        %2691 = vmatpush1.msra.mxu0 %v2670
        %2692 = vmatprep.subr.mxu0 0.0
        %2693 = vmatpush1.msra.mxu0 %v2671
        %2694 = vmatprep.subr.mxu0 0.0
        %2695 = vmatpush1.msra.mxu0 %v2672
        %2696 = vmatprep.subr.mxu0 0.0
        %2697 = vmatpush1.msra.mxu0 %v2673
        %2698 = vmatprep.subr.mxu0 0.0
        %2699 = vmatpush1.msra.mxu0 %v2674
        %2700 = vmatprep.subr.mxu0 0.0
        %2701 = vmatpush1.msra.mxu0 %v2675
        %2702 = vmatprep.subr.mxu0 0.0
        %2703 = vmatpush1.msra.mxu0 %v2676
        %2704 = vmatprep.subr.mxu0 0.0
        %2705 = vmatpush1.msra.mxu0 %v2677
        %2706 = vmatprep.subr.mxu0 0.0
        %2707 = vmatpush1.msra.mxu0 %v2678
        %2708 = vmatprep.subr.mxu0 0.0
        %2709 = vmatpush1.msra.mxu0 %v2679
        %2710 = vmatprep.subr.mxu0 0.0
        %2711 = vmatpush1.msra.mxu0 %v2680
        %2712 = vmatprep.subr.mxu0 0.0
        %2713 = vmatpush1.msra.mxu0 %v2681
        %2714 = vmatprep.subr.mxu0 0.0
        %2715 = vmatpush1.msra.mxu0 0.0
        %2716 = vmatprep.subr.mxu0 0.0
        %2717 = vmatpush1.msra.mxu0 0.0
        %2718 = vmatprep.subr.mxu0 0.0
        %2719 = vmatpush1.msra.mxu0 0.0
        %2720 = vmatprep.subr.mxu0 0.0
        %2721 = vmatpush1.msra.mxu0 0.0
        %2722 = vmatprep.subr.mxu0 0.0
        %2723 = vmatpush1.msra.mxu0 0.0
        %2724 = vmatprep.subr.mxu0 0.0
        %2725 = vmatpush1.msra.mxu0 0.0
        %2726 = vmatprep.subr.mxu0 0.0
        %2727 = vmatpush1.msra.mxu0 0.0
        %2728 = vmatprep.subr.mxu0 0.0
        %2729 = vmatpush1.msra.mxu0 0.0
        %2730 = vmatprep.subr.mxu0 0.0
        %2731 = vmatpush1.msra.mxu0 0.0
        %2732 = vmatprep.subr.mxu0 0.0
        %2733 = vmatpush1.msra.mxu0 0.0
        %2734 = vmatprep.subr.mxu0 0.0
        %2735 = vmatpush1.msra.mxu0 0.0
        %2736 = vmatprep.subr.mxu0 0.0
        %2737 = vmatpush1.msra.mxu0 0.0
        %2738 = vmatprep.subr.mxu0 0.0
        %2739 = vmatpush1.msra.mxu0 0.0
        %2740 = vmatprep.subr.mxu0 0.0
        %2741 = vmatpush1.msra.mxu0 0.0
        %2742 = vmatprep.subr.mxu0 0.0
        %2743 = vmatpush1.msra.mxu0 0.0
        %2744 = vmatprep.subr.mxu0 0.0
        %2745 = vmatpush1.msra.mxu0 0.0
        %2746 = vmatprep.mubr.f32.mxu0 0.0
        %2747 = vmatmul.mubr.f32.gmra.mrb[0].mxu0 %v2633
        %v2748 = vpop.f32.mrb[0].mxu0
        %v2749 = vadd.f32 0.0, %v2748
        %v2750 = vpop.f32.mrb[0].mxu0
        %2751 = vmatprep.mubr.f32.mxu0 0.0
        %2752 = vmatmul.mubr.f32.gmra.mrb[0].mxu0 %v2634
        %v2753 = vpop.f32.mrb[0].mxu0
        %v2754 = vadd.f32 0.0, %v2753
        %v2755 = vpop.f32.mrb[0].mxu0
        %2756 = vmatprep.mubr.f32.mxu0 0.0
        %2757 = vmatmul.mubr.f32.gmra.mrb[0].mxu0 %v2635
        %v2758 = vpop.f32.mrb[0].mxu0
        %v2759 = vadd.f32 0.0, %v2758
        %v2760 = vpop.f32.mrb[0].mxu0
        %2761 = vmatprep.mubr.f32.mxu0 0.0
        %2762 = vmatmul.mubr.f32.gmra.mrb[0].mxu0 %v2636
        %v2763 = vpop.f32.mrb[0].mxu0
        %v2764 = vadd.f32 0.0, %v2763
        %v2765 = vpop.f32.mrb[0].mxu0
        %2766 = vmatprep.mubr.f32.mxu0 0.0
        %2767 = vmatmul.mubr.f32.gmra.mrb[0].mxu0 %v2637
        %v2768 = vpop.f32.mrb[0].mxu0
        %v2769 = vadd.f32 0.0, %v2768
        %v2770 = vpop.f32.mrb[0].mxu0
        %2771 = vmatprep.mubr.f32.mxu0 0.0
        %2772 = vmatmul.mubr.f32.gmra.mrb[0].mxu0 %v2638
        %v2773 = vpop.f32.mrb[0].mxu0
        %v2774 = vadd.f32 0.0, %v2773
        %v2775 = vpop.f32.mrb[0].mxu0
        %2776 = vmatprep.mubr.f32.mxu0 0.0
        %2777 = vmatmul.mubr.f32.gmra.mrb[0].mxu0 %v2639
        %v2778 = vpop.f32.mrb[0].mxu0
        %v2779 = vadd.f32 0.0, %v2778
        %v2780 = vpop.f32.mrb[0].mxu0
        %2781 = vmatprep.mubr.f32.mxu0 0.0
        %2782 = vmatmul.mubr.f32.gmra.mrb[0].mxu0 %v2640
        %v2783 = vpop.f32.mrb[0].mxu0
        %v2784 = vadd.f32 0.0, %v2783
        %v2785 = vpop.f32.mrb[0].mxu0
        %2786 = vmatprep.mubr.f32.mxu0 0.0
        %2787 = vmatmul.mubr.f32.gmra.mrb[0].mxu0 %v2641
        %v2788 = vpop.f32.mrb[0].mxu0
        %v2789 = vadd.f32 0.0, %v2788
        %v2790 = vpop.f32.mrb[0].mxu0
        %2791 = vmatprep.mubr.f32.mxu0 0.0
        %2792 = vmatmul.mubr.f32.gmra.mrb[0].mxu0 %v2642
        %v2793 = vpop.f32.mrb[0].mxu0
        %v2794 = vadd.f32 0.0, %v2793
        %v2795 = vpop.f32.mrb[0].mxu0
        %2796 = vmatprep.mubr.f32.mxu0 0.0
        %2797 = vmatmul.mubr.f32.gmra.mrb[0].mxu0 %v2643
        %v2798 = vpop.f32.mrb[0].mxu0
        %v2799 = vadd.f32 0.0, %v2798
        %v2800 = vpop.f32.mrb[0].mxu0
        %2801 = vmatprep.mubr.f32.mxu0 0.0
        %2802 = vmatmul.mubr.f32.gmra.mrb[0].mxu0 %v2644
        %v2803 = vpop.f32.mrb[0].mxu0
        %v2804 = vadd.f32 0.0, %v2803
        %v2805 = vpop.f32.mrb[0].mxu0
        %2806 = vmatprep.mubr.f32.mxu0 0.0
        %2807 = vmatmul.mubr.f32.gmra.mrb[0].mxu0 %v2645
        %v2808 = vpop.f32.mrb[0].mxu0
        %v2809 = vadd.f32 0.0, %v2808
        %v2810 = vpop.f32.mrb[0].mxu0
        %2811 = vmatprep.mubr.f32.mxu0 0.0
        %2812 = vmatmul.mubr.f32.gmra.mrb[0].mxu0 %v2646
        %v2813 = vpop.f32.mrb[0].mxu0
        %v2814 = vadd.f32 0.0, %v2813
        %v2815 = vpop.f32.mrb[0].mxu0
        %2816 = vmatprep.mubr.f32.mxu0 0.0
        %2817 = vmatmul.mubr.f32.gmra.mrb[0].mxu0 %v2647
        %v2818 = vpop.f32.mrb[0].mxu0
        %v2819 = vadd.f32 0.0, %v2818
        %v2820 = vpop.f32.mrb[0].mxu0
        %2821 = vmatprep.mubr.f32.mxu0 0.0
        %2822 = vmatmul.mubr.f32.gmra.mrb[0].mxu0 %v2648
        %v2823 = vpop.f32.mrb[0].mxu0
        %v2824 = vadd.f32 0.0, %v2823
        %v2825 = vpop.f32.mrb[0].mxu0
        %2826 = vmatprep.mubr.f32.mxu0 0.0
        %2827 = vmatmul.mubr.f32.gmra.mrb[0].mxu0 %v2649
        %v2828 = vpop.f32.mrb[0].mxu0
        %v2829 = vadd.f32 0.0, %v2828
        %v2830 = vpop.f32.mrb[0].mxu0
        %2831 = vmatprep.mubr.f32.mxu0 0.0
        %2832 = vmatmul.mubr.f32.gmra.mrb[0].mxu0 %v2650
        %v2833 = vpop.f32.mrb[0].mxu0
        %v2834 = vadd.f32 0.0, %v2833
        %v2835 = vpop.f32.mrb[0].mxu0
        %2836 = vmatprep.mubr.f32.mxu0 0.0
        %2837 = vmatmul.mubr.f32.gmra.mrb[0].mxu0 %v2651
        %v2838 = vpop.f32.mrb[0].mxu0
        %v2839 = vadd.f32 0.0, %v2838
        %v2840 = vpop.f32.mrb[0].mxu0
        %2841 = vmatprep.mubr.f32.mxu0 0.0
        %2842 = vmatmul.mubr.f32.gmra.mrb[0].mxu0 %v2652
        %v2843 = vpop.f32.mrb[0].mxu0
        %v2844 = vadd.f32 0.0, %v2843
        %v2845 = vpop.f32.mrb[0].mxu0
        %2846 = vmatprep.mubr.f32.mxu0 0.0
        %2847 = vmatmul.mubr.f32.gmra.mrb[0].mxu0 %v2653
        %v2848 = vpop.f32.mrb[0].mxu0
        %v2849 = vadd.f32 0.0, %v2848
        %v2850 = vpop.f32.mrb[0].mxu0
        %2851 = vmatprep.mubr.f32.mxu0 0.0
        %2852 = vmatmul.mubr.f32.gmra.mrb[0].mxu0 %v2654
        %v2853 = vpop.f32.mrb[0].mxu0
        %v2854 = vadd.f32 0.0, %v2853
        %v2855 = vpop.f32.mrb[0].mxu0
        %2856 = vmatprep.mubr.f32.mxu0 0.0
        %2857 = vmatmul.mubr.f32.gmra.mrb[0].mxu0 %v2655
        %v2858 = vpop.f32.mrb[0].mxu0
        %v2859 = vadd.f32 0.0, %v2858
        %v2860 = vpop.f32.mrb[0].mxu0
        %2861 = vmatprep.mubr.f32.mxu0 0.0
        %2862 = vmatmul.mubr.f32.gmra.mrb[0].mxu0 %v2656
        %v2863 = vpop.f32.mrb[0].mxu0
        %v2864 = vadd.f32 0.0, %v2863
        %v2865 = vpop.f32.mrb[0].mxu0
        %2866 = vmatprep.mubr.f32.mxu0 0.0
        %2867 = vmatmul.mubr.f32.gmra.mrb[0].mxu0 %v2657
        %v2868 = vpop.f32.mrb[0].mxu0
        %v2869 = vadd.f32 0.0, %v2868
        %v2870 = vpop.f32.mrb[0].mxu0
        %2871 = vmatprep.mubr.f32.mxu0 0.0
        %2872 = vmatmul.mubr.f32.gmra.mrb[0].mxu0 %v2658
        %v2873 = vpop.f32.mrb[0].mxu0
        %v2874 = vadd.f32 0.0, %v2873
        %v2875 = vpop.f32.mrb[0].mxu0
        %2876 = vmatprep.mubr.f32.mxu0 0.0
        %2877 = vmatmul.mubr.f32.gmra.mrb[0].mxu0 %v2659
        %v2878 = vpop.f32.mrb[0].mxu0
        %v2879 = vadd.f32 0.0, %v2878
        %v2880 = vpop.f32.mrb[0].mxu0
        %2881 = vmatprep.mubr.f32.mxu0 0.0
        %2882 = vmatmul.mubr.f32.gmra.mrb[0].mxu0 %v2660
        %v2883 = vpop.f32.mrb[0].mxu0
        %v2884 = vadd.f32 0.0, %v2883
        %v2885 = vpop.f32.mrb[0].mxu0
        %2886 = vmatprep.mubr.f32.mxu0 0.0
        %2887 = vmatmul.mubr.f32.gmra.mrb[0].mxu0 %v2661
        %v2888 = vpop.f32.mrb[0].mxu0
        %v2889 = vadd.f32 0.0, %v2888
        %v2890 = vpop.f32.mrb[0].mxu0
        %2891 = vmatprep.mubr.f32.mxu0 0.0
        %2892 = vmatmul.mubr.f32.gmra.mrb[0].mxu0 %v2662
        %v2893 = vpop.f32.mrb[0].mxu0
        %v2894 = vadd.f32 0.0, %v2893
        %v2895 = vpop.f32.mrb[0].mxu0
        %2896 = vmatprep.mubr.f32.mxu0 0.0
        %2897 = vmatmul.mubr.f32.gmra.mrb[0].mxu0 %v2663
        %v2898 = vpop.f32.mrb[0].mxu0
        %v2899 = vadd.f32 0.0, %v2898
        %v2900 = vpop.f32.mrb[0].mxu0
        %2901 = vmatprep.mubr.f32.mxu0 0.0
        %2902 = vmatmul.mubr.f32.gmra.mrb[0].mxu0 %v2664
        %v2903 = vpop.f32.mrb[0].mxu0
        %v2904 = vadd.f32 0.0, %v2903
        %v2905 = vpop.f32.mrb[0].mxu0
        %2906 = vdwg.mxu0
        %2907 = vmatprep.subr.mxu0 0.0
        %2908 = vmatpush1.msra.mxu0 %v2615
        %2909 = vmatprep.subr.mxu0 0.0
        %2910 = vmatpush1.msra.mxu0 %v2616
        %2911 = vmatprep.subr.mxu0 0.0
        %2912 = vmatpush1.msra.mxu0 %v2617
        %2913 = vmatprep.subr.mxu0 0.0
        %2914 = vmatpush1.msra.mxu0 %v2618
        %2915 = vmatprep.subr.mxu0 0.0
        %2916 = vmatpush1.msra.mxu0 %v2619
        %2917 = vmatprep.subr.mxu0 0.0
        %2918 = vmatpush1.msra.mxu0 %v2620
        %2919 = vmatprep.subr.mxu0 0.0
        %2920 = vmatpush1.msra.mxu0 %v2621
        %2921 = vmatprep.subr.mxu0 0.0
        %2922 = vmatpush1.msra.mxu0 %v2622
        %2923 = vmatprep.subr.mxu0 0.0
        %2924 = vmatpush1.msra.mxu0 %v2623
        %2925 = vmatprep.subr.mxu0 0.0
        %2926 = vmatpush1.msra.mxu0 %v2624
        %2927 = vmatprep.subr.mxu0 0.0
        %2928 = vmatpush1.msra.mxu0 %v2625
        %2929 = vmatprep.subr.mxu0 0.0
        %2930 = vmatpush1.msra.mxu0 %v2626
        %2931 = vmatprep.subr.mxu0 0.0
        %2932 = vmatpush1.msra.mxu0 %v2627
        %2933 = vmatprep.subr.mxu0 0.0
        %2934 = vmatpush1.msra.mxu0 %v2628
        %2935 = vmatprep.subr.mxu0 0.0
        %2936 = vmatpush1.msra.mxu0 %v2629
        %2937 = vmatprep.subr.mxu0 0.0
        %2938 = vmatpush1.msra.mxu0 %v2630
        %2939 = vmatprep.subr.mxu0 0.0
        %2940 = vmatpush1.msra.mxu0 0.0
        %2941 = vmatprep.subr.mxu0 0.0
        %2942 = vmatpush1.msra.mxu0 0.0
        %2943 = vmatprep.subr.mxu0 0.0
        %2944 = vmatpush1.msra.mxu0 0.0
        %2945 = vmatprep.subr.mxu0 0.0
        %2946 = vmatpush1.msra.mxu0 0.0
        %2947 = vmatprep.subr.mxu0 0.0
        %2948 = vmatpush1.msra.mxu0 0.0
        %2949 = vmatprep.subr.mxu0 0.0
        %2950 = vmatpush1.msra.mxu0 0.0
        %2951 = vmatprep.subr.mxu0 0.0
        %2952 = vmatpush1.msra.mxu0 0.0
        %2953 = vmatprep.subr.mxu0 0.0
        %2954 = vmatpush1.msra.mxu0 0.0
        %2955 = vmatprep.subr.mxu0 0.0
        %2956 = vmatpush1.msra.mxu0 0.0
        %2957 = vmatprep.subr.mxu0 0.0
        %2958 = vmatpush1.msra.mxu0 0.0
        %2959 = vmatprep.subr.mxu0 0.0
        %2960 = vmatpush1.msra.mxu0 0.0
        %2961 = vmatprep.subr.mxu0 0.0
        %2962 = vmatpush1.msra.mxu0 0.0
        %2963 = vmatprep.subr.mxu0 0.0
        %2964 = vmatpush1.msra.mxu0 0.0
        %2965 = vmatprep.subr.mxu0 0.0
        %2966 = vmatpush1.msra.mxu0 0.0
        %2967 = vmatprep.subr.mxu0 0.0
        %2968 = vmatpush1.msra.mxu0 0.0
        %2969 = vmatprep.subr.mxu0 0.0
        %2970 = vmatpush1.msra.mxu0 0.0
        %2971 = vmatprep.mubr.f32.mxu0 0.0
        %2972 = vmatmul.mubr.f32.gmra.mrb[0].mxu0 %v2583
        %v2973 = vpop.f32.mrb[0].mxu0
        %v2974 = vadd.f32 %v2749, %v2973
        %v2975 = vpop.f32.mrb[0].mxu0
        %2976 = vmatprep.mubr.f32.mxu0 0.0
        %2977 = vmatmul.mubr.f32.gmra.mrb[0].mxu0 %v2584
        %v2978 = vpop.f32.mrb[0].mxu0
        %v2979 = vadd.f32 %v2754, %v2978
        %v2980 = vpop.f32.mrb[0].mxu0
        %2981 = vmatprep.mubr.f32.mxu0 0.0
        %2982 = vmatmul.mubr.f32.gmra.mrb[0].mxu0 %v2585
        %v2983 = vpop.f32.mrb[0].mxu0
        %v2984 = vadd.f32 %v2759, %v2983
        %v2985 = vpop.f32.mrb[0].mxu0
        %2986 = vmatprep.mubr.f32.mxu0 0.0
        %2987 = vmatmul.mubr.f32.gmra.mrb[0].mxu0 %v2586
        %v2988 = vpop.f32.mrb[0].mxu0
        %v2989 = vadd.f32 %v2764, %v2988
        %v2990 = vpop.f32.mrb[0].mxu0
        %2991 = vmatprep.mubr.f32.mxu0 0.0
        %2992 = vmatmul.mubr.f32.gmra.mrb[0].mxu0 %v2587
        %v2993 = vpop.f32.mrb[0].mxu0
        %v2994 = vadd.f32 %v2769, %v2993
        %v2995 = vpop.f32.mrb[0].mxu0
        %2996 = vmatprep.mubr.f32.mxu0 0.0
        %2997 = vmatmul.mubr.f32.gmra.mrb[0].mxu0 %v2588
        %v2998 = vpop.f32.mrb[0].mxu0
        %v2999 = vadd.f32 %v2774, %v2998
        %v3000 = vpop.f32.mrb[0].mxu0
        %3001 = vmatprep.mubr.f32.mxu0 0.0
        %3002 = vmatmul.mubr.f32.gmra.mrb[0].mxu0 %v2589
        %v3003 = vpop.f32.mrb[0].mxu0
        %v3004 = vadd.f32 %v2779, %v3003
        %v3005 = vpop.f32.mrb[0].mxu0
        %3006 = vmatprep.mubr.f32.mxu0 0.0
        %3007 = vmatmul.mubr.f32.gmra.mrb[0].mxu0 %v2590
        %v3008 = vpop.f32.mrb[0].mxu0
        %v3009 = vadd.f32 %v2784, %v3008
        %v3010 = vpop.f32.mrb[0].mxu0
        %3011 = vmatprep.mubr.f32.mxu0 0.0
        %3012 = vmatmul.mubr.f32.gmra.mrb[0].mxu0 %v2591
        %v3013 = vpop.f32.mrb[0].mxu0
        %v3014 = vadd.f32 %v2789, %v3013
        %v3015 = vpop.f32.mrb[0].mxu0
        %3016 = vmatprep.mubr.f32.mxu0 0.0
        %3017 = vmatmul.mubr.f32.gmra.mrb[0].mxu0 %v2592
        %v3018 = vpop.f32.mrb[0].mxu0
        %v3019 = vadd.f32 %v2794, %v3018
        %v3020 = vpop.f32.mrb[0].mxu0
        %3021 = vmatprep.mubr.f32.mxu0 0.0
        %3022 = vmatmul.mubr.f32.gmra.mrb[0].mxu0 %v2593
        %v3023 = vpop.f32.mrb[0].mxu0
        %v3024 = vadd.f32 %v2799, %v3023
        %v3025 = vpop.f32.mrb[0].mxu0
        %3026 = vmatprep.mubr.f32.mxu0 0.0
        %3027 = vmatmul.mubr.f32.gmra.mrb[0].mxu0 %v2594
        %v3028 = vpop.f32.mrb[0].mxu0
        %v3029 = vadd.f32 %v2804, %v3028
        %v3030 = vpop.f32.mrb[0].mxu0
        %3031 = vmatprep.mubr.f32.mxu0 0.0
        %3032 = vmatmul.mubr.f32.gmra.mrb[0].mxu0 %v2595
        %v3033 = vpop.f32.mrb[0].mxu0
        %v3034 = vadd.f32 %v2809, %v3033
        %v3035 = vpop.f32.mrb[0].mxu0
        %3036 = vmatprep.mubr.f32.mxu0 0.0
        %3037 = vmatmul.mubr.f32.gmra.mrb[0].mxu0 %v2596
        %v3038 = vpop.f32.mrb[0].mxu0
        %v3039 = vadd.f32 %v2814, %v3038
        %v3040 = vpop.f32.mrb[0].mxu0
        %3041 = vmatprep.mubr.f32.mxu0 0.0
        %3042 = vmatmul.mubr.f32.gmra.mrb[0].mxu0 %v2597
        %v3043 = vpop.f32.mrb[0].mxu0
        %v3044 = vadd.f32 %v2819, %v3043
        %v3045 = vpop.f32.mrb[0].mxu0
        %3046 = vmatprep.mubr.f32.mxu0 0.0
        %3047 = vmatmul.mubr.f32.gmra.mrb[0].mxu0 %v2598
        %v3048 = vpop.f32.mrb[0].mxu0
        %v3049 = vadd.f32 %v2824, %v3048
        %v3050 = vpop.f32.mrb[0].mxu0
        %3051 = vmatprep.mubr.f32.mxu0 0.0
        %3052 = vmatmul.mubr.f32.gmra.mrb[0].mxu0 %v2599
        %v3053 = vpop.f32.mrb[0].mxu0
        %v3054 = vadd.f32 %v2829, %v3053
        %v3055 = vpop.f32.mrb[0].mxu0
        %3056 = vmatprep.mubr.f32.mxu0 0.0
        %3057 = vmatmul.mubr.f32.gmra.mrb[0].mxu0 %v2600
        %v3058 = vpop.f32.mrb[0].mxu0
        %v3059 = vadd.f32 %v2834, %v3058
        %v3060 = vpop.f32.mrb[0].mxu0
        %3061 = vmatprep.mubr.f32.mxu0 0.0
        %3062 = vmatmul.mubr.f32.gmra.mrb[0].mxu0 %v2601
        %v3063 = vpop.f32.mrb[0].mxu0
        %v3064 = vadd.f32 %v2839, %v3063
        %v3065 = vpop.f32.mrb[0].mxu0
        %3066 = vmatprep.mubr.f32.mxu0 0.0
        %3067 = vmatmul.mubr.f32.gmra.mrb[0].mxu0 %v2602
        %v3068 = vpop.f32.mrb[0].mxu0
        %v3069 = vadd.f32 %v2844, %v3068
        %v3070 = vpop.f32.mrb[0].mxu0
        %3071 = vmatprep.mubr.f32.mxu0 0.0
        %3072 = vmatmul.mubr.f32.gmra.mrb[0].mxu0 %v2603
        %v3073 = vpop.f32.mrb[0].mxu0
        %v3074 = vadd.f32 %v2849, %v3073
        %v3075 = vpop.f32.mrb[0].mxu0
        %3076 = vmatprep.mubr.f32.mxu0 0.0
        %3077 = vmatmul.mubr.f32.gmra.mrb[0].mxu0 %v2604
        %v3078 = vpop.f32.mrb[0].mxu0
        %v3079 = vadd.f32 %v2854, %v3078
        %v3080 = vpop.f32.mrb[0].mxu0
        %3081 = vmatprep.mubr.f32.mxu0 0.0
        %3082 = vmatmul.mubr.f32.gmra.mrb[0].mxu0 %v2605
        %v3083 = vpop.f32.mrb[0].mxu0
        %v3084 = vadd.f32 %v2859, %v3083
        %v3085 = vpop.f32.mrb[0].mxu0
        %3086 = vmatprep.mubr.f32.mxu0 0.0
        %3087 = vmatmul.mubr.f32.gmra.mrb[0].mxu0 %v2606
        %v3088 = vpop.f32.mrb[0].mxu0
        %v3089 = vadd.f32 %v2864, %v3088
        %v3090 = vpop.f32.mrb[0].mxu0
        %3091 = vmatprep.mubr.f32.mxu0 0.0
        %3092 = vmatmul.mubr.f32.gmra.mrb[0].mxu0 %v2607
        %v3093 = vpop.f32.mrb[0].mxu0
        %v3094 = vadd.f32 %v2869, %v3093
        %v3095 = vpop.f32.mrb[0].mxu0
        %3096 = vmatprep.mubr.f32.mxu0 0.0
        %3097 = vmatmul.mubr.f32.gmra.mrb[0].mxu0 %v2608
        %v3098 = vpop.f32.mrb[0].mxu0
        %v3099 = vadd.f32 %v2874, %v3098
        %v3100 = vpop.f32.mrb[0].mxu0
        %3101 = vmatprep.mubr.f32.mxu0 0.0
        %3102 = vmatmul.mubr.f32.gmra.mrb[0].mxu0 %v2609
        %v3103 = vpop.f32.mrb[0].mxu0
        %v3104 = vadd.f32 %v2879, %v3103
        %v3105 = vpop.f32.mrb[0].mxu0
        %3106 = vmatprep.mubr.f32.mxu0 0.0
        %3107 = vmatmul.mubr.f32.gmra.mrb[0].mxu0 %v2610
        %v3108 = vpop.f32.mrb[0].mxu0
        %v3109 = vadd.f32 %v2884, %v3108
        %v3110 = vpop.f32.mrb[0].mxu0
        %3111 = vmatprep.mubr.f32.mxu0 0.0
        %3112 = vmatmul.mubr.f32.gmra.mrb[0].mxu0 %v2611
        %v3113 = vpop.f32.mrb[0].mxu0
        %v3114 = vadd.f32 %v2889, %v3113
        %v3115 = vpop.f32.mrb[0].mxu0
        %3116 = vmatprep.mubr.f32.mxu0 0.0
        %3117 = vmatmul.mubr.f32.gmra.mrb[0].mxu0 %v2612
        %v3118 = vpop.f32.mrb[0].mxu0
        %v3119 = vadd.f32 %v2894, %v3118
        %v3120 = vpop.f32.mrb[0].mxu0
        %3121 = vmatprep.mubr.f32.mxu0 0.0
        %3122 = vmatmul.mubr.f32.gmra.mrb[0].mxu0 %v2613
        %v3123 = vpop.f32.mrb[0].mxu0
        %v3124 = vadd.f32 %v2899, %v3123
        %v3125 = vpop.f32.mrb[0].mxu0
        %3126 = vmatprep.mubr.f32.mxu0 0.0
        %3127 = vmatmul.mubr.f32.gmra.mrb[0].mxu0 %v2614
        %v3128 = vpop.f32.mrb[0].mxu0
        %v3129 = vadd.f32 %v2904, %v3128
        %v3130 = vpop.f32.mrb[0].mxu0
        %3131 = vdwg.mxu0
        %s3132 = scalar_lea.vmem [#allocation7], 512
        %v3133 = vld [vmem:[%s3132] sm:$0xff]
        %v3134 = vld [vmem:[%s3132 + $0x8] sm:$0xff]
        %v3135 = vld [vmem:[%s3132 + $0x10] sm:$0xff]
        %v3136 = vld [vmem:[%s3132 + $0x18] sm:$0xff]
        %v3137 = vld [vmem:[%s3132 + $0x20] sm:$0xff]
        %v3138 = vld [vmem:[%s3132 + $0x28] sm:$0xff]
        %v3139 = vld [vmem:[%s3132 + $0x30] sm:$0xff]
        %v3140 = vld [vmem:[%s3132 + $0x38] sm:$0xff]
        %v3141 = vld [vmem:[%s3132 + $0x40] sm:$0xff]
        %v3142 = vld [vmem:[%s3132 + $0x48] sm:$0xff]
        %v3143 = vld [vmem:[%s3132 + $0x50] sm:$0xff]
        %v3144 = vld [vmem:[%s3132 + $0x58] sm:$0xff]
        %v3145 = vld [vmem:[%s3132 + $0x60] sm:$0xff]
        %v3146 = vld [vmem:[%s3132 + $0x68] sm:$0xff]
        %v3147 = vld [vmem:[%s3132 + $0x70] sm:$0xff]
        %v3148 = vld [vmem:[%s3132 + $0x78] sm:$0xff]
        %s3149 = sadd.s32 %s1786, 9
        %s3150 = scalar_lea.vmem [#allocation2], %s3149
        %v3151 = vld [vmem:[%s3150] sm:$0xff]
        %v3152 = vld [vmem:[%s3150 + $0x8] sm:$0xff]
        %v3153 = vld [vmem:[%s3150 + $0x10] sm:$0xff]
        %v3154 = vld [vmem:[%s3150 + $0x18] sm:$0xff]
        %v3155 = vld [vmem:[%s3150 + $0x20] sm:$0xff]
        %v3156 = vld [vmem:[%s3150 + $0x28] sm:$0xff]
        %v3157 = vld [vmem:[%s3150 + $0x30] sm:$0xff]
        %v3158 = vld [vmem:[%s3150 + $0x38] sm:$0xff]
        %v3159 = vld [vmem:[%s3150 + $0x40] sm:$0xff]
        %v3160 = vld [vmem:[%s3150 + $0x48] sm:$0xff]
        %v3161 = vld [vmem:[%s3150 + $0x50] sm:$0xff]
        %v3162 = vld [vmem:[%s3150 + $0x58] sm:$0xff]
        %v3163 = vld [vmem:[%s3150 + $0x60] sm:$0xff]
        %v3164 = vld [vmem:[%s3150 + $0x68] sm:$0xff]
        %v3165 = vld [vmem:[%s3150 + $0x70] sm:$0xff]
        %v3166 = vld [vmem:[%s3150 + $0x78] sm:$0xff]
        %v3167 = vld [vmem:[%s3150 + $0x80] sm:$0xff]
        %v3168 = vld [vmem:[%s3150 + $0x88] sm:$0xff]
        %v3169 = vld [vmem:[%s3150 + $0x90] sm:$0xff]
        %v3170 = vld [vmem:[%s3150 + $0x98] sm:$0xff]
        %v3171 = vld [vmem:[%s3150 + $0xa0] sm:$0xff]
        %v3172 = vld [vmem:[%s3150 + $0xa8] sm:$0xff]
        %v3173 = vld [vmem:[%s3150 + $0xb0] sm:$0xff]
        %v3174 = vld [vmem:[%s3150 + $0xb8] sm:$0xff]
        %v3175 = vld [vmem:[%s3150 + $0xc0] sm:$0xff]
        %v3176 = vld [vmem:[%s3150 + $0xc8] sm:$0xff]
        %v3177 = vld [vmem:[%s3150 + $0xd0] sm:$0xff]
        %v3178 = vld [vmem:[%s3150 + $0xd8] sm:$0xff]
        %v3179 = vld [vmem:[%s3150 + $0xe0] sm:$0xff]
        %v3180 = vld [vmem:[%s3150 + $0xe8] sm:$0xff]
        %v3181 = vld [vmem:[%s3150 + $0xf0] sm:$0xff]
        %v3182 = vld [vmem:[%s3150 + $0xf8] sm:$0xff]
        %v3183 = vsel %vm2517, %v3151, 0.0
        %v3184 = vsel %vm2518, %v3152, 0.0
        %v3185 = vsel %vm2519, %v3153, 0.0
        %v3186 = vsel %vm2520, %v3154, 0.0
        %v3187 = vsel %vm2521, %v3155, 0.0
        %v3188 = vsel %vm2522, %v3156, 0.0
        %v3189 = vsel %vm2523, %v3157, 0.0
        %v3190 = vsel %vm2524, %v3158, 0.0
        %v3191 = vsel %vm2525, %v3159, 0.0
        %v3192 = vsel %vm2526, %v3160, 0.0
        %v3193 = vsel %vm2527, %v3161, 0.0
        %v3194 = vsel %vm2528, %v3162, 0.0
        %v3195 = vsel %vm2529, %v3163, 0.0
        %v3196 = vsel %vm2530, %v3164, 0.0
        %v3197 = vsel %vm2531, %v3165, 0.0
        %v3198 = vsel %vm2532, %v3166, 0.0
        %v3199 = vsel %vm2533, %v3167, 0.0
        %v3200 = vsel %vm2534, %v3168, 0.0
        %v3201 = vsel %vm2535, %v3169, 0.0
        %v3202 = vsel %vm2536, %v3170, 0.0
        %v3203 = vsel %vm2537, %v3171, 0.0
        %v3204 = vsel %vm2538, %v3172, 0.0
        %v3205 = vsel %vm2539, %v3173, 0.0
        %v3206 = vsel %vm2540, %v3174, 0.0
        %v3207 = vsel %vm2541, %v3175, 0.0
        %v3208 = vsel %vm2542, %v3176, 0.0
        %v3209 = vsel %vm2543, %v3177, 0.0
        %v3210 = vsel %vm2544, %v3178, 0.0
        %v3211 = vsel %vm2545, %v3179, 0.0
        %v3212 = vsel %vm2546, %v3180, 0.0
        %v3213 = vsel %vm2547, %v3181, 0.0
        %v3214 = vsel %vm2548, %v3182, 0.0
        %s3215 = scalar_lea.vmem [#allocation7], 640
        %v3216 = vld [vmem:[%s3215] sm:$0xff]
        %v3217 = vld [vmem:[%s3215 + $0x8] sm:$0xff]
        %v3218 = vld [vmem:[%s3215 + $0x10] sm:$0xff]
        %v3219 = vld [vmem:[%s3215 + $0x18] sm:$0xff]
        %v3220 = vld [vmem:[%s3215 + $0x20] sm:$0xff]
        %v3221 = vld [vmem:[%s3215 + $0x28] sm:$0xff]
        %v3222 = vld [vmem:[%s3215 + $0x30] sm:$0xff]
        %v3223 = vld [vmem:[%s3215 + $0x38] sm:$0xff]
        %v3224 = vld [vmem:[%s3215 + $0x40] sm:$0xff]
        %v3225 = vld [vmem:[%s3215 + $0x48] sm:$0xff]
        %v3226 = vld [vmem:[%s3215 + $0x50] sm:$0xff]
        %v3227 = vld [vmem:[%s3215 + $0x58] sm:$0xff]
        %v3228 = vld [vmem:[%s3215 + $0x60] sm:$0xff]
        %v3229 = vld [vmem:[%s3215 + $0x68] sm:$0xff]
        %v3230 = vld [vmem:[%s3215 + $0x70] sm:$0xff]
        %v3231 = vld [vmem:[%s3215 + $0x78] sm:$0xff]
        %3232 = vmatprep.subr.mxu0 0.0
        %3233 = vmatpush1.msra.mxu0 %v3216
        %3234 = vmatprep.subr.mxu0 0.0
        %3235 = vmatpush1.msra.mxu0 %v3217
        %3236 = vmatprep.subr.mxu0 0.0
        %3237 = vmatpush1.msra.mxu0 %v3218
        %3238 = vmatprep.subr.mxu0 0.0
        %3239 = vmatpush1.msra.mxu0 %v3219
        %3240 = vmatprep.subr.mxu0 0.0
        %3241 = vmatpush1.msra.mxu0 %v3220
        %3242 = vmatprep.subr.mxu0 0.0
        %3243 = vmatpush1.msra.mxu0 %v3221
        %3244 = vmatprep.subr.mxu0 0.0
        %3245 = vmatpush1.msra.mxu0 %v3222
        %3246 = vmatprep.subr.mxu0 0.0
        %3247 = vmatpush1.msra.mxu0 %v3223
        %3248 = vmatprep.subr.mxu0 0.0
        %3249 = vmatpush1.msra.mxu0 %v3224
        %3250 = vmatprep.subr.mxu0 0.0
        %3251 = vmatpush1.msra.mxu0 %v3225
        %3252 = vmatprep.subr.mxu0 0.0
        %3253 = vmatpush1.msra.mxu0 %v3226
        %3254 = vmatprep.subr.mxu0 0.0
        %3255 = vmatpush1.msra.mxu0 %v3227
        %3256 = vmatprep.subr.mxu0 0.0
        %3257 = vmatpush1.msra.mxu0 %v3228
        %3258 = vmatprep.subr.mxu0 0.0
        %3259 = vmatpush1.msra.mxu0 %v3229
        %3260 = vmatprep.subr.mxu0 0.0
        %3261 = vmatpush1.msra.mxu0 %v3230
        %3262 = vmatprep.subr.mxu0 0.0
        %3263 = vmatpush1.msra.mxu0 %v3231
        %3264 = vmatprep.subr.mxu0 0.0
        %3265 = vmatpush1.msra.mxu0 0.0
        %3266 = vmatprep.subr.mxu0 0.0
        %3267 = vmatpush1.msra.mxu0 0.0
        %3268 = vmatprep.subr.mxu0 0.0
        %3269 = vmatpush1.msra.mxu0 0.0
        %3270 = vmatprep.subr.mxu0 0.0
        %3271 = vmatpush1.msra.mxu0 0.0
        %3272 = vmatprep.subr.mxu0 0.0
        %3273 = vmatpush1.msra.mxu0 0.0
        %3274 = vmatprep.subr.mxu0 0.0
        %3275 = vmatpush1.msra.mxu0 0.0
        %3276 = vmatprep.subr.mxu0 0.0
        %3277 = vmatpush1.msra.mxu0 0.0
        %3278 = vmatprep.subr.mxu0 0.0
        %3279 = vmatpush1.msra.mxu0 0.0
        %3280 = vmatprep.subr.mxu0 0.0
        %3281 = vmatpush1.msra.mxu0 0.0
        %3282 = vmatprep.subr.mxu0 0.0
        %3283 = vmatpush1.msra.mxu0 0.0
        %3284 = vmatprep.subr.mxu0 0.0
        %3285 = vmatpush1.msra.mxu0 0.0
        %3286 = vmatprep.subr.mxu0 0.0
        %3287 = vmatpush1.msra.mxu0 0.0
        %3288 = vmatprep.subr.mxu0 0.0
        %3289 = vmatpush1.msra.mxu0 0.0
        %3290 = vmatprep.subr.mxu0 0.0
        %3291 = vmatpush1.msra.mxu0 0.0
        %3292 = vmatprep.subr.mxu0 0.0
        %3293 = vmatpush1.msra.mxu0 0.0
        %3294 = vmatprep.subr.mxu0 0.0
        %3295 = vmatpush1.msra.mxu0 0.0
        %3296 = vmatprep.mubr.f32.mxu0 0.0
        %3297 = vmatmul.mubr.f32.gmra.mrb[0].mxu0 %v3183
        %v3298 = vpop.f32.mrb[0].mxu0
        %v3299 = vadd.f32 0.0, %v3298
        %v3300 = vpop.f32.mrb[0].mxu0
        %3301 = vmatprep.mubr.f32.mxu0 0.0
        %3302 = vmatmul.mubr.f32.gmra.mrb[0].mxu0 %v3184
        %v3303 = vpop.f32.mrb[0].mxu0
        %v3304 = vadd.f32 0.0, %v3303
        %v3305 = vpop.f32.mrb[0].mxu0
        %3306 = vmatprep.mubr.f32.mxu0 0.0
        %3307 = vmatmul.mubr.f32.gmra.mrb[0].mxu0 %v3185
        %v3308 = vpop.f32.mrb[0].mxu0
        %v3309 = vadd.f32 0.0, %v3308
        %v3310 = vpop.f32.mrb[0].mxu0
        %3311 = vmatprep.mubr.f32.mxu0 0.0
        %3312 = vmatmul.mubr.f32.gmra.mrb[0].mxu0 %v3186
        %v3313 = vpop.f32.mrb[0].mxu0
        %v3314 = vadd.f32 0.0, %v3313
        %v3315 = vpop.f32.mrb[0].mxu0
        %3316 = vmatprep.mubr.f32.mxu0 0.0
        %3317 = vmatmul.mubr.f32.gmra.mrb[0].mxu0 %v3187
        %v3318 = vpop.f32.mrb[0].mxu0
        %v3319 = vadd.f32 0.0, %v3318
        %v3320 = vpop.f32.mrb[0].mxu0
        %3321 = vmatprep.mubr.f32.mxu0 0.0
        %3322 = vmatmul.mubr.f32.gmra.mrb[0].mxu0 %v3188
        %v3323 = vpop.f32.mrb[0].mxu0
        %v3324 = vadd.f32 0.0, %v3323
        %v3325 = vpop.f32.mrb[0].mxu0
        %3326 = vmatprep.mubr.f32.mxu0 0.0
        %3327 = vmatmul.mubr.f32.gmra.mrb[0].mxu0 %v3189
        %v3328 = vpop.f32.mrb[0].mxu0
        %v3329 = vadd.f32 0.0, %v3328
        %v3330 = vpop.f32.mrb[0].mxu0
        %3331 = vmatprep.mubr.f32.mxu0 0.0
        %3332 = vmatmul.mubr.f32.gmra.mrb[0].mxu0 %v3190
        %v3333 = vpop.f32.mrb[0].mxu0
        %v3334 = vadd.f32 0.0, %v3333
        %v3335 = vpop.f32.mrb[0].mxu0
        %3336 = vmatprep.mubr.f32.mxu0 0.0
        %3337 = vmatmul.mubr.f32.gmra.mrb[0].mxu0 %v3191
        %v3338 = vpop.f32.mrb[0].mxu0
        %v3339 = vadd.f32 0.0, %v3338
        %v3340 = vpop.f32.mrb[0].mxu0
        %3341 = vmatprep.mubr.f32.mxu0 0.0
        %3342 = vmatmul.mubr.f32.gmra.mrb[0].mxu0 %v3192
        %v3343 = vpop.f32.mrb[0].mxu0
        %v3344 = vadd.f32 0.0, %v3343
        %v3345 = vpop.f32.mrb[0].mxu0
        %3346 = vmatprep.mubr.f32.mxu0 0.0
        %3347 = vmatmul.mubr.f32.gmra.mrb[0].mxu0 %v3193
        %v3348 = vpop.f32.mrb[0].mxu0
        %v3349 = vadd.f32 0.0, %v3348
        %v3350 = vpop.f32.mrb[0].mxu0
        %3351 = vmatprep.mubr.f32.mxu0 0.0
        %3352 = vmatmul.mubr.f32.gmra.mrb[0].mxu0 %v3194
        %v3353 = vpop.f32.mrb[0].mxu0
        %v3354 = vadd.f32 0.0, %v3353
        %v3355 = vpop.f32.mrb[0].mxu0
        %3356 = vmatprep.mubr.f32.mxu0 0.0
        %3357 = vmatmul.mubr.f32.gmra.mrb[0].mxu0 %v3195
        %v3358 = vpop.f32.mrb[0].mxu0
        %v3359 = vadd.f32 0.0, %v3358
        %v3360 = vpop.f32.mrb[0].mxu0
        %3361 = vmatprep.mubr.f32.mxu0 0.0
        %3362 = vmatmul.mubr.f32.gmra.mrb[0].mxu0 %v3196
        %v3363 = vpop.f32.mrb[0].mxu0
        %v3364 = vadd.f32 0.0, %v3363
        %v3365 = vpop.f32.mrb[0].mxu0
        %3366 = vmatprep.mubr.f32.mxu0 0.0
        %3367 = vmatmul.mubr.f32.gmra.mrb[0].mxu0 %v3197
        %v3368 = vpop.f32.mrb[0].mxu0
        %v3369 = vadd.f32 0.0, %v3368
        %v3370 = vpop.f32.mrb[0].mxu0
        %3371 = vmatprep.mubr.f32.mxu0 0.0
        %3372 = vmatmul.mubr.f32.gmra.mrb[0].mxu0 %v3198
        %v3373 = vpop.f32.mrb[0].mxu0
        %v3374 = vadd.f32 0.0, %v3373
        %v3375 = vpop.f32.mrb[0].mxu0
        %3376 = vmatprep.mubr.f32.mxu0 0.0
        %3377 = vmatmul.mubr.f32.gmra.mrb[0].mxu0 %v3199
        %v3378 = vpop.f32.mrb[0].mxu0
        %v3379 = vadd.f32 0.0, %v3378
        %v3380 = vpop.f32.mrb[0].mxu0
        %3381 = vmatprep.mubr.f32.mxu0 0.0
        %3382 = vmatmul.mubr.f32.gmra.mrb[0].mxu0 %v3200
        %v3383 = vpop.f32.mrb[0].mxu0
        %v3384 = vadd.f32 0.0, %v3383
        %v3385 = vpop.f32.mrb[0].mxu0
        %3386 = vmatprep.mubr.f32.mxu0 0.0
        %3387 = vmatmul.mubr.f32.gmra.mrb[0].mxu0 %v3201
        %v3388 = vpop.f32.mrb[0].mxu0
        %v3389 = vadd.f32 0.0, %v3388
        %v3390 = vpop.f32.mrb[0].mxu0
        %3391 = vmatprep.mubr.f32.mxu0 0.0
        %3392 = vmatmul.mubr.f32.gmra.mrb[0].mxu0 %v3202
        %v3393 = vpop.f32.mrb[0].mxu0
        %v3394 = vadd.f32 0.0, %v3393
        %v3395 = vpop.f32.mrb[0].mxu0
        %3396 = vmatprep.mubr.f32.mxu0 0.0
        %3397 = vmatmul.mubr.f32.gmra.mrb[0].mxu0 %v3203
        %v3398 = vpop.f32.mrb[0].mxu0
        %v3399 = vadd.f32 0.0, %v3398
        %v3400 = vpop.f32.mrb[0].mxu0
        %3401 = vmatprep.mubr.f32.mxu0 0.0
        %3402 = vmatmul.mubr.f32.gmra.mrb[0].mxu0 %v3204
        %v3403 = vpop.f32.mrb[0].mxu0
        %v3404 = vadd.f32 0.0, %v3403
        %v3405 = vpop.f32.mrb[0].mxu0
        %3406 = vmatprep.mubr.f32.mxu0 0.0
        %3407 = vmatmul.mubr.f32.gmra.mrb[0].mxu0 %v3205
        %v3408 = vpop.f32.mrb[0].mxu0
        %v3409 = vadd.f32 0.0, %v3408
        %v3410 = vpop.f32.mrb[0].mxu0
        %3411 = vmatprep.mubr.f32.mxu0 0.0
        %3412 = vmatmul.mubr.f32.gmra.mrb[0].mxu0 %v3206
        %v3413 = vpop.f32.mrb[0].mxu0
        %v3414 = vadd.f32 0.0, %v3413
        %v3415 = vpop.f32.mrb[0].mxu0
        %3416 = vmatprep.mubr.f32.mxu0 0.0
        %3417 = vmatmul.mubr.f32.gmra.mrb[0].mxu0 %v3207
        %v3418 = vpop.f32.mrb[0].mxu0
        %v3419 = vadd.f32 0.0, %v3418
        %v3420 = vpop.f32.mrb[0].mxu0
        %3421 = vmatprep.mubr.f32.mxu0 0.0
        %3422 = vmatmul.mubr.f32.gmra.mrb[0].mxu0 %v3208
        %v3423 = vpop.f32.mrb[0].mxu0
        %v3424 = vadd.f32 0.0, %v3423
        %v3425 = vpop.f32.mrb[0].mxu0
        %3426 = vmatprep.mubr.f32.mxu0 0.0
        %3427 = vmatmul.mubr.f32.gmra.mrb[0].mxu0 %v3209
        %v3428 = vpop.f32.mrb[0].mxu0
        %v3429 = vadd.f32 0.0, %v3428
        %v3430 = vpop.f32.mrb[0].mxu0
        %3431 = vmatprep.mubr.f32.mxu0 0.0
        %3432 = vmatmul.mubr.f32.gmra.mrb[0].mxu0 %v3210
        %v3433 = vpop.f32.mrb[0].mxu0
        %v3434 = vadd.f32 0.0, %v3433
        %v3435 = vpop.f32.mrb[0].mxu0
        %3436 = vmatprep.mubr.f32.mxu0 0.0
        %3437 = vmatmul.mubr.f32.gmra.mrb[0].mxu0 %v3211
        %v3438 = vpop.f32.mrb[0].mxu0
        %v3439 = vadd.f32 0.0, %v3438
        %v3440 = vpop.f32.mrb[0].mxu0
        %3441 = vmatprep.mubr.f32.mxu0 0.0
        %3442 = vmatmul.mubr.f32.gmra.mrb[0].mxu0 %v3212
        %v3443 = vpop.f32.mrb[0].mxu0
        %v3444 = vadd.f32 0.0, %v3443
        %v3445 = vpop.f32.mrb[0].mxu0
        %3446 = vmatprep.mubr.f32.mxu0 0.0
        %3447 = vmatmul.mubr.f32.gmra.mrb[0].mxu0 %v3213
        %v3448 = vpop.f32.mrb[0].mxu0
        %v3449 = vadd.f32 0.0, %v3448
        %v3450 = vpop.f32.mrb[0].mxu0
        %3451 = vmatprep.mubr.f32.mxu0 0.0
        %3452 = vmatmul.mubr.f32.gmra.mrb[0].mxu0 %v3214
        %v3453 = vpop.f32.mrb[0].mxu0
        %v3454 = vadd.f32 0.0, %v3453
        %v3455 = vpop.f32.mrb[0].mxu0
        %3456 = vdwg.mxu0
        %3457 = vmatprep.subr.mxu0 0.0
        %3458 = vmatpush1.msra.mxu0 %v3133
        %3459 = vmatprep.subr.mxu0 0.0
        %3460 = vmatpush1.msra.mxu0 %v3134
        %3461 = vmatprep.subr.mxu0 0.0
        %3462 = vmatpush1.msra.mxu0 %v3135
        %3463 = vmatprep.subr.mxu0 0.0
        %3464 = vmatpush1.msra.mxu0 %v3136
        %3465 = vmatprep.subr.mxu0 0.0
        %3466 = vmatpush1.msra.mxu0 %v3137
        %3467 = vmatprep.subr.mxu0 0.0
        %3468 = vmatpush1.msra.mxu0 %v3138
        %3469 = vmatprep.subr.mxu0 0.0
        %3470 = vmatpush1.msra.mxu0 %v3139
        %3471 = vmatprep.subr.mxu0 0.0
        %3472 = vmatpush1.msra.mxu0 %v3140
        %3473 = vmatprep.subr.mxu0 0.0
        %3474 = vmatpush1.msra.mxu0 %v3141
        %3475 = vmatprep.subr.mxu0 0.0
        %3476 = vmatpush1.msra.mxu0 %v3142
        %3477 = vmatprep.subr.mxu0 0.0
        %3478 = vmatpush1.msra.mxu0 %v3143
        %3479 = vmatprep.subr.mxu0 0.0
        %3480 = vmatpush1.msra.mxu0 %v3144
        %3481 = vmatprep.subr.mxu0 0.0
        %3482 = vmatpush1.msra.mxu0 %v3145
        %3483 = vmatprep.subr.mxu0 0.0
        %3484 = vmatpush1.msra.mxu0 %v3146
        %3485 = vmatprep.subr.mxu0 0.0
        %3486 = vmatpush1.msra.mxu0 %v3147
        %3487 = vmatprep.subr.mxu0 0.0
        %3488 = vmatpush1.msra.mxu0 %v3148
        %3489 = vmatprep.subr.mxu0 0.0
        %3490 = vmatpush1.msra.mxu0 0.0
        %3491 = vmatprep.subr.mxu0 0.0
        %3492 = vmatpush1.msra.mxu0 0.0
        %3493 = vmatprep.subr.mxu0 0.0
        %3494 = vmatpush1.msra.mxu0 0.0
        %3495 = vmatprep.subr.mxu0 0.0
        %3496 = vmatpush1.msra.mxu0 0.0
        %3497 = vmatprep.subr.mxu0 0.0
        %3498 = vmatpush1.msra.mxu0 0.0
        %3499 = vmatprep.subr.mxu0 0.0
        %3500 = vmatpush1.msra.mxu0 0.0
        %3501 = vmatprep.subr.mxu0 0.0
        %3502 = vmatpush1.msra.mxu0 0.0
        %3503 = vmatprep.subr.mxu0 0.0
        %3504 = vmatpush1.msra.mxu0 0.0
        %3505 = vmatprep.subr.mxu0 0.0
        %3506 = vmatpush1.msra.mxu0 0.0
        %3507 = vmatprep.subr.mxu0 0.0
        %3508 = vmatpush1.msra.mxu0 0.0
        %3509 = vmatprep.subr.mxu0 0.0
        %3510 = vmatpush1.msra.mxu0 0.0
        %3511 = vmatprep.subr.mxu0 0.0
        %3512 = vmatpush1.msra.mxu0 0.0
        %3513 = vmatprep.subr.mxu0 0.0
        %3514 = vmatpush1.msra.mxu0 0.0
        %3515 = vmatprep.subr.mxu0 0.0
        %3516 = vmatpush1.msra.mxu0 0.0
        %3517 = vmatprep.subr.mxu0 0.0
        %3518 = vmatpush1.msra.mxu0 0.0
        %3519 = vmatprep.subr.mxu0 0.0
        %3520 = vmatpush1.msra.mxu0 0.0
        %3521 = vmatprep.mubr.f32.mxu0 0.0
        %3522 = vmatmul.mubr.f32.gmra.mrb[0].mxu0 %v2633
        %v3523 = vpop.f32.mrb[0].mxu0
        %v3524 = vadd.f32 %v3299, %v3523
        %v3525 = vpop.f32.mrb[0].mxu0
        %3526 = vmatprep.mubr.f32.mxu0 0.0
        %3527 = vmatmul.mubr.f32.gmra.mrb[0].mxu0 %v2634
        %v3528 = vpop.f32.mrb[0].mxu0
        %v3529 = vadd.f32 %v3304, %v3528
        %v3530 = vpop.f32.mrb[0].mxu0
        %3531 = vmatprep.mubr.f32.mxu0 0.0
        %3532 = vmatmul.mubr.f32.gmra.mrb[0].mxu0 %v2635
        %v3533 = vpop.f32.mrb[0].mxu0
        %v3534 = vadd.f32 %v3309, %v3533
        %v3535 = vpop.f32.mrb[0].mxu0
        %3536 = vmatprep.mubr.f32.mxu0 0.0
        %3537 = vmatmul.mubr.f32.gmra.mrb[0].mxu0 %v2636
        %v3538 = vpop.f32.mrb[0].mxu0
        %v3539 = vadd.f32 %v3314, %v3538
        %v3540 = vpop.f32.mrb[0].mxu0
        %3541 = vmatprep.mubr.f32.mxu0 0.0
        %3542 = vmatmul.mubr.f32.gmra.mrb[0].mxu0 %v2637
        %v3543 = vpop.f32.mrb[0].mxu0
        %v3544 = vadd.f32 %v3319, %v3543
        %v3545 = vpop.f32.mrb[0].mxu0
        %3546 = vmatprep.mubr.f32.mxu0 0.0
        %3547 = vmatmul.mubr.f32.gmra.mrb[0].mxu0 %v2638
        %v3548 = vpop.f32.mrb[0].mxu0
        %v3549 = vadd.f32 %v3324, %v3548
        %v3550 = vpop.f32.mrb[0].mxu0
        %3551 = vmatprep.mubr.f32.mxu0 0.0
        %3552 = vmatmul.mubr.f32.gmra.mrb[0].mxu0 %v2639
        %v3553 = vpop.f32.mrb[0].mxu0
        %v3554 = vadd.f32 %v3329, %v3553
        %v3555 = vpop.f32.mrb[0].mxu0
        %3556 = vmatprep.mubr.f32.mxu0 0.0
        %3557 = vmatmul.mubr.f32.gmra.mrb[0].mxu0 %v2640
        %v3558 = vpop.f32.mrb[0].mxu0
        %v3559 = vadd.f32 %v3334, %v3558
        %v3560 = vpop.f32.mrb[0].mxu0
        %3561 = vmatprep.mubr.f32.mxu0 0.0
        %3562 = vmatmul.mubr.f32.gmra.mrb[0].mxu0 %v2641
        %v3563 = vpop.f32.mrb[0].mxu0
        %v3564 = vadd.f32 %v3339, %v3563
        %v3565 = vpop.f32.mrb[0].mxu0
        %3566 = vmatprep.mubr.f32.mxu0 0.0
        %3567 = vmatmul.mubr.f32.gmra.mrb[0].mxu0 %v2642
        %v3568 = vpop.f32.mrb[0].mxu0
        %v3569 = vadd.f32 %v3344, %v3568
        %v3570 = vpop.f32.mrb[0].mxu0
        %3571 = vmatprep.mubr.f32.mxu0 0.0
        %3572 = vmatmul.mubr.f32.gmra.mrb[0].mxu0 %v2643
        %v3573 = vpop.f32.mrb[0].mxu0
        %v3574 = vadd.f32 %v3349, %v3573
        %v3575 = vpop.f32.mrb[0].mxu0
        %3576 = vmatprep.mubr.f32.mxu0 0.0
        %3577 = vmatmul.mubr.f32.gmra.mrb[0].mxu0 %v2644
        %v3578 = vpop.f32.mrb[0].mxu0
        %v3579 = vadd.f32 %v3354, %v3578
        %v3580 = vpop.f32.mrb[0].mxu0
        %3581 = vmatprep.mubr.f32.mxu0 0.0
        %3582 = vmatmul.mubr.f32.gmra.mrb[0].mxu0 %v2645
        %v3583 = vpop.f32.mrb[0].mxu0
        %v3584 = vadd.f32 %v3359, %v3583
        %v3585 = vpop.f32.mrb[0].mxu0
        %3586 = vmatprep.mubr.f32.mxu0 0.0
        %3587 = vmatmul.mubr.f32.gmra.mrb[0].mxu0 %v2646
        %v3588 = vpop.f32.mrb[0].mxu0
        %v3589 = vadd.f32 %v3364, %v3588
        %v3590 = vpop.f32.mrb[0].mxu0
        %3591 = vmatprep.mubr.f32.mxu0 0.0
        %3592 = vmatmul.mubr.f32.gmra.mrb[0].mxu0 %v2647
        %v3593 = vpop.f32.mrb[0].mxu0
        %v3594 = vadd.f32 %v3369, %v3593
        %v3595 = vpop.f32.mrb[0].mxu0
        %3596 = vmatprep.mubr.f32.mxu0 0.0
        %3597 = vmatmul.mubr.f32.gmra.mrb[0].mxu0 %v2648
        %v3598 = vpop.f32.mrb[0].mxu0
        %v3599 = vadd.f32 %v3374, %v3598
        %v3600 = vpop.f32.mrb[0].mxu0
        %3601 = vmatprep.mubr.f32.mxu0 0.0
        %3602 = vmatmul.mubr.f32.gmra.mrb[0].mxu0 %v2649
        %v3603 = vpop.f32.mrb[0].mxu0
        %v3604 = vadd.f32 %v3379, %v3603
        %v3605 = vpop.f32.mrb[0].mxu0
        %3606 = vmatprep.mubr.f32.mxu0 0.0
        %3607 = vmatmul.mubr.f32.gmra.mrb[0].mxu0 %v2650
        %v3608 = vpop.f32.mrb[0].mxu0
        %v3609 = vadd.f32 %v3384, %v3608
        %v3610 = vpop.f32.mrb[0].mxu0
        %3611 = vmatprep.mubr.f32.mxu0 0.0
        %3612 = vmatmul.mubr.f32.gmra.mrb[0].mxu0 %v2651
        %v3613 = vpop.f32.mrb[0].mxu0
        %v3614 = vadd.f32 %v3389, %v3613
        %v3615 = vpop.f32.mrb[0].mxu0
        %3616 = vmatprep.mubr.f32.mxu0 0.0
        %3617 = vmatmul.mubr.f32.gmra.mrb[0].mxu0 %v2652
        %v3618 = vpop.f32.mrb[0].mxu0
        %v3619 = vadd.f32 %v3394, %v3618
        %v3620 = vpop.f32.mrb[0].mxu0
        %3621 = vmatprep.mubr.f32.mxu0 0.0
        %3622 = vmatmul.mubr.f32.gmra.mrb[0].mxu0 %v2653
        %v3623 = vpop.f32.mrb[0].mxu0
        %v3624 = vadd.f32 %v3399, %v3623
        %v3625 = vpop.f32.mrb[0].mxu0
        %3626 = vmatprep.mubr.f32.mxu0 0.0
        %3627 = vmatmul.mubr.f32.gmra.mrb[0].mxu0 %v2654
        %v3628 = vpop.f32.mrb[0].mxu0
        %v3629 = vadd.f32 %v3404, %v3628
        %v3630 = vpop.f32.mrb[0].mxu0
        %3631 = vmatprep.mubr.f32.mxu0 0.0
        %3632 = vmatmul.mubr.f32.gmra.mrb[0].mxu0 %v2655
        %v3633 = vpop.f32.mrb[0].mxu0
        %v3634 = vadd.f32 %v3409, %v3633
        %v3635 = vpop.f32.mrb[0].mxu0
        %3636 = vmatprep.mubr.f32.mxu0 0.0
        %3637 = vmatmul.mubr.f32.gmra.mrb[0].mxu0 %v2656
        %v3638 = vpop.f32.mrb[0].mxu0
        %v3639 = vadd.f32 %v3414, %v3638
        %v3640 = vpop.f32.mrb[0].mxu0
        %3641 = vmatprep.mubr.f32.mxu0 0.0
        %3642 = vmatmul.mubr.f32.gmra.mrb[0].mxu0 %v2657
        %v3643 = vpop.f32.mrb[0].mxu0
        %v3644 = vadd.f32 %v3419, %v3643
        %v3645 = vpop.f32.mrb[0].mxu0
        %3646 = vmatprep.mubr.f32.mxu0 0.0
        %3647 = vmatmul.mubr.f32.gmra.mrb[0].mxu0 %v2658
        %v3648 = vpop.f32.mrb[0].mxu0
        %v3649 = vadd.f32 %v3424, %v3648
        %v3650 = vpop.f32.mrb[0].mxu0
        %3651 = vmatprep.mubr.f32.mxu0 0.0
        %3652 = vmatmul.mubr.f32.gmra.mrb[0].mxu0 %v2659
        %v3653 = vpop.f32.mrb[0].mxu0
        %v3654 = vadd.f32 %v3429, %v3653
        %v3655 = vpop.f32.mrb[0].mxu0
        %3656 = vmatprep.mubr.f32.mxu0 0.0
        %3657 = vmatmul.mubr.f32.gmra.mrb[0].mxu0 %v2660
        %v3658 = vpop.f32.mrb[0].mxu0
        %v3659 = vadd.f32 %v3434, %v3658
        %v3660 = vpop.f32.mrb[0].mxu0
        %3661 = vmatprep.mubr.f32.mxu0 0.0
        %3662 = vmatmul.mubr.f32.gmra.mrb[0].mxu0 %v2661
        %v3663 = vpop.f32.mrb[0].mxu0
        %v3664 = vadd.f32 %v3439, %v3663
        %v3665 = vpop.f32.mrb[0].mxu0
        %3666 = vmatprep.mubr.f32.mxu0 0.0
        %3667 = vmatmul.mubr.f32.gmra.mrb[0].mxu0 %v2662
        %v3668 = vpop.f32.mrb[0].mxu0
        %v3669 = vadd.f32 %v3444, %v3668
        %v3670 = vpop.f32.mrb[0].mxu0
        %3671 = vmatprep.mubr.f32.mxu0 0.0
        %3672 = vmatmul.mubr.f32.gmra.mrb[0].mxu0 %v2663
        %v3673 = vpop.f32.mrb[0].mxu0
        %v3674 = vadd.f32 %v3449, %v3673
        %v3675 = vpop.f32.mrb[0].mxu0
        %3676 = vmatprep.mubr.f32.mxu0 0.0
        %3677 = vmatmul.mubr.f32.gmra.mrb[0].mxu0 %v2664
        %v3678 = vpop.f32.mrb[0].mxu0
        %v3679 = vadd.f32 %v3454, %v3678
        %v3680 = vpop.f32.mrb[0].mxu0
        %3681 = vdwg.mxu0
        %s3682 = sadd.s32 %s1786, 23
        %s3683 = scalar_lea.vmem [#allocation2], %s3682
        %v3684 = vld [vmem:[%s3683] sm:$0xff]
        %v3685 = vld [vmem:[%s3683 + $0x8] sm:$0xff]
        %v3686 = vld [vmem:[%s3683 + $0x10] sm:$0xff]
        %v3687 = vld [vmem:[%s3683 + $0x18] sm:$0xff]
        %v3688 = vld [vmem:[%s3683 + $0x20] sm:$0xff]
        %v3689 = vld [vmem:[%s3683 + $0x28] sm:$0xff]
        %v3690 = vld [vmem:[%s3683 + $0x30] sm:$0xff]
        %v3691 = vld [vmem:[%s3683 + $0x38] sm:$0xff]
        %v3692 = vld [vmem:[%s3683 + $0x40] sm:$0xff]
        %v3693 = vld [vmem:[%s3683 + $0x48] sm:$0xff]
        %v3694 = vld [vmem:[%s3683 + $0x50] sm:$0xff]
        %v3695 = vld [vmem:[%s3683 + $0x58] sm:$0xff]
        %v3696 = vld [vmem:[%s3683 + $0x60] sm:$0xff]
        %v3697 = vld [vmem:[%s3683 + $0x68] sm:$0xff]
        %v3698 = vld [vmem:[%s3683 + $0x70] sm:$0xff]
        %v3699 = vld [vmem:[%s3683 + $0x78] sm:$0xff]
        %v3700 = vld [vmem:[%s3683 + $0x80] sm:$0xff]
        %v3701 = vld [vmem:[%s3683 + $0x88] sm:$0xff]
        %v3702 = vld [vmem:[%s3683 + $0x90] sm:$0xff]
        %v3703 = vld [vmem:[%s3683 + $0x98] sm:$0xff]
        %v3704 = vld [vmem:[%s3683 + $0xa0] sm:$0xff]
        %v3705 = vld [vmem:[%s3683 + $0xa8] sm:$0xff]
        %v3706 = vld [vmem:[%s3683 + $0xb0] sm:$0xff]
        %v3707 = vld [vmem:[%s3683 + $0xb8] sm:$0xff]
        %v3708 = vld [vmem:[%s3683 + $0xc0] sm:$0xff]
        %v3709 = vld [vmem:[%s3683 + $0xc8] sm:$0xff]
        %v3710 = vld [vmem:[%s3683 + $0xd0] sm:$0xff]
        %v3711 = vld [vmem:[%s3683 + $0xd8] sm:$0xff]
        %v3712 = vld [vmem:[%s3683 + $0xe0] sm:$0xff]
        %v3713 = vld [vmem:[%s3683 + $0xe8] sm:$0xff]
        %v3714 = vld [vmem:[%s3683 + $0xf0] sm:$0xff]
        %v3715 = vld [vmem:[%s3683 + $0xf8] sm:$0xff]
        %v3716 = vsel %vm2485, %v3684, 0.0
        %v3717 = vsel %vm2486, %v3685, 0.0
        %v3718 = vsel %vm2487, %v3686, 0.0
        %v3719 = vsel %vm2488, %v3687, 0.0
        %v3720 = vsel %vm2489, %v3688, 0.0
        %v3721 = vsel %vm2490, %v3689, 0.0
        %v3722 = vsel %vm2491, %v3690, 0.0
        %v3723 = vsel %vm2492, %v3691, 0.0
        %v3724 = vsel %vm2493, %v3692, 0.0
        %v3725 = vsel %vm2494, %v3693, 0.0
        %v3726 = vsel %vm2495, %v3694, 0.0
        %v3727 = vsel %vm2496, %v3695, 0.0
        %v3728 = vsel %vm2497, %v3696, 0.0
        %v3729 = vsel %vm2498, %v3697, 0.0
        %v3730 = vsel %vm2499, %v3698, 0.0
        %v3731 = vsel %vm2500, %v3699, 0.0
        %v3732 = vsel %vm2501, %v3700, 0.0
        %v3733 = vsel %vm2502, %v3701, 0.0
        %v3734 = vsel %vm2503, %v3702, 0.0
        %v3735 = vsel %vm2504, %v3703, 0.0
        %v3736 = vsel %vm2505, %v3704, 0.0
        %v3737 = vsel %vm2506, %v3705, 0.0
        %v3738 = vsel %vm2507, %v3706, 0.0
        %v3739 = vsel %vm2508, %v3707, 0.0
        %v3740 = vsel %vm2509, %v3708, 0.0
        %v3741 = vsel %vm2510, %v3709, 0.0
        %v3742 = vsel %vm2511, %v3710, 0.0
        %v3743 = vsel %vm2512, %v3711, 0.0
        %v3744 = vsel %vm2513, %v3712, 0.0
        %v3745 = vsel %vm2514, %v3713, 0.0
        %v3746 = vsel %vm2515, %v3714, 0.0
        %v3747 = vsel %vm2516, %v3715, 0.0
        %s3748 = scalar_lea.vmem [#allocation7], 256
        %v3749 = vld [vmem:[%s3748] sm:$0xff]
        %v3750 = vld [vmem:[%s3748 + $0x8] sm:$0xff]
        %v3751 = vld [vmem:[%s3748 + $0x10] sm:$0xff]
        %v3752 = vld [vmem:[%s3748 + $0x18] sm:$0xff]
        %v3753 = vld [vmem:[%s3748 + $0x20] sm:$0xff]
        %v3754 = vld [vmem:[%s3748 + $0x28] sm:$0xff]
        %v3755 = vld [vmem:[%s3748 + $0x30] sm:$0xff]
        %v3756 = vld [vmem:[%s3748 + $0x38] sm:$0xff]
        %v3757 = vld [vmem:[%s3748 + $0x40] sm:$0xff]
        %v3758 = vld [vmem:[%s3748 + $0x48] sm:$0xff]
        %v3759 = vld [vmem:[%s3748 + $0x50] sm:$0xff]
        %v3760 = vld [vmem:[%s3748 + $0x58] sm:$0xff]
        %v3761 = vld [vmem:[%s3748 + $0x60] sm:$0xff]
        %v3762 = vld [vmem:[%s3748 + $0x68] sm:$0xff]
        %v3763 = vld [vmem:[%s3748 + $0x70] sm:$0xff]
        %v3764 = vld [vmem:[%s3748 + $0x78] sm:$0xff]
        %3765 = vmatprep.subr.mxu0 0.0
        %3766 = vmatpush1.msra.mxu0 %v3749
        %3767 = vmatprep.subr.mxu0 0.0
        %3768 = vmatpush1.msra.mxu0 %v3750
        %3769 = vmatprep.subr.mxu0 0.0
        %3770 = vmatpush1.msra.mxu0 %v3751
        %3771 = vmatprep.subr.mxu0 0.0
        %3772 = vmatpush1.msra.mxu0 %v3752
        %3773 = vmatprep.subr.mxu0 0.0
        %3774 = vmatpush1.msra.mxu0 %v3753
        %3775 = vmatprep.subr.mxu0 0.0
        %3776 = vmatpush1.msra.mxu0 %v3754
        %3777 = vmatprep.subr.mxu0 0.0
        %3778 = vmatpush1.msra.mxu0 %v3755
        %3779 = vmatprep.subr.mxu0 0.0
        %3780 = vmatpush1.msra.mxu0 %v3756
        %3781 = vmatprep.subr.mxu0 0.0
        %3782 = vmatpush1.msra.mxu0 %v3757
        %3783 = vmatprep.subr.mxu0 0.0
        %3784 = vmatpush1.msra.mxu0 %v3758
        %3785 = vmatprep.subr.mxu0 0.0
        %3786 = vmatpush1.msra.mxu0 %v3759
        %3787 = vmatprep.subr.mxu0 0.0
        %3788 = vmatpush1.msra.mxu0 %v3760
        %3789 = vmatprep.subr.mxu0 0.0
        %3790 = vmatpush1.msra.mxu0 %v3761
        %3791 = vmatprep.subr.mxu0 0.0
        %3792 = vmatpush1.msra.mxu0 %v3762
        %3793 = vmatprep.subr.mxu0 0.0
        %3794 = vmatpush1.msra.mxu0 %v3763
        %3795 = vmatprep.subr.mxu0 0.0
        %3796 = vmatpush1.msra.mxu0 %v3764
        %3797 = vmatprep.subr.mxu0 0.0
        %3798 = vmatpush1.msra.mxu0 0.0
        %3799 = vmatprep.subr.mxu0 0.0
        %3800 = vmatpush1.msra.mxu0 0.0
        %3801 = vmatprep.subr.mxu0 0.0
        %3802 = vmatpush1.msra.mxu0 0.0
        %3803 = vmatprep.subr.mxu0 0.0
        %3804 = vmatpush1.msra.mxu0 0.0
        %3805 = vmatprep.subr.mxu0 0.0
        %3806 = vmatpush1.msra.mxu0 0.0
        %3807 = vmatprep.subr.mxu0 0.0
        %3808 = vmatpush1.msra.mxu0 0.0
        %3809 = vmatprep.subr.mxu0 0.0
        %3810 = vmatpush1.msra.mxu0 0.0
        %3811 = vmatprep.subr.mxu0 0.0
        %3812 = vmatpush1.msra.mxu0 0.0
        %3813 = vmatprep.subr.mxu0 0.0
        %3814 = vmatpush1.msra.mxu0 0.0
        %3815 = vmatprep.subr.mxu0 0.0
        %3816 = vmatpush1.msra.mxu0 0.0
        %3817 = vmatprep.subr.mxu0 0.0
        %3818 = vmatpush1.msra.mxu0 0.0
        %3819 = vmatprep.subr.mxu0 0.0
        %3820 = vmatpush1.msra.mxu0 0.0
        %3821 = vmatprep.subr.mxu0 0.0
        %3822 = vmatpush1.msra.mxu0 0.0
        %3823 = vmatprep.subr.mxu0 0.0
        %3824 = vmatpush1.msra.mxu0 0.0
        %3825 = vmatprep.subr.mxu0 0.0
        %3826 = vmatpush1.msra.mxu0 0.0
        %3827 = vmatprep.subr.mxu0 0.0
        %3828 = vmatpush1.msra.mxu0 0.0
        %3829 = vmatprep.mubr.f32.mxu0 0.0
        %3830 = vmatmul.mubr.f32.gmra.mrb[0].mxu0 %v3716
        %v3831 = vpop.f32.mrb[0].mxu0
        %v3832 = vadd.f32 0.0, %v3831
        %v3833 = vpop.f32.mrb[0].mxu0
        %3834 = vmatprep.mubr.f32.mxu0 0.0
        %3835 = vmatmul.mubr.f32.gmra.mrb[0].mxu0 %v3717
        %v3836 = vpop.f32.mrb[0].mxu0
        %v3837 = vadd.f32 0.0, %v3836
        %v3838 = vpop.f32.mrb[0].mxu0
        %3839 = vmatprep.mubr.f32.mxu0 0.0
        %3840 = vmatmul.mubr.f32.gmra.mrb[0].mxu0 %v3718
        %v3841 = vpop.f32.mrb[0].mxu0
        %v3842 = vadd.f32 0.0, %v3841
        %v3843 = vpop.f32.mrb[0].mxu0
        %3844 = vmatprep.mubr.f32.mxu0 0.0
        %3845 = vmatmul.mubr.f32.gmra.mrb[0].mxu0 %v3719
        %v3846 = vpop.f32.mrb[0].mxu0
        %v3847 = vadd.f32 0.0, %v3846
        %v3848 = vpop.f32.mrb[0].mxu0
        %3849 = vmatprep.mubr.f32.mxu0 0.0
        %3850 = vmatmul.mubr.f32.gmra.mrb[0].mxu0 %v3720
        %v3851 = vpop.f32.mrb[0].mxu0
        %v3852 = vadd.f32 0.0, %v3851
        %v3853 = vpop.f32.mrb[0].mxu0
        %3854 = vmatprep.mubr.f32.mxu0 0.0
        %3855 = vmatmul.mubr.f32.gmra.mrb[0].mxu0 %v3721
        %v3856 = vpop.f32.mrb[0].mxu0
        %v3857 = vadd.f32 0.0, %v3856
        %v3858 = vpop.f32.mrb[0].mxu0
        %3859 = vmatprep.mubr.f32.mxu0 0.0
        %3860 = vmatmul.mubr.f32.gmra.mrb[0].mxu0 %v3722
        %v3861 = vpop.f32.mrb[0].mxu0
        %v3862 = vadd.f32 0.0, %v3861
        %v3863 = vpop.f32.mrb[0].mxu0
        %3864 = vmatprep.mubr.f32.mxu0 0.0
        %3865 = vmatmul.mubr.f32.gmra.mrb[0].mxu0 %v3723
        %v3866 = vpop.f32.mrb[0].mxu0
        %v3867 = vadd.f32 0.0, %v3866
        %v3868 = vpop.f32.mrb[0].mxu0
        %3869 = vmatprep.mubr.f32.mxu0 0.0
        %3870 = vmatmul.mubr.f32.gmra.mrb[0].mxu0 %v3724
        %v3871 = vpop.f32.mrb[0].mxu0
        %v3872 = vadd.f32 0.0, %v3871
        %v3873 = vpop.f32.mrb[0].mxu0
        %3874 = vmatprep.mubr.f32.mxu0 0.0
        %3875 = vmatmul.mubr.f32.gmra.mrb[0].mxu0 %v3725
        %v3876 = vpop.f32.mrb[0].mxu0
        %v3877 = vadd.f32 0.0, %v3876
        %v3878 = vpop.f32.mrb[0].mxu0
        %3879 = vmatprep.mubr.f32.mxu0 0.0
        %3880 = vmatmul.mubr.f32.gmra.mrb[0].mxu0 %v3726
        %v3881 = vpop.f32.mrb[0].mxu0
        %v3882 = vadd.f32 0.0, %v3881
        %v3883 = vpop.f32.mrb[0].mxu0
        %3884 = vmatprep.mubr.f32.mxu0 0.0
        %3885 = vmatmul.mubr.f32.gmra.mrb[0].mxu0 %v3727
        %v3886 = vpop.f32.mrb[0].mxu0
        %v3887 = vadd.f32 0.0, %v3886
        %v3888 = vpop.f32.mrb[0].mxu0
        %3889 = vmatprep.mubr.f32.mxu0 0.0
        %3890 = vmatmul.mubr.f32.gmra.mrb[0].mxu0 %v3728
        %v3891 = vpop.f32.mrb[0].mxu0
        %v3892 = vadd.f32 0.0, %v3891
        %v3893 = vpop.f32.mrb[0].mxu0
        %3894 = vmatprep.mubr.f32.mxu0 0.0
        %3895 = vmatmul.mubr.f32.gmra.mrb[0].mxu0 %v3729
        %v3896 = vpop.f32.mrb[0].mxu0
        %v3897 = vadd.f32 0.0, %v3896
        %v3898 = vpop.f32.mrb[0].mxu0
        %3899 = vmatprep.mubr.f32.mxu0 0.0
        %3900 = vmatmul.mubr.f32.gmra.mrb[0].mxu0 %v3730
        %v3901 = vpop.f32.mrb[0].mxu0
        %v3902 = vadd.f32 0.0, %v3901
        %v3903 = vpop.f32.mrb[0].mxu0
        %3904 = vmatprep.mubr.f32.mxu0 0.0
        %3905 = vmatmul.mubr.f32.gmra.mrb[0].mxu0 %v3731
        %v3906 = vpop.f32.mrb[0].mxu0
        %v3907 = vadd.f32 0.0, %v3906
        %v3908 = vpop.f32.mrb[0].mxu0
        %3909 = vmatprep.mubr.f32.mxu0 0.0
        %3910 = vmatmul.mubr.f32.gmra.mrb[0].mxu0 %v3732
        %v3911 = vpop.f32.mrb[0].mxu0
        %v3912 = vadd.f32 0.0, %v3911
        %v3913 = vpop.f32.mrb[0].mxu0
        %3914 = vmatprep.mubr.f32.mxu0 0.0
        %3915 = vmatmul.mubr.f32.gmra.mrb[0].mxu0 %v3733
        %v3916 = vpop.f32.mrb[0].mxu0
        %v3917 = vadd.f32 0.0, %v3916
        %v3918 = vpop.f32.mrb[0].mxu0
        %3919 = vmatprep.mubr.f32.mxu0 0.0
        %3920 = vmatmul.mubr.f32.gmra.mrb[0].mxu0 %v3734
        %v3921 = vpop.f32.mrb[0].mxu0
        %v3922 = vadd.f32 0.0, %v3921
        %v3923 = vpop.f32.mrb[0].mxu0
        %3924 = vmatprep.mubr.f32.mxu0 0.0
        %3925 = vmatmul.mubr.f32.gmra.mrb[0].mxu0 %v3735
        %v3926 = vpop.f32.mrb[0].mxu0
        %v3927 = vadd.f32 0.0, %v3926
        %v3928 = vpop.f32.mrb[0].mxu0
        %3929 = vmatprep.mubr.f32.mxu0 0.0
        %3930 = vmatmul.mubr.f32.gmra.mrb[0].mxu0 %v3736
        %v3931 = vpop.f32.mrb[0].mxu0
        %v3932 = vadd.f32 0.0, %v3931
        %v3933 = vpop.f32.mrb[0].mxu0
        %3934 = vmatprep.mubr.f32.mxu0 0.0
        %3935 = vmatmul.mubr.f32.gmra.mrb[0].mxu0 %v3737
        %v3936 = vpop.f32.mrb[0].mxu0
        %v3937 = vadd.f32 0.0, %v3936
        %v3938 = vpop.f32.mrb[0].mxu0
        %3939 = vmatprep.mubr.f32.mxu0 0.0
        %3940 = vmatmul.mubr.f32.gmra.mrb[0].mxu0 %v3738
        %v3941 = vpop.f32.mrb[0].mxu0
        %v3942 = vadd.f32 0.0, %v3941
        %v3943 = vpop.f32.mrb[0].mxu0
        %3944 = vmatprep.mubr.f32.mxu0 0.0
        %3945 = vmatmul.mubr.f32.gmra.mrb[0].mxu0 %v3739
        %v3946 = vpop.f32.mrb[0].mxu0
        %v3947 = vadd.f32 0.0, %v3946
        %v3948 = vpop.f32.mrb[0].mxu0
        %3949 = vmatprep.mubr.f32.mxu0 0.0
        %3950 = vmatmul.mubr.f32.gmra.mrb[0].mxu0 %v3740
        %v3951 = vpop.f32.mrb[0].mxu0
        %v3952 = vadd.f32 0.0, %v3951
        %v3953 = vpop.f32.mrb[0].mxu0
        %3954 = vmatprep.mubr.f32.mxu0 0.0
        %3955 = vmatmul.mubr.f32.gmra.mrb[0].mxu0 %v3741
        %v3956 = vpop.f32.mrb[0].mxu0
        %v3957 = vadd.f32 0.0, %v3956
        %v3958 = vpop.f32.mrb[0].mxu0
        %3959 = vmatprep.mubr.f32.mxu0 0.0
        %3960 = vmatmul.mubr.f32.gmra.mrb[0].mxu0 %v3742
        %v3961 = vpop.f32.mrb[0].mxu0
        %v3962 = vadd.f32 0.0, %v3961
        %v3963 = vpop.f32.mrb[0].mxu0
        %3964 = vmatprep.mubr.f32.mxu0 0.0
        %3965 = vmatmul.mubr.f32.gmra.mrb[0].mxu0 %v3743
        %v3966 = vpop.f32.mrb[0].mxu0
        %v3967 = vadd.f32 0.0, %v3966
        %v3968 = vpop.f32.mrb[0].mxu0
        %3969 = vmatprep.mubr.f32.mxu0 0.0
        %3970 = vmatmul.mubr.f32.gmra.mrb[0].mxu0 %v3744
        %v3971 = vpop.f32.mrb[0].mxu0
        %v3972 = vadd.f32 0.0, %v3971
        %v3973 = vpop.f32.mrb[0].mxu0
        %3974 = vmatprep.mubr.f32.mxu0 0.0
        %3975 = vmatmul.mubr.f32.gmra.mrb[0].mxu0 %v3745
        %v3976 = vpop.f32.mrb[0].mxu0
        %v3977 = vadd.f32 0.0, %v3976
        %v3978 = vpop.f32.mrb[0].mxu0
        %3979 = vmatprep.mubr.f32.mxu0 0.0
        %3980 = vmatmul.mubr.f32.gmra.mrb[0].mxu0 %v3746
        %v3981 = vpop.f32.mrb[0].mxu0
        %v3982 = vadd.f32 0.0, %v3981
        %v3983 = vpop.f32.mrb[0].mxu0
        %3984 = vmatprep.mubr.f32.mxu0 0.0
        %3985 = vmatmul.mubr.f32.gmra.mrb[0].mxu0 %v3747
        %v3986 = vpop.f32.mrb[0].mxu0
        %v3987 = vadd.f32 0.0, %v3986
        %v3988 = vpop.f32.mrb[0].mxu0
        %3989 = vdwg.mxu0
        %v3990 = vadd.f32 %v2974, %v3832
        %v3991 = vadd.f32 %v2979, %v3837
        %v3992 = vadd.f32 %v2984, %v3842
        %v3993 = vadd.f32 %v2989, %v3847
        %v3994 = vadd.f32 %v2994, %v3852
        %v3995 = vadd.f32 %v2999, %v3857
        %v3996 = vadd.f32 %v3004, %v3862
        %v3997 = vadd.f32 %v3009, %v3867
        %v3998 = vadd.f32 %v3014, %v3872
        %v3999 = vadd.f32 %v3019, %v3877
        %v4000 = vadd.f32 %v3024, %v3882
        %v4001 = vadd.f32 %v3029, %v3887
        %v4002 = vadd.f32 %v3034, %v3892
        %v4003 = vadd.f32 %v3039, %v3897
        %v4004 = vadd.f32 %v3044, %v3902
        %v4005 = vadd.f32 %v3049, %v3907
        %v4006 = vadd.f32 %v3054, %v3912
        %v4007 = vadd.f32 %v3059, %v3917
        %v4008 = vadd.f32 %v3064, %v3922
        %v4009 = vadd.f32 %v3069, %v3927
        %v4010 = vadd.f32 %v3074, %v3932
        %v4011 = vadd.f32 %v3079, %v3937
        %v4012 = vadd.f32 %v3084, %v3942
        %v4013 = vadd.f32 %v3089, %v3947
        %v4014 = vadd.f32 %v3094, %v3952
        %v4015 = vadd.f32 %v3099, %v3957
        %v4016 = vadd.f32 %v3104, %v3962
        %v4017 = vadd.f32 %v3109, %v3967
        %v4018 = vadd.f32 %v3114, %v3972
        %v4019 = vadd.f32 %v3119, %v3977
        %v4020 = vadd.f32 %v3124, %v3982
        %v4021 = vadd.f32 %v3129, %v3987
        %s4022 = scalar_lea.vmem [#allocation7], 1024
        %v4023 = vld [vmem:[%s4022] sm:$0xff]
        %v4024 = vld [vmem:[%s4022 + $0x8] sm:$0xff]
        %v4025 = vld [vmem:[%s4022 + $0x10] sm:$0xff]
        %v4026 = vld [vmem:[%s4022 + $0x18] sm:$0xff]
        %v4027 = vld [vmem:[%s4022 + $0x20] sm:$0xff]
        %v4028 = vld [vmem:[%s4022 + $0x28] sm:$0xff]
        %v4029 = vld [vmem:[%s4022 + $0x30] sm:$0xff]
        %v4030 = vld [vmem:[%s4022 + $0x38] sm:$0xff]
        %v4031 = vld [vmem:[%s4022 + $0x40] sm:$0xff]
        %v4032 = vld [vmem:[%s4022 + $0x48] sm:$0xff]
        %v4033 = vld [vmem:[%s4022 + $0x50] sm:$0xff]
        %v4034 = vld [vmem:[%s4022 + $0x58] sm:$0xff]
        %v4035 = vld [vmem:[%s4022 + $0x60] sm:$0xff]
        %v4036 = vld [vmem:[%s4022 + $0x68] sm:$0xff]
        %v4037 = vld [vmem:[%s4022 + $0x70] sm:$0xff]
        %v4038 = vld [vmem:[%s4022 + $0x78] sm:$0xff]
        %s4039 = sadd.s32 %s1786, 24
        %s4040 = scalar_lea.vmem [#allocation2], %s4039
        %v4041 = vld [vmem:[%s4040] sm:$0xff]
        %v4042 = vld [vmem:[%s4040 + $0x8] sm:$0xff]
        %v4043 = vld [vmem:[%s4040 + $0x10] sm:$0xff]
        %v4044 = vld [vmem:[%s4040 + $0x18] sm:$0xff]
        %v4045 = vld [vmem:[%s4040 + $0x20] sm:$0xff]
        %v4046 = vld [vmem:[%s4040 + $0x28] sm:$0xff]
        %v4047 = vld [vmem:[%s4040 + $0x30] sm:$0xff]
        %v4048 = vld [vmem:[%s4040 + $0x38] sm:$0xff]
        %v4049 = vld [vmem:[%s4040 + $0x40] sm:$0xff]
        %v4050 = vld [vmem:[%s4040 + $0x48] sm:$0xff]
        %v4051 = vld [vmem:[%s4040 + $0x50] sm:$0xff]
        %v4052 = vld [vmem:[%s4040 + $0x58] sm:$0xff]
        %v4053 = vld [vmem:[%s4040 + $0x60] sm:$0xff]
        %v4054 = vld [vmem:[%s4040 + $0x68] sm:$0xff]
        %v4055 = vld [vmem:[%s4040 + $0x70] sm:$0xff]
        %v4056 = vld [vmem:[%s4040 + $0x78] sm:$0xff]
        %v4057 = vld [vmem:[%s4040 + $0x80] sm:$0xff]
        %v4058 = vld [vmem:[%s4040 + $0x88] sm:$0xff]
        %v4059 = vld [vmem:[%s4040 + $0x90] sm:$0xff]
        %v4060 = vld [vmem:[%s4040 + $0x98] sm:$0xff]
        %v4061 = vld [vmem:[%s4040 + $0xa0] sm:$0xff]
        %v4062 = vld [vmem:[%s4040 + $0xa8] sm:$0xff]
        %v4063 = vld [vmem:[%s4040 + $0xb0] sm:$0xff]
        %v4064 = vld [vmem:[%s4040 + $0xb8] sm:$0xff]
        %v4065 = vld [vmem:[%s4040 + $0xc0] sm:$0xff]
        %v4066 = vld [vmem:[%s4040 + $0xc8] sm:$0xff]
        %v4067 = vld [vmem:[%s4040 + $0xd0] sm:$0xff]
        %v4068 = vld [vmem:[%s4040 + $0xd8] sm:$0xff]
        %v4069 = vld [vmem:[%s4040 + $0xe0] sm:$0xff]
        %v4070 = vld [vmem:[%s4040 + $0xe8] sm:$0xff]
        %v4071 = vld [vmem:[%s4040 + $0xf0] sm:$0xff]
        %v4072 = vld [vmem:[%s4040 + $0xf8] sm:$0xff]
        %s4073 = scalar_lea.vmem [#allocation7], 384
        %v4074 = vld [vmem:[%s4073] sm:$0xff]
        %v4075 = vld [vmem:[%s4073 + $0x8] sm:$0xff]
        %v4076 = vld [vmem:[%s4073 + $0x10] sm:$0xff]
        %v4077 = vld [vmem:[%s4073 + $0x18] sm:$0xff]
        %v4078 = vld [vmem:[%s4073 + $0x20] sm:$0xff]
        %v4079 = vld [vmem:[%s4073 + $0x28] sm:$0xff]
        %v4080 = vld [vmem:[%s4073 + $0x30] sm:$0xff]
        %v4081 = vld [vmem:[%s4073 + $0x38] sm:$0xff]
        %v4082 = vld [vmem:[%s4073 + $0x40] sm:$0xff]
        %v4083 = vld [vmem:[%s4073 + $0x48] sm:$0xff]
        %v4084 = vld [vmem:[%s4073 + $0x50] sm:$0xff]
        %v4085 = vld [vmem:[%s4073 + $0x58] sm:$0xff]
        %v4086 = vld [vmem:[%s4073 + $0x60] sm:$0xff]
        %v4087 = vld [vmem:[%s4073 + $0x68] sm:$0xff]
        %v4088 = vld [vmem:[%s4073 + $0x70] sm:$0xff]
        %v4089 = vld [vmem:[%s4073 + $0x78] sm:$0xff]
        %4090 = vmatprep.subr.mxu0 0.0
        %4091 = vmatpush1.msra.mxu0 %v4074
        %4092 = vmatprep.subr.mxu0 0.0
        %4093 = vmatpush1.msra.mxu0 %v4075
        %4094 = vmatprep.subr.mxu0 0.0
        %4095 = vmatpush1.msra.mxu0 %v4076
        %4096 = vmatprep.subr.mxu0 0.0
        %4097 = vmatpush1.msra.mxu0 %v4077
        %4098 = vmatprep.subr.mxu0 0.0
        %4099 = vmatpush1.msra.mxu0 %v4078
        %4100 = vmatprep.subr.mxu0 0.0
        %4101 = vmatpush1.msra.mxu0 %v4079
        %4102 = vmatprep.subr.mxu0 0.0
        %4103 = vmatpush1.msra.mxu0 %v4080
        %4104 = vmatprep.subr.mxu0 0.0
        %4105 = vmatpush1.msra.mxu0 %v4081
        %4106 = vmatprep.subr.mxu0 0.0
        %4107 = vmatpush1.msra.mxu0 %v4082
        %4108 = vmatprep.subr.mxu0 0.0
        %4109 = vmatpush1.msra.mxu0 %v4083
        %4110 = vmatprep.subr.mxu0 0.0
        %4111 = vmatpush1.msra.mxu0 %v4084
        %4112 = vmatprep.subr.mxu0 0.0
        %4113 = vmatpush1.msra.mxu0 %v4085
        %4114 = vmatprep.subr.mxu0 0.0
        %4115 = vmatpush1.msra.mxu0 %v4086
        %4116 = vmatprep.subr.mxu0 0.0
        %4117 = vmatpush1.msra.mxu0 %v4087
        %4118 = vmatprep.subr.mxu0 0.0
        %4119 = vmatpush1.msra.mxu0 %v4088
        %4120 = vmatprep.subr.mxu0 0.0
        %4121 = vmatpush1.msra.mxu0 %v4089
        %4122 = vmatprep.subr.mxu0 0.0
        %4123 = vmatpush1.msra.mxu0 0.0
        %4124 = vmatprep.subr.mxu0 0.0
        %4125 = vmatpush1.msra.mxu0 0.0
        %4126 = vmatprep.subr.mxu0 0.0
        %4127 = vmatpush1.msra.mxu0 0.0
        %4128 = vmatprep.subr.mxu0 0.0
        %4129 = vmatpush1.msra.mxu0 0.0
        %4130 = vmatprep.subr.mxu0 0.0
        %4131 = vmatpush1.msra.mxu0 0.0
        %4132 = vmatprep.subr.mxu0 0.0
        %4133 = vmatpush1.msra.mxu0 0.0
        %4134 = vmatprep.subr.mxu0 0.0
        %4135 = vmatpush1.msra.mxu0 0.0
        %4136 = vmatprep.subr.mxu0 0.0
        %4137 = vmatpush1.msra.mxu0 0.0
        %4138 = vmatprep.subr.mxu0 0.0
        %4139 = vmatpush1.msra.mxu0 0.0
        %4140 = vmatprep.subr.mxu0 0.0
        %4141 = vmatpush1.msra.mxu0 0.0
        %4142 = vmatprep.subr.mxu0 0.0
        %4143 = vmatpush1.msra.mxu0 0.0
        %4144 = vmatprep.subr.mxu0 0.0
        %4145 = vmatpush1.msra.mxu0 0.0
        %4146 = vmatprep.subr.mxu0 0.0
        %4147 = vmatpush1.msra.mxu0 0.0
        %4148 = vmatprep.subr.mxu0 0.0
        %4149 = vmatpush1.msra.mxu0 0.0
        %4150 = vmatprep.subr.mxu0 0.0
        %4151 = vmatpush1.msra.mxu0 0.0
        %4152 = vmatprep.subr.mxu0 0.0
        %4153 = vmatpush1.msra.mxu0 0.0
        %4154 = vmatprep.mubr.f32.mxu0 0.0
        %4155 = vmatmul.mubr.f32.gmra.mrb[0].mxu0 %v4041
        %v4156 = vpop.f32.mrb[0].mxu0
        %v4157 = vadd.f32 0.0, %v4156
        %v4158 = vpop.f32.mrb[0].mxu0
        %4159 = vmatprep.mubr.f32.mxu0 0.0
        %4160 = vmatmul.mubr.f32.gmra.mrb[0].mxu0 %v4042
        %v4161 = vpop.f32.mrb[0].mxu0
        %v4162 = vadd.f32 0.0, %v4161
        %v4163 = vpop.f32.mrb[0].mxu0
        %4164 = vmatprep.mubr.f32.mxu0 0.0
        %4165 = vmatmul.mubr.f32.gmra.mrb[0].mxu0 %v4043
        %v4166 = vpop.f32.mrb[0].mxu0
        %v4167 = vadd.f32 0.0, %v4166
        %v4168 = vpop.f32.mrb[0].mxu0
        %4169 = vmatprep.mubr.f32.mxu0 0.0
        %4170 = vmatmul.mubr.f32.gmra.mrb[0].mxu0 %v4044
        %v4171 = vpop.f32.mrb[0].mxu0
        %v4172 = vadd.f32 0.0, %v4171
        %v4173 = vpop.f32.mrb[0].mxu0
        %4174 = vmatprep.mubr.f32.mxu0 0.0
        %4175 = vmatmul.mubr.f32.gmra.mrb[0].mxu0 %v4045
        %v4176 = vpop.f32.mrb[0].mxu0
        %v4177 = vadd.f32 0.0, %v4176
        %v4178 = vpop.f32.mrb[0].mxu0
        %4179 = vmatprep.mubr.f32.mxu0 0.0
        %4180 = vmatmul.mubr.f32.gmra.mrb[0].mxu0 %v4046
        %v4181 = vpop.f32.mrb[0].mxu0
        %v4182 = vadd.f32 0.0, %v4181
        %v4183 = vpop.f32.mrb[0].mxu0
        %4184 = vmatprep.mubr.f32.mxu0 0.0
        %4185 = vmatmul.mubr.f32.gmra.mrb[0].mxu0 %v4047
        %v4186 = vpop.f32.mrb[0].mxu0
        %v4187 = vadd.f32 0.0, %v4186
        %v4188 = vpop.f32.mrb[0].mxu0
        %4189 = vmatprep.mubr.f32.mxu0 0.0
        %4190 = vmatmul.mubr.f32.gmra.mrb[0].mxu0 %v4048
        %v4191 = vpop.f32.mrb[0].mxu0
        %v4192 = vadd.f32 0.0, %v4191
        %v4193 = vpop.f32.mrb[0].mxu0
        %4194 = vmatprep.mubr.f32.mxu0 0.0
        %4195 = vmatmul.mubr.f32.gmra.mrb[0].mxu0 %v4049
        %v4196 = vpop.f32.mrb[0].mxu0
        %v4197 = vadd.f32 0.0, %v4196
        %v4198 = vpop.f32.mrb[0].mxu0
        %4199 = vmatprep.mubr.f32.mxu0 0.0
        %4200 = vmatmul.mubr.f32.gmra.mrb[0].mxu0 %v4050
        %v4201 = vpop.f32.mrb[0].mxu0
        %v4202 = vadd.f32 0.0, %v4201
        %v4203 = vpop.f32.mrb[0].mxu0
        %4204 = vmatprep.mubr.f32.mxu0 0.0
        %4205 = vmatmul.mubr.f32.gmra.mrb[0].mxu0 %v4051
        %v4206 = vpop.f32.mrb[0].mxu0
        %v4207 = vadd.f32 0.0, %v4206
        %v4208 = vpop.f32.mrb[0].mxu0
        %4209 = vmatprep.mubr.f32.mxu0 0.0
        %4210 = vmatmul.mubr.f32.gmra.mrb[0].mxu0 %v4052
        %v4211 = vpop.f32.mrb[0].mxu0
        %v4212 = vadd.f32 0.0, %v4211
        %v4213 = vpop.f32.mrb[0].mxu0
        %4214 = vmatprep.mubr.f32.mxu0 0.0
        %4215 = vmatmul.mubr.f32.gmra.mrb[0].mxu0 %v4053
        %v4216 = vpop.f32.mrb[0].mxu0
        %v4217 = vadd.f32 0.0, %v4216
        %v4218 = vpop.f32.mrb[0].mxu0
        %4219 = vmatprep.mubr.f32.mxu0 0.0
        %4220 = vmatmul.mubr.f32.gmra.mrb[0].mxu0 %v4054
        %v4221 = vpop.f32.mrb[0].mxu0
        %v4222 = vadd.f32 0.0, %v4221
        %v4223 = vpop.f32.mrb[0].mxu0
        %4224 = vmatprep.mubr.f32.mxu0 0.0
        %4225 = vmatmul.mubr.f32.gmra.mrb[0].mxu0 %v4055
        %v4226 = vpop.f32.mrb[0].mxu0
        %v4227 = vadd.f32 0.0, %v4226
        %v4228 = vpop.f32.mrb[0].mxu0
        %4229 = vmatprep.mubr.f32.mxu0 0.0
        %4230 = vmatmul.mubr.f32.gmra.mrb[0].mxu0 %v4056
        %v4231 = vpop.f32.mrb[0].mxu0
        %v4232 = vadd.f32 0.0, %v4231
        %v4233 = vpop.f32.mrb[0].mxu0
        %4234 = vmatprep.mubr.f32.mxu0 0.0
        %4235 = vmatmul.mubr.f32.gmra.mrb[0].mxu0 %v4057
        %v4236 = vpop.f32.mrb[0].mxu0
        %v4237 = vadd.f32 0.0, %v4236
        %v4238 = vpop.f32.mrb[0].mxu0
        %4239 = vmatprep.mubr.f32.mxu0 0.0
        %4240 = vmatmul.mubr.f32.gmra.mrb[0].mxu0 %v4058
        %v4241 = vpop.f32.mrb[0].mxu0
        %v4242 = vadd.f32 0.0, %v4241
        %v4243 = vpop.f32.mrb[0].mxu0
        %4244 = vmatprep.mubr.f32.mxu0 0.0
        %4245 = vmatmul.mubr.f32.gmra.mrb[0].mxu0 %v4059
        %v4246 = vpop.f32.mrb[0].mxu0
        %v4247 = vadd.f32 0.0, %v4246
        %v4248 = vpop.f32.mrb[0].mxu0
        %4249 = vmatprep.mubr.f32.mxu0 0.0
        %4250 = vmatmul.mubr.f32.gmra.mrb[0].mxu0 %v4060
        %v4251 = vpop.f32.mrb[0].mxu0
        %v4252 = vadd.f32 0.0, %v4251
        %v4253 = vpop.f32.mrb[0].mxu0
        %4254 = vmatprep.mubr.f32.mxu0 0.0
        %4255 = vmatmul.mubr.f32.gmra.mrb[0].mxu0 %v4061
        %v4256 = vpop.f32.mrb[0].mxu0
        %v4257 = vadd.f32 0.0, %v4256
        %v4258 = vpop.f32.mrb[0].mxu0
        %4259 = vmatprep.mubr.f32.mxu0 0.0
        %4260 = vmatmul.mubr.f32.gmra.mrb[0].mxu0 %v4062
        %v4261 = vpop.f32.mrb[0].mxu0
        %v4262 = vadd.f32 0.0, %v4261
        %v4263 = vpop.f32.mrb[0].mxu0
        %4264 = vmatprep.mubr.f32.mxu0 0.0
        %4265 = vmatmul.mubr.f32.gmra.mrb[0].mxu0 %v4063
        %v4266 = vpop.f32.mrb[0].mxu0
        %v4267 = vadd.f32 0.0, %v4266
        %v4268 = vpop.f32.mrb[0].mxu0
        %4269 = vmatprep.mubr.f32.mxu0 0.0
        %4270 = vmatmul.mubr.f32.gmra.mrb[0].mxu0 %v4064
        %v4271 = vpop.f32.mrb[0].mxu0
        %v4272 = vadd.f32 0.0, %v4271
        %v4273 = vpop.f32.mrb[0].mxu0
        %4274 = vmatprep.mubr.f32.mxu0 0.0
        %4275 = vmatmul.mubr.f32.gmra.mrb[0].mxu0 %v4065
        %v4276 = vpop.f32.mrb[0].mxu0
        %v4277 = vadd.f32 0.0, %v4276
        %v4278 = vpop.f32.mrb[0].mxu0
        %4279 = vmatprep.mubr.f32.mxu0 0.0
        %4280 = vmatmul.mubr.f32.gmra.mrb[0].mxu0 %v4066
        %v4281 = vpop.f32.mrb[0].mxu0
        %v4282 = vadd.f32 0.0, %v4281
        %v4283 = vpop.f32.mrb[0].mxu0
        %4284 = vmatprep.mubr.f32.mxu0 0.0
        %4285 = vmatmul.mubr.f32.gmra.mrb[0].mxu0 %v4067
        %v4286 = vpop.f32.mrb[0].mxu0
        %v4287 = vadd.f32 0.0, %v4286
        %v4288 = vpop.f32.mrb[0].mxu0
        %4289 = vmatprep.mubr.f32.mxu0 0.0
        %4290 = vmatmul.mubr.f32.gmra.mrb[0].mxu0 %v4068
        %v4291 = vpop.f32.mrb[0].mxu0
        %v4292 = vadd.f32 0.0, %v4291
        %v4293 = vpop.f32.mrb[0].mxu0
        %4294 = vmatprep.mubr.f32.mxu0 0.0
        %4295 = vmatmul.mubr.f32.gmra.mrb[0].mxu0 %v4069
        %v4296 = vpop.f32.mrb[0].mxu0
        %v4297 = vadd.f32 0.0, %v4296
        %v4298 = vpop.f32.mrb[0].mxu0
        %4299 = vmatprep.mubr.f32.mxu0 0.0
        %4300 = vmatmul.mubr.f32.gmra.mrb[0].mxu0 %v4070
        %v4301 = vpop.f32.mrb[0].mxu0
        %v4302 = vadd.f32 0.0, %v4301
        %v4303 = vpop.f32.mrb[0].mxu0
        %4304 = vmatprep.mubr.f32.mxu0 0.0
        %4305 = vmatmul.mubr.f32.gmra.mrb[0].mxu0 %v4071
        %v4306 = vpop.f32.mrb[0].mxu0
        %v4307 = vadd.f32 0.0, %v4306
        %v4308 = vpop.f32.mrb[0].mxu0
        %4309 = vmatprep.mubr.f32.mxu0 0.0
        %4310 = vmatmul.mubr.f32.gmra.mrb[0].mxu0 %v4072
        %v4311 = vpop.f32.mrb[0].mxu0
        %v4312 = vadd.f32 0.0, %v4311
        %v4313 = vpop.f32.mrb[0].mxu0
        %4314 = vdwg.mxu0
        %v4315 = vadd.f32 %v3990, %v4157
        %v4316 = vadd.f32 %v3991, %v4162
        %v4317 = vadd.f32 %v3992, %v4167
        %v4318 = vadd.f32 %v3993, %v4172
        %v4319 = vadd.f32 %v3994, %v4177
        %v4320 = vadd.f32 %v3995, %v4182
        %v4321 = vadd.f32 %v3996, %v4187
        %v4322 = vadd.f32 %v3997, %v4192
        %v4323 = vadd.f32 %v3998, %v4197
        %v4324 = vadd.f32 %v3999, %v4202
        %v4325 = vadd.f32 %v4000, %v4207
        %v4326 = vadd.f32 %v4001, %v4212
        %v4327 = vadd.f32 %v4002, %v4217
        %v4328 = vadd.f32 %v4003, %v4222
        %v4329 = vadd.f32 %v4004, %v4227
        %v4330 = vadd.f32 %v4005, %v4232
        %v4331 = vadd.f32 %v4006, %v4237
        %v4332 = vadd.f32 %v4007, %v4242
        %v4333 = vadd.f32 %v4008, %v4247
        %v4334 = vadd.f32 %v4009, %v4252
        %v4335 = vadd.f32 %v4010, %v4257
        %v4336 = vadd.f32 %v4011, %v4262
        %v4337 = vadd.f32 %v4012, %v4267
        %v4338 = vadd.f32 %v4013, %v4272
        %v4339 = vadd.f32 %v4014, %v4277
        %v4340 = vadd.f32 %v4015, %v4282
        %v4341 = vadd.f32 %v4016, %v4287
        %v4342 = vadd.f32 %v4017, %v4292
        %v4343 = vadd.f32 %v4018, %v4297
        %v4344 = vadd.f32 %v4019, %v4302
        %v4345 = vadd.f32 %v4020, %v4307
        %v4346 = vadd.f32 %v4021, %v4312
        %s4347 = scalar_lea.vmem [#allocation7], 768
        %v4348 = vld [vmem:[%s4347] sm:$0xff]
        %v4349 = vld [vmem:[%s4347 + $0x8] sm:$0xff]
        %v4350 = vld [vmem:[%s4347 + $0x10] sm:$0xff]
        %v4351 = vld [vmem:[%s4347 + $0x18] sm:$0xff]
        %v4352 = vld [vmem:[%s4347 + $0x20] sm:$0xff]
        %v4353 = vld [vmem:[%s4347 + $0x28] sm:$0xff]
        %v4354 = vld [vmem:[%s4347 + $0x30] sm:$0xff]
        %v4355 = vld [vmem:[%s4347 + $0x38] sm:$0xff]
        %v4356 = vld [vmem:[%s4347 + $0x40] sm:$0xff]
        %v4357 = vld [vmem:[%s4347 + $0x48] sm:$0xff]
        %v4358 = vld [vmem:[%s4347 + $0x50] sm:$0xff]
        %v4359 = vld [vmem:[%s4347 + $0x58] sm:$0xff]
        %v4360 = vld [vmem:[%s4347 + $0x60] sm:$0xff]
        %v4361 = vld [vmem:[%s4347 + $0x68] sm:$0xff]
        %v4362 = vld [vmem:[%s4347 + $0x70] sm:$0xff]
        %v4363 = vld [vmem:[%s4347 + $0x78] sm:$0xff]
        %4364 = vmatprep.subr.mxu0 0.0
        %4365 = vmatpush1.msra.mxu0 %v4348
        %4366 = vmatprep.subr.mxu0 0.0
        %4367 = vmatpush1.msra.mxu0 %v4349
        %4368 = vmatprep.subr.mxu0 0.0
        %4369 = vmatpush1.msra.mxu0 %v4350
        %4370 = vmatprep.subr.mxu0 0.0
        %4371 = vmatpush1.msra.mxu0 %v4351
        %4372 = vmatprep.subr.mxu0 0.0
        %4373 = vmatpush1.msra.mxu0 %v4352
        %4374 = vmatprep.subr.mxu0 0.0
        %4375 = vmatpush1.msra.mxu0 %v4353
        %4376 = vmatprep.subr.mxu0 0.0
        %4377 = vmatpush1.msra.mxu0 %v4354
        %4378 = vmatprep.subr.mxu0 0.0
        %4379 = vmatpush1.msra.mxu0 %v4355
        %4380 = vmatprep.subr.mxu0 0.0
        %4381 = vmatpush1.msra.mxu0 %v4356
        %4382 = vmatprep.subr.mxu0 0.0
        %4383 = vmatpush1.msra.mxu0 %v4357
        %4384 = vmatprep.subr.mxu0 0.0
        %4385 = vmatpush1.msra.mxu0 %v4358
        %4386 = vmatprep.subr.mxu0 0.0
        %4387 = vmatpush1.msra.mxu0 %v4359
        %4388 = vmatprep.subr.mxu0 0.0
        %4389 = vmatpush1.msra.mxu0 %v4360
        %4390 = vmatprep.subr.mxu0 0.0
        %4391 = vmatpush1.msra.mxu0 %v4361
        %4392 = vmatprep.subr.mxu0 0.0
        %4393 = vmatpush1.msra.mxu0 %v4362
        %4394 = vmatprep.subr.mxu0 0.0
        %4395 = vmatpush1.msra.mxu0 %v4363
        %4396 = vmatprep.subr.mxu0 0.0
        %4397 = vmatpush1.msra.mxu0 0.0
        %4398 = vmatprep.subr.mxu0 0.0
        %4399 = vmatpush1.msra.mxu0 0.0
        %4400 = vmatprep.subr.mxu0 0.0
        %4401 = vmatpush1.msra.mxu0 0.0
        %4402 = vmatprep.subr.mxu0 0.0
        %4403 = vmatpush1.msra.mxu0 0.0
        %4404 = vmatprep.subr.mxu0 0.0
        %4405 = vmatpush1.msra.mxu0 0.0
        %4406 = vmatprep.subr.mxu0 0.0
        %4407 = vmatpush1.msra.mxu0 0.0
        %4408 = vmatprep.subr.mxu0 0.0
        %4409 = vmatpush1.msra.mxu0 0.0
        %4410 = vmatprep.subr.mxu0 0.0
        %4411 = vmatpush1.msra.mxu0 0.0
        %4412 = vmatprep.subr.mxu0 0.0
        %4413 = vmatpush1.msra.mxu0 0.0
        %4414 = vmatprep.subr.mxu0 0.0
        %4415 = vmatpush1.msra.mxu0 0.0
        %4416 = vmatprep.subr.mxu0 0.0
        %4417 = vmatpush1.msra.mxu0 0.0
        %4418 = vmatprep.subr.mxu0 0.0
        %4419 = vmatpush1.msra.mxu0 0.0
        %4420 = vmatprep.subr.mxu0 0.0
        %4421 = vmatpush1.msra.mxu0 0.0
        %4422 = vmatprep.subr.mxu0 0.0
        %4423 = vmatpush1.msra.mxu0 0.0
        %4424 = vmatprep.subr.mxu0 0.0
        %4425 = vmatpush1.msra.mxu0 0.0
        %4426 = vmatprep.subr.mxu0 0.0
        %4427 = vmatpush1.msra.mxu0 0.0
        %4428 = vmatprep.mubr.f32.mxu0 0.0
        %4429 = vmatmul.mubr.f32.gmra.mrb[0].mxu0 %v4041
        %v4430 = vpop.f32.mrb[0].mxu0
        %v4431 = vadd.f32 0.0, %v4430
        %v4432 = vpop.f32.mrb[0].mxu0
        %4433 = vmatprep.mubr.f32.mxu0 0.0
        %4434 = vmatmul.mubr.f32.gmra.mrb[0].mxu0 %v4042
        %v4435 = vpop.f32.mrb[0].mxu0
        %v4436 = vadd.f32 0.0, %v4435
        %v4437 = vpop.f32.mrb[0].mxu0
        %4438 = vmatprep.mubr.f32.mxu0 0.0
        %4439 = vmatmul.mubr.f32.gmra.mrb[0].mxu0 %v4043
        %v4440 = vpop.f32.mrb[0].mxu0
        %v4441 = vadd.f32 0.0, %v4440
        %v4442 = vpop.f32.mrb[0].mxu0
        %4443 = vmatprep.mubr.f32.mxu0 0.0
        %4444 = vmatmul.mubr.f32.gmra.mrb[0].mxu0 %v4044
        %v4445 = vpop.f32.mrb[0].mxu0
        %v4446 = vadd.f32 0.0, %v4445
        %v4447 = vpop.f32.mrb[0].mxu0
        %4448 = vmatprep.mubr.f32.mxu0 0.0
        %4449 = vmatmul.mubr.f32.gmra.mrb[0].mxu0 %v4045
        %v4450 = vpop.f32.mrb[0].mxu0
        %v4451 = vadd.f32 0.0, %v4450
        %v4452 = vpop.f32.mrb[0].mxu0
        %4453 = vmatprep.mubr.f32.mxu0 0.0
        %4454 = vmatmul.mubr.f32.gmra.mrb[0].mxu0 %v4046
        %v4455 = vpop.f32.mrb[0].mxu0
        %v4456 = vadd.f32 0.0, %v4455
        %v4457 = vpop.f32.mrb[0].mxu0
        %4458 = vmatprep.mubr.f32.mxu0 0.0
        %4459 = vmatmul.mubr.f32.gmra.mrb[0].mxu0 %v4047
        %v4460 = vpop.f32.mrb[0].mxu0
        %v4461 = vadd.f32 0.0, %v4460
        %v4462 = vpop.f32.mrb[0].mxu0
        %4463 = vmatprep.mubr.f32.mxu0 0.0
        %4464 = vmatmul.mubr.f32.gmra.mrb[0].mxu0 %v4048
        %v4465 = vpop.f32.mrb[0].mxu0
        %v4466 = vadd.f32 0.0, %v4465
        %v4467 = vpop.f32.mrb[0].mxu0
        %4468 = vmatprep.mubr.f32.mxu0 0.0
        %4469 = vmatmul.mubr.f32.gmra.mrb[0].mxu0 %v4049
        %v4470 = vpop.f32.mrb[0].mxu0
        %v4471 = vadd.f32 0.0, %v4470
        %v4472 = vpop.f32.mrb[0].mxu0
        %4473 = vmatprep.mubr.f32.mxu0 0.0
        %4474 = vmatmul.mubr.f32.gmra.mrb[0].mxu0 %v4050
        %v4475 = vpop.f32.mrb[0].mxu0
        %v4476 = vadd.f32 0.0, %v4475
        %v4477 = vpop.f32.mrb[0].mxu0
        %4478 = vmatprep.mubr.f32.mxu0 0.0
        %4479 = vmatmul.mubr.f32.gmra.mrb[0].mxu0 %v4051
        %v4480 = vpop.f32.mrb[0].mxu0
        %v4481 = vadd.f32 0.0, %v4480
        %v4482 = vpop.f32.mrb[0].mxu0
        %4483 = vmatprep.mubr.f32.mxu0 0.0
        %4484 = vmatmul.mubr.f32.gmra.mrb[0].mxu0 %v4052
        %v4485 = vpop.f32.mrb[0].mxu0
        %v4486 = vadd.f32 0.0, %v4485
        %v4487 = vpop.f32.mrb[0].mxu0
        %4488 = vmatprep.mubr.f32.mxu0 0.0
        %4489 = vmatmul.mubr.f32.gmra.mrb[0].mxu0 %v4053
        %v4490 = vpop.f32.mrb[0].mxu0
        %v4491 = vadd.f32 0.0, %v4490
        %v4492 = vpop.f32.mrb[0].mxu0
        %4493 = vmatprep.mubr.f32.mxu0 0.0
        %4494 = vmatmul.mubr.f32.gmra.mrb[0].mxu0 %v4054
        %v4495 = vpop.f32.mrb[0].mxu0
        %v4496 = vadd.f32 0.0, %v4495
        %v4497 = vpop.f32.mrb[0].mxu0
        %4498 = vmatprep.mubr.f32.mxu0 0.0
        %4499 = vmatmul.mubr.f32.gmra.mrb[0].mxu0 %v4055
        %v4500 = vpop.f32.mrb[0].mxu0
        %v4501 = vadd.f32 0.0, %v4500
        %v4502 = vpop.f32.mrb[0].mxu0
        %4503 = vmatprep.mubr.f32.mxu0 0.0
        %4504 = vmatmul.mubr.f32.gmra.mrb[0].mxu0 %v4056
        %v4505 = vpop.f32.mrb[0].mxu0
        %v4506 = vadd.f32 0.0, %v4505
        %v4507 = vpop.f32.mrb[0].mxu0
        %4508 = vmatprep.mubr.f32.mxu0 0.0
        %4509 = vmatmul.mubr.f32.gmra.mrb[0].mxu0 %v4057
        %v4510 = vpop.f32.mrb[0].mxu0
        %v4511 = vadd.f32 0.0, %v4510
        %v4512 = vpop.f32.mrb[0].mxu0
        %4513 = vmatprep.mubr.f32.mxu0 0.0
        %4514 = vmatmul.mubr.f32.gmra.mrb[0].mxu0 %v4058
        %v4515 = vpop.f32.mrb[0].mxu0
        %v4516 = vadd.f32 0.0, %v4515
        %v4517 = vpop.f32.mrb[0].mxu0
        %4518 = vmatprep.mubr.f32.mxu0 0.0
        %4519 = vmatmul.mubr.f32.gmra.mrb[0].mxu0 %v4059
        %v4520 = vpop.f32.mrb[0].mxu0
        %v4521 = vadd.f32 0.0, %v4520
        %v4522 = vpop.f32.mrb[0].mxu0
        %4523 = vmatprep.mubr.f32.mxu0 0.0
        %4524 = vmatmul.mubr.f32.gmra.mrb[0].mxu0 %v4060
        %v4525 = vpop.f32.mrb[0].mxu0
        %v4526 = vadd.f32 0.0, %v4525
        %v4527 = vpop.f32.mrb[0].mxu0
        %4528 = vmatprep.mubr.f32.mxu0 0.0
        %4529 = vmatmul.mubr.f32.gmra.mrb[0].mxu0 %v4061
        %v4530 = vpop.f32.mrb[0].mxu0
        %v4531 = vadd.f32 0.0, %v4530
        %v4532 = vpop.f32.mrb[0].mxu0
        %4533 = vmatprep.mubr.f32.mxu0 0.0
        %4534 = vmatmul.mubr.f32.gmra.mrb[0].mxu0 %v4062
        %v4535 = vpop.f32.mrb[0].mxu0
        %v4536 = vadd.f32 0.0, %v4535
        %v4537 = vpop.f32.mrb[0].mxu0
        %4538 = vmatprep.mubr.f32.mxu0 0.0
        %4539 = vmatmul.mubr.f32.gmra.mrb[0].mxu0 %v4063
        %v4540 = vpop.f32.mrb[0].mxu0
        %v4541 = vadd.f32 0.0, %v4540
        %v4542 = vpop.f32.mrb[0].mxu0
        %4543 = vmatprep.mubr.f32.mxu0 0.0
        %4544 = vmatmul.mubr.f32.gmra.mrb[0].mxu0 %v4064
        %v4545 = vpop.f32.mrb[0].mxu0
        %v4546 = vadd.f32 0.0, %v4545
        %v4547 = vpop.f32.mrb[0].mxu0
        %4548 = vmatprep.mubr.f32.mxu0 0.0
        %4549 = vmatmul.mubr.f32.gmra.mrb[0].mxu0 %v4065
        %v4550 = vpop.f32.mrb[0].mxu0
        %v4551 = vadd.f32 0.0, %v4550
        %v4552 = vpop.f32.mrb[0].mxu0
        %4553 = vmatprep.mubr.f32.mxu0 0.0
        %4554 = vmatmul.mubr.f32.gmra.mrb[0].mxu0 %v4066
        %v4555 = vpop.f32.mrb[0].mxu0
        %v4556 = vadd.f32 0.0, %v4555
        %v4557 = vpop.f32.mrb[0].mxu0
        %4558 = vmatprep.mubr.f32.mxu0 0.0
        %4559 = vmatmul.mubr.f32.gmra.mrb[0].mxu0 %v4067
        %v4560 = vpop.f32.mrb[0].mxu0
        %v4561 = vadd.f32 0.0, %v4560
        %v4562 = vpop.f32.mrb[0].mxu0
        %4563 = vmatprep.mubr.f32.mxu0 0.0
        %4564 = vmatmul.mubr.f32.gmra.mrb[0].mxu0 %v4068
        %v4565 = vpop.f32.mrb[0].mxu0
        %v4566 = vadd.f32 0.0, %v4565
        %v4567 = vpop.f32.mrb[0].mxu0
        %4568 = vmatprep.mubr.f32.mxu0 0.0
        %4569 = vmatmul.mubr.f32.gmra.mrb[0].mxu0 %v4069
        %v4570 = vpop.f32.mrb[0].mxu0
        %v4571 = vadd.f32 0.0, %v4570
        %v4572 = vpop.f32.mrb[0].mxu0
        %4573 = vmatprep.mubr.f32.mxu0 0.0
        %4574 = vmatmul.mubr.f32.gmra.mrb[0].mxu0 %v4070
        %v4575 = vpop.f32.mrb[0].mxu0
        %v4576 = vadd.f32 0.0, %v4575
        %v4577 = vpop.f32.mrb[0].mxu0
        %4578 = vmatprep.mubr.f32.mxu0 0.0
        %4579 = vmatmul.mubr.f32.gmra.mrb[0].mxu0 %v4071
        %v4580 = vpop.f32.mrb[0].mxu0
        %v4581 = vadd.f32 0.0, %v4580
        %v4582 = vpop.f32.mrb[0].mxu0
        %4583 = vmatprep.mubr.f32.mxu0 0.0
        %4584 = vmatmul.mubr.f32.gmra.mrb[0].mxu0 %v4072
        %v4585 = vpop.f32.mrb[0].mxu0
        %v4586 = vadd.f32 0.0, %v4585
        %v4587 = vpop.f32.mrb[0].mxu0
        %4588 = vdwg.mxu0
        %v4589 = vadd.f32 %v3524, %v4431
        %v4590 = vadd.f32 %v3529, %v4436
        %v4591 = vadd.f32 %v3534, %v4441
        %v4592 = vadd.f32 %v3539, %v4446
        %v4593 = vadd.f32 %v3544, %v4451
        %v4594 = vadd.f32 %v3549, %v4456
        %v4595 = vadd.f32 %v3554, %v4461
        %v4596 = vadd.f32 %v3559, %v4466
        %v4597 = vadd.f32 %v3564, %v4471
        %v4598 = vadd.f32 %v3569, %v4476
        %v4599 = vadd.f32 %v3574, %v4481
        %v4600 = vadd.f32 %v3579, %v4486
        %v4601 = vadd.f32 %v3584, %v4491
        %v4602 = vadd.f32 %v3589, %v4496
        %v4603 = vadd.f32 %v3594, %v4501
        %v4604 = vadd.f32 %v3599, %v4506
        %v4605 = vadd.f32 %v3604, %v4511
        %v4606 = vadd.f32 %v3609, %v4516
        %v4607 = vadd.f32 %v3614, %v4521
        %v4608 = vadd.f32 %v3619, %v4526
        %v4609 = vadd.f32 %v3624, %v4531
        %v4610 = vadd.f32 %v3629, %v4536
        %v4611 = vadd.f32 %v3634, %v4541
        %v4612 = vadd.f32 %v3639, %v4546
        %v4613 = vadd.f32 %v3644, %v4551
        %v4614 = vadd.f32 %v3649, %v4556
        %v4615 = vadd.f32 %v3654, %v4561
        %v4616 = vadd.f32 %v3659, %v4566
        %v4617 = vadd.f32 %v3664, %v4571
        %v4618 = vadd.f32 %v3669, %v4576
        %v4619 = vadd.f32 %v3674, %v4581
        %v4620 = vadd.f32 %v3679, %v4586
        %s4621 = scalar_lea.vmem [#allocation7], 1152
        %v4622 = vld [vmem:[%s4621] sm:$0xff]
        %v4623 = vld [vmem:[%s4621 + $0x8] sm:$0xff]
        %v4624 = vld [vmem:[%s4621 + $0x10] sm:$0xff]
        %v4625 = vld [vmem:[%s4621 + $0x18] sm:$0xff]
        %v4626 = vld [vmem:[%s4621 + $0x20] sm:$0xff]
        %v4627 = vld [vmem:[%s4621 + $0x28] sm:$0xff]
        %v4628 = vld [vmem:[%s4621 + $0x30] sm:$0xff]
        %v4629 = vld [vmem:[%s4621 + $0x38] sm:$0xff]
        %v4630 = vld [vmem:[%s4621 + $0x40] sm:$0xff]
        %v4631 = vld [vmem:[%s4621 + $0x48] sm:$0xff]
        %v4632 = vld [vmem:[%s4621 + $0x50] sm:$0xff]
        %v4633 = vld [vmem:[%s4621 + $0x58] sm:$0xff]
        %v4634 = vld [vmem:[%s4621 + $0x60] sm:$0xff]
        %v4635 = vld [vmem:[%s4621 + $0x68] sm:$0xff]
        %v4636 = vld [vmem:[%s4621 + $0x70] sm:$0xff]
        %v4637 = vld [vmem:[%s4621 + $0x78] sm:$0xff]
        %4638 = vmatprep.subr.mxu0 0.0
        %4639 = vmatpush1.msra.mxu0 %v4622
        %4640 = vmatprep.subr.mxu0 0.0
        %4641 = vmatpush1.msra.mxu0 %v4623
        %4642 = vmatprep.subr.mxu0 0.0
        %4643 = vmatpush1.msra.mxu0 %v4624
        %4644 = vmatprep.subr.mxu0 0.0
        %4645 = vmatpush1.msra.mxu0 %v4625
        %4646 = vmatprep.subr.mxu0 0.0
        %4647 = vmatpush1.msra.mxu0 %v4626
        %4648 = vmatprep.subr.mxu0 0.0
        %4649 = vmatpush1.msra.mxu0 %v4627
        %4650 = vmatprep.subr.mxu0 0.0
        %4651 = vmatpush1.msra.mxu0 %v4628
        %4652 = vmatprep.subr.mxu0 0.0
        %4653 = vmatpush1.msra.mxu0 %v4629
        %4654 = vmatprep.subr.mxu0 0.0
        %4655 = vmatpush1.msra.mxu0 %v4630
        %4656 = vmatprep.subr.mxu0 0.0
        %4657 = vmatpush1.msra.mxu0 %v4631
        %4658 = vmatprep.subr.mxu0 0.0
        %4659 = vmatpush1.msra.mxu0 %v4632
        %4660 = vmatprep.subr.mxu0 0.0
        %4661 = vmatpush1.msra.mxu0 %v4633
        %4662 = vmatprep.subr.mxu0 0.0
        %4663 = vmatpush1.msra.mxu0 %v4634
        %4664 = vmatprep.subr.mxu0 0.0
        %4665 = vmatpush1.msra.mxu0 %v4635
        %4666 = vmatprep.subr.mxu0 0.0
        %4667 = vmatpush1.msra.mxu0 %v4636
        %4668 = vmatprep.subr.mxu0 0.0
        %4669 = vmatpush1.msra.mxu0 %v4637
        %4670 = vmatprep.subr.mxu0 0.0
        %4671 = vmatpush1.msra.mxu0 0.0
        %4672 = vmatprep.subr.mxu0 0.0
        %4673 = vmatpush1.msra.mxu0 0.0
        %4674 = vmatprep.subr.mxu0 0.0
        %4675 = vmatpush1.msra.mxu0 0.0
        %4676 = vmatprep.subr.mxu0 0.0
        %4677 = vmatpush1.msra.mxu0 0.0
        %4678 = vmatprep.subr.mxu0 0.0
        %4679 = vmatpush1.msra.mxu0 0.0
        %4680 = vmatprep.subr.mxu0 0.0
        %4681 = vmatpush1.msra.mxu0 0.0
        %4682 = vmatprep.subr.mxu0 0.0
        %4683 = vmatpush1.msra.mxu0 0.0
        %4684 = vmatprep.subr.mxu0 0.0
        %4685 = vmatpush1.msra.mxu0 0.0
        %4686 = vmatprep.subr.mxu0 0.0
        %4687 = vmatpush1.msra.mxu0 0.0
        %4688 = vmatprep.subr.mxu0 0.0
        %4689 = vmatpush1.msra.mxu0 0.0
        %4690 = vmatprep.subr.mxu0 0.0
        %4691 = vmatpush1.msra.mxu0 0.0
        %4692 = vmatprep.subr.mxu0 0.0
        %4693 = vmatpush1.msra.mxu0 0.0
        %4694 = vmatprep.subr.mxu0 0.0
        %4695 = vmatpush1.msra.mxu0 0.0
        %4696 = vmatprep.subr.mxu0 0.0
        %4697 = vmatpush1.msra.mxu0 0.0
        %4698 = vmatprep.subr.mxu0 0.0
        %4699 = vmatpush1.msra.mxu0 0.0
        %4700 = vmatprep.subr.mxu0 0.0
        %4701 = vmatpush1.msra.mxu0 0.0
        %4702 = vmatprep.mubr.f32.mxu0 0.0
        %4703 = vmatmul.mubr.f32.gmra.mrb[0].mxu0 %v4041
        %v4704 = vpop.f32.mrb[0].mxu0
        %v4705 = vadd.f32 0.0, %v4704
        %v4706 = vpop.f32.mrb[0].mxu0
        %4707 = vmatprep.mubr.f32.mxu0 0.0
        %4708 = vmatmul.mubr.f32.gmra.mrb[0].mxu0 %v4042
        %v4709 = vpop.f32.mrb[0].mxu0
        %v4710 = vadd.f32 0.0, %v4709
        %v4711 = vpop.f32.mrb[0].mxu0
        %4712 = vmatprep.mubr.f32.mxu0 0.0
        %4713 = vmatmul.mubr.f32.gmra.mrb[0].mxu0 %v4043
        %v4714 = vpop.f32.mrb[0].mxu0
        %v4715 = vadd.f32 0.0, %v4714
        %v4716 = vpop.f32.mrb[0].mxu0
        %4717 = vmatprep.mubr.f32.mxu0 0.0
        %4718 = vmatmul.mubr.f32.gmra.mrb[0].mxu0 %v4044
        %v4719 = vpop.f32.mrb[0].mxu0
        %v4720 = vadd.f32 0.0, %v4719
        %v4721 = vpop.f32.mrb[0].mxu0
        %4722 = vmatprep.mubr.f32.mxu0 0.0
        %4723 = vmatmul.mubr.f32.gmra.mrb[0].mxu0 %v4045
        %v4724 = vpop.f32.mrb[0].mxu0
        %v4725 = vadd.f32 0.0, %v4724
        %v4726 = vpop.f32.mrb[0].mxu0
        %4727 = vmatprep.mubr.f32.mxu0 0.0
        %4728 = vmatmul.mubr.f32.gmra.mrb[0].mxu0 %v4046
        %v4729 = vpop.f32.mrb[0].mxu0
        %v4730 = vadd.f32 0.0, %v4729
        %v4731 = vpop.f32.mrb[0].mxu0
        %4732 = vmatprep.mubr.f32.mxu0 0.0
        %4733 = vmatmul.mubr.f32.gmra.mrb[0].mxu0 %v4047
        %v4734 = vpop.f32.mrb[0].mxu0
        %v4735 = vadd.f32 0.0, %v4734
        %v4736 = vpop.f32.mrb[0].mxu0
        %4737 = vmatprep.mubr.f32.mxu0 0.0
        %4738 = vmatmul.mubr.f32.gmra.mrb[0].mxu0 %v4048
        %v4739 = vpop.f32.mrb[0].mxu0
        %v4740 = vadd.f32 0.0, %v4739
        %v4741 = vpop.f32.mrb[0].mxu0
        %4742 = vmatprep.mubr.f32.mxu0 0.0
        %4743 = vmatmul.mubr.f32.gmra.mrb[0].mxu0 %v4049
        %v4744 = vpop.f32.mrb[0].mxu0
        %v4745 = vadd.f32 0.0, %v4744
        %v4746 = vpop.f32.mrb[0].mxu0
        %4747 = vmatprep.mubr.f32.mxu0 0.0
        %4748 = vmatmul.mubr.f32.gmra.mrb[0].mxu0 %v4050
        %v4749 = vpop.f32.mrb[0].mxu0
        %v4750 = vadd.f32 0.0, %v4749
        %v4751 = vpop.f32.mrb[0].mxu0
        %4752 = vmatprep.mubr.f32.mxu0 0.0
        %4753 = vmatmul.mubr.f32.gmra.mrb[0].mxu0 %v4051
        %v4754 = vpop.f32.mrb[0].mxu0
        %v4755 = vadd.f32 0.0, %v4754
        %v4756 = vpop.f32.mrb[0].mxu0
        %4757 = vmatprep.mubr.f32.mxu0 0.0
        %4758 = vmatmul.mubr.f32.gmra.mrb[0].mxu0 %v4052
        %v4759 = vpop.f32.mrb[0].mxu0
        %v4760 = vadd.f32 0.0, %v4759
        %v4761 = vpop.f32.mrb[0].mxu0
        %4762 = vmatprep.mubr.f32.mxu0 0.0
        %4763 = vmatmul.mubr.f32.gmra.mrb[0].mxu0 %v4053
        %v4764 = vpop.f32.mrb[0].mxu0
        %v4765 = vadd.f32 0.0, %v4764
        %v4766 = vpop.f32.mrb[0].mxu0
        %4767 = vmatprep.mubr.f32.mxu0 0.0
        %4768 = vmatmul.mubr.f32.gmra.mrb[0].mxu0 %v4054
        %v4769 = vpop.f32.mrb[0].mxu0
        %v4770 = vadd.f32 0.0, %v4769
        %v4771 = vpop.f32.mrb[0].mxu0
        %4772 = vmatprep.mubr.f32.mxu0 0.0
        %4773 = vmatmul.mubr.f32.gmra.mrb[0].mxu0 %v4055
        %v4774 = vpop.f32.mrb[0].mxu0
        %v4775 = vadd.f32 0.0, %v4774
        %v4776 = vpop.f32.mrb[0].mxu0
        %4777 = vmatprep.mubr.f32.mxu0 0.0
        %4778 = vmatmul.mubr.f32.gmra.mrb[0].mxu0 %v4056
        %v4779 = vpop.f32.mrb[0].mxu0
        %v4780 = vadd.f32 0.0, %v4779
        %v4781 = vpop.f32.mrb[0].mxu0
        %4782 = vmatprep.mubr.f32.mxu0 0.0
        %4783 = vmatmul.mubr.f32.gmra.mrb[0].mxu0 %v4057
        %v4784 = vpop.f32.mrb[0].mxu0
        %v4785 = vadd.f32 0.0, %v4784
        %v4786 = vpop.f32.mrb[0].mxu0
        %4787 = vmatprep.mubr.f32.mxu0 0.0
        %4788 = vmatmul.mubr.f32.gmra.mrb[0].mxu0 %v4058
        %v4789 = vpop.f32.mrb[0].mxu0
        %v4790 = vadd.f32 0.0, %v4789
        %v4791 = vpop.f32.mrb[0].mxu0
        %4792 = vmatprep.mubr.f32.mxu0 0.0
        %4793 = vmatmul.mubr.f32.gmra.mrb[0].mxu0 %v4059
        %v4794 = vpop.f32.mrb[0].mxu0
        %v4795 = vadd.f32 0.0, %v4794
        %v4796 = vpop.f32.mrb[0].mxu0
        %4797 = vmatprep.mubr.f32.mxu0 0.0
        %4798 = vmatmul.mubr.f32.gmra.mrb[0].mxu0 %v4060
        %v4799 = vpop.f32.mrb[0].mxu0
        %v4800 = vadd.f32 0.0, %v4799
        %v4801 = vpop.f32.mrb[0].mxu0
        %4802 = vmatprep.mubr.f32.mxu0 0.0
        %4803 = vmatmul.mubr.f32.gmra.mrb[0].mxu0 %v4061
        %v4804 = vpop.f32.mrb[0].mxu0
        %v4805 = vadd.f32 0.0, %v4804
        %v4806 = vpop.f32.mrb[0].mxu0
        %4807 = vmatprep.mubr.f32.mxu0 0.0
        %4808 = vmatmul.mubr.f32.gmra.mrb[0].mxu0 %v4062
        %v4809 = vpop.f32.mrb[0].mxu0
        %v4810 = vadd.f32 0.0, %v4809
        %v4811 = vpop.f32.mrb[0].mxu0
        %4812 = vmatprep.mubr.f32.mxu0 0.0
        %4813 = vmatmul.mubr.f32.gmra.mrb[0].mxu0 %v4063
        %v4814 = vpop.f32.mrb[0].mxu0
        %v4815 = vadd.f32 0.0, %v4814
        %v4816 = vpop.f32.mrb[0].mxu0
        %4817 = vmatprep.mubr.f32.mxu0 0.0
        %4818 = vmatmul.mubr.f32.gmra.mrb[0].mxu0 %v4064
        %v4819 = vpop.f32.mrb[0].mxu0
        %v4820 = vadd.f32 0.0, %v4819
        %v4821 = vpop.f32.mrb[0].mxu0
        %4822 = vmatprep.mubr.f32.mxu0 0.0
        %4823 = vmatmul.mubr.f32.gmra.mrb[0].mxu0 %v4065
        %v4824 = vpop.f32.mrb[0].mxu0
        %v4825 = vadd.f32 0.0, %v4824
        %v4826 = vpop.f32.mrb[0].mxu0
        %4827 = vmatprep.mubr.f32.mxu0 0.0
        %4828 = vmatmul.mubr.f32.gmra.mrb[0].mxu0 %v4066
        %v4829 = vpop.f32.mrb[0].mxu0
        %v4830 = vadd.f32 0.0, %v4829
        %v4831 = vpop.f32.mrb[0].mxu0
        %4832 = vmatprep.mubr.f32.mxu0 0.0
        %4833 = vmatmul.mubr.f32.gmra.mrb[0].mxu0 %v4067
        %v4834 = vpop.f32.mrb[0].mxu0
        %v4835 = vadd.f32 0.0, %v4834
        %v4836 = vpop.f32.mrb[0].mxu0
        %4837 = vmatprep.mubr.f32.mxu0 0.0
        %4838 = vmatmul.mubr.f32.gmra.mrb[0].mxu0 %v4068
        %v4839 = vpop.f32.mrb[0].mxu0
        %v4840 = vadd.f32 0.0, %v4839
        %v4841 = vpop.f32.mrb[0].mxu0
        %4842 = vmatprep.mubr.f32.mxu0 0.0
        %4843 = vmatmul.mubr.f32.gmra.mrb[0].mxu0 %v4069
        %v4844 = vpop.f32.mrb[0].mxu0
        %v4845 = vadd.f32 0.0, %v4844
        %v4846 = vpop.f32.mrb[0].mxu0
        %4847 = vmatprep.mubr.f32.mxu0 0.0
        %4848 = vmatmul.mubr.f32.gmra.mrb[0].mxu0 %v4070
        %v4849 = vpop.f32.mrb[0].mxu0
        %v4850 = vadd.f32 0.0, %v4849
        %v4851 = vpop.f32.mrb[0].mxu0
        %4852 = vmatprep.mubr.f32.mxu0 0.0
        %4853 = vmatmul.mubr.f32.gmra.mrb[0].mxu0 %v4071
        %v4854 = vpop.f32.mrb[0].mxu0
        %v4855 = vadd.f32 0.0, %v4854
        %v4856 = vpop.f32.mrb[0].mxu0
        %4857 = vmatprep.mubr.f32.mxu0 0.0
        %4858 = vmatmul.mubr.f32.gmra.mrb[0].mxu0 %v4072
        %v4859 = vpop.f32.mrb[0].mxu0
        %v4860 = vadd.f32 0.0, %v4859
        %v4861 = vpop.f32.mrb[0].mxu0
        %4862 = vdwg.mxu0
        %4863 = vmatprep.subr.mxu0 0.0
        %4864 = vmatpush1.msra.mxu0 %v4023
        %4865 = vmatprep.subr.mxu0 0.0
        %4866 = vmatpush1.msra.mxu0 %v4024
        %4867 = vmatprep.subr.mxu0 0.0
        %4868 = vmatpush1.msra.mxu0 %v4025
        %4869 = vmatprep.subr.mxu0 0.0
        %4870 = vmatpush1.msra.mxu0 %v4026
        %4871 = vmatprep.subr.mxu0 0.0
        %4872 = vmatpush1.msra.mxu0 %v4027
        %4873 = vmatprep.subr.mxu0 0.0
        %4874 = vmatpush1.msra.mxu0 %v4028
        %4875 = vmatprep.subr.mxu0 0.0
        %4876 = vmatpush1.msra.mxu0 %v4029
        %4877 = vmatprep.subr.mxu0 0.0
        %4878 = vmatpush1.msra.mxu0 %v4030
        %4879 = vmatprep.subr.mxu0 0.0
        %4880 = vmatpush1.msra.mxu0 %v4031
        %4881 = vmatprep.subr.mxu0 0.0
        %4882 = vmatpush1.msra.mxu0 %v4032
        %4883 = vmatprep.subr.mxu0 0.0
        %4884 = vmatpush1.msra.mxu0 %v4033
        %4885 = vmatprep.subr.mxu0 0.0
        %4886 = vmatpush1.msra.mxu0 %v4034
        %4887 = vmatprep.subr.mxu0 0.0
        %4888 = vmatpush1.msra.mxu0 %v4035
        %4889 = vmatprep.subr.mxu0 0.0
        %4890 = vmatpush1.msra.mxu0 %v4036
        %4891 = vmatprep.subr.mxu0 0.0
        %4892 = vmatpush1.msra.mxu0 %v4037
        %4893 = vmatprep.subr.mxu0 0.0
        %4894 = vmatpush1.msra.mxu0 %v4038
        %4895 = vmatprep.subr.mxu0 0.0
        %4896 = vmatpush1.msra.mxu0 0.0
        %4897 = vmatprep.subr.mxu0 0.0
        %4898 = vmatpush1.msra.mxu0 0.0
        %4899 = vmatprep.subr.mxu0 0.0
        %4900 = vmatpush1.msra.mxu0 0.0
        %4901 = vmatprep.subr.mxu0 0.0
        %4902 = vmatpush1.msra.mxu0 0.0
        %4903 = vmatprep.subr.mxu0 0.0
        %4904 = vmatpush1.msra.mxu0 0.0
        %4905 = vmatprep.subr.mxu0 0.0
        %4906 = vmatpush1.msra.mxu0 0.0
        %4907 = vmatprep.subr.mxu0 0.0
        %4908 = vmatpush1.msra.mxu0 0.0
        %4909 = vmatprep.subr.mxu0 0.0
        %4910 = vmatpush1.msra.mxu0 0.0
        %4911 = vmatprep.subr.mxu0 0.0
        %4912 = vmatpush1.msra.mxu0 0.0
        %4913 = vmatprep.subr.mxu0 0.0
        %4914 = vmatpush1.msra.mxu0 0.0
        %4915 = vmatprep.subr.mxu0 0.0
        %4916 = vmatpush1.msra.mxu0 0.0
        %4917 = vmatprep.subr.mxu0 0.0
        %4918 = vmatpush1.msra.mxu0 0.0
        %4919 = vmatprep.subr.mxu0 0.0
        %4920 = vmatpush1.msra.mxu0 0.0
        %4921 = vmatprep.subr.mxu0 0.0
        %4922 = vmatpush1.msra.mxu0 0.0
        %4923 = vmatprep.subr.mxu0 0.0
        %4924 = vmatpush1.msra.mxu0 0.0
        %4925 = vmatprep.subr.mxu0 0.0
        %4926 = vmatpush1.msra.mxu0 0.0
        %4927 = vmatprep.mubr.f32.mxu0 0.0
        %4928 = vmatmul.mubr.f32.gmra.mrb[0].mxu0 %v3716
        %v4929 = vpop.f32.mrb[0].mxu0
        %v4930 = vadd.f32 %v4705, %v4929
        %v4931 = vpop.f32.mrb[0].mxu0
        %4932 = vmatprep.mubr.f32.mxu0 0.0
        %4933 = vmatmul.mubr.f32.gmra.mrb[0].mxu0 %v3717
        %v4934 = vpop.f32.mrb[0].mxu0
        %v4935 = vadd.f32 %v4710, %v4934
        %v4936 = vpop.f32.mrb[0].mxu0
        %4937 = vmatprep.mubr.f32.mxu0 0.0
        %4938 = vmatmul.mubr.f32.gmra.mrb[0].mxu0 %v3718
        %v4939 = vpop.f32.mrb[0].mxu0
        %v4940 = vadd.f32 %v4715, %v4939
        %v4941 = vpop.f32.mrb[0].mxu0
        %4942 = vmatprep.mubr.f32.mxu0 0.0
        %4943 = vmatmul.mubr.f32.gmra.mrb[0].mxu0 %v3719
        %v4944 = vpop.f32.mrb[0].mxu0
        %v4945 = vadd.f32 %v4720, %v4944
        %v4946 = vpop.f32.mrb[0].mxu0
        %4947 = vmatprep.mubr.f32.mxu0 0.0
        %4948 = vmatmul.mubr.f32.gmra.mrb[0].mxu0 %v3720
        %v4949 = vpop.f32.mrb[0].mxu0
        %v4950 = vadd.f32 %v4725, %v4949
        %v4951 = vpop.f32.mrb[0].mxu0
        %4952 = vmatprep.mubr.f32.mxu0 0.0
        %4953 = vmatmul.mubr.f32.gmra.mrb[0].mxu0 %v3721
        %v4954 = vpop.f32.mrb[0].mxu0
        %v4955 = vadd.f32 %v4730, %v4954
        %v4956 = vpop.f32.mrb[0].mxu0
        %4957 = vmatprep.mubr.f32.mxu0 0.0
        %4958 = vmatmul.mubr.f32.gmra.mrb[0].mxu0 %v3722
        %v4959 = vpop.f32.mrb[0].mxu0
        %v4960 = vadd.f32 %v4735, %v4959
        %v4961 = vpop.f32.mrb[0].mxu0
        %4962 = vmatprep.mubr.f32.mxu0 0.0
        %4963 = vmatmul.mubr.f32.gmra.mrb[0].mxu0 %v3723
        %v4964 = vpop.f32.mrb[0].mxu0
        %v4965 = vadd.f32 %v4740, %v4964
        %v4966 = vpop.f32.mrb[0].mxu0
        %4967 = vmatprep.mubr.f32.mxu0 0.0
        %4968 = vmatmul.mubr.f32.gmra.mrb[0].mxu0 %v3724
        %v4969 = vpop.f32.mrb[0].mxu0
        %v4970 = vadd.f32 %v4745, %v4969
        %v4971 = vpop.f32.mrb[0].mxu0
        %4972 = vmatprep.mubr.f32.mxu0 0.0
        %4973 = vmatmul.mubr.f32.gmra.mrb[0].mxu0 %v3725
        %v4974 = vpop.f32.mrb[0].mxu0
        %v4975 = vadd.f32 %v4750, %v4974
        %v4976 = vpop.f32.mrb[0].mxu0
        %4977 = vmatprep.mubr.f32.mxu0 0.0
        %4978 = vmatmul.mubr.f32.gmra.mrb[0].mxu0 %v3726
        %v4979 = vpop.f32.mrb[0].mxu0
        %v4980 = vadd.f32 %v4755, %v4979
        %v4981 = vpop.f32.mrb[0].mxu0
        %4982 = vmatprep.mubr.f32.mxu0 0.0
        %4983 = vmatmul.mubr.f32.gmra.mrb[0].mxu0 %v3727
        %v4984 = vpop.f32.mrb[0].mxu0
        %v4985 = vadd.f32 %v4760, %v4984
        %v4986 = vpop.f32.mrb[0].mxu0
        %4987 = vmatprep.mubr.f32.mxu0 0.0
        %4988 = vmatmul.mubr.f32.gmra.mrb[0].mxu0 %v3728
        %v4989 = vpop.f32.mrb[0].mxu0
        %v4990 = vadd.f32 %v4765, %v4989
        %v4991 = vpop.f32.mrb[0].mxu0
        %4992 = vmatprep.mubr.f32.mxu0 0.0
        %4993 = vmatmul.mubr.f32.gmra.mrb[0].mxu0 %v3729
        %v4994 = vpop.f32.mrb[0].mxu0
        %v4995 = vadd.f32 %v4770, %v4994
        %v4996 = vpop.f32.mrb[0].mxu0
        %4997 = vmatprep.mubr.f32.mxu0 0.0
        %4998 = vmatmul.mubr.f32.gmra.mrb[0].mxu0 %v3730
        %v4999 = vpop.f32.mrb[0].mxu0
        %v5000 = vadd.f32 %v4775, %v4999
        %v5001 = vpop.f32.mrb[0].mxu0
        %5002 = vmatprep.mubr.f32.mxu0 0.0
        %5003 = vmatmul.mubr.f32.gmra.mrb[0].mxu0 %v3731
        %v5004 = vpop.f32.mrb[0].mxu0
        %v5005 = vadd.f32 %v4780, %v5004
        %v5006 = vpop.f32.mrb[0].mxu0
        %5007 = vmatprep.mubr.f32.mxu0 0.0
        %5008 = vmatmul.mubr.f32.gmra.mrb[0].mxu0 %v3732
        %v5009 = vpop.f32.mrb[0].mxu0
        %v5010 = vadd.f32 %v4785, %v5009
        %v5011 = vpop.f32.mrb[0].mxu0
        %5012 = vmatprep.mubr.f32.mxu0 0.0
        %5013 = vmatmul.mubr.f32.gmra.mrb[0].mxu0 %v3733
        %v5014 = vpop.f32.mrb[0].mxu0
        %v5015 = vadd.f32 %v4790, %v5014
        %v5016 = vpop.f32.mrb[0].mxu0
        %5017 = vmatprep.mubr.f32.mxu0 0.0
        %5018 = vmatmul.mubr.f32.gmra.mrb[0].mxu0 %v3734
        %v5019 = vpop.f32.mrb[0].mxu0
        %v5020 = vadd.f32 %v4795, %v5019
        %v5021 = vpop.f32.mrb[0].mxu0
        %5022 = vmatprep.mubr.f32.mxu0 0.0
        %5023 = vmatmul.mubr.f32.gmra.mrb[0].mxu0 %v3735
        %v5024 = vpop.f32.mrb[0].mxu0
        %v5025 = vadd.f32 %v4800, %v5024
        %v5026 = vpop.f32.mrb[0].mxu0
        %5027 = vmatprep.mubr.f32.mxu0 0.0
        %5028 = vmatmul.mubr.f32.gmra.mrb[0].mxu0 %v3736
        %v5029 = vpop.f32.mrb[0].mxu0
        %v5030 = vadd.f32 %v4805, %v5029
        %v5031 = vpop.f32.mrb[0].mxu0
        %5032 = vmatprep.mubr.f32.mxu0 0.0
        %5033 = vmatmul.mubr.f32.gmra.mrb[0].mxu0 %v3737
        %v5034 = vpop.f32.mrb[0].mxu0
        %v5035 = vadd.f32 %v4810, %v5034
        %v5036 = vpop.f32.mrb[0].mxu0
        %5037 = vmatprep.mubr.f32.mxu0 0.0
        %5038 = vmatmul.mubr.f32.gmra.mrb[0].mxu0 %v3738
        %v5039 = vpop.f32.mrb[0].mxu0
        %v5040 = vadd.f32 %v4815, %v5039
        %v5041 = vpop.f32.mrb[0].mxu0
        %5042 = vmatprep.mubr.f32.mxu0 0.0
        %5043 = vmatmul.mubr.f32.gmra.mrb[0].mxu0 %v3739
        %v5044 = vpop.f32.mrb[0].mxu0
        %v5045 = vadd.f32 %v4820, %v5044
        %v5046 = vpop.f32.mrb[0].mxu0
        %5047 = vmatprep.mubr.f32.mxu0 0.0
        %5048 = vmatmul.mubr.f32.gmra.mrb[0].mxu0 %v3740
        %v5049 = vpop.f32.mrb[0].mxu0
        %v5050 = vadd.f32 %v4825, %v5049
        %v5051 = vpop.f32.mrb[0].mxu0
        %5052 = vmatprep.mubr.f32.mxu0 0.0
        %5053 = vmatmul.mubr.f32.gmra.mrb[0].mxu0 %v3741
        %v5054 = vpop.f32.mrb[0].mxu0
        %v5055 = vadd.f32 %v4830, %v5054
        %v5056 = vpop.f32.mrb[0].mxu0
        %5057 = vmatprep.mubr.f32.mxu0 0.0
        %5058 = vmatmul.mubr.f32.gmra.mrb[0].mxu0 %v3742
        %v5059 = vpop.f32.mrb[0].mxu0
        %v5060 = vadd.f32 %v4835, %v5059
        %v5061 = vpop.f32.mrb[0].mxu0
        %5062 = vmatprep.mubr.f32.mxu0 0.0
        %5063 = vmatmul.mubr.f32.gmra.mrb[0].mxu0 %v3743
        %v5064 = vpop.f32.mrb[0].mxu0
        %v5065 = vadd.f32 %v4840, %v5064
        %v5066 = vpop.f32.mrb[0].mxu0
        %5067 = vmatprep.mubr.f32.mxu0 0.0
        %5068 = vmatmul.mubr.f32.gmra.mrb[0].mxu0 %v3744
        %v5069 = vpop.f32.mrb[0].mxu0
        %v5070 = vadd.f32 %v4845, %v5069
        %v5071 = vpop.f32.mrb[0].mxu0
        %5072 = vmatprep.mubr.f32.mxu0 0.0
        %5073 = vmatmul.mubr.f32.gmra.mrb[0].mxu0 %v3745
        %v5074 = vpop.f32.mrb[0].mxu0
        %v5075 = vadd.f32 %v4850, %v5074
        %v5076 = vpop.f32.mrb[0].mxu0
        %5077 = vmatprep.mubr.f32.mxu0 0.0
        %5078 = vmatmul.mubr.f32.gmra.mrb[0].mxu0 %v3746
        %v5079 = vpop.f32.mrb[0].mxu0
        %v5080 = vadd.f32 %v4855, %v5079
        %v5081 = vpop.f32.mrb[0].mxu0
        %5082 = vmatprep.mubr.f32.mxu0 0.0
        %5083 = vmatmul.mubr.f32.gmra.mrb[0].mxu0 %v3747
        %v5084 = vpop.f32.mrb[0].mxu0
        %v5085 = vadd.f32 %v4860, %v5084
        %v5086 = vpop.f32.mrb[0].mxu0
        %5087 = vdwg.mxu0
        %s5088 = scalar_lea.vmem [#allocation7], 1536
        %v5089 = vld [vmem:[%s5088] sm:$0xff]
        %v5090 = vld [vmem:[%s5088 + $0x8] sm:$0xff]
        %v5091 = vld [vmem:[%s5088 + $0x10] sm:$0xff]
        %v5092 = vld [vmem:[%s5088 + $0x18] sm:$0xff]
        %v5093 = vld [vmem:[%s5088 + $0x20] sm:$0xff]
        %v5094 = vld [vmem:[%s5088 + $0x28] sm:$0xff]
        %v5095 = vld [vmem:[%s5088 + $0x30] sm:$0xff]
        %v5096 = vld [vmem:[%s5088 + $0x38] sm:$0xff]
        %v5097 = vld [vmem:[%s5088 + $0x40] sm:$0xff]
        %v5098 = vld [vmem:[%s5088 + $0x48] sm:$0xff]
        %v5099 = vld [vmem:[%s5088 + $0x50] sm:$0xff]
        %v5100 = vld [vmem:[%s5088 + $0x58] sm:$0xff]
        %v5101 = vld [vmem:[%s5088 + $0x60] sm:$0xff]
        %v5102 = vld [vmem:[%s5088 + $0x68] sm:$0xff]
        %v5103 = vld [vmem:[%s5088 + $0x70] sm:$0xff]
        %v5104 = vld [vmem:[%s5088 + $0x78] sm:$0xff]
        %s5105 = sadd.s32 %s1786, 25
        %s5106 = scalar_lea.vmem [#allocation2], %s5105
        %v5107 = vld [vmem:[%s5106] sm:$0xff]
        %v5108 = vld [vmem:[%s5106 + $0x8] sm:$0xff]
        %v5109 = vld [vmem:[%s5106 + $0x10] sm:$0xff]
        %v5110 = vld [vmem:[%s5106 + $0x18] sm:$0xff]
        %v5111 = vld [vmem:[%s5106 + $0x20] sm:$0xff]
        %v5112 = vld [vmem:[%s5106 + $0x28] sm:$0xff]
        %v5113 = vld [vmem:[%s5106 + $0x30] sm:$0xff]
        %v5114 = vld [vmem:[%s5106 + $0x38] sm:$0xff]
        %v5115 = vld [vmem:[%s5106 + $0x40] sm:$0xff]
        %v5116 = vld [vmem:[%s5106 + $0x48] sm:$0xff]
        %v5117 = vld [vmem:[%s5106 + $0x50] sm:$0xff]
        %v5118 = vld [vmem:[%s5106 + $0x58] sm:$0xff]
        %v5119 = vld [vmem:[%s5106 + $0x60] sm:$0xff]
        %v5120 = vld [vmem:[%s5106 + $0x68] sm:$0xff]
        %v5121 = vld [vmem:[%s5106 + $0x70] sm:$0xff]
        %v5122 = vld [vmem:[%s5106 + $0x78] sm:$0xff]
        %v5123 = vld [vmem:[%s5106 + $0x80] sm:$0xff]
        %v5124 = vld [vmem:[%s5106 + $0x88] sm:$0xff]
        %v5125 = vld [vmem:[%s5106 + $0x90] sm:$0xff]
        %v5126 = vld [vmem:[%s5106 + $0x98] sm:$0xff]
        %v5127 = vld [vmem:[%s5106 + $0xa0] sm:$0xff]
        %v5128 = vld [vmem:[%s5106 + $0xa8] sm:$0xff]
        %v5129 = vld [vmem:[%s5106 + $0xb0] sm:$0xff]
        %v5130 = vld [vmem:[%s5106 + $0xb8] sm:$0xff]
        %v5131 = vld [vmem:[%s5106 + $0xc0] sm:$0xff]
        %v5132 = vld [vmem:[%s5106 + $0xc8] sm:$0xff]
        %v5133 = vld [vmem:[%s5106 + $0xd0] sm:$0xff]
        %v5134 = vld [vmem:[%s5106 + $0xd8] sm:$0xff]
        %v5135 = vld [vmem:[%s5106 + $0xe0] sm:$0xff]
        %v5136 = vld [vmem:[%s5106 + $0xe8] sm:$0xff]
        %v5137 = vld [vmem:[%s5106 + $0xf0] sm:$0xff]
        %v5138 = vld [vmem:[%s5106 + $0xf8] sm:$0xff]
        %v5139 = vsel %vm2517, %v5107, 0.0
        %v5140 = vsel %vm2518, %v5108, 0.0
        %v5141 = vsel %vm2519, %v5109, 0.0
        %v5142 = vsel %vm2520, %v5110, 0.0
        %v5143 = vsel %vm2521, %v5111, 0.0
        %v5144 = vsel %vm2522, %v5112, 0.0
        %v5145 = vsel %vm2523, %v5113, 0.0
        %v5146 = vsel %vm2524, %v5114, 0.0
        %v5147 = vsel %vm2525, %v5115, 0.0
        %v5148 = vsel %vm2526, %v5116, 0.0
        %v5149 = vsel %vm2527, %v5117, 0.0
        %v5150 = vsel %vm2528, %v5118, 0.0
        %v5151 = vsel %vm2529, %v5119, 0.0
        %v5152 = vsel %vm2530, %v5120, 0.0
        %v5153 = vsel %vm2531, %v5121, 0.0
        %v5154 = vsel %vm2532, %v5122, 0.0
        %v5155 = vsel %vm2533, %v5123, 0.0
        %v5156 = vsel %vm2534, %v5124, 0.0
        %v5157 = vsel %vm2535, %v5125, 0.0
        %v5158 = vsel %vm2536, %v5126, 0.0
        %v5159 = vsel %vm2537, %v5127, 0.0
        %v5160 = vsel %vm2538, %v5128, 0.0
        %v5161 = vsel %vm2539, %v5129, 0.0
        %v5162 = vsel %vm2540, %v5130, 0.0
        %v5163 = vsel %vm2541, %v5131, 0.0
        %v5164 = vsel %vm2542, %v5132, 0.0
        %v5165 = vsel %vm2543, %v5133, 0.0
        %v5166 = vsel %vm2544, %v5134, 0.0
        %v5167 = vsel %vm2545, %v5135, 0.0
        %v5168 = vsel %vm2546, %v5136, 0.0
        %v5169 = vsel %vm2547, %v5137, 0.0
        %v5170 = vsel %vm2548, %v5138, 0.0
        %s5171 = scalar_lea.vmem [#allocation7], 896
        %v5172 = vld [vmem:[%s5171] sm:$0xff]
        %v5173 = vld [vmem:[%s5171 + $0x8] sm:$0xff]
        %v5174 = vld [vmem:[%s5171 + $0x10] sm:$0xff]
        %v5175 = vld [vmem:[%s5171 + $0x18] sm:$0xff]
        %v5176 = vld [vmem:[%s5171 + $0x20] sm:$0xff]
        %v5177 = vld [vmem:[%s5171 + $0x28] sm:$0xff]
        %v5178 = vld [vmem:[%s5171 + $0x30] sm:$0xff]
        %v5179 = vld [vmem:[%s5171 + $0x38] sm:$0xff]
        %v5180 = vld [vmem:[%s5171 + $0x40] sm:$0xff]
        %v5181 = vld [vmem:[%s5171 + $0x48] sm:$0xff]
        %v5182 = vld [vmem:[%s5171 + $0x50] sm:$0xff]
        %v5183 = vld [vmem:[%s5171 + $0x58] sm:$0xff]
        %v5184 = vld [vmem:[%s5171 + $0x60] sm:$0xff]
        %v5185 = vld [vmem:[%s5171 + $0x68] sm:$0xff]
        %v5186 = vld [vmem:[%s5171 + $0x70] sm:$0xff]
        %v5187 = vld [vmem:[%s5171 + $0x78] sm:$0xff]
        %5188 = vmatprep.subr.mxu0 0.0
        %5189 = vmatpush1.msra.mxu0 %v5172
        %5190 = vmatprep.subr.mxu0 0.0
        %5191 = vmatpush1.msra.mxu0 %v5173
        %5192 = vmatprep.subr.mxu0 0.0
        %5193 = vmatpush1.msra.mxu0 %v5174
        %5194 = vmatprep.subr.mxu0 0.0
        %5195 = vmatpush1.msra.mxu0 %v5175
        %5196 = vmatprep.subr.mxu0 0.0
        %5197 = vmatpush1.msra.mxu0 %v5176
        %5198 = vmatprep.subr.mxu0 0.0
        %5199 = vmatpush1.msra.mxu0 %v5177
        %5200 = vmatprep.subr.mxu0 0.0
        %5201 = vmatpush1.msra.mxu0 %v5178
        %5202 = vmatprep.subr.mxu0 0.0
        %5203 = vmatpush1.msra.mxu0 %v5179
        %5204 = vmatprep.subr.mxu0 0.0
        %5205 = vmatpush1.msra.mxu0 %v5180
        %5206 = vmatprep.subr.mxu0 0.0
        %5207 = vmatpush1.msra.mxu0 %v5181
        %5208 = vmatprep.subr.mxu0 0.0
        %5209 = vmatpush1.msra.mxu0 %v5182
        %5210 = vmatprep.subr.mxu0 0.0
        %5211 = vmatpush1.msra.mxu0 %v5183
        %5212 = vmatprep.subr.mxu0 0.0
        %5213 = vmatpush1.msra.mxu0 %v5184
        %5214 = vmatprep.subr.mxu0 0.0
        %5215 = vmatpush1.msra.mxu0 %v5185
        %5216 = vmatprep.subr.mxu0 0.0
        %5217 = vmatpush1.msra.mxu0 %v5186
        %5218 = vmatprep.subr.mxu0 0.0
        %5219 = vmatpush1.msra.mxu0 %v5187
        %5220 = vmatprep.subr.mxu0 0.0
        %5221 = vmatpush1.msra.mxu0 0.0
        %5222 = vmatprep.subr.mxu0 0.0
        %5223 = vmatpush1.msra.mxu0 0.0
        %5224 = vmatprep.subr.mxu0 0.0
        %5225 = vmatpush1.msra.mxu0 0.0
        %5226 = vmatprep.subr.mxu0 0.0
        %5227 = vmatpush1.msra.mxu0 0.0
        %5228 = vmatprep.subr.mxu0 0.0
        %5229 = vmatpush1.msra.mxu0 0.0
        %5230 = vmatprep.subr.mxu0 0.0
        %5231 = vmatpush1.msra.mxu0 0.0
        %5232 = vmatprep.subr.mxu0 0.0
        %5233 = vmatpush1.msra.mxu0 0.0
        %5234 = vmatprep.subr.mxu0 0.0
        %5235 = vmatpush1.msra.mxu0 0.0
        %5236 = vmatprep.subr.mxu0 0.0
        %5237 = vmatpush1.msra.mxu0 0.0
        %5238 = vmatprep.subr.mxu0 0.0
        %5239 = vmatpush1.msra.mxu0 0.0
        %5240 = vmatprep.subr.mxu0 0.0
        %5241 = vmatpush1.msra.mxu0 0.0
        %5242 = vmatprep.subr.mxu0 0.0
        %5243 = vmatpush1.msra.mxu0 0.0
        %5244 = vmatprep.subr.mxu0 0.0
        %5245 = vmatpush1.msra.mxu0 0.0
        %5246 = vmatprep.subr.mxu0 0.0
        %5247 = vmatpush1.msra.mxu0 0.0
        %5248 = vmatprep.subr.mxu0 0.0
        %5249 = vmatpush1.msra.mxu0 0.0
        %5250 = vmatprep.subr.mxu0 0.0
        %5251 = vmatpush1.msra.mxu0 0.0
        %5252 = vmatprep.mubr.f32.mxu0 0.0
        %5253 = vmatmul.mubr.f32.gmra.mrb[0].mxu0 %v5139
        %v5254 = vpop.f32.mrb[0].mxu0
        %v5255 = vadd.f32 0.0, %v5254
        %v5256 = vpop.f32.mrb[0].mxu0
        %5257 = vmatprep.mubr.f32.mxu0 0.0
        %5258 = vmatmul.mubr.f32.gmra.mrb[0].mxu0 %v5140
        %v5259 = vpop.f32.mrb[0].mxu0
        %v5260 = vadd.f32 0.0, %v5259
        %v5261 = vpop.f32.mrb[0].mxu0
        %5262 = vmatprep.mubr.f32.mxu0 0.0
        %5263 = vmatmul.mubr.f32.gmra.mrb[0].mxu0 %v5141
        %v5264 = vpop.f32.mrb[0].mxu0
        %v5265 = vadd.f32 0.0, %v5264
        %v5266 = vpop.f32.mrb[0].mxu0
        %5267 = vmatprep.mubr.f32.mxu0 0.0
        %5268 = vmatmul.mubr.f32.gmra.mrb[0].mxu0 %v5142
        %v5269 = vpop.f32.mrb[0].mxu0
        %v5270 = vadd.f32 0.0, %v5269
        %v5271 = vpop.f32.mrb[0].mxu0
        %5272 = vmatprep.mubr.f32.mxu0 0.0
        %5273 = vmatmul.mubr.f32.gmra.mrb[0].mxu0 %v5143
        %v5274 = vpop.f32.mrb[0].mxu0
        %v5275 = vadd.f32 0.0, %v5274
        %v5276 = vpop.f32.mrb[0].mxu0
        %5277 = vmatprep.mubr.f32.mxu0 0.0
        %5278 = vmatmul.mubr.f32.gmra.mrb[0].mxu0 %v5144
        %v5279 = vpop.f32.mrb[0].mxu0
        %v5280 = vadd.f32 0.0, %v5279
        %v5281 = vpop.f32.mrb[0].mxu0
        %5282 = vmatprep.mubr.f32.mxu0 0.0
        %5283 = vmatmul.mubr.f32.gmra.mrb[0].mxu0 %v5145
        %v5284 = vpop.f32.mrb[0].mxu0
        %v5285 = vadd.f32 0.0, %v5284
        %v5286 = vpop.f32.mrb[0].mxu0
        %5287 = vmatprep.mubr.f32.mxu0 0.0
        %5288 = vmatmul.mubr.f32.gmra.mrb[0].mxu0 %v5146
        %v5289 = vpop.f32.mrb[0].mxu0
        %v5290 = vadd.f32 0.0, %v5289
        %v5291 = vpop.f32.mrb[0].mxu0
        %5292 = vmatprep.mubr.f32.mxu0 0.0
        %5293 = vmatmul.mubr.f32.gmra.mrb[0].mxu0 %v5147
        %v5294 = vpop.f32.mrb[0].mxu0
        %v5295 = vadd.f32 0.0, %v5294
        %v5296 = vpop.f32.mrb[0].mxu0
        %5297 = vmatprep.mubr.f32.mxu0 0.0
        %5298 = vmatmul.mubr.f32.gmra.mrb[0].mxu0 %v5148
        %v5299 = vpop.f32.mrb[0].mxu0
        %v5300 = vadd.f32 0.0, %v5299
        %v5301 = vpop.f32.mrb[0].mxu0
        %5302 = vmatprep.mubr.f32.mxu0 0.0
        %5303 = vmatmul.mubr.f32.gmra.mrb[0].mxu0 %v5149
        %v5304 = vpop.f32.mrb[0].mxu0
        %v5305 = vadd.f32 0.0, %v5304
        %v5306 = vpop.f32.mrb[0].mxu0
        %5307 = vmatprep.mubr.f32.mxu0 0.0
        %5308 = vmatmul.mubr.f32.gmra.mrb[0].mxu0 %v5150
        %v5309 = vpop.f32.mrb[0].mxu0
        %v5310 = vadd.f32 0.0, %v5309
        %v5311 = vpop.f32.mrb[0].mxu0
        %5312 = vmatprep.mubr.f32.mxu0 0.0
        %5313 = vmatmul.mubr.f32.gmra.mrb[0].mxu0 %v5151
        %v5314 = vpop.f32.mrb[0].mxu0
        %v5315 = vadd.f32 0.0, %v5314
        %v5316 = vpop.f32.mrb[0].mxu0
        %5317 = vmatprep.mubr.f32.mxu0 0.0
        %5318 = vmatmul.mubr.f32.gmra.mrb[0].mxu0 %v5152
        %v5319 = vpop.f32.mrb[0].mxu0
        %v5320 = vadd.f32 0.0, %v5319
        %v5321 = vpop.f32.mrb[0].mxu0
        %5322 = vmatprep.mubr.f32.mxu0 0.0
        %5323 = vmatmul.mubr.f32.gmra.mrb[0].mxu0 %v5153
        %v5324 = vpop.f32.mrb[0].mxu0
        %v5325 = vadd.f32 0.0, %v5324
        %v5326 = vpop.f32.mrb[0].mxu0
        %5327 = vmatprep.mubr.f32.mxu0 0.0
        %5328 = vmatmul.mubr.f32.gmra.mrb[0].mxu0 %v5154
        %v5329 = vpop.f32.mrb[0].mxu0
        %v5330 = vadd.f32 0.0, %v5329
        %v5331 = vpop.f32.mrb[0].mxu0
        %5332 = vmatprep.mubr.f32.mxu0 0.0
        %5333 = vmatmul.mubr.f32.gmra.mrb[0].mxu0 %v5155
        %v5334 = vpop.f32.mrb[0].mxu0
        %v5335 = vadd.f32 0.0, %v5334
        %v5336 = vpop.f32.mrb[0].mxu0
        %5337 = vmatprep.mubr.f32.mxu0 0.0
        %5338 = vmatmul.mubr.f32.gmra.mrb[0].mxu0 %v5156
        %v5339 = vpop.f32.mrb[0].mxu0
        %v5340 = vadd.f32 0.0, %v5339
        %v5341 = vpop.f32.mrb[0].mxu0
        %5342 = vmatprep.mubr.f32.mxu0 0.0
        %5343 = vmatmul.mubr.f32.gmra.mrb[0].mxu0 %v5157
        %v5344 = vpop.f32.mrb[0].mxu0
        %v5345 = vadd.f32 0.0, %v5344
        %v5346 = vpop.f32.mrb[0].mxu0
        %5347 = vmatprep.mubr.f32.mxu0 0.0
        %5348 = vmatmul.mubr.f32.gmra.mrb[0].mxu0 %v5158
        %v5349 = vpop.f32.mrb[0].mxu0
        %v5350 = vadd.f32 0.0, %v5349
        %v5351 = vpop.f32.mrb[0].mxu0
        %5352 = vmatprep.mubr.f32.mxu0 0.0
        %5353 = vmatmul.mubr.f32.gmra.mrb[0].mxu0 %v5159
        %v5354 = vpop.f32.mrb[0].mxu0
        %v5355 = vadd.f32 0.0, %v5354
        %v5356 = vpop.f32.mrb[0].mxu0
        %5357 = vmatprep.mubr.f32.mxu0 0.0
        %5358 = vmatmul.mubr.f32.gmra.mrb[0].mxu0 %v5160
        %v5359 = vpop.f32.mrb[0].mxu0
        %v5360 = vadd.f32 0.0, %v5359
        %v5361 = vpop.f32.mrb[0].mxu0
        %5362 = vmatprep.mubr.f32.mxu0 0.0
        %5363 = vmatmul.mubr.f32.gmra.mrb[0].mxu0 %v5161
        %v5364 = vpop.f32.mrb[0].mxu0
        %v5365 = vadd.f32 0.0, %v5364
        %v5366 = vpop.f32.mrb[0].mxu0
        %5367 = vmatprep.mubr.f32.mxu0 0.0
        %5368 = vmatmul.mubr.f32.gmra.mrb[0].mxu0 %v5162
        %v5369 = vpop.f32.mrb[0].mxu0
        %v5370 = vadd.f32 0.0, %v5369
        %v5371 = vpop.f32.mrb[0].mxu0
        %5372 = vmatprep.mubr.f32.mxu0 0.0
        %5373 = vmatmul.mubr.f32.gmra.mrb[0].mxu0 %v5163
        %v5374 = vpop.f32.mrb[0].mxu0
        %v5375 = vadd.f32 0.0, %v5374
        %v5376 = vpop.f32.mrb[0].mxu0
        %5377 = vmatprep.mubr.f32.mxu0 0.0
        %5378 = vmatmul.mubr.f32.gmra.mrb[0].mxu0 %v5164
        %v5379 = vpop.f32.mrb[0].mxu0
        %v5380 = vadd.f32 0.0, %v5379
        %v5381 = vpop.f32.mrb[0].mxu0
        %5382 = vmatprep.mubr.f32.mxu0 0.0
        %5383 = vmatmul.mubr.f32.gmra.mrb[0].mxu0 %v5165
        %v5384 = vpop.f32.mrb[0].mxu0
        %v5385 = vadd.f32 0.0, %v5384
        %v5386 = vpop.f32.mrb[0].mxu0
        %5387 = vmatprep.mubr.f32.mxu0 0.0
        %5388 = vmatmul.mubr.f32.gmra.mrb[0].mxu0 %v5166
        %v5389 = vpop.f32.mrb[0].mxu0
        %v5390 = vadd.f32 0.0, %v5389
        %v5391 = vpop.f32.mrb[0].mxu0
        %5392 = vmatprep.mubr.f32.mxu0 0.0
        %5393 = vmatmul.mubr.f32.gmra.mrb[0].mxu0 %v5167
        %v5394 = vpop.f32.mrb[0].mxu0
        %v5395 = vadd.f32 0.0, %v5394
        %v5396 = vpop.f32.mrb[0].mxu0
        %5397 = vmatprep.mubr.f32.mxu0 0.0
        %5398 = vmatmul.mubr.f32.gmra.mrb[0].mxu0 %v5168
        %v5399 = vpop.f32.mrb[0].mxu0
        %v5400 = vadd.f32 0.0, %v5399
        %v5401 = vpop.f32.mrb[0].mxu0
        %5402 = vmatprep.mubr.f32.mxu0 0.0
        %5403 = vmatmul.mubr.f32.gmra.mrb[0].mxu0 %v5169
        %v5404 = vpop.f32.mrb[0].mxu0
        %v5405 = vadd.f32 0.0, %v5404
        %v5406 = vpop.f32.mrb[0].mxu0
        %5407 = vmatprep.mubr.f32.mxu0 0.0
        %5408 = vmatmul.mubr.f32.gmra.mrb[0].mxu0 %v5170
        %v5409 = vpop.f32.mrb[0].mxu0
        %v5410 = vadd.f32 0.0, %v5409
        %v5411 = vpop.f32.mrb[0].mxu0
        %5412 = vdwg.mxu0
        %v5413 = vadd.f32 %v4589, %v5255
        %v5414 = vadd.f32 %v4590, %v5260
        %v5415 = vadd.f32 %v4591, %v5265
        %v5416 = vadd.f32 %v4592, %v5270
        %v5417 = vadd.f32 %v4593, %v5275
        %v5418 = vadd.f32 %v4594, %v5280
        %v5419 = vadd.f32 %v4595, %v5285
        %v5420 = vadd.f32 %v4596, %v5290
        %v5421 = vadd.f32 %v4597, %v5295
        %v5422 = vadd.f32 %v4598, %v5300
        %v5423 = vadd.f32 %v4599, %v5305
        %v5424 = vadd.f32 %v4600, %v5310
        %v5425 = vadd.f32 %v4601, %v5315
        %v5426 = vadd.f32 %v4602, %v5320
        %v5427 = vadd.f32 %v4603, %v5325
        %v5428 = vadd.f32 %v4604, %v5330
        %v5429 = vadd.f32 %v4605, %v5335
        %v5430 = vadd.f32 %v4606, %v5340
        %v5431 = vadd.f32 %v4607, %v5345
        %v5432 = vadd.f32 %v4608, %v5350
        %v5433 = vadd.f32 %v4609, %v5355
        %v5434 = vadd.f32 %v4610, %v5360
        %v5435 = vadd.f32 %v4611, %v5365
        %v5436 = vadd.f32 %v4612, %v5370
        %v5437 = vadd.f32 %v4613, %v5375
        %v5438 = vadd.f32 %v4614, %v5380
        %v5439 = vadd.f32 %v4615, %v5385
        %v5440 = vadd.f32 %v4616, %v5390
        %v5441 = vadd.f32 %v4617, %v5395
        %v5442 = vadd.f32 %v4618, %v5400
        %v5443 = vadd.f32 %v4619, %v5405
        %v5444 = vadd.f32 %v4620, %v5410
        %s5445 = scalar_lea.vmem [#allocation7], 1664
        %v5446 = vld [vmem:[%s5445] sm:$0xff]
        %v5447 = vld [vmem:[%s5445 + $0x8] sm:$0xff]
        %v5448 = vld [vmem:[%s5445 + $0x10] sm:$0xff]
        %v5449 = vld [vmem:[%s5445 + $0x18] sm:$0xff]
        %v5450 = vld [vmem:[%s5445 + $0x20] sm:$0xff]
        %v5451 = vld [vmem:[%s5445 + $0x28] sm:$0xff]
        %v5452 = vld [vmem:[%s5445 + $0x30] sm:$0xff]
        %v5453 = vld [vmem:[%s5445 + $0x38] sm:$0xff]
        %v5454 = vld [vmem:[%s5445 + $0x40] sm:$0xff]
        %v5455 = vld [vmem:[%s5445 + $0x48] sm:$0xff]
        %v5456 = vld [vmem:[%s5445 + $0x50] sm:$0xff]
        %v5457 = vld [vmem:[%s5445 + $0x58] sm:$0xff]
        %v5458 = vld [vmem:[%s5445 + $0x60] sm:$0xff]
        %v5459 = vld [vmem:[%s5445 + $0x68] sm:$0xff]
        %v5460 = vld [vmem:[%s5445 + $0x70] sm:$0xff]
        %v5461 = vld [vmem:[%s5445 + $0x78] sm:$0xff]
        %5462 = vmatprep.subr.mxu0 0.0
        %5463 = vmatpush1.msra.mxu0 %v5446
        %5464 = vmatprep.subr.mxu0 0.0
        %5465 = vmatpush1.msra.mxu0 %v5447
        %5466 = vmatprep.subr.mxu0 0.0
        %5467 = vmatpush1.msra.mxu0 %v5448
        %5468 = vmatprep.subr.mxu0 0.0
        %5469 = vmatpush1.msra.mxu0 %v5449
        %5470 = vmatprep.subr.mxu0 0.0
        %5471 = vmatpush1.msra.mxu0 %v5450
        %5472 = vmatprep.subr.mxu0 0.0
        %5473 = vmatpush1.msra.mxu0 %v5451
        %5474 = vmatprep.subr.mxu0 0.0
        %5475 = vmatpush1.msra.mxu0 %v5452
        %5476 = vmatprep.subr.mxu0 0.0
        %5477 = vmatpush1.msra.mxu0 %v5453
        %5478 = vmatprep.subr.mxu0 0.0
        %5479 = vmatpush1.msra.mxu0 %v5454
        %5480 = vmatprep.subr.mxu0 0.0
        %5481 = vmatpush1.msra.mxu0 %v5455
        %5482 = vmatprep.subr.mxu0 0.0
        %5483 = vmatpush1.msra.mxu0 %v5456
        %5484 = vmatprep.subr.mxu0 0.0
        %5485 = vmatpush1.msra.mxu0 %v5457
        %5486 = vmatprep.subr.mxu0 0.0
        %5487 = vmatpush1.msra.mxu0 %v5458
        %5488 = vmatprep.subr.mxu0 0.0
        %5489 = vmatpush1.msra.mxu0 %v5459
        %5490 = vmatprep.subr.mxu0 0.0
        %5491 = vmatpush1.msra.mxu0 %v5460
        %5492 = vmatprep.subr.mxu0 0.0
        %5493 = vmatpush1.msra.mxu0 %v5461
        %5494 = vmatprep.subr.mxu0 0.0
        %5495 = vmatpush1.msra.mxu0 0.0
        %5496 = vmatprep.subr.mxu0 0.0
        %5497 = vmatpush1.msra.mxu0 0.0
        %5498 = vmatprep.subr.mxu0 0.0
        %5499 = vmatpush1.msra.mxu0 0.0
        %5500 = vmatprep.subr.mxu0 0.0
        %5501 = vmatpush1.msra.mxu0 0.0
        %5502 = vmatprep.subr.mxu0 0.0
        %5503 = vmatpush1.msra.mxu0 0.0
        %5504 = vmatprep.subr.mxu0 0.0
        %5505 = vmatpush1.msra.mxu0 0.0
        %5506 = vmatprep.subr.mxu0 0.0
        %5507 = vmatpush1.msra.mxu0 0.0
        %5508 = vmatprep.subr.mxu0 0.0
        %5509 = vmatpush1.msra.mxu0 0.0
        %5510 = vmatprep.subr.mxu0 0.0
        %5511 = vmatpush1.msra.mxu0 0.0
        %5512 = vmatprep.subr.mxu0 0.0
        %5513 = vmatpush1.msra.mxu0 0.0
        %5514 = vmatprep.subr.mxu0 0.0
        %5515 = vmatpush1.msra.mxu0 0.0
        %5516 = vmatprep.subr.mxu0 0.0
        %5517 = vmatpush1.msra.mxu0 0.0
        %5518 = vmatprep.subr.mxu0 0.0
        %5519 = vmatpush1.msra.mxu0 0.0
        %5520 = vmatprep.subr.mxu0 0.0
        %5521 = vmatpush1.msra.mxu0 0.0
        %5522 = vmatprep.subr.mxu0 0.0
        %5523 = vmatpush1.msra.mxu0 0.0
        %5524 = vmatprep.subr.mxu0 0.0
        %5525 = vmatpush1.msra.mxu0 0.0
        %5526 = vmatprep.mubr.f32.mxu0 0.0
        %5527 = vmatmul.mubr.f32.gmra.mrb[0].mxu0 %v5139
        %v5528 = vpop.f32.mrb[0].mxu0
        %v5529 = vadd.f32 0.0, %v5528
        %v5530 = vpop.f32.mrb[0].mxu0
        %5531 = vmatprep.mubr.f32.mxu0 0.0
        %5532 = vmatmul.mubr.f32.gmra.mrb[0].mxu0 %v5140
        %v5533 = vpop.f32.mrb[0].mxu0
        %v5534 = vadd.f32 0.0, %v5533
        %v5535 = vpop.f32.mrb[0].mxu0
        %5536 = vmatprep.mubr.f32.mxu0 0.0
        %5537 = vmatmul.mubr.f32.gmra.mrb[0].mxu0 %v5141
        %v5538 = vpop.f32.mrb[0].mxu0
        %v5539 = vadd.f32 0.0, %v5538
        %v5540 = vpop.f32.mrb[0].mxu0
        %5541 = vmatprep.mubr.f32.mxu0 0.0
        %5542 = vmatmul.mubr.f32.gmra.mrb[0].mxu0 %v5142
        %v5543 = vpop.f32.mrb[0].mxu0
        %v5544 = vadd.f32 0.0, %v5543
        %v5545 = vpop.f32.mrb[0].mxu0
        %5546 = vmatprep.mubr.f32.mxu0 0.0
        %5547 = vmatmul.mubr.f32.gmra.mrb[0].mxu0 %v5143
        %v5548 = vpop.f32.mrb[0].mxu0
        %v5549 = vadd.f32 0.0, %v5548
        %v5550 = vpop.f32.mrb[0].mxu0
        %5551 = vmatprep.mubr.f32.mxu0 0.0
        %5552 = vmatmul.mubr.f32.gmra.mrb[0].mxu0 %v5144
        %v5553 = vpop.f32.mrb[0].mxu0
        %v5554 = vadd.f32 0.0, %v5553
        %v5555 = vpop.f32.mrb[0].mxu0
        %5556 = vmatprep.mubr.f32.mxu0 0.0
        %5557 = vmatmul.mubr.f32.gmra.mrb[0].mxu0 %v5145
        %v5558 = vpop.f32.mrb[0].mxu0
        %v5559 = vadd.f32 0.0, %v5558
        %v5560 = vpop.f32.mrb[0].mxu0
        %5561 = vmatprep.mubr.f32.mxu0 0.0
        %5562 = vmatmul.mubr.f32.gmra.mrb[0].mxu0 %v5146
        %v5563 = vpop.f32.mrb[0].mxu0
        %v5564 = vadd.f32 0.0, %v5563
        %v5565 = vpop.f32.mrb[0].mxu0
        %5566 = vmatprep.mubr.f32.mxu0 0.0
        %5567 = vmatmul.mubr.f32.gmra.mrb[0].mxu0 %v5147
        %v5568 = vpop.f32.mrb[0].mxu0
        %v5569 = vadd.f32 0.0, %v5568
        %v5570 = vpop.f32.mrb[0].mxu0
        %5571 = vmatprep.mubr.f32.mxu0 0.0
        %5572 = vmatmul.mubr.f32.gmra.mrb[0].mxu0 %v5148
        %v5573 = vpop.f32.mrb[0].mxu0
        %v5574 = vadd.f32 0.0, %v5573
        %v5575 = vpop.f32.mrb[0].mxu0
        %5576 = vmatprep.mubr.f32.mxu0 0.0
        %5577 = vmatmul.mubr.f32.gmra.mrb[0].mxu0 %v5149
        %v5578 = vpop.f32.mrb[0].mxu0
        %v5579 = vadd.f32 0.0, %v5578
        %v5580 = vpop.f32.mrb[0].mxu0
        %5581 = vmatprep.mubr.f32.mxu0 0.0
        %5582 = vmatmul.mubr.f32.gmra.mrb[0].mxu0 %v5150
        %v5583 = vpop.f32.mrb[0].mxu0
        %v5584 = vadd.f32 0.0, %v5583
        %v5585 = vpop.f32.mrb[0].mxu0
        %5586 = vmatprep.mubr.f32.mxu0 0.0
        %5587 = vmatmul.mubr.f32.gmra.mrb[0].mxu0 %v5151
        %v5588 = vpop.f32.mrb[0].mxu0
        %v5589 = vadd.f32 0.0, %v5588
        %v5590 = vpop.f32.mrb[0].mxu0
        %5591 = vmatprep.mubr.f32.mxu0 0.0
        %5592 = vmatmul.mubr.f32.gmra.mrb[0].mxu0 %v5152
        %v5593 = vpop.f32.mrb[0].mxu0
        %v5594 = vadd.f32 0.0, %v5593
        %v5595 = vpop.f32.mrb[0].mxu0
        %5596 = vmatprep.mubr.f32.mxu0 0.0
        %5597 = vmatmul.mubr.f32.gmra.mrb[0].mxu0 %v5153
        %v5598 = vpop.f32.mrb[0].mxu0
        %v5599 = vadd.f32 0.0, %v5598
        %v5600 = vpop.f32.mrb[0].mxu0
        %5601 = vmatprep.mubr.f32.mxu0 0.0
        %5602 = vmatmul.mubr.f32.gmra.mrb[0].mxu0 %v5154
        %v5603 = vpop.f32.mrb[0].mxu0
        %v5604 = vadd.f32 0.0, %v5603
        %v5605 = vpop.f32.mrb[0].mxu0
        %5606 = vmatprep.mubr.f32.mxu0 0.0
        %5607 = vmatmul.mubr.f32.gmra.mrb[0].mxu0 %v5155
        %v5608 = vpop.f32.mrb[0].mxu0
        %v5609 = vadd.f32 0.0, %v5608
        %v5610 = vpop.f32.mrb[0].mxu0
        %5611 = vmatprep.mubr.f32.mxu0 0.0
        %5612 = vmatmul.mubr.f32.gmra.mrb[0].mxu0 %v5156
        %v5613 = vpop.f32.mrb[0].mxu0
        %v5614 = vadd.f32 0.0, %v5613
        %v5615 = vpop.f32.mrb[0].mxu0
        %5616 = vmatprep.mubr.f32.mxu0 0.0
        %5617 = vmatmul.mubr.f32.gmra.mrb[0].mxu0 %v5157
        %v5618 = vpop.f32.mrb[0].mxu0
        %v5619 = vadd.f32 0.0, %v5618
        %v5620 = vpop.f32.mrb[0].mxu0
        %5621 = vmatprep.mubr.f32.mxu0 0.0
        %5622 = vmatmul.mubr.f32.gmra.mrb[0].mxu0 %v5158
        %v5623 = vpop.f32.mrb[0].mxu0
        %v5624 = vadd.f32 0.0, %v5623
        %v5625 = vpop.f32.mrb[0].mxu0
        %5626 = vmatprep.mubr.f32.mxu0 0.0
        %5627 = vmatmul.mubr.f32.gmra.mrb[0].mxu0 %v5159
        %v5628 = vpop.f32.mrb[0].mxu0
        %v5629 = vadd.f32 0.0, %v5628
        %v5630 = vpop.f32.mrb[0].mxu0
        %5631 = vmatprep.mubr.f32.mxu0 0.0
        %5632 = vmatmul.mubr.f32.gmra.mrb[0].mxu0 %v5160
        %v5633 = vpop.f32.mrb[0].mxu0
        %v5634 = vadd.f32 0.0, %v5633
        %v5635 = vpop.f32.mrb[0].mxu0
        %5636 = vmatprep.mubr.f32.mxu0 0.0
        %5637 = vmatmul.mubr.f32.gmra.mrb[0].mxu0 %v5161
        %v5638 = vpop.f32.mrb[0].mxu0
        %v5639 = vadd.f32 0.0, %v5638
        %v5640 = vpop.f32.mrb[0].mxu0
        %5641 = vmatprep.mubr.f32.mxu0 0.0
        %5642 = vmatmul.mubr.f32.gmra.mrb[0].mxu0 %v5162
        %v5643 = vpop.f32.mrb[0].mxu0
        %v5644 = vadd.f32 0.0, %v5643
        %v5645 = vpop.f32.mrb[0].mxu0
        %5646 = vmatprep.mubr.f32.mxu0 0.0
        %5647 = vmatmul.mubr.f32.gmra.mrb[0].mxu0 %v5163
        %v5648 = vpop.f32.mrb[0].mxu0
        %v5649 = vadd.f32 0.0, %v5648
        %v5650 = vpop.f32.mrb[0].mxu0
        %5651 = vmatprep.mubr.f32.mxu0 0.0
        %5652 = vmatmul.mubr.f32.gmra.mrb[0].mxu0 %v5164
        %v5653 = vpop.f32.mrb[0].mxu0
        %v5654 = vadd.f32 0.0, %v5653
        %v5655 = vpop.f32.mrb[0].mxu0
        %5656 = vmatprep.mubr.f32.mxu0 0.0
        %5657 = vmatmul.mubr.f32.gmra.mrb[0].mxu0 %v5165
        %v5658 = vpop.f32.mrb[0].mxu0
        %v5659 = vadd.f32 0.0, %v5658
        %v5660 = vpop.f32.mrb[0].mxu0
        %5661 = vmatprep.mubr.f32.mxu0 0.0
        %5662 = vmatmul.mubr.f32.gmra.mrb[0].mxu0 %v5166
        %v5663 = vpop.f32.mrb[0].mxu0
        %v5664 = vadd.f32 0.0, %v5663
        %v5665 = vpop.f32.mrb[0].mxu0
        %5666 = vmatprep.mubr.f32.mxu0 0.0
        %5667 = vmatmul.mubr.f32.gmra.mrb[0].mxu0 %v5167
        %v5668 = vpop.f32.mrb[0].mxu0
        %v5669 = vadd.f32 0.0, %v5668
        %v5670 = vpop.f32.mrb[0].mxu0
        %5671 = vmatprep.mubr.f32.mxu0 0.0
        %5672 = vmatmul.mubr.f32.gmra.mrb[0].mxu0 %v5168
        %v5673 = vpop.f32.mrb[0].mxu0
        %v5674 = vadd.f32 0.0, %v5673
        %v5675 = vpop.f32.mrb[0].mxu0
        %5676 = vmatprep.mubr.f32.mxu0 0.0
        %5677 = vmatmul.mubr.f32.gmra.mrb[0].mxu0 %v5169
        %v5678 = vpop.f32.mrb[0].mxu0
        %v5679 = vadd.f32 0.0, %v5678
        %v5680 = vpop.f32.mrb[0].mxu0
        %5681 = vmatprep.mubr.f32.mxu0 0.0
        %5682 = vmatmul.mubr.f32.gmra.mrb[0].mxu0 %v5170
        %v5683 = vpop.f32.mrb[0].mxu0
        %v5684 = vadd.f32 0.0, %v5683
        %v5685 = vpop.f32.mrb[0].mxu0
        %5686 = vdwg.mxu0
        %5687 = vmatprep.subr.mxu0 0.0
        %5688 = vmatpush1.msra.mxu0 %v5089
        %5689 = vmatprep.subr.mxu0 0.0
        %5690 = vmatpush1.msra.mxu0 %v5090
        %5691 = vmatprep.subr.mxu0 0.0
        %5692 = vmatpush1.msra.mxu0 %v5091
        %5693 = vmatprep.subr.mxu0 0.0
        %5694 = vmatpush1.msra.mxu0 %v5092
        %5695 = vmatprep.subr.mxu0 0.0
        %5696 = vmatpush1.msra.mxu0 %v5093
        %5697 = vmatprep.subr.mxu0 0.0
        %5698 = vmatpush1.msra.mxu0 %v5094
        %5699 = vmatprep.subr.mxu0 0.0
        %5700 = vmatpush1.msra.mxu0 %v5095
        %5701 = vmatprep.subr.mxu0 0.0
        %5702 = vmatpush1.msra.mxu0 %v5096
        %5703 = vmatprep.subr.mxu0 0.0
        %5704 = vmatpush1.msra.mxu0 %v5097
        %5705 = vmatprep.subr.mxu0 0.0
        %5706 = vmatpush1.msra.mxu0 %v5098
        %5707 = vmatprep.subr.mxu0 0.0
        %5708 = vmatpush1.msra.mxu0 %v5099
        %5709 = vmatprep.subr.mxu0 0.0
        %5710 = vmatpush1.msra.mxu0 %v5100
        %5711 = vmatprep.subr.mxu0 0.0
        %5712 = vmatpush1.msra.mxu0 %v5101
        %5713 = vmatprep.subr.mxu0 0.0
        %5714 = vmatpush1.msra.mxu0 %v5102
        %5715 = vmatprep.subr.mxu0 0.0
        %5716 = vmatpush1.msra.mxu0 %v5103
        %5717 = vmatprep.subr.mxu0 0.0
        %5718 = vmatpush1.msra.mxu0 %v5104
        %5719 = vmatprep.subr.mxu0 0.0
        %5720 = vmatpush1.msra.mxu0 0.0
        %5721 = vmatprep.subr.mxu0 0.0
        %5722 = vmatpush1.msra.mxu0 0.0
        %5723 = vmatprep.subr.mxu0 0.0
        %5724 = vmatpush1.msra.mxu0 0.0
        %5725 = vmatprep.subr.mxu0 0.0
        %5726 = vmatpush1.msra.mxu0 0.0
        %5727 = vmatprep.subr.mxu0 0.0
        %5728 = vmatpush1.msra.mxu0 0.0
        %5729 = vmatprep.subr.mxu0 0.0
        %5730 = vmatpush1.msra.mxu0 0.0
        %5731 = vmatprep.subr.mxu0 0.0
        %5732 = vmatpush1.msra.mxu0 0.0
        %5733 = vmatprep.subr.mxu0 0.0
        %5734 = vmatpush1.msra.mxu0 0.0
        %5735 = vmatprep.subr.mxu0 0.0
        %5736 = vmatpush1.msra.mxu0 0.0
        %5737 = vmatprep.subr.mxu0 0.0
        %5738 = vmatpush1.msra.mxu0 0.0
        %5739 = vmatprep.subr.mxu0 0.0
        %5740 = vmatpush1.msra.mxu0 0.0
        %5741 = vmatprep.subr.mxu0 0.0
        %5742 = vmatpush1.msra.mxu0 0.0
        %5743 = vmatprep.subr.mxu0 0.0
        %5744 = vmatpush1.msra.mxu0 0.0
        %5745 = vmatprep.subr.mxu0 0.0
        %5746 = vmatpush1.msra.mxu0 0.0
        %5747 = vmatprep.subr.mxu0 0.0
        %5748 = vmatpush1.msra.mxu0 0.0
        %5749 = vmatprep.subr.mxu0 0.0
        %5750 = vmatpush1.msra.mxu0 0.0
        %5751 = vmatprep.mubr.f32.mxu0 0.0
        %5752 = vmatmul.mubr.f32.gmra.mrb[0].mxu0 %v4041
        %v5753 = vpop.f32.mrb[0].mxu0
        %v5754 = vadd.f32 %v5529, %v5753
        %v5755 = vpop.f32.mrb[0].mxu0
        %5756 = vmatprep.mubr.f32.mxu0 0.0
        %5757 = vmatmul.mubr.f32.gmra.mrb[0].mxu0 %v4042
        %v5758 = vpop.f32.mrb[0].mxu0
        %v5759 = vadd.f32 %v5534, %v5758
        %v5760 = vpop.f32.mrb[0].mxu0
        %5761 = vmatprep.mubr.f32.mxu0 0.0
        %5762 = vmatmul.mubr.f32.gmra.mrb[0].mxu0 %v4043
        %v5763 = vpop.f32.mrb[0].mxu0
        %v5764 = vadd.f32 %v5539, %v5763
        %v5765 = vpop.f32.mrb[0].mxu0
        %5766 = vmatprep.mubr.f32.mxu0 0.0
        %5767 = vmatmul.mubr.f32.gmra.mrb[0].mxu0 %v4044
        %v5768 = vpop.f32.mrb[0].mxu0
        %v5769 = vadd.f32 %v5544, %v5768
        %v5770 = vpop.f32.mrb[0].mxu0
        %5771 = vmatprep.mubr.f32.mxu0 0.0
        %5772 = vmatmul.mubr.f32.gmra.mrb[0].mxu0 %v4045
        %v5773 = vpop.f32.mrb[0].mxu0
        %v5774 = vadd.f32 %v5549, %v5773
        %v5775 = vpop.f32.mrb[0].mxu0
        %5776 = vmatprep.mubr.f32.mxu0 0.0
        %5777 = vmatmul.mubr.f32.gmra.mrb[0].mxu0 %v4046
        %v5778 = vpop.f32.mrb[0].mxu0
        %v5779 = vadd.f32 %v5554, %v5778
        %v5780 = vpop.f32.mrb[0].mxu0
        %5781 = vmatprep.mubr.f32.mxu0 0.0
        %5782 = vmatmul.mubr.f32.gmra.mrb[0].mxu0 %v4047
        %v5783 = vpop.f32.mrb[0].mxu0
        %v5784 = vadd.f32 %v5559, %v5783
        %v5785 = vpop.f32.mrb[0].mxu0
        %5786 = vmatprep.mubr.f32.mxu0 0.0
        %5787 = vmatmul.mubr.f32.gmra.mrb[0].mxu0 %v4048
        %v5788 = vpop.f32.mrb[0].mxu0
        %v5789 = vadd.f32 %v5564, %v5788
        %v5790 = vpop.f32.mrb[0].mxu0
        %5791 = vmatprep.mubr.f32.mxu0 0.0
        %5792 = vmatmul.mubr.f32.gmra.mrb[0].mxu0 %v4049
        %v5793 = vpop.f32.mrb[0].mxu0
        %v5794 = vadd.f32 %v5569, %v5793
        %v5795 = vpop.f32.mrb[0].mxu0
        %5796 = vmatprep.mubr.f32.mxu0 0.0
        %5797 = vmatmul.mubr.f32.gmra.mrb[0].mxu0 %v4050
        %v5798 = vpop.f32.mrb[0].mxu0
        %v5799 = vadd.f32 %v5574, %v5798
        %v5800 = vpop.f32.mrb[0].mxu0
        %5801 = vmatprep.mubr.f32.mxu0 0.0
        %5802 = vmatmul.mubr.f32.gmra.mrb[0].mxu0 %v4051
        %v5803 = vpop.f32.mrb[0].mxu0
        %v5804 = vadd.f32 %v5579, %v5803
        %v5805 = vpop.f32.mrb[0].mxu0
        %5806 = vmatprep.mubr.f32.mxu0 0.0
        %5807 = vmatmul.mubr.f32.gmra.mrb[0].mxu0 %v4052
        %v5808 = vpop.f32.mrb[0].mxu0
        %v5809 = vadd.f32 %v5584, %v5808
        %v5810 = vpop.f32.mrb[0].mxu0
        %5811 = vmatprep.mubr.f32.mxu0 0.0
        %5812 = vmatmul.mubr.f32.gmra.mrb[0].mxu0 %v4053
        %v5813 = vpop.f32.mrb[0].mxu0
        %v5814 = vadd.f32 %v5589, %v5813
        %v5815 = vpop.f32.mrb[0].mxu0
        %5816 = vmatprep.mubr.f32.mxu0 0.0
        %5817 = vmatmul.mubr.f32.gmra.mrb[0].mxu0 %v4054
        %v5818 = vpop.f32.mrb[0].mxu0
        %v5819 = vadd.f32 %v5594, %v5818
        %v5820 = vpop.f32.mrb[0].mxu0
        %5821 = vmatprep.mubr.f32.mxu0 0.0
        %5822 = vmatmul.mubr.f32.gmra.mrb[0].mxu0 %v4055
        %v5823 = vpop.f32.mrb[0].mxu0
        %v5824 = vadd.f32 %v5599, %v5823
        %v5825 = vpop.f32.mrb[0].mxu0
        %5826 = vmatprep.mubr.f32.mxu0 0.0
        %5827 = vmatmul.mubr.f32.gmra.mrb[0].mxu0 %v4056
        %v5828 = vpop.f32.mrb[0].mxu0
        %v5829 = vadd.f32 %v5604, %v5828
        %v5830 = vpop.f32.mrb[0].mxu0
        %5831 = vmatprep.mubr.f32.mxu0 0.0
        %5832 = vmatmul.mubr.f32.gmra.mrb[0].mxu0 %v4057
        %v5833 = vpop.f32.mrb[0].mxu0
        %v5834 = vadd.f32 %v5609, %v5833
        %v5835 = vpop.f32.mrb[0].mxu0
        %5836 = vmatprep.mubr.f32.mxu0 0.0
        %5837 = vmatmul.mubr.f32.gmra.mrb[0].mxu0 %v4058
        %v5838 = vpop.f32.mrb[0].mxu0
        %v5839 = vadd.f32 %v5614, %v5838
        %v5840 = vpop.f32.mrb[0].mxu0
        %5841 = vmatprep.mubr.f32.mxu0 0.0
        %5842 = vmatmul.mubr.f32.gmra.mrb[0].mxu0 %v4059
        %v5843 = vpop.f32.mrb[0].mxu0
        %v5844 = vadd.f32 %v5619, %v5843
        %v5845 = vpop.f32.mrb[0].mxu0
        %5846 = vmatprep.mubr.f32.mxu0 0.0
        %5847 = vmatmul.mubr.f32.gmra.mrb[0].mxu0 %v4060
        %v5848 = vpop.f32.mrb[0].mxu0
        %v5849 = vadd.f32 %v5624, %v5848
        %v5850 = vpop.f32.mrb[0].mxu0
        %5851 = vmatprep.mubr.f32.mxu0 0.0
        %5852 = vmatmul.mubr.f32.gmra.mrb[0].mxu0 %v4061
        %v5853 = vpop.f32.mrb[0].mxu0
        %v5854 = vadd.f32 %v5629, %v5853
        %v5855 = vpop.f32.mrb[0].mxu0
        %5856 = vmatprep.mubr.f32.mxu0 0.0
        %5857 = vmatmul.mubr.f32.gmra.mrb[0].mxu0 %v4062
        %v5858 = vpop.f32.mrb[0].mxu0
        %v5859 = vadd.f32 %v5634, %v5858
        %v5860 = vpop.f32.mrb[0].mxu0
        %5861 = vmatprep.mubr.f32.mxu0 0.0
        %5862 = vmatmul.mubr.f32.gmra.mrb[0].mxu0 %v4063
        %v5863 = vpop.f32.mrb[0].mxu0
        %v5864 = vadd.f32 %v5639, %v5863
        %v5865 = vpop.f32.mrb[0].mxu0
        %5866 = vmatprep.mubr.f32.mxu0 0.0
        %5867 = vmatmul.mubr.f32.gmra.mrb[0].mxu0 %v4064
        %v5868 = vpop.f32.mrb[0].mxu0
        %v5869 = vadd.f32 %v5644, %v5868
        %v5870 = vpop.f32.mrb[0].mxu0
        %5871 = vmatprep.mubr.f32.mxu0 0.0
        %5872 = vmatmul.mubr.f32.gmra.mrb[0].mxu0 %v4065
        %v5873 = vpop.f32.mrb[0].mxu0
        %v5874 = vadd.f32 %v5649, %v5873
        %v5875 = vpop.f32.mrb[0].mxu0
        %5876 = vmatprep.mubr.f32.mxu0 0.0
        %5877 = vmatmul.mubr.f32.gmra.mrb[0].mxu0 %v4066
        %v5878 = vpop.f32.mrb[0].mxu0
        %v5879 = vadd.f32 %v5654, %v5878
        %v5880 = vpop.f32.mrb[0].mxu0
        %5881 = vmatprep.mubr.f32.mxu0 0.0
        %5882 = vmatmul.mubr.f32.gmra.mrb[0].mxu0 %v4067
        %v5883 = vpop.f32.mrb[0].mxu0
        %v5884 = vadd.f32 %v5659, %v5883
        %v5885 = vpop.f32.mrb[0].mxu0
        %5886 = vmatprep.mubr.f32.mxu0 0.0
        %5887 = vmatmul.mubr.f32.gmra.mrb[0].mxu0 %v4068
        %v5888 = vpop.f32.mrb[0].mxu0
        %v5889 = vadd.f32 %v5664, %v5888
        %v5890 = vpop.f32.mrb[0].mxu0
        %5891 = vmatprep.mubr.f32.mxu0 0.0
        %5892 = vmatmul.mubr.f32.gmra.mrb[0].mxu0 %v4069
        %v5893 = vpop.f32.mrb[0].mxu0
        %v5894 = vadd.f32 %v5669, %v5893
        %v5895 = vpop.f32.mrb[0].mxu0
        %5896 = vmatprep.mubr.f32.mxu0 0.0
        %5897 = vmatmul.mubr.f32.gmra.mrb[0].mxu0 %v4070
        %v5898 = vpop.f32.mrb[0].mxu0
        %v5899 = vadd.f32 %v5674, %v5898
        %v5900 = vpop.f32.mrb[0].mxu0
        %5901 = vmatprep.mubr.f32.mxu0 0.0
        %5902 = vmatmul.mubr.f32.gmra.mrb[0].mxu0 %v4071
        %v5903 = vpop.f32.mrb[0].mxu0
        %v5904 = vadd.f32 %v5679, %v5903
        %v5905 = vpop.f32.mrb[0].mxu0
        %5906 = vmatprep.mubr.f32.mxu0 0.0
        %5907 = vmatmul.mubr.f32.gmra.mrb[0].mxu0 %v4072
        %v5908 = vpop.f32.mrb[0].mxu0
        %v5909 = vadd.f32 %v5684, %v5908
        %v5910 = vpop.f32.mrb[0].mxu0
        %5911 = vdwg.mxu0
        %s5912 = sadd.s32 %s1786, 39
        %s5913 = scalar_lea.vmem [#allocation2], %s5912
        %v5914 = vld [vmem:[%s5913] sm:$0xff]
        %v5915 = vld [vmem:[%s5913 + $0x8] sm:$0xff]
        %v5916 = vld [vmem:[%s5913 + $0x10] sm:$0xff]
        %v5917 = vld [vmem:[%s5913 + $0x18] sm:$0xff]
        %v5918 = vld [vmem:[%s5913 + $0x20] sm:$0xff]
        %v5919 = vld [vmem:[%s5913 + $0x28] sm:$0xff]
        %v5920 = vld [vmem:[%s5913 + $0x30] sm:$0xff]
        %v5921 = vld [vmem:[%s5913 + $0x38] sm:$0xff]
        %v5922 = vld [vmem:[%s5913 + $0x40] sm:$0xff]
        %v5923 = vld [vmem:[%s5913 + $0x48] sm:$0xff]
        %v5924 = vld [vmem:[%s5913 + $0x50] sm:$0xff]
        %v5925 = vld [vmem:[%s5913 + $0x58] sm:$0xff]
        %v5926 = vld [vmem:[%s5913 + $0x60] sm:$0xff]
        %v5927 = vld [vmem:[%s5913 + $0x68] sm:$0xff]
        %v5928 = vld [vmem:[%s5913 + $0x70] sm:$0xff]
        %v5929 = vld [vmem:[%s5913 + $0x78] sm:$0xff]
        %v5930 = vld [vmem:[%s5913 + $0x80] sm:$0xff]
        %v5931 = vld [vmem:[%s5913 + $0x88] sm:$0xff]
        %v5932 = vld [vmem:[%s5913 + $0x90] sm:$0xff]
        %v5933 = vld [vmem:[%s5913 + $0x98] sm:$0xff]
        %v5934 = vld [vmem:[%s5913 + $0xa0] sm:$0xff]
        %v5935 = vld [vmem:[%s5913 + $0xa8] sm:$0xff]
        %v5936 = vld [vmem:[%s5913 + $0xb0] sm:$0xff]
        %v5937 = vld [vmem:[%s5913 + $0xb8] sm:$0xff]
        %v5938 = vld [vmem:[%s5913 + $0xc0] sm:$0xff]
        %v5939 = vld [vmem:[%s5913 + $0xc8] sm:$0xff]
        %v5940 = vld [vmem:[%s5913 + $0xd0] sm:$0xff]
        %v5941 = vld [vmem:[%s5913 + $0xd8] sm:$0xff]
        %v5942 = vld [vmem:[%s5913 + $0xe0] sm:$0xff]
        %v5943 = vld [vmem:[%s5913 + $0xe8] sm:$0xff]
        %v5944 = vld [vmem:[%s5913 + $0xf0] sm:$0xff]
        %v5945 = vld [vmem:[%s5913 + $0xf8] sm:$0xff]
        %v5946 = vsel %vm2485, %v5914, 0.0
        %v5947 = vsel %vm2486, %v5915, 0.0
        %v5948 = vsel %vm2487, %v5916, 0.0
        %v5949 = vsel %vm2488, %v5917, 0.0
        %v5950 = vsel %vm2489, %v5918, 0.0
        %v5951 = vsel %vm2490, %v5919, 0.0
        %v5952 = vsel %vm2491, %v5920, 0.0
        %v5953 = vsel %vm2492, %v5921, 0.0
        %v5954 = vsel %vm2493, %v5922, 0.0
        %v5955 = vsel %vm2494, %v5923, 0.0
        %v5956 = vsel %vm2495, %v5924, 0.0
        %v5957 = vsel %vm2496, %v5925, 0.0
        %v5958 = vsel %vm2497, %v5926, 0.0
        %v5959 = vsel %vm2498, %v5927, 0.0
        %v5960 = vsel %vm2499, %v5928, 0.0
        %v5961 = vsel %vm2500, %v5929, 0.0
        %v5962 = vsel %vm2501, %v5930, 0.0
        %v5963 = vsel %vm2502, %v5931, 0.0
        %v5964 = vsel %vm2503, %v5932, 0.0
        %v5965 = vsel %vm2504, %v5933, 0.0
        %v5966 = vsel %vm2505, %v5934, 0.0
        %v5967 = vsel %vm2506, %v5935, 0.0
        %v5968 = vsel %vm2507, %v5936, 0.0
        %v5969 = vsel %vm2508, %v5937, 0.0
        %v5970 = vsel %vm2509, %v5938, 0.0
        %v5971 = vsel %vm2510, %v5939, 0.0
        %v5972 = vsel %vm2511, %v5940, 0.0
        %v5973 = vsel %vm2512, %v5941, 0.0
        %v5974 = vsel %vm2513, %v5942, 0.0
        %v5975 = vsel %vm2514, %v5943, 0.0
        %v5976 = vsel %vm2515, %v5944, 0.0
        %v5977 = vsel %vm2516, %v5945, 0.0
        %s5978 = scalar_lea.vmem [#allocation7], 1280
        %v5979 = vld [vmem:[%s5978] sm:$0xff]
        %v5980 = vld [vmem:[%s5978 + $0x8] sm:$0xff]
        %v5981 = vld [vmem:[%s5978 + $0x10] sm:$0xff]
        %v5982 = vld [vmem:[%s5978 + $0x18] sm:$0xff]
        %v5983 = vld [vmem:[%s5978 + $0x20] sm:$0xff]
        %v5984 = vld [vmem:[%s5978 + $0x28] sm:$0xff]
        %v5985 = vld [vmem:[%s5978 + $0x30] sm:$0xff]
        %v5986 = vld [vmem:[%s5978 + $0x38] sm:$0xff]
        %v5987 = vld [vmem:[%s5978 + $0x40] sm:$0xff]
        %v5988 = vld [vmem:[%s5978 + $0x48] sm:$0xff]
        %v5989 = vld [vmem:[%s5978 + $0x50] sm:$0xff]
        %v5990 = vld [vmem:[%s5978 + $0x58] sm:$0xff]
        %v5991 = vld [vmem:[%s5978 + $0x60] sm:$0xff]
        %v5992 = vld [vmem:[%s5978 + $0x68] sm:$0xff]
        %v5993 = vld [vmem:[%s5978 + $0x70] sm:$0xff]
        %v5994 = vld [vmem:[%s5978 + $0x78] sm:$0xff]
        %5995 = vmatprep.subr.mxu0 0.0
        %5996 = vmatpush1.msra.mxu0 %v5979
        %5997 = vmatprep.subr.mxu0 0.0
        %5998 = vmatpush1.msra.mxu0 %v5980
        %5999 = vmatprep.subr.mxu0 0.0
        %6000 = vmatpush1.msra.mxu0 %v5981
        %6001 = vmatprep.subr.mxu0 0.0
        %6002 = vmatpush1.msra.mxu0 %v5982
        %6003 = vmatprep.subr.mxu0 0.0
        %6004 = vmatpush1.msra.mxu0 %v5983
        %6005 = vmatprep.subr.mxu0 0.0
        %6006 = vmatpush1.msra.mxu0 %v5984
        %6007 = vmatprep.subr.mxu0 0.0
        %6008 = vmatpush1.msra.mxu0 %v5985
        %6009 = vmatprep.subr.mxu0 0.0
        %6010 = vmatpush1.msra.mxu0 %v5986
        %6011 = vmatprep.subr.mxu0 0.0
        %6012 = vmatpush1.msra.mxu0 %v5987
        %6013 = vmatprep.subr.mxu0 0.0
        %6014 = vmatpush1.msra.mxu0 %v5988
        %6015 = vmatprep.subr.mxu0 0.0
        %6016 = vmatpush1.msra.mxu0 %v5989
        %6017 = vmatprep.subr.mxu0 0.0
        %6018 = vmatpush1.msra.mxu0 %v5990
        %6019 = vmatprep.subr.mxu0 0.0
        %6020 = vmatpush1.msra.mxu0 %v5991
        %6021 = vmatprep.subr.mxu0 0.0
        %6022 = vmatpush1.msra.mxu0 %v5992
        %6023 = vmatprep.subr.mxu0 0.0
        %6024 = vmatpush1.msra.mxu0 %v5993
        %6025 = vmatprep.subr.mxu0 0.0
        %6026 = vmatpush1.msra.mxu0 %v5994
        %6027 = vmatprep.subr.mxu0 0.0
        %6028 = vmatpush1.msra.mxu0 0.0
        %6029 = vmatprep.subr.mxu0 0.0
        %6030 = vmatpush1.msra.mxu0 0.0
        %6031 = vmatprep.subr.mxu0 0.0
        %6032 = vmatpush1.msra.mxu0 0.0
        %6033 = vmatprep.subr.mxu0 0.0
        %6034 = vmatpush1.msra.mxu0 0.0
        %6035 = vmatprep.subr.mxu0 0.0
        %6036 = vmatpush1.msra.mxu0 0.0
        %6037 = vmatprep.subr.mxu0 0.0
        %6038 = vmatpush1.msra.mxu0 0.0
        %6039 = vmatprep.subr.mxu0 0.0
        %6040 = vmatpush1.msra.mxu0 0.0
        %6041 = vmatprep.subr.mxu0 0.0
        %6042 = vmatpush1.msra.mxu0 0.0
        %6043 = vmatprep.subr.mxu0 0.0
        %6044 = vmatpush1.msra.mxu0 0.0
        %6045 = vmatprep.subr.mxu0 0.0
        %6046 = vmatpush1.msra.mxu0 0.0
        %6047 = vmatprep.subr.mxu0 0.0
        %6048 = vmatpush1.msra.mxu0 0.0
        %6049 = vmatprep.subr.mxu0 0.0
        %6050 = vmatpush1.msra.mxu0 0.0
        %6051 = vmatprep.subr.mxu0 0.0
        %6052 = vmatpush1.msra.mxu0 0.0
        %6053 = vmatprep.subr.mxu0 0.0
        %6054 = vmatpush1.msra.mxu0 0.0
        %6055 = vmatprep.subr.mxu0 0.0
        %6056 = vmatpush1.msra.mxu0 0.0
        %6057 = vmatprep.subr.mxu0 0.0
        %6058 = vmatpush1.msra.mxu0 0.0
        %6059 = vmatprep.mubr.f32.mxu0 0.0
        %6060 = vmatmul.mubr.f32.gmra.mrb[0].mxu0 %v5946
        %v6061 = vpop.f32.mrb[0].mxu0
        %v6062 = vadd.f32 0.0, %v6061
        %v6063 = vpop.f32.mrb[0].mxu0
        %6064 = vmatprep.mubr.f32.mxu0 0.0
        %6065 = vmatmul.mubr.f32.gmra.mrb[0].mxu0 %v5947
        %v6066 = vpop.f32.mrb[0].mxu0
        %v6067 = vadd.f32 0.0, %v6066
        %v6068 = vpop.f32.mrb[0].mxu0
        %6069 = vmatprep.mubr.f32.mxu0 0.0
        %6070 = vmatmul.mubr.f32.gmra.mrb[0].mxu0 %v5948
        %v6071 = vpop.f32.mrb[0].mxu0
        %v6072 = vadd.f32 0.0, %v6071
        %v6073 = vpop.f32.mrb[0].mxu0
        %6074 = vmatprep.mubr.f32.mxu0 0.0
        %6075 = vmatmul.mubr.f32.gmra.mrb[0].mxu0 %v5949
        %v6076 = vpop.f32.mrb[0].mxu0
        %v6077 = vadd.f32 0.0, %v6076
        %v6078 = vpop.f32.mrb[0].mxu0
        %6079 = vmatprep.mubr.f32.mxu0 0.0
        %6080 = vmatmul.mubr.f32.gmra.mrb[0].mxu0 %v5950
        %v6081 = vpop.f32.mrb[0].mxu0
        %v6082 = vadd.f32 0.0, %v6081
        %v6083 = vpop.f32.mrb[0].mxu0
        %6084 = vmatprep.mubr.f32.mxu0 0.0
        %6085 = vmatmul.mubr.f32.gmra.mrb[0].mxu0 %v5951
        %v6086 = vpop.f32.mrb[0].mxu0
        %v6087 = vadd.f32 0.0, %v6086
        %v6088 = vpop.f32.mrb[0].mxu0
        %6089 = vmatprep.mubr.f32.mxu0 0.0
        %6090 = vmatmul.mubr.f32.gmra.mrb[0].mxu0 %v5952
        %v6091 = vpop.f32.mrb[0].mxu0
        %v6092 = vadd.f32 0.0, %v6091
        %v6093 = vpop.f32.mrb[0].mxu0
        %6094 = vmatprep.mubr.f32.mxu0 0.0
        %6095 = vmatmul.mubr.f32.gmra.mrb[0].mxu0 %v5953
        %v6096 = vpop.f32.mrb[0].mxu0
        %v6097 = vadd.f32 0.0, %v6096
        %v6098 = vpop.f32.mrb[0].mxu0
        %6099 = vmatprep.mubr.f32.mxu0 0.0
        %6100 = vmatmul.mubr.f32.gmra.mrb[0].mxu0 %v5954
        %v6101 = vpop.f32.mrb[0].mxu0
        %v6102 = vadd.f32 0.0, %v6101
        %v6103 = vpop.f32.mrb[0].mxu0
        %6104 = vmatprep.mubr.f32.mxu0 0.0
        %6105 = vmatmul.mubr.f32.gmra.mrb[0].mxu0 %v5955
        %v6106 = vpop.f32.mrb[0].mxu0
        %v6107 = vadd.f32 0.0, %v6106
        %v6108 = vpop.f32.mrb[0].mxu0
        %6109 = vmatprep.mubr.f32.mxu0 0.0
        %6110 = vmatmul.mubr.f32.gmra.mrb[0].mxu0 %v5956
        %v6111 = vpop.f32.mrb[0].mxu0
        %v6112 = vadd.f32 0.0, %v6111
        %v6113 = vpop.f32.mrb[0].mxu0
        %6114 = vmatprep.mubr.f32.mxu0 0.0
        %6115 = vmatmul.mubr.f32.gmra.mrb[0].mxu0 %v5957
        %v6116 = vpop.f32.mrb[0].mxu0
        %v6117 = vadd.f32 0.0, %v6116
        %v6118 = vpop.f32.mrb[0].mxu0
        %6119 = vmatprep.mubr.f32.mxu0 0.0
        %6120 = vmatmul.mubr.f32.gmra.mrb[0].mxu0 %v5958
        %v6121 = vpop.f32.mrb[0].mxu0
        %v6122 = vadd.f32 0.0, %v6121
        %v6123 = vpop.f32.mrb[0].mxu0
        %6124 = vmatprep.mubr.f32.mxu0 0.0
        %6125 = vmatmul.mubr.f32.gmra.mrb[0].mxu0 %v5959
        %v6126 = vpop.f32.mrb[0].mxu0
        %v6127 = vadd.f32 0.0, %v6126
        %v6128 = vpop.f32.mrb[0].mxu0
        %6129 = vmatprep.mubr.f32.mxu0 0.0
        %6130 = vmatmul.mubr.f32.gmra.mrb[0].mxu0 %v5960
        %v6131 = vpop.f32.mrb[0].mxu0
        %v6132 = vadd.f32 0.0, %v6131
        %v6133 = vpop.f32.mrb[0].mxu0
        %6134 = vmatprep.mubr.f32.mxu0 0.0
        %6135 = vmatmul.mubr.f32.gmra.mrb[0].mxu0 %v5961
        %v6136 = vpop.f32.mrb[0].mxu0
        %v6137 = vadd.f32 0.0, %v6136
        %v6138 = vpop.f32.mrb[0].mxu0
        %6139 = vmatprep.mubr.f32.mxu0 0.0
        %6140 = vmatmul.mubr.f32.gmra.mrb[0].mxu0 %v5962
        %v6141 = vpop.f32.mrb[0].mxu0
        %v6142 = vadd.f32 0.0, %v6141
        %v6143 = vpop.f32.mrb[0].mxu0
        %6144 = vmatprep.mubr.f32.mxu0 0.0
        %6145 = vmatmul.mubr.f32.gmra.mrb[0].mxu0 %v5963
        %v6146 = vpop.f32.mrb[0].mxu0
        %v6147 = vadd.f32 0.0, %v6146
        %v6148 = vpop.f32.mrb[0].mxu0
        %6149 = vmatprep.mubr.f32.mxu0 0.0
        %6150 = vmatmul.mubr.f32.gmra.mrb[0].mxu0 %v5964
        %v6151 = vpop.f32.mrb[0].mxu0
        %v6152 = vadd.f32 0.0, %v6151
        %v6153 = vpop.f32.mrb[0].mxu0
        %6154 = vmatprep.mubr.f32.mxu0 0.0
        %6155 = vmatmul.mubr.f32.gmra.mrb[0].mxu0 %v5965
        %v6156 = vpop.f32.mrb[0].mxu0
        %v6157 = vadd.f32 0.0, %v6156
        %v6158 = vpop.f32.mrb[0].mxu0
        %6159 = vmatprep.mubr.f32.mxu0 0.0
        %6160 = vmatmul.mubr.f32.gmra.mrb[0].mxu0 %v5966
        %v6161 = vpop.f32.mrb[0].mxu0
        %v6162 = vadd.f32 0.0, %v6161
        %v6163 = vpop.f32.mrb[0].mxu0
        %6164 = vmatprep.mubr.f32.mxu0 0.0
        %6165 = vmatmul.mubr.f32.gmra.mrb[0].mxu0 %v5967
        %v6166 = vpop.f32.mrb[0].mxu0
        %v6167 = vadd.f32 0.0, %v6166
        %v6168 = vpop.f32.mrb[0].mxu0
        %6169 = vmatprep.mubr.f32.mxu0 0.0
        %6170 = vmatmul.mubr.f32.gmra.mrb[0].mxu0 %v5968
        %v6171 = vpop.f32.mrb[0].mxu0
        %v6172 = vadd.f32 0.0, %v6171
        %v6173 = vpop.f32.mrb[0].mxu0
        %6174 = vmatprep.mubr.f32.mxu0 0.0
        %6175 = vmatmul.mubr.f32.gmra.mrb[0].mxu0 %v5969
        %v6176 = vpop.f32.mrb[0].mxu0
        %v6177 = vadd.f32 0.0, %v6176
        %v6178 = vpop.f32.mrb[0].mxu0
        %6179 = vmatprep.mubr.f32.mxu0 0.0
        %6180 = vmatmul.mubr.f32.gmra.mrb[0].mxu0 %v5970
        %v6181 = vpop.f32.mrb[0].mxu0
        %v6182 = vadd.f32 0.0, %v6181
        %v6183 = vpop.f32.mrb[0].mxu0
        %6184 = vmatprep.mubr.f32.mxu0 0.0
        %6185 = vmatmul.mubr.f32.gmra.mrb[0].mxu0 %v5971
        %v6186 = vpop.f32.mrb[0].mxu0
        %v6187 = vadd.f32 0.0, %v6186
        %v6188 = vpop.f32.mrb[0].mxu0
        %6189 = vmatprep.mubr.f32.mxu0 0.0
        %6190 = vmatmul.mubr.f32.gmra.mrb[0].mxu0 %v5972
        %v6191 = vpop.f32.mrb[0].mxu0
        %v6192 = vadd.f32 0.0, %v6191
        %v6193 = vpop.f32.mrb[0].mxu0
        %6194 = vmatprep.mubr.f32.mxu0 0.0
        %6195 = vmatmul.mubr.f32.gmra.mrb[0].mxu0 %v5973
        %v6196 = vpop.f32.mrb[0].mxu0
        %v6197 = vadd.f32 0.0, %v6196
        %v6198 = vpop.f32.mrb[0].mxu0
        %6199 = vmatprep.mubr.f32.mxu0 0.0
        %6200 = vmatmul.mubr.f32.gmra.mrb[0].mxu0 %v5974
        %v6201 = vpop.f32.mrb[0].mxu0
        %v6202 = vadd.f32 0.0, %v6201
        %v6203 = vpop.f32.mrb[0].mxu0
        %6204 = vmatprep.mubr.f32.mxu0 0.0
        %6205 = vmatmul.mubr.f32.gmra.mrb[0].mxu0 %v5975
        %v6206 = vpop.f32.mrb[0].mxu0
        %v6207 = vadd.f32 0.0, %v6206
        %v6208 = vpop.f32.mrb[0].mxu0
        %6209 = vmatprep.mubr.f32.mxu0 0.0
        %6210 = vmatmul.mubr.f32.gmra.mrb[0].mxu0 %v5976
        %v6211 = vpop.f32.mrb[0].mxu0
        %v6212 = vadd.f32 0.0, %v6211
        %v6213 = vpop.f32.mrb[0].mxu0
        %6214 = vmatprep.mubr.f32.mxu0 0.0
        %6215 = vmatmul.mubr.f32.gmra.mrb[0].mxu0 %v5977
        %v6216 = vpop.f32.mrb[0].mxu0
        %v6217 = vadd.f32 0.0, %v6216
        %v6218 = vpop.f32.mrb[0].mxu0
        %6219 = vdwg.mxu0
        %v6220 = vadd.f32 %v4930, %v6062
        %v6221 = vadd.f32 %v4935, %v6067
        %v6222 = vadd.f32 %v4940, %v6072
        %v6223 = vadd.f32 %v4945, %v6077
        %v6224 = vadd.f32 %v4950, %v6082
        %v6225 = vadd.f32 %v4955, %v6087
        %v6226 = vadd.f32 %v4960, %v6092
        %v6227 = vadd.f32 %v4965, %v6097
        %v6228 = vadd.f32 %v4970, %v6102
        %v6229 = vadd.f32 %v4975, %v6107
        %v6230 = vadd.f32 %v4980, %v6112
        %v6231 = vadd.f32 %v4985, %v6117
        %v6232 = vadd.f32 %v4990, %v6122
        %v6233 = vadd.f32 %v4995, %v6127
        %v6234 = vadd.f32 %v5000, %v6132
        %v6235 = vadd.f32 %v5005, %v6137
        %v6236 = vadd.f32 %v5010, %v6142
        %v6237 = vadd.f32 %v5015, %v6147
        %v6238 = vadd.f32 %v5020, %v6152
        %v6239 = vadd.f32 %v5025, %v6157
        %v6240 = vadd.f32 %v5030, %v6162
        %v6241 = vadd.f32 %v5035, %v6167
        %v6242 = vadd.f32 %v5040, %v6172
        %v6243 = vadd.f32 %v5045, %v6177
        %v6244 = vadd.f32 %v5050, %v6182
        %v6245 = vadd.f32 %v5055, %v6187
        %v6246 = vadd.f32 %v5060, %v6192
        %v6247 = vadd.f32 %v5065, %v6197
        %v6248 = vadd.f32 %v5070, %v6202
        %v6249 = vadd.f32 %v5075, %v6207
        %v6250 = vadd.f32 %v5080, %v6212
        %v6251 = vadd.f32 %v5085, %v6217
        %s6252 = sadd.s32 %s1786, 40
        %s6253 = scalar_lea.vmem [#allocation2], %s6252
        %v6254 = vld [vmem:[%s6253] sm:$0xff]
        %v6255 = vld [vmem:[%s6253 + $0x8] sm:$0xff]
        %v6256 = vld [vmem:[%s6253 + $0x10] sm:$0xff]
        %v6257 = vld [vmem:[%s6253 + $0x18] sm:$0xff]
        %v6258 = vld [vmem:[%s6253 + $0x20] sm:$0xff]
        %v6259 = vld [vmem:[%s6253 + $0x28] sm:$0xff]
        %v6260 = vld [vmem:[%s6253 + $0x30] sm:$0xff]
        %v6261 = vld [vmem:[%s6253 + $0x38] sm:$0xff]
        %v6262 = vld [vmem:[%s6253 + $0x40] sm:$0xff]
        %v6263 = vld [vmem:[%s6253 + $0x48] sm:$0xff]
        %v6264 = vld [vmem:[%s6253 + $0x50] sm:$0xff]
        %v6265 = vld [vmem:[%s6253 + $0x58] sm:$0xff]
        %v6266 = vld [vmem:[%s6253 + $0x60] sm:$0xff]
        %v6267 = vld [vmem:[%s6253 + $0x68] sm:$0xff]
        %v6268 = vld [vmem:[%s6253 + $0x70] sm:$0xff]
        %v6269 = vld [vmem:[%s6253 + $0x78] sm:$0xff]
        %v6270 = vld [vmem:[%s6253 + $0x80] sm:$0xff]
        %v6271 = vld [vmem:[%s6253 + $0x88] sm:$0xff]
        %v6272 = vld [vmem:[%s6253 + $0x90] sm:$0xff]
        %v6273 = vld [vmem:[%s6253 + $0x98] sm:$0xff]
        %v6274 = vld [vmem:[%s6253 + $0xa0] sm:$0xff]
        %v6275 = vld [vmem:[%s6253 + $0xa8] sm:$0xff]
        %v6276 = vld [vmem:[%s6253 + $0xb0] sm:$0xff]
        %v6277 = vld [vmem:[%s6253 + $0xb8] sm:$0xff]
        %v6278 = vld [vmem:[%s6253 + $0xc0] sm:$0xff]
        %v6279 = vld [vmem:[%s6253 + $0xc8] sm:$0xff]
        %v6280 = vld [vmem:[%s6253 + $0xd0] sm:$0xff]
        %v6281 = vld [vmem:[%s6253 + $0xd8] sm:$0xff]
        %v6282 = vld [vmem:[%s6253 + $0xe0] sm:$0xff]
        %v6283 = vld [vmem:[%s6253 + $0xe8] sm:$0xff]
        %v6284 = vld [vmem:[%s6253 + $0xf0] sm:$0xff]
        %v6285 = vld [vmem:[%s6253 + $0xf8] sm:$0xff]
        %s6286 = scalar_lea.vmem [#allocation7], 1408
        %v6287 = vld [vmem:[%s6286] sm:$0xff]
        %v6288 = vld [vmem:[%s6286 + $0x8] sm:$0xff]
        %v6289 = vld [vmem:[%s6286 + $0x10] sm:$0xff]
        %v6290 = vld [vmem:[%s6286 + $0x18] sm:$0xff]
        %v6291 = vld [vmem:[%s6286 + $0x20] sm:$0xff]
        %v6292 = vld [vmem:[%s6286 + $0x28] sm:$0xff]
        %v6293 = vld [vmem:[%s6286 + $0x30] sm:$0xff]
        %v6294 = vld [vmem:[%s6286 + $0x38] sm:$0xff]
        %v6295 = vld [vmem:[%s6286 + $0x40] sm:$0xff]
        %v6296 = vld [vmem:[%s6286 + $0x48] sm:$0xff]
        %v6297 = vld [vmem:[%s6286 + $0x50] sm:$0xff]
        %v6298 = vld [vmem:[%s6286 + $0x58] sm:$0xff]
        %v6299 = vld [vmem:[%s6286 + $0x60] sm:$0xff]
        %v6300 = vld [vmem:[%s6286 + $0x68] sm:$0xff]
        %v6301 = vld [vmem:[%s6286 + $0x70] sm:$0xff]
        %v6302 = vld [vmem:[%s6286 + $0x78] sm:$0xff]
        %6303 = vmatprep.subr.mxu0 0.0
        %6304 = vmatpush1.msra.mxu0 %v6287
        %6305 = vmatprep.subr.mxu0 0.0
        %6306 = vmatpush1.msra.mxu0 %v6288
        %6307 = vmatprep.subr.mxu0 0.0
        %6308 = vmatpush1.msra.mxu0 %v6289
        %6309 = vmatprep.subr.mxu0 0.0
        %6310 = vmatpush1.msra.mxu0 %v6290
        %6311 = vmatprep.subr.mxu0 0.0
        %6312 = vmatpush1.msra.mxu0 %v6291
        %6313 = vmatprep.subr.mxu0 0.0
        %6314 = vmatpush1.msra.mxu0 %v6292
        %6315 = vmatprep.subr.mxu0 0.0
        %6316 = vmatpush1.msra.mxu0 %v6293
        %6317 = vmatprep.subr.mxu0 0.0
        %6318 = vmatpush1.msra.mxu0 %v6294
        %6319 = vmatprep.subr.mxu0 0.0
        %6320 = vmatpush1.msra.mxu0 %v6295
        %6321 = vmatprep.subr.mxu0 0.0
        %6322 = vmatpush1.msra.mxu0 %v6296
        %6323 = vmatprep.subr.mxu0 0.0
        %6324 = vmatpush1.msra.mxu0 %v6297
        %6325 = vmatprep.subr.mxu0 0.0
        %6326 = vmatpush1.msra.mxu0 %v6298
        %6327 = vmatprep.subr.mxu0 0.0
        %6328 = vmatpush1.msra.mxu0 %v6299
        %6329 = vmatprep.subr.mxu0 0.0
        %6330 = vmatpush1.msra.mxu0 %v6300
        %6331 = vmatprep.subr.mxu0 0.0
        %6332 = vmatpush1.msra.mxu0 %v6301
        %6333 = vmatprep.subr.mxu0 0.0
        %6334 = vmatpush1.msra.mxu0 %v6302
        %6335 = vmatprep.subr.mxu0 0.0
        %6336 = vmatpush1.msra.mxu0 0.0
        %6337 = vmatprep.subr.mxu0 0.0
        %6338 = vmatpush1.msra.mxu0 0.0
        %6339 = vmatprep.subr.mxu0 0.0
        %6340 = vmatpush1.msra.mxu0 0.0
        %6341 = vmatprep.subr.mxu0 0.0
        %6342 = vmatpush1.msra.mxu0 0.0
        %6343 = vmatprep.subr.mxu0 0.0
        %6344 = vmatpush1.msra.mxu0 0.0
        %6345 = vmatprep.subr.mxu0 0.0
        %6346 = vmatpush1.msra.mxu0 0.0
        %6347 = vmatprep.subr.mxu0 0.0
        %6348 = vmatpush1.msra.mxu0 0.0
        %6349 = vmatprep.subr.mxu0 0.0
        %6350 = vmatpush1.msra.mxu0 0.0
        %6351 = vmatprep.subr.mxu0 0.0
        %6352 = vmatpush1.msra.mxu0 0.0
        %6353 = vmatprep.subr.mxu0 0.0
        %6354 = vmatpush1.msra.mxu0 0.0
        %6355 = vmatprep.subr.mxu0 0.0
        %6356 = vmatpush1.msra.mxu0 0.0
        %6357 = vmatprep.subr.mxu0 0.0
        %6358 = vmatpush1.msra.mxu0 0.0
        %6359 = vmatprep.subr.mxu0 0.0
        %6360 = vmatpush1.msra.mxu0 0.0
        %6361 = vmatprep.subr.mxu0 0.0
        %6362 = vmatpush1.msra.mxu0 0.0
        %6363 = vmatprep.subr.mxu0 0.0
        %6364 = vmatpush1.msra.mxu0 0.0
        %6365 = vmatprep.subr.mxu0 0.0
        %6366 = vmatpush1.msra.mxu0 0.0
        %6367 = vmatprep.mubr.f32.mxu0 0.0
        %6368 = vmatmul.mubr.f32.gmra.mrb[0].mxu0 %v6254
        %v6369 = vpop.f32.mrb[0].mxu0
        %v6370 = vadd.f32 0.0, %v6369
        %v6371 = vpop.f32.mrb[0].mxu0
        %6372 = vmatprep.mubr.f32.mxu0 0.0
        %6373 = vmatmul.mubr.f32.gmra.mrb[0].mxu0 %v6255
        %v6374 = vpop.f32.mrb[0].mxu0
        %v6375 = vadd.f32 0.0, %v6374
        %v6376 = vpop.f32.mrb[0].mxu0
        %6377 = vmatprep.mubr.f32.mxu0 0.0
        %6378 = vmatmul.mubr.f32.gmra.mrb[0].mxu0 %v6256
        %v6379 = vpop.f32.mrb[0].mxu0
        %v6380 = vadd.f32 0.0, %v6379
        %v6381 = vpop.f32.mrb[0].mxu0
        %6382 = vmatprep.mubr.f32.mxu0 0.0
        %6383 = vmatmul.mubr.f32.gmra.mrb[0].mxu0 %v6257
        %v6384 = vpop.f32.mrb[0].mxu0
        %v6385 = vadd.f32 0.0, %v6384
        %v6386 = vpop.f32.mrb[0].mxu0
        %6387 = vmatprep.mubr.f32.mxu0 0.0
        %6388 = vmatmul.mubr.f32.gmra.mrb[0].mxu0 %v6258
        %v6389 = vpop.f32.mrb[0].mxu0
        %v6390 = vadd.f32 0.0, %v6389
        %v6391 = vpop.f32.mrb[0].mxu0
        %6392 = vmatprep.mubr.f32.mxu0 0.0
        %6393 = vmatmul.mubr.f32.gmra.mrb[0].mxu0 %v6259
        %v6394 = vpop.f32.mrb[0].mxu0
        %v6395 = vadd.f32 0.0, %v6394
        %v6396 = vpop.f32.mrb[0].mxu0
        %6397 = vmatprep.mubr.f32.mxu0 0.0
        %6398 = vmatmul.mubr.f32.gmra.mrb[0].mxu0 %v6260
        %v6399 = vpop.f32.mrb[0].mxu0
        %v6400 = vadd.f32 0.0, %v6399
        %v6401 = vpop.f32.mrb[0].mxu0
        %6402 = vmatprep.mubr.f32.mxu0 0.0
        %6403 = vmatmul.mubr.f32.gmra.mrb[0].mxu0 %v6261
        %v6404 = vpop.f32.mrb[0].mxu0
        %v6405 = vadd.f32 0.0, %v6404
        %v6406 = vpop.f32.mrb[0].mxu0
        %6407 = vmatprep.mubr.f32.mxu0 0.0
        %6408 = vmatmul.mubr.f32.gmra.mrb[0].mxu0 %v6262
        %v6409 = vpop.f32.mrb[0].mxu0
        %v6410 = vadd.f32 0.0, %v6409
        %v6411 = vpop.f32.mrb[0].mxu0
        %6412 = vmatprep.mubr.f32.mxu0 0.0
        %6413 = vmatmul.mubr.f32.gmra.mrb[0].mxu0 %v6263
        %v6414 = vpop.f32.mrb[0].mxu0
        %v6415 = vadd.f32 0.0, %v6414
        %v6416 = vpop.f32.mrb[0].mxu0
        %6417 = vmatprep.mubr.f32.mxu0 0.0
        %6418 = vmatmul.mubr.f32.gmra.mrb[0].mxu0 %v6264
        %v6419 = vpop.f32.mrb[0].mxu0
        %v6420 = vadd.f32 0.0, %v6419
        %v6421 = vpop.f32.mrb[0].mxu0
        %6422 = vmatprep.mubr.f32.mxu0 0.0
        %6423 = vmatmul.mubr.f32.gmra.mrb[0].mxu0 %v6265
        %v6424 = vpop.f32.mrb[0].mxu0
        %v6425 = vadd.f32 0.0, %v6424
        %v6426 = vpop.f32.mrb[0].mxu0
        %6427 = vmatprep.mubr.f32.mxu0 0.0
        %6428 = vmatmul.mubr.f32.gmra.mrb[0].mxu0 %v6266
        %v6429 = vpop.f32.mrb[0].mxu0
        %v6430 = vadd.f32 0.0, %v6429
        %v6431 = vpop.f32.mrb[0].mxu0
        %6432 = vmatprep.mubr.f32.mxu0 0.0
        %6433 = vmatmul.mubr.f32.gmra.mrb[0].mxu0 %v6267
        %v6434 = vpop.f32.mrb[0].mxu0
        %v6435 = vadd.f32 0.0, %v6434
        %v6436 = vpop.f32.mrb[0].mxu0
        %6437 = vmatprep.mubr.f32.mxu0 0.0
        %6438 = vmatmul.mubr.f32.gmra.mrb[0].mxu0 %v6268
        %v6439 = vpop.f32.mrb[0].mxu0
        %v6440 = vadd.f32 0.0, %v6439
        %v6441 = vpop.f32.mrb[0].mxu0
        %6442 = vmatprep.mubr.f32.mxu0 0.0
        %6443 = vmatmul.mubr.f32.gmra.mrb[0].mxu0 %v6269
        %v6444 = vpop.f32.mrb[0].mxu0
        %v6445 = vadd.f32 0.0, %v6444
        %v6446 = vpop.f32.mrb[0].mxu0
        %6447 = vmatprep.mubr.f32.mxu0 0.0
        %6448 = vmatmul.mubr.f32.gmra.mrb[0].mxu0 %v6270
        %v6449 = vpop.f32.mrb[0].mxu0
        %v6450 = vadd.f32 0.0, %v6449
        %v6451 = vpop.f32.mrb[0].mxu0
        %6452 = vmatprep.mubr.f32.mxu0 0.0
        %6453 = vmatmul.mubr.f32.gmra.mrb[0].mxu0 %v6271
        %v6454 = vpop.f32.mrb[0].mxu0
        %v6455 = vadd.f32 0.0, %v6454
        %v6456 = vpop.f32.mrb[0].mxu0
        %6457 = vmatprep.mubr.f32.mxu0 0.0
        %6458 = vmatmul.mubr.f32.gmra.mrb[0].mxu0 %v6272
        %v6459 = vpop.f32.mrb[0].mxu0
        %v6460 = vadd.f32 0.0, %v6459
        %v6461 = vpop.f32.mrb[0].mxu0
        %6462 = vmatprep.mubr.f32.mxu0 0.0
        %6463 = vmatmul.mubr.f32.gmra.mrb[0].mxu0 %v6273
        %v6464 = vpop.f32.mrb[0].mxu0
        %v6465 = vadd.f32 0.0, %v6464
        %v6466 = vpop.f32.mrb[0].mxu0
        %6467 = vmatprep.mubr.f32.mxu0 0.0
        %6468 = vmatmul.mubr.f32.gmra.mrb[0].mxu0 %v6274
        %v6469 = vpop.f32.mrb[0].mxu0
        %v6470 = vadd.f32 0.0, %v6469
        %v6471 = vpop.f32.mrb[0].mxu0
        %6472 = vmatprep.mubr.f32.mxu0 0.0
        %6473 = vmatmul.mubr.f32.gmra.mrb[0].mxu0 %v6275
        %v6474 = vpop.f32.mrb[0].mxu0
        %v6475 = vadd.f32 0.0, %v6474
        %v6476 = vpop.f32.mrb[0].mxu0
        %6477 = vmatprep.mubr.f32.mxu0 0.0
        %6478 = vmatmul.mubr.f32.gmra.mrb[0].mxu0 %v6276
        %v6479 = vpop.f32.mrb[0].mxu0
        %v6480 = vadd.f32 0.0, %v6479
        %v6481 = vpop.f32.mrb[0].mxu0
        %6482 = vmatprep.mubr.f32.mxu0 0.0
        %6483 = vmatmul.mubr.f32.gmra.mrb[0].mxu0 %v6277
        %v6484 = vpop.f32.mrb[0].mxu0
        %v6485 = vadd.f32 0.0, %v6484
        %v6486 = vpop.f32.mrb[0].mxu0
        %6487 = vmatprep.mubr.f32.mxu0 0.0
        %6488 = vmatmul.mubr.f32.gmra.mrb[0].mxu0 %v6278
        %v6489 = vpop.f32.mrb[0].mxu0
        %v6490 = vadd.f32 0.0, %v6489
        %v6491 = vpop.f32.mrb[0].mxu0
        %6492 = vmatprep.mubr.f32.mxu0 0.0
        %6493 = vmatmul.mubr.f32.gmra.mrb[0].mxu0 %v6279
        %v6494 = vpop.f32.mrb[0].mxu0
        %v6495 = vadd.f32 0.0, %v6494
        %v6496 = vpop.f32.mrb[0].mxu0
        %6497 = vmatprep.mubr.f32.mxu0 0.0
        %6498 = vmatmul.mubr.f32.gmra.mrb[0].mxu0 %v6280
        %v6499 = vpop.f32.mrb[0].mxu0
        %v6500 = vadd.f32 0.0, %v6499
        %v6501 = vpop.f32.mrb[0].mxu0
        %6502 = vmatprep.mubr.f32.mxu0 0.0
        %6503 = vmatmul.mubr.f32.gmra.mrb[0].mxu0 %v6281
        %v6504 = vpop.f32.mrb[0].mxu0
        %v6505 = vadd.f32 0.0, %v6504
        %v6506 = vpop.f32.mrb[0].mxu0
        %6507 = vmatprep.mubr.f32.mxu0 0.0
        %6508 = vmatmul.mubr.f32.gmra.mrb[0].mxu0 %v6282
        %v6509 = vpop.f32.mrb[0].mxu0
        %v6510 = vadd.f32 0.0, %v6509
        %v6511 = vpop.f32.mrb[0].mxu0
        %6512 = vmatprep.mubr.f32.mxu0 0.0
        %6513 = vmatmul.mubr.f32.gmra.mrb[0].mxu0 %v6283
        %v6514 = vpop.f32.mrb[0].mxu0
        %v6515 = vadd.f32 0.0, %v6514
        %v6516 = vpop.f32.mrb[0].mxu0
        %6517 = vmatprep.mubr.f32.mxu0 0.0
        %6518 = vmatmul.mubr.f32.gmra.mrb[0].mxu0 %v6284
        %v6519 = vpop.f32.mrb[0].mxu0
        %v6520 = vadd.f32 0.0, %v6519
        %v6521 = vpop.f32.mrb[0].mxu0
        %6522 = vmatprep.mubr.f32.mxu0 0.0
        %6523 = vmatmul.mubr.f32.gmra.mrb[0].mxu0 %v6285
        %v6524 = vpop.f32.mrb[0].mxu0
        %v6525 = vadd.f32 0.0, %v6524
        %v6526 = vpop.f32.mrb[0].mxu0
        %6527 = vdwg.mxu0
        %v6528 = vadd.f32 %v6220, %v6370
        %v6529 = vadd.f32 %v6221, %v6375
        %v6530 = vadd.f32 %v6222, %v6380
        %v6531 = vadd.f32 %v6223, %v6385
        %v6532 = vadd.f32 %v6224, %v6390
        %v6533 = vadd.f32 %v6225, %v6395
        %v6534 = vadd.f32 %v6226, %v6400
        %v6535 = vadd.f32 %v6227, %v6405
        %v6536 = vadd.f32 %v6228, %v6410
        %v6537 = vadd.f32 %v6229, %v6415
        %v6538 = vadd.f32 %v6230, %v6420
        %v6539 = vadd.f32 %v6231, %v6425
        %v6540 = vadd.f32 %v6232, %v6430
        %v6541 = vadd.f32 %v6233, %v6435
        %v6542 = vadd.f32 %v6234, %v6440
        %v6543 = vadd.f32 %v6235, %v6445
        %v6544 = vadd.f32 %v6236, %v6450
        %v6545 = vadd.f32 %v6237, %v6455
        %v6546 = vadd.f32 %v6238, %v6460
        %v6547 = vadd.f32 %v6239, %v6465
        %v6548 = vadd.f32 %v6240, %v6470
        %v6549 = vadd.f32 %v6241, %v6475
        %v6550 = vadd.f32 %v6242, %v6480
        %v6551 = vadd.f32 %v6243, %v6485
        %v6552 = vadd.f32 %v6244, %v6490
        %v6553 = vadd.f32 %v6245, %v6495
        %v6554 = vadd.f32 %v6246, %v6500
        %v6555 = vadd.f32 %v6247, %v6505
        %v6556 = vadd.f32 %v6248, %v6510
        %v6557 = vadd.f32 %v6249, %v6515
        %v6558 = vadd.f32 %v6250, %v6520
        %v6559 = vadd.f32 %v6251, %v6525
        %s6560 = scalar_lea.vmem [#allocation7], 1792
        %v6561 = vld [vmem:[%s6560] sm:$0xff]
        %v6562 = vld [vmem:[%s6560 + $0x8] sm:$0xff]
        %v6563 = vld [vmem:[%s6560 + $0x10] sm:$0xff]
        %v6564 = vld [vmem:[%s6560 + $0x18] sm:$0xff]
        %v6565 = vld [vmem:[%s6560 + $0x20] sm:$0xff]
        %v6566 = vld [vmem:[%s6560 + $0x28] sm:$0xff]
        %v6567 = vld [vmem:[%s6560 + $0x30] sm:$0xff]
        %v6568 = vld [vmem:[%s6560 + $0x38] sm:$0xff]
        %v6569 = vld [vmem:[%s6560 + $0x40] sm:$0xff]
        %v6570 = vld [vmem:[%s6560 + $0x48] sm:$0xff]
        %v6571 = vld [vmem:[%s6560 + $0x50] sm:$0xff]
        %v6572 = vld [vmem:[%s6560 + $0x58] sm:$0xff]
        %v6573 = vld [vmem:[%s6560 + $0x60] sm:$0xff]
        %v6574 = vld [vmem:[%s6560 + $0x68] sm:$0xff]
        %v6575 = vld [vmem:[%s6560 + $0x70] sm:$0xff]
        %v6576 = vld [vmem:[%s6560 + $0x78] sm:$0xff]
        %6577 = vmatprep.subr.mxu0 0.0
        %6578 = vmatpush1.msra.mxu0 %v6561
        %6579 = vmatprep.subr.mxu0 0.0
        %6580 = vmatpush1.msra.mxu0 %v6562
        %6581 = vmatprep.subr.mxu0 0.0
        %6582 = vmatpush1.msra.mxu0 %v6563
        %6583 = vmatprep.subr.mxu0 0.0
        %6584 = vmatpush1.msra.mxu0 %v6564
        %6585 = vmatprep.subr.mxu0 0.0
        %6586 = vmatpush1.msra.mxu0 %v6565
        %6587 = vmatprep.subr.mxu0 0.0
        %6588 = vmatpush1.msra.mxu0 %v6566
        %6589 = vmatprep.subr.mxu0 0.0
        %6590 = vmatpush1.msra.mxu0 %v6567
        %6591 = vmatprep.subr.mxu0 0.0
        %6592 = vmatpush1.msra.mxu0 %v6568
        %6593 = vmatprep.subr.mxu0 0.0
        %6594 = vmatpush1.msra.mxu0 %v6569
        %6595 = vmatprep.subr.mxu0 0.0
        %6596 = vmatpush1.msra.mxu0 %v6570
        %6597 = vmatprep.subr.mxu0 0.0
        %6598 = vmatpush1.msra.mxu0 %v6571
        %6599 = vmatprep.subr.mxu0 0.0
        %6600 = vmatpush1.msra.mxu0 %v6572
        %6601 = vmatprep.subr.mxu0 0.0
        %6602 = vmatpush1.msra.mxu0 %v6573
        %6603 = vmatprep.subr.mxu0 0.0
        %6604 = vmatpush1.msra.mxu0 %v6574
        %6605 = vmatprep.subr.mxu0 0.0
        %6606 = vmatpush1.msra.mxu0 %v6575
        %6607 = vmatprep.subr.mxu0 0.0
        %6608 = vmatpush1.msra.mxu0 %v6576
        %6609 = vmatprep.subr.mxu0 0.0
        %6610 = vmatpush1.msra.mxu0 0.0
        %6611 = vmatprep.subr.mxu0 0.0
        %6612 = vmatpush1.msra.mxu0 0.0
        %6613 = vmatprep.subr.mxu0 0.0
        %6614 = vmatpush1.msra.mxu0 0.0
        %6615 = vmatprep.subr.mxu0 0.0
        %6616 = vmatpush1.msra.mxu0 0.0
        %6617 = vmatprep.subr.mxu0 0.0
        %6618 = vmatpush1.msra.mxu0 0.0
        %6619 = vmatprep.subr.mxu0 0.0
        %6620 = vmatpush1.msra.mxu0 0.0
        %6621 = vmatprep.subr.mxu0 0.0
        %6622 = vmatpush1.msra.mxu0 0.0
        %6623 = vmatprep.subr.mxu0 0.0
        %6624 = vmatpush1.msra.mxu0 0.0
        %6625 = vmatprep.subr.mxu0 0.0
        %6626 = vmatpush1.msra.mxu0 0.0
        %6627 = vmatprep.subr.mxu0 0.0
        %6628 = vmatpush1.msra.mxu0 0.0
        %6629 = vmatprep.subr.mxu0 0.0
        %6630 = vmatpush1.msra.mxu0 0.0
        %6631 = vmatprep.subr.mxu0 0.0
        %6632 = vmatpush1.msra.mxu0 0.0
        %6633 = vmatprep.subr.mxu0 0.0
        %6634 = vmatpush1.msra.mxu0 0.0
        %6635 = vmatprep.subr.mxu0 0.0
        %6636 = vmatpush1.msra.mxu0 0.0
        %6637 = vmatprep.subr.mxu0 0.0
        %6638 = vmatpush1.msra.mxu0 0.0
        %6639 = vmatprep.subr.mxu0 0.0
        %6640 = vmatpush1.msra.mxu0 0.0
        %6641 = vmatprep.mubr.f32.mxu0 0.0
        %6642 = vmatmul.mubr.f32.gmra.mrb[0].mxu0 %v6254
        %v6643 = vpop.f32.mrb[0].mxu0
        %v6644 = vadd.f32 0.0, %v6643
        %v6645 = vpop.f32.mrb[0].mxu0
        %6646 = vmatprep.mubr.f32.mxu0 0.0
        %6647 = vmatmul.mubr.f32.gmra.mrb[0].mxu0 %v6255
        %v6648 = vpop.f32.mrb[0].mxu0
        %v6649 = vadd.f32 0.0, %v6648
        %v6650 = vpop.f32.mrb[0].mxu0
        %6651 = vmatprep.mubr.f32.mxu0 0.0
        %6652 = vmatmul.mubr.f32.gmra.mrb[0].mxu0 %v6256
        %v6653 = vpop.f32.mrb[0].mxu0
        %v6654 = vadd.f32 0.0, %v6653
        %v6655 = vpop.f32.mrb[0].mxu0
        %6656 = vmatprep.mubr.f32.mxu0 0.0
        %6657 = vmatmul.mubr.f32.gmra.mrb[0].mxu0 %v6257
        %v6658 = vpop.f32.mrb[0].mxu0
        %v6659 = vadd.f32 0.0, %v6658
        %v6660 = vpop.f32.mrb[0].mxu0
        %6661 = vmatprep.mubr.f32.mxu0 0.0
        %6662 = vmatmul.mubr.f32.gmra.mrb[0].mxu0 %v6258
        %v6663 = vpop.f32.mrb[0].mxu0
        %v6664 = vadd.f32 0.0, %v6663
        %v6665 = vpop.f32.mrb[0].mxu0
        %6666 = vmatprep.mubr.f32.mxu0 0.0
        %6667 = vmatmul.mubr.f32.gmra.mrb[0].mxu0 %v6259
        %v6668 = vpop.f32.mrb[0].mxu0
        %v6669 = vadd.f32 0.0, %v6668
        %v6670 = vpop.f32.mrb[0].mxu0
        %6671 = vmatprep.mubr.f32.mxu0 0.0
        %6672 = vmatmul.mubr.f32.gmra.mrb[0].mxu0 %v6260
        %v6673 = vpop.f32.mrb[0].mxu0
        %v6674 = vadd.f32 0.0, %v6673
        %v6675 = vpop.f32.mrb[0].mxu0
        %6676 = vmatprep.mubr.f32.mxu0 0.0
        %6677 = vmatmul.mubr.f32.gmra.mrb[0].mxu0 %v6261
        %v6678 = vpop.f32.mrb[0].mxu0
        %v6679 = vadd.f32 0.0, %v6678
        %v6680 = vpop.f32.mrb[0].mxu0
        %6681 = vmatprep.mubr.f32.mxu0 0.0
        %6682 = vmatmul.mubr.f32.gmra.mrb[0].mxu0 %v6262
        %v6683 = vpop.f32.mrb[0].mxu0
        %v6684 = vadd.f32 0.0, %v6683
        %v6685 = vpop.f32.mrb[0].mxu0
        %6686 = vmatprep.mubr.f32.mxu0 0.0
        %6687 = vmatmul.mubr.f32.gmra.mrb[0].mxu0 %v6263
        %v6688 = vpop.f32.mrb[0].mxu0
        %v6689 = vadd.f32 0.0, %v6688
        %v6690 = vpop.f32.mrb[0].mxu0
        %6691 = vmatprep.mubr.f32.mxu0 0.0
        %6692 = vmatmul.mubr.f32.gmra.mrb[0].mxu0 %v6264
        %v6693 = vpop.f32.mrb[0].mxu0
        %v6694 = vadd.f32 0.0, %v6693
        %v6695 = vpop.f32.mrb[0].mxu0
        %6696 = vmatprep.mubr.f32.mxu0 0.0
        %6697 = vmatmul.mubr.f32.gmra.mrb[0].mxu0 %v6265
        %v6698 = vpop.f32.mrb[0].mxu0
        %v6699 = vadd.f32 0.0, %v6698
        %v6700 = vpop.f32.mrb[0].mxu0
        %6701 = vmatprep.mubr.f32.mxu0 0.0
        %6702 = vmatmul.mubr.f32.gmra.mrb[0].mxu0 %v6266
        %v6703 = vpop.f32.mrb[0].mxu0
        %v6704 = vadd.f32 0.0, %v6703
        %v6705 = vpop.f32.mrb[0].mxu0
        %6706 = vmatprep.mubr.f32.mxu0 0.0
        %6707 = vmatmul.mubr.f32.gmra.mrb[0].mxu0 %v6267
        %v6708 = vpop.f32.mrb[0].mxu0
        %v6709 = vadd.f32 0.0, %v6708
        %v6710 = vpop.f32.mrb[0].mxu0
        %6711 = vmatprep.mubr.f32.mxu0 0.0
        %6712 = vmatmul.mubr.f32.gmra.mrb[0].mxu0 %v6268
        %v6713 = vpop.f32.mrb[0].mxu0
        %v6714 = vadd.f32 0.0, %v6713
        %v6715 = vpop.f32.mrb[0].mxu0
        %6716 = vmatprep.mubr.f32.mxu0 0.0
        %6717 = vmatmul.mubr.f32.gmra.mrb[0].mxu0 %v6269
        %v6718 = vpop.f32.mrb[0].mxu0
        %v6719 = vadd.f32 0.0, %v6718
        %v6720 = vpop.f32.mrb[0].mxu0
        %6721 = vmatprep.mubr.f32.mxu0 0.0
        %6722 = vmatmul.mubr.f32.gmra.mrb[0].mxu0 %v6270
        %v6723 = vpop.f32.mrb[0].mxu0
        %v6724 = vadd.f32 0.0, %v6723
        %v6725 = vpop.f32.mrb[0].mxu0
        %6726 = vmatprep.mubr.f32.mxu0 0.0
        %6727 = vmatmul.mubr.f32.gmra.mrb[0].mxu0 %v6271
        %v6728 = vpop.f32.mrb[0].mxu0
        %v6729 = vadd.f32 0.0, %v6728
        %v6730 = vpop.f32.mrb[0].mxu0
        %6731 = vmatprep.mubr.f32.mxu0 0.0
        %6732 = vmatmul.mubr.f32.gmra.mrb[0].mxu0 %v6272
        %v6733 = vpop.f32.mrb[0].mxu0
        %v6734 = vadd.f32 0.0, %v6733
        %v6735 = vpop.f32.mrb[0].mxu0
        %6736 = vmatprep.mubr.f32.mxu0 0.0
        %6737 = vmatmul.mubr.f32.gmra.mrb[0].mxu0 %v6273
        %v6738 = vpop.f32.mrb[0].mxu0
        %v6739 = vadd.f32 0.0, %v6738
        %v6740 = vpop.f32.mrb[0].mxu0
        %6741 = vmatprep.mubr.f32.mxu0 0.0
        %6742 = vmatmul.mubr.f32.gmra.mrb[0].mxu0 %v6274
        %v6743 = vpop.f32.mrb[0].mxu0
        %v6744 = vadd.f32 0.0, %v6743
        %v6745 = vpop.f32.mrb[0].mxu0
        %6746 = vmatprep.mubr.f32.mxu0 0.0
        %6747 = vmatmul.mubr.f32.gmra.mrb[0].mxu0 %v6275
        %v6748 = vpop.f32.mrb[0].mxu0
        %v6749 = vadd.f32 0.0, %v6748
        %v6750 = vpop.f32.mrb[0].mxu0
        %6751 = vmatprep.mubr.f32.mxu0 0.0
        %6752 = vmatmul.mubr.f32.gmra.mrb[0].mxu0 %v6276
        %v6753 = vpop.f32.mrb[0].mxu0
        %v6754 = vadd.f32 0.0, %v6753
        %v6755 = vpop.f32.mrb[0].mxu0
        %6756 = vmatprep.mubr.f32.mxu0 0.0
        %6757 = vmatmul.mubr.f32.gmra.mrb[0].mxu0 %v6277
        %v6758 = vpop.f32.mrb[0].mxu0
        %v6759 = vadd.f32 0.0, %v6758
        %v6760 = vpop.f32.mrb[0].mxu0
        %6761 = vmatprep.mubr.f32.mxu0 0.0
        %6762 = vmatmul.mubr.f32.gmra.mrb[0].mxu0 %v6278
        %v6763 = vpop.f32.mrb[0].mxu0
        %v6764 = vadd.f32 0.0, %v6763
        %v6765 = vpop.f32.mrb[0].mxu0
        %6766 = vmatprep.mubr.f32.mxu0 0.0
        %6767 = vmatmul.mubr.f32.gmra.mrb[0].mxu0 %v6279
        %v6768 = vpop.f32.mrb[0].mxu0
        %v6769 = vadd.f32 0.0, %v6768
        %v6770 = vpop.f32.mrb[0].mxu0
        %6771 = vmatprep.mubr.f32.mxu0 0.0
        %6772 = vmatmul.mubr.f32.gmra.mrb[0].mxu0 %v6280
        %v6773 = vpop.f32.mrb[0].mxu0
        %v6774 = vadd.f32 0.0, %v6773
        %v6775 = vpop.f32.mrb[0].mxu0
        %6776 = vmatprep.mubr.f32.mxu0 0.0
        %6777 = vmatmul.mubr.f32.gmra.mrb[0].mxu0 %v6281
        %v6778 = vpop.f32.mrb[0].mxu0
        %v6779 = vadd.f32 0.0, %v6778
        %v6780 = vpop.f32.mrb[0].mxu0
        %6781 = vmatprep.mubr.f32.mxu0 0.0
        %6782 = vmatmul.mubr.f32.gmra.mrb[0].mxu0 %v6282
        %v6783 = vpop.f32.mrb[0].mxu0
        %v6784 = vadd.f32 0.0, %v6783
        %v6785 = vpop.f32.mrb[0].mxu0
        %6786 = vmatprep.mubr.f32.mxu0 0.0
        %6787 = vmatmul.mubr.f32.gmra.mrb[0].mxu0 %v6283
        %v6788 = vpop.f32.mrb[0].mxu0
        %v6789 = vadd.f32 0.0, %v6788
        %v6790 = vpop.f32.mrb[0].mxu0
        %6791 = vmatprep.mubr.f32.mxu0 0.0
        %6792 = vmatmul.mubr.f32.gmra.mrb[0].mxu0 %v6284
        %v6793 = vpop.f32.mrb[0].mxu0
        %v6794 = vadd.f32 0.0, %v6793
        %v6795 = vpop.f32.mrb[0].mxu0
        %6796 = vmatprep.mubr.f32.mxu0 0.0
        %6797 = vmatmul.mubr.f32.gmra.mrb[0].mxu0 %v6285
        %v6798 = vpop.f32.mrb[0].mxu0
        %v6799 = vadd.f32 0.0, %v6798
        %v6800 = vpop.f32.mrb[0].mxu0
        %6801 = vdwg.mxu0
        %v6802 = vadd.f32 %v5754, %v6644
        %v6803 = vadd.f32 %v5759, %v6649
        %v6804 = vadd.f32 %v5764, %v6654
        %v6805 = vadd.f32 %v5769, %v6659
        %v6806 = vadd.f32 %v5774, %v6664
        %v6807 = vadd.f32 %v5779, %v6669
        %v6808 = vadd.f32 %v5784, %v6674
        %v6809 = vadd.f32 %v5789, %v6679
        %v6810 = vadd.f32 %v5794, %v6684
        %v6811 = vadd.f32 %v5799, %v6689
        %v6812 = vadd.f32 %v5804, %v6694
        %v6813 = vadd.f32 %v5809, %v6699
        %v6814 = vadd.f32 %v5814, %v6704
        %v6815 = vadd.f32 %v5819, %v6709
        %v6816 = vadd.f32 %v5824, %v6714
        %v6817 = vadd.f32 %v5829, %v6719
        %v6818 = vadd.f32 %v5834, %v6724
        %v6819 = vadd.f32 %v5839, %v6729
        %v6820 = vadd.f32 %v5844, %v6734
        %v6821 = vadd.f32 %v5849, %v6739
        %v6822 = vadd.f32 %v5854, %v6744
        %v6823 = vadd.f32 %v5859, %v6749
        %v6824 = vadd.f32 %v5864, %v6754
        %v6825 = vadd.f32 %v5869, %v6759
        %v6826 = vadd.f32 %v5874, %v6764
        %v6827 = vadd.f32 %v5879, %v6769
        %v6828 = vadd.f32 %v5884, %v6774
        %v6829 = vadd.f32 %v5889, %v6779
        %v6830 = vadd.f32 %v5894, %v6784
        %v6831 = vadd.f32 %v5899, %v6789
        %v6832 = vadd.f32 %v5904, %v6794
        %v6833 = vadd.f32 %v5909, %v6799
        %s6834 = sadd.s32 %s1786, 41
        %s6835 = scalar_lea.vmem [#allocation2], %s6834
        %v6836 = vld [vmem:[%s6835] sm:$0xff]
        %v6837 = vld [vmem:[%s6835 + $0x8] sm:$0xff]
        %v6838 = vld [vmem:[%s6835 + $0x10] sm:$0xff]
        %v6839 = vld [vmem:[%s6835 + $0x18] sm:$0xff]
        %v6840 = vld [vmem:[%s6835 + $0x20] sm:$0xff]
        %v6841 = vld [vmem:[%s6835 + $0x28] sm:$0xff]
        %v6842 = vld [vmem:[%s6835 + $0x30] sm:$0xff]
        %v6843 = vld [vmem:[%s6835 + $0x38] sm:$0xff]
        %v6844 = vld [vmem:[%s6835 + $0x40] sm:$0xff]
        %v6845 = vld [vmem:[%s6835 + $0x48] sm:$0xff]
        %v6846 = vld [vmem:[%s6835 + $0x50] sm:$0xff]
        %v6847 = vld [vmem:[%s6835 + $0x58] sm:$0xff]
        %v6848 = vld [vmem:[%s6835 + $0x60] sm:$0xff]
        %v6849 = vld [vmem:[%s6835 + $0x68] sm:$0xff]
        %v6850 = vld [vmem:[%s6835 + $0x70] sm:$0xff]
        %v6851 = vld [vmem:[%s6835 + $0x78] sm:$0xff]
        %v6852 = vld [vmem:[%s6835 + $0x80] sm:$0xff]
        %v6853 = vld [vmem:[%s6835 + $0x88] sm:$0xff]
        %v6854 = vld [vmem:[%s6835 + $0x90] sm:$0xff]
        %v6855 = vld [vmem:[%s6835 + $0x98] sm:$0xff]
        %v6856 = vld [vmem:[%s6835 + $0xa0] sm:$0xff]
        %v6857 = vld [vmem:[%s6835 + $0xa8] sm:$0xff]
        %v6858 = vld [vmem:[%s6835 + $0xb0] sm:$0xff]
        %v6859 = vld [vmem:[%s6835 + $0xb8] sm:$0xff]
        %v6860 = vld [vmem:[%s6835 + $0xc0] sm:$0xff]
        %v6861 = vld [vmem:[%s6835 + $0xc8] sm:$0xff]
        %v6862 = vld [vmem:[%s6835 + $0xd0] sm:$0xff]
        %v6863 = vld [vmem:[%s6835 + $0xd8] sm:$0xff]
        %v6864 = vld [vmem:[%s6835 + $0xe0] sm:$0xff]
        %v6865 = vld [vmem:[%s6835 + $0xe8] sm:$0xff]
        %v6866 = vld [vmem:[%s6835 + $0xf0] sm:$0xff]
        %v6867 = vld [vmem:[%s6835 + $0xf8] sm:$0xff]
        %v6868 = vsel %vm2517, %v6836, 0.0
        %v6869 = vsel %vm2518, %v6837, 0.0
        %v6870 = vsel %vm2519, %v6838, 0.0
        %v6871 = vsel %vm2520, %v6839, 0.0
        %v6872 = vsel %vm2521, %v6840, 0.0
        %v6873 = vsel %vm2522, %v6841, 0.0
        %v6874 = vsel %vm2523, %v6842, 0.0
        %v6875 = vsel %vm2524, %v6843, 0.0
        %v6876 = vsel %vm2525, %v6844, 0.0
        %v6877 = vsel %vm2526, %v6845, 0.0
        %v6878 = vsel %vm2527, %v6846, 0.0
        %v6879 = vsel %vm2528, %v6847, 0.0
        %v6880 = vsel %vm2529, %v6848, 0.0
        %v6881 = vsel %vm2530, %v6849, 0.0
        %v6882 = vsel %vm2531, %v6850, 0.0
        %v6883 = vsel %vm2532, %v6851, 0.0
        %v6884 = vsel %vm2533, %v6852, 0.0
        %v6885 = vsel %vm2534, %v6853, 0.0
        %v6886 = vsel %vm2535, %v6854, 0.0
        %v6887 = vsel %vm2536, %v6855, 0.0
        %v6888 = vsel %vm2537, %v6856, 0.0
        %v6889 = vsel %vm2538, %v6857, 0.0
        %v6890 = vsel %vm2539, %v6858, 0.0
        %v6891 = vsel %vm2540, %v6859, 0.0
        %v6892 = vsel %vm2541, %v6860, 0.0
        %v6893 = vsel %vm2542, %v6861, 0.0
        %v6894 = vsel %vm2543, %v6862, 0.0
        %v6895 = vsel %vm2544, %v6863, 0.0
        %v6896 = vsel %vm2545, %v6864, 0.0
        %v6897 = vsel %vm2546, %v6865, 0.0
        %v6898 = vsel %vm2547, %v6866, 0.0
        %v6899 = vsel %vm2548, %v6867, 0.0
        %s6900 = scalar_lea.vmem [#allocation7], 1920
        %v6901 = vld [vmem:[%s6900] sm:$0xff]
        %v6902 = vld [vmem:[%s6900 + $0x8] sm:$0xff]
        %v6903 = vld [vmem:[%s6900 + $0x10] sm:$0xff]
        %v6904 = vld [vmem:[%s6900 + $0x18] sm:$0xff]
        %v6905 = vld [vmem:[%s6900 + $0x20] sm:$0xff]
        %v6906 = vld [vmem:[%s6900 + $0x28] sm:$0xff]
        %v6907 = vld [vmem:[%s6900 + $0x30] sm:$0xff]
        %v6908 = vld [vmem:[%s6900 + $0x38] sm:$0xff]
        %v6909 = vld [vmem:[%s6900 + $0x40] sm:$0xff]
        %v6910 = vld [vmem:[%s6900 + $0x48] sm:$0xff]
        %v6911 = vld [vmem:[%s6900 + $0x50] sm:$0xff]
        %v6912 = vld [vmem:[%s6900 + $0x58] sm:$0xff]
        %v6913 = vld [vmem:[%s6900 + $0x60] sm:$0xff]
        %v6914 = vld [vmem:[%s6900 + $0x68] sm:$0xff]
        %v6915 = vld [vmem:[%s6900 + $0x70] sm:$0xff]
        %v6916 = vld [vmem:[%s6900 + $0x78] sm:$0xff]
        %6917 = vmatprep.subr.mxu0 0.0
        %6918 = vmatpush1.msra.mxu0 %v6901
        %6919 = vmatprep.subr.mxu0 0.0
        %6920 = vmatpush1.msra.mxu0 %v6902
        %6921 = vmatprep.subr.mxu0 0.0
        %6922 = vmatpush1.msra.mxu0 %v6903
        %6923 = vmatprep.subr.mxu0 0.0
        %6924 = vmatpush1.msra.mxu0 %v6904
        %6925 = vmatprep.subr.mxu0 0.0
        %6926 = vmatpush1.msra.mxu0 %v6905
        %6927 = vmatprep.subr.mxu0 0.0
        %6928 = vmatpush1.msra.mxu0 %v6906
        %6929 = vmatprep.subr.mxu0 0.0
        %6930 = vmatpush1.msra.mxu0 %v6907
        %6931 = vmatprep.subr.mxu0 0.0
        %6932 = vmatpush1.msra.mxu0 %v6908
        %6933 = vmatprep.subr.mxu0 0.0
        %6934 = vmatpush1.msra.mxu0 %v6909
        %6935 = vmatprep.subr.mxu0 0.0
        %6936 = vmatpush1.msra.mxu0 %v6910
        %6937 = vmatprep.subr.mxu0 0.0
        %6938 = vmatpush1.msra.mxu0 %v6911
        %6939 = vmatprep.subr.mxu0 0.0
        %6940 = vmatpush1.msra.mxu0 %v6912
        %6941 = vmatprep.subr.mxu0 0.0
        %6942 = vmatpush1.msra.mxu0 %v6913
        %6943 = vmatprep.subr.mxu0 0.0
        %6944 = vmatpush1.msra.mxu0 %v6914
        %6945 = vmatprep.subr.mxu0 0.0
        %6946 = vmatpush1.msra.mxu0 %v6915
        %6947 = vmatprep.subr.mxu0 0.0
        %6948 = vmatpush1.msra.mxu0 %v6916
        %6949 = vmatprep.subr.mxu0 0.0
        %6950 = vmatpush1.msra.mxu0 0.0
        %6951 = vmatprep.subr.mxu0 0.0
        %6952 = vmatpush1.msra.mxu0 0.0
        %6953 = vmatprep.subr.mxu0 0.0
        %6954 = vmatpush1.msra.mxu0 0.0
        %6955 = vmatprep.subr.mxu0 0.0
        %6956 = vmatpush1.msra.mxu0 0.0
        %6957 = vmatprep.subr.mxu0 0.0
        %6958 = vmatpush1.msra.mxu0 0.0
        %6959 = vmatprep.subr.mxu0 0.0
        %6960 = vmatpush1.msra.mxu0 0.0
        %6961 = vmatprep.subr.mxu0 0.0
        %6962 = vmatpush1.msra.mxu0 0.0
        %6963 = vmatprep.subr.mxu0 0.0
        %6964 = vmatpush1.msra.mxu0 0.0
        %6965 = vmatprep.subr.mxu0 0.0
        %6966 = vmatpush1.msra.mxu0 0.0
        %6967 = vmatprep.subr.mxu0 0.0
        %6968 = vmatpush1.msra.mxu0 0.0
        %6969 = vmatprep.subr.mxu0 0.0
        %6970 = vmatpush1.msra.mxu0 0.0
        %6971 = vmatprep.subr.mxu0 0.0
        %6972 = vmatpush1.msra.mxu0 0.0
        %6973 = vmatprep.subr.mxu0 0.0
        %6974 = vmatpush1.msra.mxu0 0.0
        %6975 = vmatprep.subr.mxu0 0.0
        %6976 = vmatpush1.msra.mxu0 0.0
        %6977 = vmatprep.subr.mxu0 0.0
        %6978 = vmatpush1.msra.mxu0 0.0
        %6979 = vmatprep.subr.mxu0 0.0
        %6980 = vmatpush1.msra.mxu0 0.0
        %6981 = vmatprep.mubr.f32.mxu0 0.0
        %6982 = vmatmul.mubr.f32.gmra.mrb[0].mxu0 %v6868
        %v6983 = vpop.f32.mrb[0].mxu0
        %v6984 = vadd.f32 0.0, %v6983
        %v6985 = vpop.f32.mrb[0].mxu0
        %6986 = vmatprep.mubr.f32.mxu0 0.0
        %6987 = vmatmul.mubr.f32.gmra.mrb[0].mxu0 %v6869
        %v6988 = vpop.f32.mrb[0].mxu0
        %v6989 = vadd.f32 0.0, %v6988
        %v6990 = vpop.f32.mrb[0].mxu0
        %6991 = vmatprep.mubr.f32.mxu0 0.0
        %6992 = vmatmul.mubr.f32.gmra.mrb[0].mxu0 %v6870
        %v6993 = vpop.f32.mrb[0].mxu0
        %v6994 = vadd.f32 0.0, %v6993
        %v6995 = vpop.f32.mrb[0].mxu0
        %6996 = vmatprep.mubr.f32.mxu0 0.0
        %6997 = vmatmul.mubr.f32.gmra.mrb[0].mxu0 %v6871
        %v6998 = vpop.f32.mrb[0].mxu0
        %v6999 = vadd.f32 0.0, %v6998
        %v7000 = vpop.f32.mrb[0].mxu0
        %7001 = vmatprep.mubr.f32.mxu0 0.0
        %7002 = vmatmul.mubr.f32.gmra.mrb[0].mxu0 %v6872
        %v7003 = vpop.f32.mrb[0].mxu0
        %v7004 = vadd.f32 0.0, %v7003
        %v7005 = vpop.f32.mrb[0].mxu0
        %7006 = vmatprep.mubr.f32.mxu0 0.0
        %7007 = vmatmul.mubr.f32.gmra.mrb[0].mxu0 %v6873
        %v7008 = vpop.f32.mrb[0].mxu0
        %v7009 = vadd.f32 0.0, %v7008
        %v7010 = vpop.f32.mrb[0].mxu0
        %7011 = vmatprep.mubr.f32.mxu0 0.0
        %7012 = vmatmul.mubr.f32.gmra.mrb[0].mxu0 %v6874
        %v7013 = vpop.f32.mrb[0].mxu0
        %v7014 = vadd.f32 0.0, %v7013
        %v7015 = vpop.f32.mrb[0].mxu0
        %7016 = vmatprep.mubr.f32.mxu0 0.0
        %7017 = vmatmul.mubr.f32.gmra.mrb[0].mxu0 %v6875
        %v7018 = vpop.f32.mrb[0].mxu0
        %v7019 = vadd.f32 0.0, %v7018
        %v7020 = vpop.f32.mrb[0].mxu0
        %7021 = vmatprep.mubr.f32.mxu0 0.0
        %7022 = vmatmul.mubr.f32.gmra.mrb[0].mxu0 %v6876
        %v7023 = vpop.f32.mrb[0].mxu0
        %v7024 = vadd.f32 0.0, %v7023
        %v7025 = vpop.f32.mrb[0].mxu0
        %7026 = vmatprep.mubr.f32.mxu0 0.0
        %7027 = vmatmul.mubr.f32.gmra.mrb[0].mxu0 %v6877
        %v7028 = vpop.f32.mrb[0].mxu0
        %v7029 = vadd.f32 0.0, %v7028
        %v7030 = vpop.f32.mrb[0].mxu0
        %7031 = vmatprep.mubr.f32.mxu0 0.0
        %7032 = vmatmul.mubr.f32.gmra.mrb[0].mxu0 %v6878
        %v7033 = vpop.f32.mrb[0].mxu0
        %v7034 = vadd.f32 0.0, %v7033
        %v7035 = vpop.f32.mrb[0].mxu0
        %7036 = vmatprep.mubr.f32.mxu0 0.0
        %7037 = vmatmul.mubr.f32.gmra.mrb[0].mxu0 %v6879
        %v7038 = vpop.f32.mrb[0].mxu0
        %v7039 = vadd.f32 0.0, %v7038
        %v7040 = vpop.f32.mrb[0].mxu0
        %7041 = vmatprep.mubr.f32.mxu0 0.0
        %7042 = vmatmul.mubr.f32.gmra.mrb[0].mxu0 %v6880
        %v7043 = vpop.f32.mrb[0].mxu0
        %v7044 = vadd.f32 0.0, %v7043
        %v7045 = vpop.f32.mrb[0].mxu0
        %7046 = vmatprep.mubr.f32.mxu0 0.0
        %7047 = vmatmul.mubr.f32.gmra.mrb[0].mxu0 %v6881
        %v7048 = vpop.f32.mrb[0].mxu0
        %v7049 = vadd.f32 0.0, %v7048
        %v7050 = vpop.f32.mrb[0].mxu0
        %7051 = vmatprep.mubr.f32.mxu0 0.0
        %7052 = vmatmul.mubr.f32.gmra.mrb[0].mxu0 %v6882
        %v7053 = vpop.f32.mrb[0].mxu0
        %v7054 = vadd.f32 0.0, %v7053
        %v7055 = vpop.f32.mrb[0].mxu0
        %7056 = vmatprep.mubr.f32.mxu0 0.0
        %7057 = vmatmul.mubr.f32.gmra.mrb[0].mxu0 %v6883
        %v7058 = vpop.f32.mrb[0].mxu0
        %v7059 = vadd.f32 0.0, %v7058
        %v7060 = vpop.f32.mrb[0].mxu0
        %7061 = vmatprep.mubr.f32.mxu0 0.0
        %7062 = vmatmul.mubr.f32.gmra.mrb[0].mxu0 %v6884
        %v7063 = vpop.f32.mrb[0].mxu0
        %v7064 = vadd.f32 0.0, %v7063
        %v7065 = vpop.f32.mrb[0].mxu0
        %7066 = vmatprep.mubr.f32.mxu0 0.0
        %7067 = vmatmul.mubr.f32.gmra.mrb[0].mxu0 %v6885
        %v7068 = vpop.f32.mrb[0].mxu0
        %v7069 = vadd.f32 0.0, %v7068
        %v7070 = vpop.f32.mrb[0].mxu0
        %7071 = vmatprep.mubr.f32.mxu0 0.0
        %7072 = vmatmul.mubr.f32.gmra.mrb[0].mxu0 %v6886
        %v7073 = vpop.f32.mrb[0].mxu0
        %v7074 = vadd.f32 0.0, %v7073
        %v7075 = vpop.f32.mrb[0].mxu0
        %7076 = vmatprep.mubr.f32.mxu0 0.0
        %7077 = vmatmul.mubr.f32.gmra.mrb[0].mxu0 %v6887
        %v7078 = vpop.f32.mrb[0].mxu0
        %v7079 = vadd.f32 0.0, %v7078
        %v7080 = vpop.f32.mrb[0].mxu0
        %7081 = vmatprep.mubr.f32.mxu0 0.0
        %7082 = vmatmul.mubr.f32.gmra.mrb[0].mxu0 %v6888
        %v7083 = vpop.f32.mrb[0].mxu0
        %v7084 = vadd.f32 0.0, %v7083
        %v7085 = vpop.f32.mrb[0].mxu0
        %7086 = vmatprep.mubr.f32.mxu0 0.0
        %7087 = vmatmul.mubr.f32.gmra.mrb[0].mxu0 %v6889
        %v7088 = vpop.f32.mrb[0].mxu0
        %v7089 = vadd.f32 0.0, %v7088
        %v7090 = vpop.f32.mrb[0].mxu0
        %7091 = vmatprep.mubr.f32.mxu0 0.0
        %7092 = vmatmul.mubr.f32.gmra.mrb[0].mxu0 %v6890
        %v7093 = vpop.f32.mrb[0].mxu0
        %v7094 = vadd.f32 0.0, %v7093
        %v7095 = vpop.f32.mrb[0].mxu0
        %7096 = vmatprep.mubr.f32.mxu0 0.0
        %7097 = vmatmul.mubr.f32.gmra.mrb[0].mxu0 %v6891
        %v7098 = vpop.f32.mrb[0].mxu0
        %v7099 = vadd.f32 0.0, %v7098
        %v7100 = vpop.f32.mrb[0].mxu0
        %7101 = vmatprep.mubr.f32.mxu0 0.0
        %7102 = vmatmul.mubr.f32.gmra.mrb[0].mxu0 %v6892
        %v7103 = vpop.f32.mrb[0].mxu0
        %v7104 = vadd.f32 0.0, %v7103
        %v7105 = vpop.f32.mrb[0].mxu0
        %7106 = vmatprep.mubr.f32.mxu0 0.0
        %7107 = vmatmul.mubr.f32.gmra.mrb[0].mxu0 %v6893
        %v7108 = vpop.f32.mrb[0].mxu0
        %v7109 = vadd.f32 0.0, %v7108
        %v7110 = vpop.f32.mrb[0].mxu0
        %7111 = vmatprep.mubr.f32.mxu0 0.0
        %7112 = vmatmul.mubr.f32.gmra.mrb[0].mxu0 %v6894
        %v7113 = vpop.f32.mrb[0].mxu0
        %v7114 = vadd.f32 0.0, %v7113
        %v7115 = vpop.f32.mrb[0].mxu0
        %7116 = vmatprep.mubr.f32.mxu0 0.0
        %7117 = vmatmul.mubr.f32.gmra.mrb[0].mxu0 %v6895
        %v7118 = vpop.f32.mrb[0].mxu0
        %v7119 = vadd.f32 0.0, %v7118
        %v7120 = vpop.f32.mrb[0].mxu0
        %7121 = vmatprep.mubr.f32.mxu0 0.0
        %7122 = vmatmul.mubr.f32.gmra.mrb[0].mxu0 %v6896
        %v7123 = vpop.f32.mrb[0].mxu0
        %v7124 = vadd.f32 0.0, %v7123
        %v7125 = vpop.f32.mrb[0].mxu0
        %7126 = vmatprep.mubr.f32.mxu0 0.0
        %7127 = vmatmul.mubr.f32.gmra.mrb[0].mxu0 %v6897
        %v7128 = vpop.f32.mrb[0].mxu0
        %v7129 = vadd.f32 0.0, %v7128
        %v7130 = vpop.f32.mrb[0].mxu0
        %7131 = vmatprep.mubr.f32.mxu0 0.0
        %7132 = vmatmul.mubr.f32.gmra.mrb[0].mxu0 %v6898
        %v7133 = vpop.f32.mrb[0].mxu0
        %v7134 = vadd.f32 0.0, %v7133
        %v7135 = vpop.f32.mrb[0].mxu0
        %7136 = vmatprep.mubr.f32.mxu0 0.0
        %7137 = vmatmul.mubr.f32.gmra.mrb[0].mxu0 %v6899
        %v7138 = vpop.f32.mrb[0].mxu0
        %v7139 = vadd.f32 0.0, %v7138
        %v7140 = vpop.f32.mrb[0].mxu0
        %7141 = vdwg.mxu0
        %v7142 = vadd.f32 %v6802, %v6984
        %v7143 = vadd.f32 %v6803, %v6989
        %v7144 = vadd.f32 %v6804, %v6994
        %v7145 = vadd.f32 %v6805, %v6999
        %v7146 = vadd.f32 %v6806, %v7004
        %v7147 = vadd.f32 %v6807, %v7009
        %v7148 = vadd.f32 %v6808, %v7014
        %v7149 = vadd.f32 %v6809, %v7019
        %v7150 = vadd.f32 %v6810, %v7024
        %v7151 = vadd.f32 %v6811, %v7029
        %v7152 = vadd.f32 %v6812, %v7034
        %v7153 = vadd.f32 %v6813, %v7039
        %v7154 = vadd.f32 %v6814, %v7044
        %v7155 = vadd.f32 %v6815, %v7049
        %v7156 = vadd.f32 %v6816, %v7054
        %v7157 = vadd.f32 %v6817, %v7059
        %v7158 = vadd.f32 %v6818, %v7064
        %v7159 = vadd.f32 %v6819, %v7069
        %v7160 = vadd.f32 %v6820, %v7074
        %v7161 = vadd.f32 %v6821, %v7079
        %v7162 = vadd.f32 %v6822, %v7084
        %v7163 = vadd.f32 %v6823, %v7089
        %v7164 = vadd.f32 %v6824, %v7094
        %v7165 = vadd.f32 %v6825, %v7099
        %v7166 = vadd.f32 %v6826, %v7104
        %v7167 = vadd.f32 %v6827, %v7109
        %v7168 = vadd.f32 %v6828, %v7114
        %v7169 = vadd.f32 %v6829, %v7119
        %v7170 = vadd.f32 %v6830, %v7124
        %v7171 = vadd.f32 %v6831, %v7129
        %v7172 = vadd.f32 %v6832, %v7134
        %v7173 = vadd.f32 %v6833, %v7139
        %v7174 = vadd.f32 %v4315, %v1910
        %v7175 = vadd.f32 %v4316, %v1915
        %v7176 = vadd.f32 %v4317, %v1920
        %v7177 = vadd.f32 %v4318, %v1925
        %v7178 = vadd.f32 %v4319, %v1930
        %v7179 = vadd.f32 %v4320, %v1935
        %v7180 = vadd.f32 %v4321, %v1940
        %v7181 = vadd.f32 %v4322, %v1945
        %v7182 = vadd.f32 %v4323, %v1950
        %v7183 = vadd.f32 %v4324, %v1955
        %v7184 = vadd.f32 %v4325, %v1960
        %v7185 = vadd.f32 %v4326, %v1965
        %v7186 = vadd.f32 %v4327, %v1970
        %v7187 = vadd.f32 %v4328, %v1975
        %v7188 = vadd.f32 %v4329, %v1980
        %v7189 = vadd.f32 %v4330, %v1985
        %v7190 = vadd.f32 %v4331, %v1990
        %v7191 = vadd.f32 %v4332, %v1995
        %v7192 = vadd.f32 %v4333, %v2000
        %v7193 = vadd.f32 %v4334, %v2005
        %v7194 = vadd.f32 %v4335, %v2010
        %v7195 = vadd.f32 %v4336, %v2015
        %v7196 = vadd.f32 %v4337, %v2020
        %v7197 = vadd.f32 %v4338, %v2025
        %v7198 = vadd.f32 %v4339, %v2030
        %v7199 = vadd.f32 %v4340, %v2035
        %v7200 = vadd.f32 %v4341, %v2040
        %v7201 = vadd.f32 %v4342, %v2045
        %v7202 = vadd.f32 %v4343, %v2050
        %v7203 = vadd.f32 %v4344, %v2055
        %v7204 = vadd.f32 %v4345, %v2060
        %v7205 = vadd.f32 %v4346, %v2065
        %7206 = vst [vmem:[%s446] sm:$0xff] %v7174
        %7207 = vst [vmem:[%s446 + $0x10] sm:$0xff] %v7175
        %7208 = vst [vmem:[%s446 + $0x40] sm:$0xff] %v7176
        %7209 = vst [vmem:[%s446 + $0x50] sm:$0xff] %v7177
        %7210 = vst [vmem:[%s446 + $0x80] sm:$0xff] %v7178
        %7211 = vst [vmem:[%s446 + $0x90] sm:$0xff] %v7179
        %7212 = vst [vmem:[%s446 + $0xc0] sm:$0xff] %v7180
        %7213 = vst [vmem:[%s446 + $0xd0] sm:$0xff] %v7181
        %7214 = vst [vmem:[%s446 + $0x100] sm:$0xff] %v7182
        %7215 = vst [vmem:[%s446 + $0x110] sm:$0xff] %v7183
        %7216 = vst [vmem:[%s446 + $0x140] sm:$0xff] %v7184
        %7217 = vst [vmem:[%s446 + $0x150] sm:$0xff] %v7185
        %7218 = vst [vmem:[%s446 + $0x180] sm:$0xff] %v7186
        %7219 = vst [vmem:[%s446 + $0x190] sm:$0xff] %v7187
        %7220 = vst [vmem:[%s446 + $0x1c0] sm:$0xff] %v7188
        %7221 = vst [vmem:[%s446 + $0x1d0] sm:$0xff] %v7189
        %7222 = vst [vmem:[%s446 + $0x200] sm:$0xff] %v7190
        %7223 = vst [vmem:[%s446 + $0x210] sm:$0xff] %v7191
        %7224 = vst [vmem:[%s446 + $0x240] sm:$0xff] %v7192
        %7225 = vst [vmem:[%s446 + $0x250] sm:$0xff] %v7193
        %7226 = vst [vmem:[%s446 + $0x280] sm:$0xff] %v7194
        %7227 = vst [vmem:[%s446 + $0x290] sm:$0xff] %v7195
        %7228 = vst [vmem:[%s446 + $0x2c0] sm:$0xff] %v7196
        %7229 = vst [vmem:[%s446 + $0x2d0] sm:$0xff] %v7197
        %7230 = vst [vmem:[%s446 + $0x300] sm:$0xff] %v7198
        %7231 = vst [vmem:[%s446 + $0x310] sm:$0xff] %v7199
        %7232 = vst [vmem:[%s446 + $0x340] sm:$0xff] %v7200
        %7233 = vst [vmem:[%s446 + $0x350] sm:$0xff] %v7201
        %7234 = vst [vmem:[%s446 + $0x380] sm:$0xff] %v7202
        %7235 = vst [vmem:[%s446 + $0x390] sm:$0xff] %v7203
        %7236 = vst [vmem:[%s446 + $0x3c0] sm:$0xff] %v7204
        %7237 = vst [vmem:[%s446 + $0x3d0] sm:$0xff] %v7205
        %v7238 = vadd.f32 %v5413, %v1910
        %v7239 = vadd.f32 %v5414, %v1915
        %v7240 = vadd.f32 %v5415, %v1920
        %v7241 = vadd.f32 %v5416, %v1925
        %v7242 = vadd.f32 %v5417, %v1930
        %v7243 = vadd.f32 %v5418, %v1935
        %v7244 = vadd.f32 %v5419, %v1940
        %v7245 = vadd.f32 %v5420, %v1945
        %v7246 = vadd.f32 %v5421, %v1950
        %v7247 = vadd.f32 %v5422, %v1955
        %v7248 = vadd.f32 %v5423, %v1960
        %v7249 = vadd.f32 %v5424, %v1965
        %v7250 = vadd.f32 %v5425, %v1970
        %v7251 = vadd.f32 %v5426, %v1975
        %v7252 = vadd.f32 %v5427, %v1980
        %v7253 = vadd.f32 %v5428, %v1985
        %v7254 = vadd.f32 %v5429, %v1990
        %v7255 = vadd.f32 %v5430, %v1995
        %v7256 = vadd.f32 %v5431, %v2000
        %v7257 = vadd.f32 %v5432, %v2005
        %v7258 = vadd.f32 %v5433, %v2010
        %v7259 = vadd.f32 %v5434, %v2015
        %v7260 = vadd.f32 %v5435, %v2020
        %v7261 = vadd.f32 %v5436, %v2025
        %v7262 = vadd.f32 %v5437, %v2030
        %v7263 = vadd.f32 %v5438, %v2035
        %v7264 = vadd.f32 %v5439, %v2040
        %v7265 = vadd.f32 %v5440, %v2045
        %v7266 = vadd.f32 %v5441, %v2050
        %v7267 = vadd.f32 %v5442, %v2055
        %v7268 = vadd.f32 %v5443, %v2060
        %v7269 = vadd.f32 %v5444, %v2065
        %7270 = vst [vmem:[%s446 + $0x8] sm:$0xff] %v7238
        %7271 = vst [vmem:[%s446 + $0x18] sm:$0xff] %v7239
        %7272 = vst [vmem:[%s446 + $0x48] sm:$0xff] %v7240
        %7273 = vst [vmem:[%s446 + $0x58] sm:$0xff] %v7241
        %7274 = vst [vmem:[%s446 + $0x88] sm:$0xff] %v7242
        %7275 = vst [vmem:[%s446 + $0x98] sm:$0xff] %v7243
        %7276 = vst [vmem:[%s446 + $0xc8] sm:$0xff] %v7244
        %7277 = vst [vmem:[%s446 + $0xd8] sm:$0xff] %v7245
        %7278 = vst [vmem:[%s446 + $0x108] sm:$0xff] %v7246
        %7279 = vst [vmem:[%s446 + $0x118] sm:$0xff] %v7247
        %7280 = vst [vmem:[%s446 + $0x148] sm:$0xff] %v7248
        %7281 = vst [vmem:[%s446 + $0x158] sm:$0xff] %v7249
        %7282 = vst [vmem:[%s446 + $0x188] sm:$0xff] %v7250
        %7283 = vst [vmem:[%s446 + $0x198] sm:$0xff] %v7251
        %7284 = vst [vmem:[%s446 + $0x1c8] sm:$0xff] %v7252
        %7285 = vst [vmem:[%s446 + $0x1d8] sm:$0xff] %v7253
        %7286 = vst [vmem:[%s446 + $0x208] sm:$0xff] %v7254
        %7287 = vst [vmem:[%s446 + $0x218] sm:$0xff] %v7255
        %7288 = vst [vmem:[%s446 + $0x248] sm:$0xff] %v7256
        %7289 = vst [vmem:[%s446 + $0x258] sm:$0xff] %v7257
        %7290 = vst [vmem:[%s446 + $0x288] sm:$0xff] %v7258
        %7291 = vst [vmem:[%s446 + $0x298] sm:$0xff] %v7259
        %7292 = vst [vmem:[%s446 + $0x2c8] sm:$0xff] %v7260
        %7293 = vst [vmem:[%s446 + $0x2d8] sm:$0xff] %v7261
        %7294 = vst [vmem:[%s446 + $0x308] sm:$0xff] %v7262
        %7295 = vst [vmem:[%s446 + $0x318] sm:$0xff] %v7263
        %7296 = vst [vmem:[%s446 + $0x348] sm:$0xff] %v7264
        %7297 = vst [vmem:[%s446 + $0x358] sm:$0xff] %v7265
        %7298 = vst [vmem:[%s446 + $0x388] sm:$0xff] %v7266
        %7299 = vst [vmem:[%s446 + $0x398] sm:$0xff] %v7267
        %7300 = vst [vmem:[%s446 + $0x3c8] sm:$0xff] %v7268
        %7301 = vst [vmem:[%s446 + $0x3d8] sm:$0xff] %v7269
        %v7302 = vadd.f32 %v6528, %v1910
        %v7303 = vadd.f32 %v6529, %v1915
        %v7304 = vadd.f32 %v6530, %v1920
        %v7305 = vadd.f32 %v6531, %v1925
        %v7306 = vadd.f32 %v6532, %v1930
        %v7307 = vadd.f32 %v6533, %v1935
        %v7308 = vadd.f32 %v6534, %v1940
        %v7309 = vadd.f32 %v6535, %v1945
        %v7310 = vadd.f32 %v6536, %v1950
        %v7311 = vadd.f32 %v6537, %v1955
        %v7312 = vadd.f32 %v6538, %v1960
        %v7313 = vadd.f32 %v6539, %v1965
        %v7314 = vadd.f32 %v6540, %v1970
        %v7315 = vadd.f32 %v6541, %v1975
        %v7316 = vadd.f32 %v6542, %v1980
        %v7317 = vadd.f32 %v6543, %v1985
        %v7318 = vadd.f32 %v6544, %v1990
        %v7319 = vadd.f32 %v6545, %v1995
        %v7320 = vadd.f32 %v6546, %v2000
        %v7321 = vadd.f32 %v6547, %v2005
        %v7322 = vadd.f32 %v6548, %v2010
        %v7323 = vadd.f32 %v6549, %v2015
        %v7324 = vadd.f32 %v6550, %v2020
        %v7325 = vadd.f32 %v6551, %v2025
        %v7326 = vadd.f32 %v6552, %v2030
        %v7327 = vadd.f32 %v6553, %v2035
        %v7328 = vadd.f32 %v6554, %v2040
        %v7329 = vadd.f32 %v6555, %v2045
        %v7330 = vadd.f32 %v6556, %v2050
        %v7331 = vadd.f32 %v6557, %v2055
        %v7332 = vadd.f32 %v6558, %v2060
        %v7333 = vadd.f32 %v6559, %v2065
        %s7334 = scalar_lea.vmem %s446, 32 [#allocation12]
        %7335 = vst [vmem:[%s7334] sm:$0xff] %v7302
        %7336 = vst [vmem:[%s7334 + $0x10] sm:$0xff] %v7303
        %7337 = vst [vmem:[%s7334 + $0x40] sm:$0xff] %v7304
        %7338 = vst [vmem:[%s7334 + $0x50] sm:$0xff] %v7305
        %7339 = vst [vmem:[%s7334 + $0x80] sm:$0xff] %v7306
        %7340 = vst [vmem:[%s7334 + $0x90] sm:$0xff] %v7307
        %7341 = vst [vmem:[%s7334 + $0xc0] sm:$0xff] %v7308
        %7342 = vst [vmem:[%s7334 + $0xd0] sm:$0xff] %v7309
        %7343 = vst [vmem:[%s7334 + $0x100] sm:$0xff] %v7310
        %7344 = vst [vmem:[%s7334 + $0x110] sm:$0xff] %v7311
        %7345 = vst [vmem:[%s7334 + $0x140] sm:$0xff] %v7312
        %7346 = vst [vmem:[%s7334 + $0x150] sm:$0xff] %v7313
        %7347 = vst [vmem:[%s7334 + $0x180] sm:$0xff] %v7314
        %7348 = vst [vmem:[%s7334 + $0x190] sm:$0xff] %v7315
        %7349 = vst [vmem:[%s7334 + $0x1c0] sm:$0xff] %v7316
        %7350 = vst [vmem:[%s7334 + $0x1d0] sm:$0xff] %v7317
        %7351 = vst [vmem:[%s7334 + $0x200] sm:$0xff] %v7318
        %7352 = vst [vmem:[%s7334 + $0x210] sm:$0xff] %v7319
        %7353 = vst [vmem:[%s7334 + $0x240] sm:$0xff] %v7320
        %7354 = vst [vmem:[%s7334 + $0x250] sm:$0xff] %v7321
        %7355 = vst [vmem:[%s7334 + $0x280] sm:$0xff] %v7322
        %7356 = vst [vmem:[%s7334 + $0x290] sm:$0xff] %v7323
        %7357 = vst [vmem:[%s7334 + $0x2c0] sm:$0xff] %v7324
        %7358 = vst [vmem:[%s7334 + $0x2d0] sm:$0xff] %v7325
        %7359 = vst [vmem:[%s7334 + $0x300] sm:$0xff] %v7326
        %7360 = vst [vmem:[%s7334 + $0x310] sm:$0xff] %v7327
        %7361 = vst [vmem:[%s7334 + $0x340] sm:$0xff] %v7328
        %7362 = vst [vmem:[%s7334 + $0x350] sm:$0xff] %v7329
        %7363 = vst [vmem:[%s7334 + $0x380] sm:$0xff] %v7330
        %7364 = vst [vmem:[%s7334 + $0x390] sm:$0xff] %v7331
        %7365 = vst [vmem:[%s7334 + $0x3c0] sm:$0xff] %v7332
        %7366 = vst [vmem:[%s7334 + $0x3d0] sm:$0xff] %v7333
        %v7367 = vadd.f32 %v7142, %v1910
        %v7368 = vadd.f32 %v7143, %v1915
        %v7369 = vadd.f32 %v7144, %v1920
        %v7370 = vadd.f32 %v7145, %v1925
        %v7371 = vadd.f32 %v7146, %v1930
        %v7372 = vadd.f32 %v7147, %v1935
        %v7373 = vadd.f32 %v7148, %v1940
        %v7374 = vadd.f32 %v7149, %v1945
        %v7375 = vadd.f32 %v7150, %v1950
        %v7376 = vadd.f32 %v7151, %v1955
        %v7377 = vadd.f32 %v7152, %v1960
        %v7378 = vadd.f32 %v7153, %v1965
        %v7379 = vadd.f32 %v7154, %v1970
        %v7380 = vadd.f32 %v7155, %v1975
        %v7381 = vadd.f32 %v7156, %v1980
        %v7382 = vadd.f32 %v7157, %v1985
        %v7383 = vadd.f32 %v7158, %v1990
        %v7384 = vadd.f32 %v7159, %v1995
        %v7385 = vadd.f32 %v7160, %v2000
        %v7386 = vadd.f32 %v7161, %v2005
        %v7387 = vadd.f32 %v7162, %v2010
        %v7388 = vadd.f32 %v7163, %v2015
        %v7389 = vadd.f32 %v7164, %v2020
        %v7390 = vadd.f32 %v7165, %v2025
        %v7391 = vadd.f32 %v7166, %v2030
        %v7392 = vadd.f32 %v7167, %v2035
        %v7393 = vadd.f32 %v7168, %v2040
        %v7394 = vadd.f32 %v7169, %v2045
        %v7395 = vadd.f32 %v7170, %v2050
        %v7396 = vadd.f32 %v7171, %v2055
        %v7397 = vadd.f32 %v7172, %v2060
        %v7398 = vadd.f32 %v7173, %v2065
        %7399 = vst [vmem:[%s7334 + $0x8] sm:$0xff] %v7367
        %7400 = vst [vmem:[%s7334 + $0x18] sm:$0xff] %v7368
        %7401 = vst [vmem:[%s7334 + $0x48] sm:$0xff] %v7369
        %7402 = vst [vmem:[%s7334 + $0x58] sm:$0xff] %v7370
        %7403 = vst [vmem:[%s7334 + $0x88] sm:$0xff] %v7371
        %7404 = vst [vmem:[%s7334 + $0x98] sm:$0xff] %v7372
        %7405 = vst [vmem:[%s7334 + $0xc8] sm:$0xff] %v7373
        %7406 = vst [vmem:[%s7334 + $0xd8] sm:$0xff] %v7374
        %7407 = vst [vmem:[%s7334 + $0x108] sm:$0xff] %v7375
        %7408 = vst [vmem:[%s7334 + $0x118] sm:$0xff] %v7376
        %7409 = vst [vmem:[%s7334 + $0x148] sm:$0xff] %v7377
        %7410 = vst [vmem:[%s7334 + $0x158] sm:$0xff] %v7378
        %7411 = vst [vmem:[%s7334 + $0x188] sm:$0xff] %v7379
        %7412 = vst [vmem:[%s7334 + $0x198] sm:$0xff] %v7380
        %7413 = vst [vmem:[%s7334 + $0x1c8] sm:$0xff] %v7381
        %7414 = vst [vmem:[%s7334 + $0x1d8] sm:$0xff] %v7382
        %7415 = vst [vmem:[%s7334 + $0x208] sm:$0xff] %v7383
        %7416 = vst [vmem:[%s7334 + $0x218] sm:$0xff] %v7384
        %7417 = vst [vmem:[%s7334 + $0x248] sm:$0xff] %v7385
        %7418 = vst [vmem:[%s7334 + $0x258] sm:$0xff] %v7386
        %7419 = vst [vmem:[%s7334 + $0x288] sm:$0xff] %v7387
        %7420 = vst [vmem:[%s7334 + $0x298] sm:$0xff] %v7388
        %7421 = vst [vmem:[%s7334 + $0x2c8] sm:$0xff] %v7389
        %7422 = vst [vmem:[%s7334 + $0x2d8] sm:$0xff] %v7390
        %7423 = vst [vmem:[%s7334 + $0x308] sm:$0xff] %v7391
        %7424 = vst [vmem:[%s7334 + $0x318] sm:$0xff] %v7392
        %7425 = vst [vmem:[%s7334 + $0x348] sm:$0xff] %v7393
        %7426 = vst [vmem:[%s7334 + $0x358] sm:$0xff] %v7394
        %7427 = vst [vmem:[%s7334 + $0x388] sm:$0xff] %v7395
        %7428 = vst [vmem:[%s7334 + $0x398] sm:$0xff] %v7396
        %7429 = vst [vmem:[%s7334 + $0x3c8] sm:$0xff] %v7397
        %7430 = vst [vmem:[%s7334 + $0x3d8] sm:$0xff] %v7398
        %s7431 = sand.u32 %s271, 1
        %s7432 = scalar_lea.sflag [#allocation6], %s7431
        %s7433 = sand.u32 %s271, 1
        %s7434 = smul.addr %s7433, 1024
        %s7435 = scalar_lea.vmem [#allocation12], %s7434
        // Predicated region
        $region81: #{tpu_custom_call.1} parent=59 // pred_check
          %p7436 = pneg %p281
        $region82: #{tpu_custom_call.1} parent=59 // pred_check_branch
          %7438 = sbr.rel (%p7436) target = $region84
        $region83: #{tpu_custom_call.1} parent=59 // pred_region
          %s7439 = smul.u32 16, %s34
          %s7441 = ssub.s32 16384, 16384
          %7442 = vsyncadd %s7432, %s7441
          %s7443 = smul.addr %s7439, 8
          %s7444 = smul.addr %s33, 128
          %s7445 = sadd.s32 %s7443, %s7444
          %s7446 = smul.addr %s7445, 128
          %s7447 = scalar_lea.hbm %s10, %s7446
          %s7448 = sshll.u32 %s7435, 4
          %s7449 = int_to_ptr.vmem [resolvable:$true] %s7448
          %7454 = dma.vmem_to_hbm [thread:$0]  %s7449, 16384, %s7447, %s7432, 256, 256, 16
        $region84: #{tpu_custom_call.1} parent=59 // pred_fallthru
          _
      $region60: #{tpu_custom_call.1} parent=5 // pred_fallthru
        _
      %p7455 = scmp.le.s32.totalorder 2, %s24
      // Predicated region
      $region85: #{tpu_custom_call.1} parent=5 // pred_check
        %p7456 = pneg %p7455
      $region86: #{tpu_custom_call.1} parent=5 // pred_check_branch
        %7458 = sbr.rel (%p7456) target = $region88
      $region87: #{tpu_custom_call.1} parent=5 // pred_region
        %s7459 = ssub.s32 %s24, 2
        // Predicated region
        $region89: #{tpu_custom_call.1} parent=87 // pred_check
          %p7460 = pneg %p287
        $region90: #{tpu_custom_call.1} parent=87 // pred_check_branch
          %7462 = sbr.rel (%p7460) target = $region92
        $region91: #{tpu_custom_call.1} parent=87 // pred_region
          %s7463 = sand.u32 %s272, 1
          %s7464 = scalar_lea.sflag [#allocation6], %s7463
          %s7465 = sand.u32 %s272, 1
          %s7466 = smul.addr %s7465, 1024
          %s7467 = scalar_lea.vmem [#allocation12], %s7466
          %7468 = dma.done %s7464, 16384
        $region92: #{tpu_custom_call.1} parent=87 // pred_fallthru
          _
      $region88: #{tpu_custom_call.1} parent=5 // pred_fallthru
        _
    $region6: #{tpu_custom_call.1} parent=1 // loop_footer
      %s28 = sadd.s32 1, %s24
    $region7: #{tpu_custom_call.1} parent=1 // loop_footer_branch
      %23 = sbr.rel target = $region3
    $region8: #{tpu_custom_call.1} parent=1 // loop_exit
      _
    %7469 = vsyncpa [#allocation5], 1
    %s7470 = scalar_lea.sflag [#allocation5], 1
    %7471 = vsyncpa %s7470, 1
    %7472 = vsyncpa [#allocation8], 1
    %7473 = vsyncpa [#allocation11], 1
    %7474 = vsyncpa [#allocation6], 1
    %s7475 = scalar_lea.sflag [#allocation6], 1
    %7476 = vsyncpa %s7475, 1

</llo_original>
